<compile_context>
chip_gen: v6e
topology: v6e:2x2x1
jax: 0.10.0
libtpu: 0.0.40
codegen_flags: <defaults>
</compile_context>

<pallas_src>
import functools

import jax
import jax.numpy as jnp
import numpy as np
from jax.experimental import pallas as pl
from jax.experimental.pallas import tpu as pltpu

LN_EPS = 1e-5  # PyTorch nn.LayerNorm default eps


# ---------------------------------------------------------------------------
# Fused kernel: all encoder layers (+ optional final LayerNorm), one program.
# Activations live as a (B*L, E) slab; batch is folded into the matmul M dim.
# ---------------------------------------------------------------------------
def _encoder_stack_kernel(*refs, nhead, num_layers, has_final_norm, batch, seqlen):
    (x_ref, wqkv_ref, bqkv_ref, wo_ref, bo_ref,
     ln1w_ref, ln1b_ref, w1_ref, b1_ref, w2_ref, b2_ref,
     ln2w_ref, ln2b_ref) = refs[:13]
    idx = 13
    if has_final_norm:
        lnfw_ref, lnfb_ref = refs[idx], refs[idx + 1]
        idx += 2
    o_ref, attn_ref = refs[idx], refs[idx + 1]

    src = x_ref[...]                       # (B*L, E) float32
    M, E = src.shape
    dh = E // nhead
    scale = dh ** -0.5                     # PyTorch scales q by 1/sqrt(head_dim)
    wdt = wqkv_ref.dtype                   # matmul weight dtype (bf16 when pre-cast)

    def layer_norm(v, w, b):
        # sum(x) and sum(x*x) are independent lane reductions (no mu dependency).
        mu = jnp.mean(v, axis=-1, keepdims=True)
        ms = jnp.mean(v * v, axis=-1, keepdims=True)
        return (v - mu) * jax.lax.rsqrt(ms - mu * mu + LN_EPS) * w + b

    def split_heads(t):                    # (B*L, E) -> (B*H, L, dh)
        return (t.reshape(batch, seqlen, nhead, dh)
                 .transpose(0, 2, 1, 3)
                 .reshape(batch * nhead, seqlen, dh))

    attn_weights = None
    for l in range(num_layers):            # static loop over fused layers
        # --- multi-head self attention ---
        qkv = jnp.dot(src.astype(wdt), wqkv_ref[l],
                      preferred_element_type=jnp.float32) + bqkv_ref[l]   # (M, 3E)
        q = qkv[:, :E] * scale
        k = qkv[:, E:2 * E]
        v = qkv[:, 2 * E:]
        qs, ks, vs = split_heads(q), split_heads(k), split_heads(v)
        s = jnp.einsum("gld,gmd->glm", qs.astype(wdt), ks.astype(wdt),
                       preferred_element_type=jnp.float32)        # (B*H, L, L)
        s = s - jnp.max(s, axis=-1, keepdims=True)
        p = jnp.exp(s)
        denom = jnp.sum(p, axis=-1, keepdims=True)
        if l == num_layers - 1:
            inv = 1.0 / denom              # exact: these probabilities are returned
        else:
            inv = pl.reciprocal(denom, approx=True)
        p = p * inv
        o = jnp.einsum("glm,gmd->gld", p.astype(wdt), vs.astype(wdt),
                       preferred_element_type=jnp.float32)        # (B*H, L, dh)
        attn = (o.reshape(batch, nhead, seqlen, dh)
                 .transpose(0, 2, 1, 3)
                 .reshape(M, E))                                  # merge heads
        attn = jnp.dot(attn.astype(wdt), wo_ref[l],
                       preferred_element_type=jnp.float32) + bo_ref[l]

        # --- residual + LayerNorm 1 ---
        y = layer_norm(src + attn, ln1w_ref[l], ln1b_ref[l])

        # --- feed-forward (ReLU) + residual + LayerNorm 2 ---
        h1 = jnp.maximum(
            jnp.dot(y.astype(wdt), w1_ref[l],
                    preferred_element_type=jnp.float32) + b1_ref[l], 0.0)
        ffn = jnp.dot(h1.astype(wdt), w2_ref[l],
                      preferred_element_type=jnp.float32) + b2_ref[l]
        src = layer_norm(y + ffn, ln2w_ref[l], ln2b_ref[l])

        if l == num_layers - 1:
            # Head-averaged attention probabilities of the last layer.
            attn_weights = jnp.mean(
                p.reshape(batch, nhead, seqlen, seqlen), axis=1)  # (B, L, L)

    if has_final_norm:
        src = layer_norm(src, lnfw_ref[...], lnfb_ref[...])

    o_ref[...] = src                       # single dense (B*L, E) slab
    attn_ref[...] = attn_weights           # single dense (B, L, L) slab


def prepare_params(params):
    """One-time cast of the matmul weights to bf16 (f32 accumulation in-kernel).
    Biases and LayerNorm parameters stay f32. Call once, reuse across forwards."""
    out = dict(params)
    for name in ("wqkv", "wo", "w1", "w2"):
        out[name] = params[name].astype(jnp.bfloat16)
    return out


@functools.partial(jax.jit, static_argnums=2)
def weighted_transformer_encoder(src, params, nhead, norm=None):
    """src: (B, L, E) float32. params: dict of layer-stacked weights (leading
    dim = num_layers), matmul weights ideally pre-cast via prepare_params().
    norm: optional (gamma, beta) for the encoder's final LayerNorm."""
    B, L, E = src.shape
    num_layers = params["wqkv"].shape[0]
    x2d = src.reshape(B * L, E)            # fold batch into the matmul M dim

    inputs = [x2d,
              params["wqkv"], params["bqkv"], params["wo"], params["bo"],
              params["ln1_w"], params["ln1_b"],
              params["w1"], params["b1"], params["w2"], params["b2"],
              params["ln2_w"], params["ln2_b"]]
    has_norm = norm is not None
    if has_norm:
        inputs += [norm[0], norm[1]]

    def full_spec(a):
        nd = a.ndim
        return pl.BlockSpec(a.shape, lambda i, _nd=nd: (0,) * _nd)

    in_specs = [full_spec(a) for a in inputs]

    kernel = functools.partial(
        _encoder_stack_kernel, nhead=nhead, num_layers=num_layers,
        has_final_norm=has_norm, batch=B, seqlen=L)

    out_shape = (jax.ShapeDtypeStruct((B * L, E), jnp.float32),
                 jax.ShapeDtypeStruct((B, L, L), jnp.float32))
    out_specs = (pl.BlockSpec((B * L, E), lambda i: (0, 0)),
                 pl.BlockSpec((B, L, L), lambda i: (0, 0, 0)))

    out2d, attn = pl.pallas_call(
        kernel,
        out_shape=out_shape,
        grid=(1,),                         # single step: one weight load, one writeback
        in_specs=in_specs,
        out_specs=out_specs,
        compiler_params=pltpu.CompilerParams(
            dimension_semantics=("arbitrary",),
            vmem_limit_bytes=32 * 1024 * 1024),
    )(*inputs)
    return out2d.reshape(B, L, E), attn


# ---------------------------------------------------------------------------
# Deterministic synthetic parameters (layer-stacked, f32 master copy).
# ---------------------------------------------------------------------------
def init_params(key, num_layers, emb, ff, scale=0.05):
    keys = iter(jax.random.split(key, 12 * num_layers + 2))

    def lin(din, dout):
        w = scale * jax.random.normal(next(keys), (din, dout), jnp.float32)
        b = scale * jax.random.normal(next(keys), (1, dout), jnp.float32)
        return w, b

    def ln_pair(dim):
        w = 1.0 + scale * jax.random.normal(next(keys), (1, dim), jnp.float32)
        b = scale * jax.random.normal(next(keys), (1, dim), jnp.float32)
        return w, b

    names = ["wqkv", "bqkv", "wo", "bo", "ln1_w", "ln1_b",
             "w1", "b1", "w2", "b2", "ln2_w", "ln2_b"]
    per = {n: [] for n in names}
    for _ in range(num_layers):
        wqkv, bqkv = lin(emb, 3 * emb)
        wo, bo = lin(emb, emb)
        l1w, l1b = ln_pair(emb)
        w1, b1 = lin(emb, ff)
        w2, b2 = lin(ff, emb)
        l2w, l2b = ln_pair(emb)
        for n, v in zip(names, [wqkv, bqkv, wo, bo, l1w, l1b,
                                w1, b1, w2, b2, l2w, l2b]):
            per[n].append(v)
    params = {n: jnp.stack(v, axis=0) for n, v in per.items()}
    params["norm"] = ln_pair(emb)          # optional final LayerNorm of the encoder
    return params


# ---------------------------------------------------------------------------
# Pure-JAX reference (same math, f32 weights, no Pallas) for correctness.
# ---------------------------------------------------------------------------
def reference_encoder(src, params, nhead, norm=None):
    B, L, E = src.shape
    dh = E // nhead

    def ln(v, w, b):
        mu = jnp.mean(v, -1, keepdims=True)
        var = jnp.mean((v - mu) ** 2, -1, keepdims=True)
        return (v - mu) * jax.lax.rsqrt(var + LN_EPS) * w + b

    x = src
    weights = None
    for l in range(params["wqkv"].shape[0]):
        qkv = x @ params["wqkv"][l] + params["bqkv"][l]
        q = (qkv[..., :E] * dh ** -0.5).reshape(B, L, nhead, dh)
        k = qkv[..., E:2 * E].reshape(B, L, nhead, dh)
        v = qkv[..., 2 * E:].reshape(B, L, nhead, dh)
        s = jnp.einsum("blhd,bmhd->bhlm", q, k)
        p = jax.nn.softmax(s, axis=-1)
        attn = jnp.einsum("bhlm,bmhd->blhd", p, v).reshape(B, L, E)
        attn = attn @ params["wo"][l] + params["bo"][l]
        x = ln(x + attn, params["ln1_w"][l], params["ln1_b"][l])
        h = jnp.maximum(x @ params["w1"][l] + params["b1"][l], 0.0)
        x = ln(x + h @ params["w2"][l] + params["b2"][l],
               params["ln2_w"][l], params["ln2_b"][l])
        weights = jnp.mean(p, axis=1)      # (B, L, L), head-averaged
    if norm is not None:
        x = ln(x, norm[0], norm[1])
    return x, weights


if __name__ == "__main__":
    B, L, E = 2, 7, 32                     # batch, sector positions, embedding
    NHEAD, NUM_LAYERS, FF = 4, 2, 2048     # FF = nn.TransformerEncoderLayer default

    key = jax.random.PRNGKey(0)
    kp, kx = jax.random.split(key)
    params = init_params(kp, NUM_LAYERS, E, FF)   # f32 master weights (reference)
    kparams = prepare_params(params)              # bf16 matmul weights, cast ONCE
    src = jax.random.normal(kx, (B, L, E), jnp.float32)

    # Path 1: encoder with a final LayerNorm (norm is not None).
    out, attn_w = weighted_transformer_encoder(src, kparams, NHEAD, norm=params["norm"])
    out = jax.block_until_ready(out)
    ref_out, ref_w = reference_encoder(src, params, NHEAD, norm=params["norm"])
    assert out.shape == (B, L, E) and attn_w.shape == (B, L, L)
    np.testing.assert_allclose(np.asarray(out), np.asarray(ref_out), rtol=2e-2, atol=2e-2)
    np.testing.assert_allclose(np.asarray(attn_w), np.asarray(ref_w), rtol=2e-2, atol=2e-2)

    # Path 2: default construction (norm=None).
    out2, attn_w2 = weighted_transformer_encoder(src, kparams, NHEAD, norm=None)
    out2 = jax.block_until_ready(out2)
    ref_out2, ref_w2 = reference_encoder(src, params, NHEAD, norm=None)
    np.testing.assert_allclose(np.asarray(out2), np.asarray(ref_out2), rtol=2e-2, atol=2e-2)
    np.testing.assert_allclose(np.asarray(attn_w2), np.asarray(ref_w2), rtol=2e-2, atol=2e-2)

    print("KERNEL_OK")
</pallas_src>

<mosaic_0001>
module attributes {stable_mosaic.version = 11 : i64} {
  func.func @_encoder_stack_kernel(%arg0: i32, %arg1: memref<14x32xf32, #tpu.memory_space<vmem>>, %arg2: memref<2x32x96xbf16, #tpu.memory_space<vmem>>, %arg3: memref<2x1x96xf32, #tpu.memory_space<vmem>>, %arg4: memref<2x32x32xbf16, #tpu.memory_space<vmem>>, %arg5: memref<2x1x32xf32, #tpu.memory_space<vmem>>, %arg6: memref<2x1x32xf32, #tpu.memory_space<vmem>>, %arg7: memref<2x1x32xf32, #tpu.memory_space<vmem>>, %arg8: memref<2x32x2048xbf16, #tpu.memory_space<vmem>>, %arg9: memref<2x1x2048xf32, #tpu.memory_space<vmem>>, %arg10: memref<2x2048x32xbf16, #tpu.memory_space<vmem>>, %arg11: memref<2x1x32xf32, #tpu.memory_space<vmem>>, %arg12: memref<2x1x32xf32, #tpu.memory_space<vmem>>, %arg13: memref<2x1x32xf32, #tpu.memory_space<vmem>>, %arg14: memref<1x32xf32, #tpu.memory_space<vmem>>, %arg15: memref<1x32xf32, #tpu.memory_space<vmem>>, %arg16: memref<14x32xf32, #tpu.memory_space<vmem>>, %arg17: memref<2x7x7xf32, #tpu.memory_space<vmem>>) attributes {dimension_semantics = [#tpu.dimension_semantics<arbitrary>], iteration_bounds = array<i64: 1>, scalar_prefetch = 0 : i64, scratch_operands = 0 : i64, tpu.core_type = #tpu.core_type<tc>, window_params = [{pipeline_mode = #tpu.pipeline_mode<synchronous>, transform_indices = @transform_0, window_bounds = array<i64: 14, 32>}, {pipeline_mode = #tpu.pipeline_mode<synchronous>, transform_indices = @transform_1, window_bounds = array<i64: 2, 32, 96>}, {pipeline_mode = #tpu.pipeline_mode<synchronous>, transform_indices = @transform_2, window_bounds = array<i64: 2, 1, 96>}, {pipeline_mode = #tpu.pipeline_mode<synchronous>, transform_indices = @transform_3, window_bounds = array<i64: 2, 32, 32>}, {pipeline_mode = #tpu.pipeline_mode<synchronous>, transform_indices = @transform_4, window_bounds = array<i64: 2, 1, 32>}, {pipeline_mode = #tpu.pipeline_mode<synchronous>, transform_indices = @transform_5, window_bounds = array<i64: 2, 1, 32>}, {pipeline_mode = #tpu.pipeline_mode<synchronous>, transform_indices = @transform_6, window_bounds = array<i64: 2, 1, 32>}, {pipeline_mode = #tpu.pipeline_mode<synchronous>, transform_indices = @transform_7, window_bounds = array<i64: 2, 32, 2048>}, {pipeline_mode = #tpu.pipeline_mode<synchronous>, transform_indices = @transform_8, window_bounds = array<i64: 2, 1, 2048>}, {pipeline_mode = #tpu.pipeline_mode<synchronous>, transform_indices = @transform_9, window_bounds = array<i64: 2, 2048, 32>}, {pipeline_mode = #tpu.pipeline_mode<synchronous>, transform_indices = @transform_10, window_bounds = array<i64: 2, 1, 32>}, {pipeline_mode = #tpu.pipeline_mode<synchronous>, transform_indices = @transform_11, window_bounds = array<i64: 2, 1, 32>}, {pipeline_mode = #tpu.pipeline_mode<synchronous>, transform_indices = @transform_12, window_bounds = array<i64: 2, 1, 32>}, {pipeline_mode = #tpu.pipeline_mode<synchronous>, transform_indices = @transform_13, window_bounds = array<i64: 1, 32>}, {pipeline_mode = #tpu.pipeline_mode<synchronous>, transform_indices = @transform_14, window_bounds = array<i64: 1, 32>}, {pipeline_mode = #tpu.pipeline_mode<synchronous>, transform_indices = @transform_15, window_bounds = array<i64: 14, 32>}, {pipeline_mode = #tpu.pipeline_mode<synchronous>, transform_indices = @transform_16, window_bounds = array<i64: 2, 7, 7>}]} {
    %c0 = arith.constant 0 : index
    %c0_0 = arith.constant 0 : index
    %0 = vector.load %arg1[%c0, %c0_0] : memref<14x32xf32, #tpu.memory_space<vmem>>, vector<14x32xf32>
    %1 = arith.truncf %0 : vector<14x32xf32> to vector<14x32xbf16>
    %c0_1 = arith.constant 0 : index
    %c0_2 = arith.constant 0 : index
    %c0_3 = arith.constant 0 : index
    %2 = vector.load %arg2[%c0_1, %c0_2, %c0_3] : memref<2x32x96xbf16, #tpu.memory_space<vmem>>, vector<1x32x96xbf16>
    %3 = vector.shape_cast %2 : vector<1x32x96xbf16> to vector<32x96xbf16>
    %cst = arith.constant dense<0.000000e+00> : vector<14x96xf32>
    %4 = tpu.matmul %1, %3, %cst {dimension_numbers = #tpu.dot_dimension_numbers<[1], [0], [0], [1], [0, 0, 1, 1], [], []>} : vector<14x32xbf16>, vector<32x96xbf16>, vector<14x96xf32> -> vector<14x96xf32>
    %c0_4 = arith.constant 0 : index
    %c0_5 = arith.constant 0 : index
    %c0_6 = arith.constant 0 : index
    %5 = vector.load %arg3[%c0_4, %c0_5, %c0_6] : memref<2x1x96xf32, #tpu.memory_space<vmem>>, vector<1x1x96xf32>
    %6 = vector.shape_cast %5 : vector<1x1x96xf32> to vector<1x96xf32>
    %7 = vector.broadcast %6 : vector<1x96xf32> to vector<14x96xf32>
    %8 = arith.addf %4, %7 : vector<14x96xf32>
    %9 = vector.extract_strided_slice %8 {offsets = [0, 0], sizes = [14, 32], strides = [1, 1]} : vector<14x96xf32> to vector<14x32xf32>
    %cst_7 = arith.constant 0.353553385 : f32
    %10 = vector.broadcast %cst_7 : f32 to vector<14x32xf32>
    %11 = arith.mulf %9, %10 : vector<14x32xf32>
    %12 = vector.extract_strided_slice %8 {offsets = [0, 32], sizes = [14, 32], strides = [1, 1]} : vector<14x96xf32> to vector<14x32xf32>
    %13 = vector.extract_strided_slice %8 {offsets = [0, 64], sizes = [14, 32], strides = [1, 1]} : vector<14x96xf32> to vector<14x32xf32>
    %14 = vector.shape_cast %11 : vector<14x32xf32> to vector<2x7x4x8xf32>
    %15 = tpu.transpose %14, [0, 2, 1, 3] : vector<2x7x4x8xf32> -> vector<2x4x7x8xf32>
    %16 = vector.shape_cast %15 : vector<2x4x7x8xf32> to vector<8x7x8xf32>
    %17 = vector.shape_cast %12 : vector<14x32xf32> to vector<2x7x4x8xf32>
    %18 = tpu.transpose %17, [0, 2, 1, 3] : vector<2x7x4x8xf32> -> vector<2x4x7x8xf32>
    %19 = vector.shape_cast %18 : vector<2x4x7x8xf32> to vector<8x7x8xf32>
    %20 = vector.shape_cast %13 : vector<14x32xf32> to vector<2x7x4x8xf32>
    %21 = tpu.transpose %20, [0, 2, 1, 3] : vector<2x7x4x8xf32> -> vector<2x4x7x8xf32>
    %22 = vector.shape_cast %21 : vector<2x4x7x8xf32> to vector<8x7x8xf32>
    %23 = arith.truncf %16 : vector<8x7x8xf32> to vector<8x7x8xbf16>
    %24 = arith.truncf %19 : vector<8x7x8xf32> to vector<8x7x8xbf16>
    "tpu.trace_start"() <{level = 10 : i32, message = "gld,gmd->glm"}> : () -> ()
    %cst_8 = arith.constant dense<0.000000e+00> : vector<8x7x7xf32>
    %25 = tpu.matmul %23, %24, %cst_8 {dimension_numbers = #tpu.dot_dimension_numbers<[2], [2], [1], [1], [0, 0, 0, 1, 1, 1], [0], [0]>} : vector<8x7x8xbf16>, vector<8x7x8xbf16>, vector<8x7x7xf32> -> vector<8x7x7xf32>
    "tpu.trace_stop"() : () -> ()
    %cst_9 = arith.constant dense<0xFF800000> : vector<8x7xf32>
    %26 = vector.multi_reduction <maximumf>, %25, %cst_9 [2] : vector<8x7x7xf32> to vector<8x7xf32>
    %27 = vector.shape_cast %26 : vector<8x7xf32> to vector<8x7x1xf32>
    %28 = vector.broadcast %27 : vector<8x7x1xf32> to vector<8x7x7xf32>
    %29 = arith.subf %25, %28 : vector<8x7x7xf32>
    %30 = math.exp %29 : vector<8x7x7xf32>
    %cst_10 = arith.constant dense<0.000000e+00> : vector<8x7xf32>
    %31 = vector.multi_reduction <add>, %30, %cst_10 [2] : vector<8x7x7xf32> to vector<8x7xf32>
    %32 = vector.shape_cast %31 : vector<8x7xf32> to vector<8x7x1xf32>
    %33 = tpu.reciprocal %32 {approx = true} : vector<8x7x1xf32> -> vector<8x7x1xf32>
    %34 = vector.broadcast %33 : vector<8x7x1xf32> to vector<8x7x7xf32>
    %35 = arith.mulf %30, %34 : vector<8x7x7xf32>
    %36 = arith.truncf %35 : vector<8x7x7xf32> to vector<8x7x7xbf16>
    %37 = arith.truncf %22 : vector<8x7x8xf32> to vector<8x7x8xbf16>
    "tpu.trace_start"() <{level = 10 : i32, message = "glm,gmd->gld"}> : () -> ()
    %cst_11 = arith.constant dense<0.000000e+00> : vector<8x7x8xf32>
    %38 = tpu.matmul %36, %37, %cst_11 {dimension_numbers = #tpu.dot_dimension_numbers<[2], [1], [1], [2], [0, 0, 0, 1, 1, 2], [0], [0]>} : vector<8x7x7xbf16>, vector<8x7x8xbf16>, vector<8x7x8xf32> -> vector<8x7x8xf32>
    "tpu.trace_stop"() : () -> ()
    %39 = vector.shape_cast %38 : vector<8x7x8xf32> to vector<2x4x7x8xf32>
    %40 = tpu.transpose %39, [0, 2, 1, 3] : vector<2x4x7x8xf32> -> vector<2x7x4x8xf32>
    %41 = vector.shape_cast %40 : vector<2x7x4x8xf32> to vector<14x32xf32>
    %42 = arith.truncf %41 : vector<14x32xf32> to vector<14x32xbf16>
    %c0_12 = arith.constant 0 : index
    %c0_13 = arith.constant 0 : index
    %c0_14 = arith.constant 0 : index
    %43 = vector.load %arg4[%c0_12, %c0_13, %c0_14] : memref<2x32x32xbf16, #tpu.memory_space<vmem>>, vector<1x32x32xbf16>
    %44 = vector.shape_cast %43 : vector<1x32x32xbf16> to vector<32x32xbf16>
    %cst_15 = arith.constant dense<0.000000e+00> : vector<14x32xf32>
    %45 = tpu.matmul %42, %44, %cst_15 {dimension_numbers = #tpu.dot_dimension_numbers<[1], [0], [0], [1], [0, 0, 1, 1], [], []>} : vector<14x32xbf16>, vector<32x32xbf16>, vector<14x32xf32> -> vector<14x32xf32>
    %c0_16 = arith.constant 0 : index
    %c0_17 = arith.constant 0 : index
    %c0_18 = arith.constant 0 : index
    %46 = vector.load %arg5[%c0_16, %c0_17, %c0_18] : memref<2x1x32xf32, #tpu.memory_space<vmem>>, vector<1x1x32xf32>
    %47 = vector.shape_cast %46 : vector<1x1x32xf32> to vector<1x32xf32>
    %48 = vector.broadcast %47 : vector<1x32xf32> to vector<14x32xf32>
    %49 = arith.addf %45, %48 : vector<14x32xf32>
    %50 = arith.addf %0, %49 : vector<14x32xf32>
    %c0_19 = arith.constant 0 : index
    %c0_20 = arith.constant 0 : index
    %c0_21 = arith.constant 0 : index
    %51 = vector.load %arg6[%c0_19, %c0_20, %c0_21] : memref<2x1x32xf32, #tpu.memory_space<vmem>>, vector<1x1x32xf32>
    %52 = vector.shape_cast %51 : vector<1x1x32xf32> to vector<1x32xf32>
    %c0_22 = arith.constant 0 : index
    %c0_23 = arith.constant 0 : index
    %c0_24 = arith.constant 0 : index
    %53 = vector.load %arg7[%c0_22, %c0_23, %c0_24] : memref<2x1x32xf32, #tpu.memory_space<vmem>>, vector<1x1x32xf32>
    %54 = vector.shape_cast %53 : vector<1x1x32xf32> to vector<1x32xf32>
    %cst_25 = arith.constant dense<0.000000e+00> : vector<14xf32>
    %55 = vector.multi_reduction <add>, %50, %cst_25 [1] : vector<14x32xf32> to vector<14xf32>
    %56 = vector.shape_cast %55 : vector<14xf32> to vector<14x1xf32>
    %cst_26 = arith.constant 3.200000e+01 : f32
    %57 = vector.broadcast %cst_26 : f32 to vector<14x1xf32>
    %58 = arith.divf %56, %57 : vector<14x1xf32>
    %59 = arith.mulf %50, %50 : vector<14x32xf32>
    %cst_27 = arith.constant dense<0.000000e+00> : vector<14xf32>
    %60 = vector.multi_reduction <add>, %59, %cst_27 [1] : vector<14x32xf32> to vector<14xf32>
    %61 = vector.shape_cast %60 : vector<14xf32> to vector<14x1xf32>
    %cst_28 = arith.constant 3.200000e+01 : f32
    %62 = vector.broadcast %cst_28 : f32 to vector<14x1xf32>
    %63 = arith.divf %61, %62 : vector<14x1xf32>
    %64 = vector.broadcast %58 : vector<14x1xf32> to vector<14x32xf32>
    %65 = arith.subf %50, %64 : vector<14x32xf32>
    %66 = arith.mulf %58, %58 : vector<14x1xf32>
    %67 = arith.subf %63, %66 : vector<14x1xf32>
    %cst_29 = arith.constant 9.99999974E-6 : f32
    %68 = vector.broadcast %cst_29 : f32 to vector<14x1xf32>
    %69 = arith.addf %67, %68 : vector<14x1xf32>
    %70 = math.rsqrt %69 : vector<14x1xf32>
    %71 = vector.broadcast %70 : vector<14x1xf32> to vector<14x32xf32>
    %72 = arith.mulf %65, %71 : vector<14x32xf32>
    %73 = vector.broadcast %52 : vector<1x32xf32> to vector<14x32xf32>
    %74 = arith.mulf %72, %73 : vector<14x32xf32>
    %75 = vector.broadcast %54 : vector<1x32xf32> to vector<14x32xf32>
    %76 = arith.addf %74, %75 : vector<14x32xf32>
    %77 = arith.truncf %76 : vector<14x32xf32> to vector<14x32xbf16>
    %c0_30 = arith.constant 0 : index
    %c0_31 = arith.constant 0 : index
    %c0_32 = arith.constant 0 : index
    %78 = vector.load %arg8[%c0_30, %c0_31, %c0_32] : memref<2x32x2048xbf16, #tpu.memory_space<vmem>>, vector<1x32x2048xbf16>
    %79 = vector.shape_cast %78 : vector<1x32x2048xbf16> to vector<32x2048xbf16>
    %cst_33 = arith.constant dense<0.000000e+00> : vector<14x2048xf32>
    %80 = tpu.matmul %77, %79, %cst_33 {dimension_numbers = #tpu.dot_dimension_numbers<[1], [0], [0], [1], [0, 0, 1, 1], [], []>} : vector<14x32xbf16>, vector<32x2048xbf16>, vector<14x2048xf32> -> vector<14x2048xf32>
    %c0_34 = arith.constant 0 : index
    %c0_35 = arith.constant 0 : index
    %c0_36 = arith.constant 0 : index
    %81 = vector.load %arg9[%c0_34, %c0_35, %c0_36] : memref<2x1x2048xf32, #tpu.memory_space<vmem>>, vector<1x1x2048xf32>
    %82 = vector.shape_cast %81 : vector<1x1x2048xf32> to vector<1x2048xf32>
    %83 = vector.broadcast %82 : vector<1x2048xf32> to vector<14x2048xf32>
    %84 = arith.addf %80, %83 : vector<14x2048xf32>
    %cst_37 = arith.constant 0.000000e+00 : f32
    %85 = vector.broadcast %cst_37 : f32 to vector<14x2048xf32>
    %86 = arith.maximumf %84, %85 : vector<14x2048xf32>
    %87 = arith.truncf %86 : vector<14x2048xf32> to vector<14x2048xbf16>
    %c0_38 = arith.constant 0 : index
    %c0_39 = arith.constant 0 : index
    %c0_40 = arith.constant 0 : index
    %88 = vector.load %arg10[%c0_38, %c0_39, %c0_40] : memref<2x2048x32xbf16, #tpu.memory_space<vmem>>, vector<1x2048x32xbf16>
    %89 = vector.shape_cast %88 : vector<1x2048x32xbf16> to vector<2048x32xbf16>
    %cst_41 = arith.constant dense<0.000000e+00> : vector<14x32xf32>
    %90 = tpu.matmul %87, %89, %cst_41 {dimension_numbers = #tpu.dot_dimension_numbers<[1], [0], [0], [1], [0, 0, 1, 1], [], []>} : vector<14x2048xbf16>, vector<2048x32xbf16>, vector<14x32xf32> -> vector<14x32xf32>
    %c0_42 = arith.constant 0 : index
    %c0_43 = arith.constant 0 : index
    %c0_44 = arith.constant 0 : index
    %91 = vector.load %arg11[%c0_42, %c0_43, %c0_44] : memref<2x1x32xf32, #tpu.memory_space<vmem>>, vector<1x1x32xf32>
    %92 = vector.shape_cast %91 : vector<1x1x32xf32> to vector<1x32xf32>
    %93 = vector.broadcast %92 : vector<1x32xf32> to vector<14x32xf32>
    %94 = arith.addf %90, %93 : vector<14x32xf32>
    %95 = arith.addf %76, %94 : vector<14x32xf32>
    %c0_45 = arith.constant 0 : index
    %c0_46 = arith.constant 0 : index
    %c0_47 = arith.constant 0 : index
    %96 = vector.load %arg12[%c0_45, %c0_46, %c0_47] : memref<2x1x32xf32, #tpu.memory_space<vmem>>, vector<1x1x32xf32>
    %97 = vector.shape_cast %96 : vector<1x1x32xf32> to vector<1x32xf32>
    %c0_48 = arith.constant 0 : index
    %c0_49 = arith.constant 0 : index
    %c0_50 = arith.constant 0 : index
    %98 = vector.load %arg13[%c0_48, %c0_49, %c0_50] : memref<2x1x32xf32, #tpu.memory_space<vmem>>, vector<1x1x32xf32>
    %99 = vector.shape_cast %98 : vector<1x1x32xf32> to vector<1x32xf32>
    %cst_51 = arith.constant dense<0.000000e+00> : vector<14xf32>
    %100 = vector.multi_reduction <add>, %95, %cst_51 [1] : vector<14x32xf32> to vector<14xf32>
    %101 = vector.shape_cast %100 : vector<14xf32> to vector<14x1xf32>
    %cst_52 = arith.constant 3.200000e+01 : f32
    %102 = vector.broadcast %cst_52 : f32 to vector<14x1xf32>
    %103 = arith.divf %101, %102 : vector<14x1xf32>
    %104 = arith.mulf %95, %95 : vector<14x32xf32>
    %cst_53 = arith.constant dense<0.000000e+00> : vector<14xf32>
    %105 = vector.multi_reduction <add>, %104, %cst_53 [1] : vector<14x32xf32> to vector<14xf32>
    %106 = vector.shape_cast %105 : vector<14xf32> to vector<14x1xf32>
    %cst_54 = arith.constant 3.200000e+01 : f32
    %107 = vector.broadcast %cst_54 : f32 to vector<14x1xf32>
    %108 = arith.divf %106, %107 : vector<14x1xf32>
    %109 = vector.broadcast %103 : vector<14x1xf32> to vector<14x32xf32>
    %110 = arith.subf %95, %109 : vector<14x32xf32>
    %111 = arith.mulf %103, %103 : vector<14x1xf32>
    %112 = arith.subf %108, %111 : vector<14x1xf32>
    %cst_55 = arith.constant 9.99999974E-6 : f32
    %113 = vector.broadcast %cst_55 : f32 to vector<14x1xf32>
    %114 = arith.addf %112, %113 : vector<14x1xf32>
    %115 = math.rsqrt %114 : vector<14x1xf32>
    %116 = vector.broadcast %115 : vector<14x1xf32> to vector<14x32xf32>
    %117 = arith.mulf %110, %116 : vector<14x32xf32>
    %118 = vector.broadcast %97 : vector<1x32xf32> to vector<14x32xf32>
    %119 = arith.mulf %117, %118 : vector<14x32xf32>
    %120 = vector.broadcast %99 : vector<1x32xf32> to vector<14x32xf32>
    %121 = arith.addf %119, %120 : vector<14x32xf32>
    %122 = arith.truncf %121 : vector<14x32xf32> to vector<14x32xbf16>
    %c1 = arith.constant 1 : index
    %c0_56 = arith.constant 0 : index
    %c0_57 = arith.constant 0 : index
    %123 = vector.load %arg2[%c1, %c0_56, %c0_57] : memref<2x32x96xbf16, #tpu.memory_space<vmem>>, vector<1x32x96xbf16>
    %124 = vector.shape_cast %123 : vector<1x32x96xbf16> to vector<32x96xbf16>
    %cst_58 = arith.constant dense<0.000000e+00> : vector<14x96xf32>
    %125 = tpu.matmul %122, %124, %cst_58 {dimension_numbers = #tpu.dot_dimension_numbers<[1], [0], [0], [1], [0, 0, 1, 1], [], []>} : vector<14x32xbf16>, vector<32x96xbf16>, vector<14x96xf32> -> vector<14x96xf32>
    %c1_59 = arith.constant 1 : index
    %c0_60 = arith.constant 0 : index
    %c0_61 = arith.constant 0 : index
    %126 = vector.load %arg3[%c1_59, %c0_60, %c0_61] : memref<2x1x96xf32, #tpu.memory_space<vmem>>, vector<1x1x96xf32>
    %127 = vector.shape_cast %126 : vector<1x1x96xf32> to vector<1x96xf32>
    %128 = vector.broadcast %127 : vector<1x96xf32> to vector<14x96xf32>
    %129 = arith.addf %125, %128 : vector<14x96xf32>
    %130 = vector.extract_strided_slice %129 {offsets = [0, 0], sizes = [14, 32], strides = [1, 1]} : vector<14x96xf32> to vector<14x32xf32>
    %cst_62 = arith.constant 0.353553385 : f32
    %131 = vector.broadcast %cst_62 : f32 to vector<14x32xf32>
    %132 = arith.mulf %130, %131 : vector<14x32xf32>
    %133 = vector.extract_strided_slice %129 {offsets = [0, 32], sizes = [14, 32], strides = [1, 1]} : vector<14x96xf32> to vector<14x32xf32>
    %134 = vector.extract_strided_slice %129 {offsets = [0, 64], sizes = [14, 32], strides = [1, 1]} : vector<14x96xf32> to vector<14x32xf32>
    %135 = vector.shape_cast %132 : vector<14x32xf32> to vector<2x7x4x8xf32>
    %136 = tpu.transpose %135, [0, 2, 1, 3] : vector<2x7x4x8xf32> -> vector<2x4x7x8xf32>
    %137 = vector.shape_cast %136 : vector<2x4x7x8xf32> to vector<8x7x8xf32>
    %138 = vector.shape_cast %133 : vector<14x32xf32> to vector<2x7x4x8xf32>
    %139 = tpu.transpose %138, [0, 2, 1, 3] : vector<2x7x4x8xf32> -> vector<2x4x7x8xf32>
    %140 = vector.shape_cast %139 : vector<2x4x7x8xf32> to vector<8x7x8xf32>
    %141 = vector.shape_cast %134 : vector<14x32xf32> to vector<2x7x4x8xf32>
    %142 = tpu.transpose %141, [0, 2, 1, 3] : vector<2x7x4x8xf32> -> vector<2x4x7x8xf32>
    %143 = vector.shape_cast %142 : vector<2x4x7x8xf32> to vector<8x7x8xf32>
    %144 = arith.truncf %137 : vector<8x7x8xf32> to vector<8x7x8xbf16>
    %145 = arith.truncf %140 : vector<8x7x8xf32> to vector<8x7x8xbf16>
    "tpu.trace_start"() <{level = 10 : i32, message = "gld,gmd->glm"}> : () -> ()
    %cst_63 = arith.constant dense<0.000000e+00> : vector<8x7x7xf32>
    %146 = tpu.matmul %144, %145, %cst_63 {dimension_numbers = #tpu.dot_dimension_numbers<[2], [2], [1], [1], [0, 0, 0, 1, 1, 1], [0], [0]>} : vector<8x7x8xbf16>, vector<8x7x8xbf16>, vector<8x7x7xf32> -> vector<8x7x7xf32>
    "tpu.trace_stop"() : () -> ()
    %cst_64 = arith.constant dense<0xFF800000> : vector<8x7xf32>
    %147 = vector.multi_reduction <maximumf>, %146, %cst_64 [2] : vector<8x7x7xf32> to vector<8x7xf32>
    %148 = vector.shape_cast %147 : vector<8x7xf32> to vector<8x7x1xf32>
    %149 = vector.broadcast %148 : vector<8x7x1xf32> to vector<8x7x7xf32>
    %150 = arith.subf %146, %149 : vector<8x7x7xf32>
    %151 = math.exp %150 : vector<8x7x7xf32>
    %cst_65 = arith.constant dense<0.000000e+00> : vector<8x7xf32>
    %152 = vector.multi_reduction <add>, %151, %cst_65 [2] : vector<8x7x7xf32> to vector<8x7xf32>
    %153 = vector.shape_cast %152 : vector<8x7xf32> to vector<8x7x1xf32>
    %cst_66 = arith.constant 1.000000e+00 : f32
    %154 = vector.broadcast %cst_66 : f32 to vector<8x7x1xf32>
    %155 = arith.divf %154, %153 : vector<8x7x1xf32>
    %156 = vector.broadcast %155 : vector<8x7x1xf32> to vector<8x7x7xf32>
    %157 = arith.mulf %151, %156 : vector<8x7x7xf32>
    %158 = arith.truncf %157 : vector<8x7x7xf32> to vector<8x7x7xbf16>
    %159 = arith.truncf %143 : vector<8x7x8xf32> to vector<8x7x8xbf16>
    "tpu.trace_start"() <{level = 10 : i32, message = "glm,gmd->gld"}> : () -> ()
    %cst_67 = arith.constant dense<0.000000e+00> : vector<8x7x8xf32>
    %160 = tpu.matmul %158, %159, %cst_67 {dimension_numbers = #tpu.dot_dimension_numbers<[2], [1], [1], [2], [0, 0, 0, 1, 1, 2], [0], [0]>} : vector<8x7x7xbf16>, vector<8x7x8xbf16>, vector<8x7x8xf32> -> vector<8x7x8xf32>
    "tpu.trace_stop"() : () -> ()
    %161 = vector.shape_cast %160 : vector<8x7x8xf32> to vector<2x4x7x8xf32>
    %162 = tpu.transpose %161, [0, 2, 1, 3] : vector<2x4x7x8xf32> -> vector<2x7x4x8xf32>
    %163 = vector.shape_cast %162 : vector<2x7x4x8xf32> to vector<14x32xf32>
    %164 = arith.truncf %163 : vector<14x32xf32> to vector<14x32xbf16>
    %c1_68 = arith.constant 1 : index
    %c0_69 = arith.constant 0 : index
    %c0_70 = arith.constant 0 : index
    %165 = vector.load %arg4[%c1_68, %c0_69, %c0_70] : memref<2x32x32xbf16, #tpu.memory_space<vmem>>, vector<1x32x32xbf16>
    %166 = vector.shape_cast %165 : vector<1x32x32xbf16> to vector<32x32xbf16>
    %cst_71 = arith.constant dense<0.000000e+00> : vector<14x32xf32>
    %167 = tpu.matmul %164, %166, %cst_71 {dimension_numbers = #tpu.dot_dimension_numbers<[1], [0], [0], [1], [0, 0, 1, 1], [], []>} : vector<14x32xbf16>, vector<32x32xbf16>, vector<14x32xf32> -> vector<14x32xf32>
    %c1_72 = arith.constant 1 : index
    %c0_73 = arith.constant 0 : index
    %c0_74 = arith.constant 0 : index
    %168 = vector.load %arg5[%c1_72, %c0_73, %c0_74] : memref<2x1x32xf32, #tpu.memory_space<vmem>>, vector<1x1x32xf32>
    %169 = vector.shape_cast %168 : vector<1x1x32xf32> to vector<1x32xf32>
    %170 = vector.broadcast %169 : vector<1x32xf32> to vector<14x32xf32>
    %171 = arith.addf %167, %170 : vector<14x32xf32>
    %172 = arith.addf %121, %171 : vector<14x32xf32>
    %c1_75 = arith.constant 1 : index
    %c0_76 = arith.constant 0 : index
    %c0_77 = arith.constant 0 : index
    %173 = vector.load %arg6[%c1_75, %c0_76, %c0_77] : memref<2x1x32xf32, #tpu.memory_space<vmem>>, vector<1x1x32xf32>
    %174 = vector.shape_cast %173 : vector<1x1x32xf32> to vector<1x32xf32>
    %c1_78 = arith.constant 1 : index
    %c0_79 = arith.constant 0 : index
    %c0_80 = arith.constant 0 : index
    %175 = vector.load %arg7[%c1_78, %c0_79, %c0_80] : memref<2x1x32xf32, #tpu.memory_space<vmem>>, vector<1x1x32xf32>
    %176 = vector.shape_cast %175 : vector<1x1x32xf32> to vector<1x32xf32>
    %cst_81 = arith.constant dense<0.000000e+00> : vector<14xf32>
    %177 = vector.multi_reduction <add>, %172, %cst_81 [1] : vector<14x32xf32> to vector<14xf32>
    %178 = vector.shape_cast %177 : vector<14xf32> to vector<14x1xf32>
    %cst_82 = arith.constant 3.200000e+01 : f32
    %179 = vector.broadcast %cst_82 : f32 to vector<14x1xf32>
    %180 = arith.divf %178, %179 : vector<14x1xf32>
    %181 = arith.mulf %172, %172 : vector<14x32xf32>
    %cst_83 = arith.constant dense<0.000000e+00> : vector<14xf32>
    %182 = vector.multi_reduction <add>, %181, %cst_83 [1] : vector<14x32xf32> to vector<14xf32>
    %183 = vector.shape_cast %182 : vector<14xf32> to vector<14x1xf32>
    %cst_84 = arith.constant 3.200000e+01 : f32
    %184 = vector.broadcast %cst_84 : f32 to vector<14x1xf32>
    %185 = arith.divf %183, %184 : vector<14x1xf32>
    %186 = vector.broadcast %180 : vector<14x1xf32> to vector<14x32xf32>
    %187 = arith.subf %172, %186 : vector<14x32xf32>
    %188 = arith.mulf %180, %180 : vector<14x1xf32>
    %189 = arith.subf %185, %188 : vector<14x1xf32>
    %cst_85 = arith.constant 9.99999974E-6 : f32
    %190 = vector.broadcast %cst_85 : f32 to vector<14x1xf32>
    %191 = arith.addf %189, %190 : vector<14x1xf32>
    %192 = math.rsqrt %191 : vector<14x1xf32>
    %193 = vector.broadcast %192 : vector<14x1xf32> to vector<14x32xf32>
    %194 = arith.mulf %187, %193 : vector<14x32xf32>
    %195 = vector.broadcast %174 : vector<1x32xf32> to vector<14x32xf32>
    %196 = arith.mulf %194, %195 : vector<14x32xf32>
    %197 = vector.broadcast %176 : vector<1x32xf32> to vector<14x32xf32>
    %198 = arith.addf %196, %197 : vector<14x32xf32>
    %199 = arith.truncf %198 : vector<14x32xf32> to vector<14x32xbf16>
    %c1_86 = arith.constant 1 : index
    %c0_87 = arith.constant 0 : index
    %c0_88 = arith.constant 0 : index
    %200 = vector.load %arg8[%c1_86, %c0_87, %c0_88] : memref<2x32x2048xbf16, #tpu.memory_space<vmem>>, vector<1x32x2048xbf16>
    %201 = vector.shape_cast %200 : vector<1x32x2048xbf16> to vector<32x2048xbf16>
    %cst_89 = arith.constant dense<0.000000e+00> : vector<14x2048xf32>
    %202 = tpu.matmul %199, %201, %cst_89 {dimension_numbers = #tpu.dot_dimension_numbers<[1], [0], [0], [1], [0, 0, 1, 1], [], []>} : vector<14x32xbf16>, vector<32x2048xbf16>, vector<14x2048xf32> -> vector<14x2048xf32>
    %c1_90 = arith.constant 1 : index
    %c0_91 = arith.constant 0 : index
    %c0_92 = arith.constant 0 : index
    %203 = vector.load %arg9[%c1_90, %c0_91, %c0_92] : memref<2x1x2048xf32, #tpu.memory_space<vmem>>, vector<1x1x2048xf32>
    %204 = vector.shape_cast %203 : vector<1x1x2048xf32> to vector<1x2048xf32>
    %205 = vector.broadcast %204 : vector<1x2048xf32> to vector<14x2048xf32>
    %206 = arith.addf %202, %205 : vector<14x2048xf32>
    %cst_93 = arith.constant 0.000000e+00 : f32
    %207 = vector.broadcast %cst_93 : f32 to vector<14x2048xf32>
    %208 = arith.maximumf %206, %207 : vector<14x2048xf32>
    %209 = arith.truncf %208 : vector<14x2048xf32> to vector<14x2048xbf16>
    %c1_94 = arith.constant 1 : index
    %c0_95 = arith.constant 0 : index
    %c0_96 = arith.constant 0 : index
    %210 = vector.load %arg10[%c1_94, %c0_95, %c0_96] : memref<2x2048x32xbf16, #tpu.memory_space<vmem>>, vector<1x2048x32xbf16>
    %211 = vector.shape_cast %210 : vector<1x2048x32xbf16> to vector<2048x32xbf16>
    %cst_97 = arith.constant dense<0.000000e+00> : vector<14x32xf32>
    %212 = tpu.matmul %209, %211, %cst_97 {dimension_numbers = #tpu.dot_dimension_numbers<[1], [0], [0], [1], [0, 0, 1, 1], [], []>} : vector<14x2048xbf16>, vector<2048x32xbf16>, vector<14x32xf32> -> vector<14x32xf32>
    %c1_98 = arith.constant 1 : index
    %c0_99 = arith.constant 0 : index
    %c0_100 = arith.constant 0 : index
    %213 = vector.load %arg11[%c1_98, %c0_99, %c0_100] : memref<2x1x32xf32, #tpu.memory_space<vmem>>, vector<1x1x32xf32>
    %214 = vector.shape_cast %213 : vector<1x1x32xf32> to vector<1x32xf32>
    %215 = vector.broadcast %214 : vector<1x32xf32> to vector<14x32xf32>
    %216 = arith.addf %212, %215 : vector<14x32xf32>
    %217 = arith.addf %198, %216 : vector<14x32xf32>
    %c1_101 = arith.constant 1 : index
    %c0_102 = arith.constant 0 : index
    %c0_103 = arith.constant 0 : index
    %218 = vector.load %arg12[%c1_101, %c0_102, %c0_103] : memref<2x1x32xf32, #tpu.memory_space<vmem>>, vector<1x1x32xf32>
    %219 = vector.shape_cast %218 : vector<1x1x32xf32> to vector<1x32xf32>
    %c1_104 = arith.constant 1 : index
    %c0_105 = arith.constant 0 : index
    %c0_106 = arith.constant 0 : index
    %220 = vector.load %arg13[%c1_104, %c0_105, %c0_106] : memref<2x1x32xf32, #tpu.memory_space<vmem>>, vector<1x1x32xf32>
    %221 = vector.shape_cast %220 : vector<1x1x32xf32> to vector<1x32xf32>
    %cst_107 = arith.constant dense<0.000000e+00> : vector<14xf32>
    %222 = vector.multi_reduction <add>, %217, %cst_107 [1] : vector<14x32xf32> to vector<14xf32>
    %223 = vector.shape_cast %222 : vector<14xf32> to vector<14x1xf32>
    %cst_108 = arith.constant 3.200000e+01 : f32
    %224 = vector.broadcast %cst_108 : f32 to vector<14x1xf32>
    %225 = arith.divf %223, %224 : vector<14x1xf32>
    %226 = arith.mulf %217, %217 : vector<14x32xf32>
    %cst_109 = arith.constant dense<0.000000e+00> : vector<14xf32>
    %227 = vector.multi_reduction <add>, %226, %cst_109 [1] : vector<14x32xf32> to vector<14xf32>
    %228 = vector.shape_cast %227 : vector<14xf32> to vector<14x1xf32>
    %cst_110 = arith.constant 3.200000e+01 : f32
    %229 = vector.broadcast %cst_110 : f32 to vector<14x1xf32>
    %230 = arith.divf %228, %229 : vector<14x1xf32>
    %231 = vector.broadcast %225 : vector<14x1xf32> to vector<14x32xf32>
    %232 = arith.subf %217, %231 : vector<14x32xf32>
    %233 = arith.mulf %225, %225 : vector<14x1xf32>
    %234 = arith.subf %230, %233 : vector<14x1xf32>
    %cst_111 = arith.constant 9.99999974E-6 : f32
    %235 = vector.broadcast %cst_111 : f32 to vector<14x1xf32>
    %236 = arith.addf %234, %235 : vector<14x1xf32>
    %237 = math.rsqrt %236 : vector<14x1xf32>
    %238 = vector.broadcast %237 : vector<14x1xf32> to vector<14x32xf32>
    %239 = arith.mulf %232, %238 : vector<14x32xf32>
    %240 = vector.broadcast %219 : vector<1x32xf32> to vector<14x32xf32>
    %241 = arith.mulf %239, %240 : vector<14x32xf32>
    %242 = vector.broadcast %221 : vector<1x32xf32> to vector<14x32xf32>
    %243 = arith.addf %241, %242 : vector<14x32xf32>
    %244 = vector.shape_cast %157 : vector<8x7x7xf32> to vector<2x4x7x7xf32>
    %cst_112 = arith.constant dense<0.000000e+00> : vector<2x7x7xf32>
    %245 = vector.multi_reduction <add>, %244, %cst_112 [1] : vector<2x4x7x7xf32> to vector<2x7x7xf32>
    %cst_113 = arith.constant 4.000000e+00 : f32
    %246 = vector.broadcast %cst_113 : f32 to vector<2x7x7xf32>
    %247 = arith.divf %245, %246 : vector<2x7x7xf32>
    %c0_114 = arith.constant 0 : index
    %c0_115 = arith.constant 0 : index
    %248 = vector.load %arg14[%c0_114, %c0_115] : memref<1x32xf32, #tpu.memory_space<vmem>>, vector<1x32xf32>
    %c0_116 = arith.constant 0 : index
    %c0_117 = arith.constant 0 : index
    %249 = vector.load %arg15[%c0_116, %c0_117] : memref<1x32xf32, #tpu.memory_space<vmem>>, vector<1x32xf32>
    %cst_118 = arith.constant dense<0.000000e+00> : vector<14xf32>
    %250 = vector.multi_reduction <add>, %243, %cst_118 [1] : vector<14x32xf32> to vector<14xf32>
    %251 = vector.shape_cast %250 : vector<14xf32> to vector<14x1xf32>
    %cst_119 = arith.constant 3.200000e+01 : f32
    %252 = vector.broadcast %cst_119 : f32 to vector<14x1xf32>
    %253 = arith.divf %251, %252 : vector<14x1xf32>
    %254 = arith.mulf %243, %243 : vector<14x32xf32>
    %cst_120 = arith.constant dense<0.000000e+00> : vector<14xf32>
    %255 = vector.multi_reduction <add>, %254, %cst_120 [1] : vector<14x32xf32> to vector<14xf32>
    %256 = vector.shape_cast %255 : vector<14xf32> to vector<14x1xf32>
    %cst_121 = arith.constant 3.200000e+01 : f32
    %257 = vector.broadcast %cst_121 : f32 to vector<14x1xf32>
    %258 = arith.divf %256, %257 : vector<14x1xf32>
    %259 = vector.broadcast %253 : vector<14x1xf32> to vector<14x32xf32>
    %260 = arith.subf %243, %259 : vector<14x32xf32>
    %261 = arith.mulf %253, %253 : vector<14x1xf32>
    %262 = arith.subf %258, %261 : vector<14x1xf32>
    %cst_122 = arith.constant 9.99999974E-6 : f32
    %263 = vector.broadcast %cst_122 : f32 to vector<14x1xf32>
    %264 = arith.addf %262, %263 : vector<14x1xf32>
    %265 = math.rsqrt %264 : vector<14x1xf32>
    %266 = vector.broadcast %265 : vector<14x1xf32> to vector<14x32xf32>
    %267 = arith.mulf %260, %266 : vector<14x32xf32>
    %268 = vector.broadcast %248 : vector<1x32xf32> to vector<14x32xf32>
    %269 = arith.mulf %267, %268 : vector<14x32xf32>
    %270 = vector.broadcast %249 : vector<1x32xf32> to vector<14x32xf32>
    %271 = arith.addf %269, %270 : vector<14x32xf32>
    %c0_123 = arith.constant 0 : index
    %c0_124 = arith.constant 0 : index
    %272 = vector.load %arg16[%c0_123, %c0_124] : memref<14x32xf32, #tpu.memory_space<vmem>>, vector<14x32xf32>
    tpu.vector_store %arg16[%c0_123, %c0_124], %271 {strides = array<i32>} : memref<14x32xf32, #tpu.memory_space<vmem>>, vector<14x32xf32>,
    %c0_125 = arith.constant 0 : index
    %c0_126 = arith.constant 0 : index
    %c0_127 = arith.constant 0 : index
    %273 = vector.load %arg17[%c0_125, %c0_126, %c0_127] : memref<2x7x7xf32, #tpu.memory_space<vmem>>, vector<2x7x7xf32>
    tpu.vector_store %arg17[%c0_125, %c0_126, %c0_127], %247 {strides = array<i32>} : memref<2x7x7xf32, #tpu.memory_space<vmem>>, vector<2x7x7xf32>,
    return
  }
  func.func @transform_0(%arg0: i32) -> (i32, i32) {
    %c0_i32 = arith.constant 0 : i32
    %c0_i32_0 = arith.constant 0 : i32
    %c0_i32_1 = arith.constant 0 : i32
    return %c0_i32, %c0_i32_0 : i32, i32
  }
  func.func @transform_1(%arg0: i32) -> (i32, i32, i32) {
    %c0_i32 = arith.constant 0 : i32
    %c0_i32_0 = arith.constant 0 : i32
    %c0_i32_1 = arith.constant 0 : i32
    %c0_i32_2 = arith.constant 0 : i32
    return %c0_i32, %c0_i32_0, %c0_i32_1 : i32, i32, i32
  }
  func.func @transform_2(%arg0: i32) -> (i32, i32, i32) {
    %c0_i32 = arith.constant 0 : i32
    %c0_i32_0 = arith.constant 0 : i32
    %c0_i32_1 = arith.constant 0 : i32
    %c0_i32_2 = arith.constant 0 : i32
    return %c0_i32, %c0_i32_0, %c0_i32_1 : i32, i32, i32
  }
  func.func @transform_3(%arg0: i32) -> (i32, i32, i32) {
    %c0_i32 = arith.constant 0 : i32
    %c0_i32_0 = arith.constant 0 : i32
    %c0_i32_1 = arith.constant 0 : i32
    %c0_i32_2 = arith.constant 0 : i32
    return %c0_i32, %c0_i32_0, %c0_i32_1 : i32, i32, i32
  }
  func.func @transform_4(%arg0: i32) -> (i32, i32, i32) {
    %c0_i32 = arith.constant 0 : i32
    %c0_i32_0 = arith.constant 0 : i32
    %c0_i32_1 = arith.constant 0 : i32
    %c0_i32_2 = arith.constant 0 : i32
    return %c0_i32, %c0_i32_0, %c0_i32_1 : i32, i32, i32
  }
  func.func @transform_5(%arg0: i32) -> (i32, i32, i32) {
    %c0_i32 = arith.constant 0 : i32
    %c0_i32_0 = arith.constant 0 : i32
    %c0_i32_1 = arith.constant 0 : i32
    %c0_i32_2 = arith.constant 0 : i32
    return %c0_i32, %c0_i32_0, %c0_i32_1 : i32, i32, i32
  }
  func.func @transform_6(%arg0: i32) -> (i32, i32, i32) {
    %c0_i32 = arith.constant 0 : i32
    %c0_i32_0 = arith.constant 0 : i32
    %c0_i32_1 = arith.constant 0 : i32
    %c0_i32_2 = arith.constant 0 : i32
    return %c0_i32, %c0_i32_0, %c0_i32_1 : i32, i32, i32
  }
  func.func @transform_7(%arg0: i32) -> (i32, i32, i32) {
    %c0_i32 = arith.constant 0 : i32
    %c0_i32_0 = arith.constant 0 : i32
    %c0_i32_1 = arith.constant 0 : i32
    %c0_i32_2 = arith.constant 0 : i32
    return %c0_i32, %c0_i32_0, %c0_i32_1 : i32, i32, i32
  }
  func.func @transform_8(%arg0: i32) -> (i32, i32, i32) {
    %c0_i32 = arith.constant 0 : i32
    %c0_i32_0 = arith.constant 0 : i32
    %c0_i32_1 = arith.constant 0 : i32
    %c0_i32_2 = arith.constant 0 : i32
    return %c0_i32, %c0_i32_0, %c0_i32_1 : i32, i32, i32
  }
  func.func @transform_9(%arg0: i32) -> (i32, i32, i32) {
    %c0_i32 = arith.constant 0 : i32
    %c0_i32_0 = arith.constant 0 : i32
    %c0_i32_1 = arith.constant 0 : i32
    %c0_i32_2 = arith.constant 0 : i32
    return %c0_i32, %c0_i32_0, %c0_i32_1 : i32, i32, i32
  }
  func.func @transform_10(%arg0: i32) -> (i32, i32, i32) {
    %c0_i32 = arith.constant 0 : i32
    %c0_i32_0 = arith.constant 0 : i32
    %c0_i32_1 = arith.constant 0 : i32
    %c0_i32_2 = arith.constant 0 : i32
    return %c0_i32, %c0_i32_0, %c0_i32_1 : i32, i32, i32
  }
  func.func @transform_11(%arg0: i32) -> (i32, i32, i32) {
    %c0_i32 = arith.constant 0 : i32
    %c0_i32_0 = arith.constant 0 : i32
    %c0_i32_1 = arith.constant 0 : i32
    %c0_i32_2 = arith.constant 0 : i32
    return %c0_i32, %c0_i32_0, %c0_i32_1 : i32, i32, i32
  }
  func.func @transform_12(%arg0: i32) -> (i32, i32, i32) {
    %c0_i32 = arith.constant 0 : i32
    %c0_i32_0 = arith.constant 0 : i32
    %c0_i32_1 = arith.constant 0 : i32
    %c0_i32_2 = arith.constant 0 : i32
    return %c0_i32, %c0_i32_0, %c0_i32_1 : i32, i32, i32
  }
  func.func @transform_13(%arg0: i32) -> (i32, i32) {
    %c0_i32 = arith.constant 0 : i32
    %c0_i32_0 = arith.constant 0 : i32
    %c0_i32_1 = arith.constant 0 : i32
    return %c0_i32, %c0_i32_0 : i32, i32
  }
  func.func @transform_14(%arg0: i32) -> (i32, i32) {
    %c0_i32 = arith.constant 0 : i32
    %c0_i32_0 = arith.constant 0 : i32
    %c0_i32_1 = arith.constant 0 : i32
    return %c0_i32, %c0_i32_0 : i32, i32
  }
  func.func @transform_15(%arg0: i32) -> (i32, i32) {
    %c0_i32 = arith.constant 0 : i32
    %c0_i32_0 = arith.constant 0 : i32
    %c0_i32_1 = arith.constant 0 : i32
    return %c0_i32, %c0_i32_0 : i32, i32
  }
  func.func @transform_16(%arg0: i32) -> (i32, i32, i32) {
    %c0_i32 = arith.constant 0 : i32
    %c0_i32_0 = arith.constant 0 : i32
    %c0_i32_1 = arith.constant 0 : i32
    %c0_i32_2 = arith.constant 0 : i32
    return %c0_i32, %c0_i32_0, %c0_i32_1 : i32, i32, i32
  }
}

</mosaic_0001>

<llo_original>
// kernel: weighted_transformer_encoder.1
$region0: #{weighted_transformer_encoder.1}
  #allocation0 [shape = 'u32[]', space=smem, size = 0x4, offset = 0x4, fixed_abs, tag = 'smem constant byte address 0x4 - core index']
  #allocation1 [shape = 'u32[144,128]{1,0:T(1,128)}', space=vmem, size = 0x12000, scoped, tag = 'internal scratch']
  %s0 = inlined_call_operand.vmem [shape: f32[14,32], index: 0, kind: input, shape index: {}]
  %s1 = inlined_call_operand.vmem [shape: bf16[2,32,96], index: 1, kind: input, shape index: {}]
  %s2 = inlined_call_operand.vmem [shape: f32[2,1,96], index: 2, kind: input, shape index: {}]
  %s3 = inlined_call_operand.vmem [shape: bf16[2,32,32], index: 3, kind: input, shape index: {}]
  %s4 = inlined_call_operand.vmem [shape: f32[2,1,32], index: 4, kind: input, shape index: {}]
  %s5 = inlined_call_operand.vmem [shape: f32[2,1,32], index: 5, kind: input, shape index: {}]
  %s6 = inlined_call_operand.vmem [shape: f32[2,1,32], index: 6, kind: input, shape index: {}]
  %s7 = inlined_call_operand.vmem [shape: bf16[2,32,2048], index: 7, kind: input, shape index: {}]
  %s8 = inlined_call_operand.vmem [shape: f32[2,1,2048], index: 8, kind: input, shape index: {}]
  %s9 = inlined_call_operand.vmem [shape: bf16[2,2048,32], index: 9, kind: input, shape index: {}]
  %s10 = inlined_call_operand.vmem [shape: f32[2,1,32], index: 10, kind: input, shape index: {}]
  %s11 = inlined_call_operand.vmem [shape: f32[2,1,32], index: 11, kind: input, shape index: {}]
  %s12 = inlined_call_operand.vmem [shape: f32[2,1,32], index: 12, kind: input, shape index: {}]
  %s13 = inlined_call_operand.vmem [shape: f32[1,32], index: 13, kind: input, shape index: {}]
  %s14 = inlined_call_operand.vmem [shape: f32[1,32], index: 14, kind: input, shape index: {}]
  %s15 = inlined_call_operand.vmem [shape: f32[14,32], index: 15, kind: output, shape index: {0}]
  %s16 = inlined_call_operand.vmem [shape: f32[2,7,7], index: 16, kind: output, shape index: {1}]
  %17 = xla_tuple %s15, %s16
  %s18 = sld [smem:[#allocation0]]
  $region78: #{weighted_transformer_encoder.1} parent=0
    _
  %s20 = ssub.s32 1, %s18
  %s21 = scalar_select 0, %s20, %s18
  // Predicated region
  $region2: #{weighted_transformer_encoder.1} parent=0 // pred_check
    _
  $region3: #{weighted_transformer_encoder.1} parent=0 // pred_check_branch
    %23 = sbr.rel (0) target = $region5
  $region4: #{weighted_transformer_encoder.1} parent=0 // pred_region
    _
  $region5: #{weighted_transformer_encoder.1} parent=0 // pred_fallthru
    _
  // Predicated region
  $region6: #{weighted_transformer_encoder.1} parent=0 // pred_check
    _
  $region7: #{weighted_transformer_encoder.1} parent=0 // pred_check_branch
    %25 = sbr.rel (0) target = $region9
  $region8: #{weighted_transformer_encoder.1} parent=0 // pred_region
    _
  $region9: #{weighted_transformer_encoder.1} parent=0 // pred_fallthru
    _
  // Predicated region
  $region10: #{weighted_transformer_encoder.1} parent=0 // pred_check
    _
  $region11: #{weighted_transformer_encoder.1} parent=0 // pred_check_branch
    %27 = sbr.rel (0) target = $region13
  $region12: #{weighted_transformer_encoder.1} parent=0 // pred_region
    _
  $region13: #{weighted_transformer_encoder.1} parent=0 // pred_fallthru
    _
  // Predicated region
  $region14: #{weighted_transformer_encoder.1} parent=0 // pred_check
    _
  $region15: #{weighted_transformer_encoder.1} parent=0 // pred_check_branch
    %29 = sbr.rel (0) target = $region17
  $region16: #{weighted_transformer_encoder.1} parent=0 // pred_region
    _
  $region17: #{weighted_transformer_encoder.1} parent=0 // pred_fallthru
    _
  // Predicated region
  $region18: #{weighted_transformer_encoder.1} parent=0 // pred_check
    _
  $region19: #{weighted_transformer_encoder.1} parent=0 // pred_check_branch
    %31 = sbr.rel (0) target = $region21
  $region20: #{weighted_transformer_encoder.1} parent=0 // pred_region
    _
  $region21: #{weighted_transformer_encoder.1} parent=0 // pred_fallthru
    _
  // Predicated region
  $region22: #{weighted_transformer_encoder.1} parent=0 // pred_check
    _
  $region23: #{weighted_transformer_encoder.1} parent=0 // pred_check_branch
    %33 = sbr.rel (0) target = $region25
  $region24: #{weighted_transformer_encoder.1} parent=0 // pred_region
    _
  $region25: #{weighted_transformer_encoder.1} parent=0 // pred_fallthru
    _
  // Predicated region
  $region26: #{weighted_transformer_encoder.1} parent=0 // pred_check
    _
  $region27: #{weighted_transformer_encoder.1} parent=0 // pred_check_branch
    %35 = sbr.rel (0) target = $region29
  $region28: #{weighted_transformer_encoder.1} parent=0 // pred_region
    _
  $region29: #{weighted_transformer_encoder.1} parent=0 // pred_fallthru
    _
  // Predicated region
  $region30: #{weighted_transformer_encoder.1} parent=0 // pred_check
    _
  $region31: #{weighted_transformer_encoder.1} parent=0 // pred_check_branch
    %37 = sbr.rel (0) target = $region33
  $region32: #{weighted_transformer_encoder.1} parent=0 // pred_region
    _
  $region33: #{weighted_transformer_encoder.1} parent=0 // pred_fallthru
    _
  // Predicated region
  $region34: #{weighted_transformer_encoder.1} parent=0 // pred_check
    _
  $region35: #{weighted_transformer_encoder.1} parent=0 // pred_check_branch
    %39 = sbr.rel (0) target = $region37
  $region36: #{weighted_transformer_encoder.1} parent=0 // pred_region
    _
  $region37: #{weighted_transformer_encoder.1} parent=0 // pred_fallthru
    _
  // Predicated region
  $region38: #{weighted_transformer_encoder.1} parent=0 // pred_check
    _
  $region39: #{weighted_transformer_encoder.1} parent=0 // pred_check_branch
    %41 = sbr.rel (0) target = $region41
  $region40: #{weighted_transformer_encoder.1} parent=0 // pred_region
    _
  $region41: #{weighted_transformer_encoder.1} parent=0 // pred_fallthru
    _
  // Predicated region
  $region42: #{weighted_transformer_encoder.1} parent=0 // pred_check
    _
  $region43: #{weighted_transformer_encoder.1} parent=0 // pred_check_branch
    %43 = sbr.rel (0) target = $region45
  $region44: #{weighted_transformer_encoder.1} parent=0 // pred_region
    _
  $region45: #{weighted_transformer_encoder.1} parent=0 // pred_fallthru
    _
  // Predicated region
  $region46: #{weighted_transformer_encoder.1} parent=0 // pred_check
    _
  $region47: #{weighted_transformer_encoder.1} parent=0 // pred_check_branch
    %45 = sbr.rel (0) target = $region49
  $region48: #{weighted_transformer_encoder.1} parent=0 // pred_region
    _
  $region49: #{weighted_transformer_encoder.1} parent=0 // pred_fallthru
    _
  // Predicated region
  $region50: #{weighted_transformer_encoder.1} parent=0 // pred_check
    _
  $region51: #{weighted_transformer_encoder.1} parent=0 // pred_check_branch
    %47 = sbr.rel (0) target = $region53
  $region52: #{weighted_transformer_encoder.1} parent=0 // pred_region
    _
  $region53: #{weighted_transformer_encoder.1} parent=0 // pred_fallthru
    _
  // Predicated region
  $region54: #{weighted_transformer_encoder.1} parent=0 // pred_check
    _
  $region55: #{weighted_transformer_encoder.1} parent=0 // pred_check_branch
    %49 = sbr.rel (0) target = $region57
  $region56: #{weighted_transformer_encoder.1} parent=0 // pred_region
    _
  $region57: #{weighted_transformer_encoder.1} parent=0 // pred_fallthru
    _
  // Predicated region
  $region58: #{weighted_transformer_encoder.1} parent=0 // pred_check
    _
  $region59: #{weighted_transformer_encoder.1} parent=0 // pred_check_branch
    %51 = sbr.rel (0) target = $region61
  $region60: #{weighted_transformer_encoder.1} parent=0 // pred_region
    _
  $region61: #{weighted_transformer_encoder.1} parent=0 // pred_fallthru
    _
  %v53 = vld [vmem:[%s0] sm:$0xff]
  %v54 = vld [vmem:[%s0 + $0x8] sm:$0x3f]
  %v55 = vpack.c.bf16 %v54, %v53
  %v56 = vld [vmem:[%s1] sm:$0xf]
  %v57 = vld [vmem:[%s1 + $0x4] sm:$0xf]
  %v58 = vld [vmem:[%s1 + $0x8] sm:$0xf]
  %v59 = vld [vmem:[%s1 + $0xc] sm:$0xf]
  %v60 = vld [vmem:[%s2] sm:$0x1]
  %v62 = vlaneseq
  %v63 = vshrl.u32 %v62, 7
  %v64 = vsub.s32 0, %v63
  %v65 = vrot.slane %v60, %v64
  %v71 = vunpack.c.l.b16 %v56
  %v72 = vunpack.c.l.b16 %v57
  %v73 = vunpack.c.l.b16 %v58
  %v74 = vunpack.c.l.b16 %v59
  %v75 = vpack.c.b16 %v72, %v71
  %v76 = vpack.c.b16 %v74, %v73
  %vm79 = vcmask 261120
  %v81 = vsel %vm79, %v55, 0
  %83 = vmatprep.subr.bf16.mxu0 0
  %84 = vmatpush1.bf16.msra.mxu0 0
  %85 = vmatprep.subr.bf16.mxu0 0
  %86 = vmatpush1.bf16.msra.mxu0 0
  %87 = vmatprep.subr.bf16.mxu0 0
  %88 = vmatpush1.bf16.msra.mxu0 0
  %89 = vmatprep.subr.bf16.mxu0 0
  %90 = vmatpush1.bf16.msra.mxu0 0
  %91 = vmatprep.subr.bf16.mxu0 0
  %92 = vmatpush1.bf16.msra.mxu0 0
  %93 = vmatprep.subr.bf16.mxu0 0
  %94 = vmatpush1.bf16.msra.mxu0 0
  %95 = vmatprep.subr.bf16.mxu0 0
  %96 = vmatpush1.bf16.msra.mxu0 %v76
  %97 = vmatprep.subr.bf16.mxu0 0
  %98 = vmatpush1.bf16.msra.mxu0 %v75
  %99 = vmatprep.subr.bf16.mxu0 0
  %100 = vmatpush2.bf16.msra.mxu0 0
  %101 = vmatprep.subr.bf16.mxu0 0
  %102 = vmatpush2.bf16.msra.mxu0 0
  %103 = vmatprep.subr.bf16.mxu0 0
  %104 = vmatpush2.bf16.msra.mxu0 0
  %105 = vmatprep.subr.bf16.mxu0 0
  %106 = vmatpush2.bf16.msra.mxu0 0
  %107 = vmatprep.subr.bf16.mxu0 0
  %108 = vmatpush2.bf16.msra.mxu0 0
  %109 = vmatprep.subr.bf16.mxu0 0
  %110 = vmatpush2.bf16.msra.mxu0 0
  %111 = vmatprep.subr.bf16.mxu0 0
  %112 = vmatpush2.bf16.msra.mxu0 0
  %113 = vmatprep.subr.bf16.mxu0 0
  %114 = vmatpush2.bf16.msra.mxu0 0
  %115 = vmatprep.mubr.bf16.mxu0 0
  %116 = vmatmul.mubr.bf16.gmra.mxu0 %v81
  %v117 = vpop.f32.mrf.mxu0
  %v118 = vadd.f32 %v65, %v117
  %v119 = vpop.f32.mrf.mxu0
  %v120 = vpop.f32.mrf.mxu0
  %v121 = vadd.f32 %v65, %v120
  %v122 = vpop.f32.mrf.mxu0
  %123 = vdwg.mxu0
  %v124 = vmul.f32 %v118, 0.35355338
  %v125 = vmul.f32 %v121, 0.35355338
  %128 = vrot.lane.b32.xlu0 %v124, 120
  %v129 = vpop.permute.xlu0 %128
  %130 = vrot.lane.b32.xlu0 %v125, 120
  %v131 = vpop.permute.xlu0 %130
  %134 = vrot.lane.b32.xlu0 %v124, 112
  %v135 = vpop.permute.xlu0 %134
  %136 = vrot.lane.b32.xlu0 %v125, 112
  %v137 = vpop.permute.xlu0 %136
  %140 = vrot.lane.b32.xlu0 %v124, 104
  %v141 = vpop.permute.xlu0 %140
  %142 = vrot.lane.b32.xlu0 %v125, 104
  %v143 = vpop.permute.xlu0 %142
  %v146 = vcombine.low %v124, %v135
  %v147 = vcombine.high %v124, %v135
  %v149 = vunpack.c.l.s4 1983009808
  %v150 = vunpack.c.0.s8 %v149
  %v151 = vlaneseq
  %v152 = vshrl.u32 %v151, 7
  %v153 = vsub.s32 %v150, %v152
  %v154 = vrot.slane %v146, %v153
  %v156 = vunpack.c.l.s4 1983009808
  %v157 = vunpack.c.0.s8 %v156
  %v158 = vlaneseq
  %v159 = vshrl.u32 %v158, 7
  %v160 = vsub.s32 %v157, %v159
  %v161 = vrot.slane %v147, %v160
  %v162 = vcombine.low %v129, %v141
  %v163 = vcombine.high %v129, %v141
  %v165 = vunpack.c.l.s4 1983009808
  %v166 = vunpack.c.0.s8 %v165
  %v167 = vlaneseq
  %v168 = vshrl.u32 %v167, 7
  %v169 = vsub.s32 %v166, %v168
  %v170 = vrot.slane %v162, %v169
  %v172 = vunpack.c.l.s4 1983009808
  %v173 = vunpack.c.0.s8 %v172
  %v174 = vlaneseq
  %v175 = vshrl.u32 %v174, 7
  %v176 = vsub.s32 %v173, %v175
  %v177 = vrot.slane %v163, %v176
  %v178 = vcombine.low %v154, %v170
  %v179 = vcombine.high %v154, %v170
  %v181 = vunpack.c.l.s4 1934713408
  %v182 = vunpack.c.0.s8 %v181
  %v183 = vlaneseq
  %v184 = vshrl.u32 %v183, 7
  %v185 = vsub.s32 %v182, %v184
  %v186 = vrot.slane %v178, %v185
  %v188 = vunpack.c.l.s4 1934713408
  %v189 = vunpack.c.0.s8 %v188
  %v190 = vlaneseq
  %v191 = vshrl.u32 %v190, 7
  %v192 = vsub.s32 %v189, %v191
  %v193 = vrot.slane %v179, %v192
  %v194 = vcombine.low %v161, %v177
  %v195 = vcombine.high %v161, %v177
  %v197 = vunpack.c.l.s4 1934713408
  %v198 = vunpack.c.0.s8 %v197
  %v199 = vlaneseq
  %v200 = vshrl.u32 %v199, 7
  %v201 = vsub.s32 %v198, %v200
  %v202 = vrot.slane %v194, %v201
  %v204 = vunpack.c.l.s4 1934713408
  %v205 = vunpack.c.0.s8 %v204
  %v206 = vlaneseq
  %v207 = vshrl.u32 %v206, 7
  %v208 = vsub.s32 %v205, %v207
  %v209 = vrot.slane %v195, %v208
  %v210 = vcombine.high %v186, 0.0
  %v211 = vcombine.high %v193, 0.0
  %v212 = vcombine.high %v209, 0.0
  %v213 = vcombine.low %v125, %v137
  %v214 = vcombine.high %v125, %v137
  %v216 = vunpack.c.l.s4 1983009808
  %v217 = vunpack.c.0.s8 %v216
  %v218 = vlaneseq
  %v219 = vshrl.u32 %v218, 7
  %v220 = vsub.s32 %v217, %v219
  %v221 = vrot.slane %v213, %v220
  %v223 = vunpack.c.l.s4 1983009808
  %v224 = vunpack.c.0.s8 %v223
  %v225 = vlaneseq
  %v226 = vshrl.u32 %v225, 7
  %v227 = vsub.s32 %v224, %v226
  %v228 = vrot.slane %v214, %v227
  %v229 = vcombine.low %v131, %v143
  %v230 = vcombine.high %v131, %v143
  %v232 = vunpack.c.l.s4 1983009808
  %v233 = vunpack.c.0.s8 %v232
  %v234 = vlaneseq
  %v235 = vshrl.u32 %v234, 7
  %v236 = vsub.s32 %v233, %v235
  %v237 = vrot.slane %v229, %v236
  %v239 = vunpack.c.l.s4 1983009808
  %v240 = vunpack.c.0.s8 %v239
  %v241 = vlaneseq
  %v242 = vshrl.u32 %v241, 7
  %v243 = vsub.s32 %v240, %v242
  %v244 = vrot.slane %v230, %v243
  %v245 = vcombine.low %v221, %v237
  %v246 = vcombine.high %v221, %v237
  %v248 = vunpack.c.l.s4 1934713408
  %v249 = vunpack.c.0.s8 %v248
  %v250 = vlaneseq
  %v251 = vshrl.u32 %v250, 7
  %v252 = vsub.s32 %v249, %v251
  %v253 = vrot.slane %v245, %v252
  %v255 = vunpack.c.l.s4 1934713408
  %v256 = vunpack.c.0.s8 %v255
  %v257 = vlaneseq
  %v258 = vshrl.u32 %v257, 7
  %v259 = vsub.s32 %v256, %v258
  %v260 = vrot.slane %v246, %v259
  %v261 = vcombine.low %v228, %v244
  %v263 = vunpack.c.l.s4 1934713408
  %v264 = vunpack.c.0.s8 %v263
  %v265 = vlaneseq
  %v266 = vshrl.u32 %v265, 7
  %v267 = vsub.s32 %v264, %v266
  %v268 = vrot.slane %v261, %v267
  %v269 = vcombine.high %v253, 0.0
  %v270 = vcombine.high %v260, 0.0
  %v271 = vcombine.high %v268, 0.0
  %v272 = vcombine.low %v186, %v193
  %v274 = vunpack.c.l.s4 1983009808
  %v275 = vunpack.c.0.s8 %v274
  %v276 = vlaneseq
  %v277 = vshrl.u32 %v276, 7
  %v278 = vsub.s32 %v275, %v277
  %v279 = vrot.slane %v272, %v278
  %v280 = vcombine.low %v210, %v211
  %v282 = vunpack.c.l.s4 1983009808
  %v283 = vunpack.c.0.s8 %v282
  %v284 = vlaneseq
  %v285 = vshrl.u32 %v284, 7
  %v286 = vsub.s32 %v283, %v285
  %v287 = vrot.slane %v280, %v286
  %v288 = vcombine.low %v202, %v209
  %v290 = vunpack.c.l.s4 1983009808
  %v291 = vunpack.c.0.s8 %v290
  %v292 = vlaneseq
  %v293 = vshrl.u32 %v292, 7
  %v294 = vsub.s32 %v291, %v293
  %v295 = vrot.slane %v288, %v294
  %v296 = vcombine.high %v202, 0.0
  %v298 = vunpack.c.l.s4 1983009808
  %v299 = vunpack.c.0.s8 %v298
  %v300 = vlaneseq
  %v301 = vshrl.u32 %v300, 7
  %v302 = vsub.s32 %v299, %v301
  %v303 = vrot.slane %v296, %v302
  %v304 = vcombine.low %v279, %v287
  %v305 = vcombine.high %v279, %v287
  %v307 = vunpack.c.l.s4 1934713408
  %v308 = vunpack.c.0.s8 %v307
  %v309 = vlaneseq
  %v310 = vshrl.u32 %v309, 7
  %v311 = vsub.s32 %v308, %v310
  %v312 = vrot.slane %v304, %v311
  %v314 = vunpack.c.l.s4 1934713408
  %v315 = vunpack.c.0.s8 %v314
  %v316 = vlaneseq
  %v317 = vshrl.u32 %v316, 7
  %v318 = vsub.s32 %v315, %v317
  %v319 = vrot.slane %v305, %v318
  %v320 = vcombine.low %v295, %v303
  %v321 = vcombine.high %v295, %v303
  %v323 = vunpack.c.l.s4 1934713408
  %v324 = vunpack.c.0.s8 %v323
  %v325 = vlaneseq
  %v326 = vshrl.u32 %v325, 7
  %v327 = vsub.s32 %v324, %v326
  %v328 = vrot.slane %v320, %v327
  %v330 = vunpack.c.l.s4 1934713408
  %v331 = vunpack.c.0.s8 %v330
  %v332 = vlaneseq
  %v333 = vshrl.u32 %v332, 7
  %v334 = vsub.s32 %v331, %v333
  %v335 = vrot.slane %v321, %v334
  %v336 = vcombine.low %v312, %v328
  %v337 = vcombine.high %v312, %v328
  %v338 = vcombine.low %v319, %v335
  %v339 = vcombine.high %v319, %v335
  %v340 = vcombine.low %v212, %v269
  %v342 = vunpack.c.l.s4 1983009808
  %v343 = vunpack.c.0.s8 %v342
  %v344 = vlaneseq
  %v345 = vshrl.u32 %v344, 7
  %v346 = vsub.s32 %v343, %v345
  %v347 = vrot.slane %v340, %v346
  %v348 = vcombine.low %v253, %v260
  %v350 = vunpack.c.l.s4 1983009808
  %v351 = vunpack.c.0.s8 %v350
  %v352 = vlaneseq
  %v353 = vshrl.u32 %v352, 7
  %v354 = vsub.s32 %v351, %v353
  %v355 = vrot.slane %v348, %v354
  %v356 = vcombine.low %v270, %v271
  %v358 = vunpack.c.l.s4 1983009808
  %v359 = vunpack.c.0.s8 %v358
  %v360 = vlaneseq
  %v361 = vshrl.u32 %v360, 7
  %v362 = vsub.s32 %v359, %v361
  %v363 = vrot.slane %v356, %v362
  %v365 = vunpack.c.l.s4 1983009808
  %v366 = vunpack.c.0.s8 %v365
  %v367 = vlaneseq
  %v368 = vshrl.u32 %v367, 7
  %v369 = vsub.s32 %v366, %v368
  %v370 = vrot.slane %v268, %v369
  %v371 = vcombine.low %v347, %v355
  %v372 = vcombine.high %v347, %v355
  %v374 = vunpack.c.l.s4 1934713408
  %v375 = vunpack.c.0.s8 %v374
  %v376 = vlaneseq
  %v377 = vshrl.u32 %v376, 7
  %v378 = vsub.s32 %v375, %v377
  %v379 = vrot.slane %v371, %v378
  %v381 = vunpack.c.l.s4 1934713408
  %v382 = vunpack.c.0.s8 %v381
  %v383 = vlaneseq
  %v384 = vshrl.u32 %v383, 7
  %v385 = vsub.s32 %v382, %v384
  %v386 = vrot.slane %v372, %v385
  %v387 = vcombine.low %v363, %v370
  %v388 = vcombine.high %v363, %v370
  %v390 = vunpack.c.l.s4 1934713408
  %v391 = vunpack.c.0.s8 %v390
  %v392 = vlaneseq
  %v393 = vshrl.u32 %v392, 7
  %v394 = vsub.s32 %v391, %v393
  %v395 = vrot.slane %v387, %v394
  %v397 = vunpack.c.l.s4 1934713408
  %v398 = vunpack.c.0.s8 %v397
  %v399 = vlaneseq
  %v400 = vshrl.u32 %v399, 7
  %v401 = vsub.s32 %v398, %v400
  %v402 = vrot.slane %v388, %v401
  %v403 = vcombine.low %v379, %v395
  %v404 = vcombine.high %v379, %v395
  %v405 = vcombine.low %v386, %v402
  %v406 = vcombine.high %v386, %v402
  %409 = vrot.lane.b32.xlu0 %v118, 120
  %v410 = vpop.permute.xlu0 %409
  %411 = vrot.lane.b32.xlu0 %v121, 120
  %v412 = vpop.permute.xlu0 %411
  %413 = vrot.lane.b32.xlu0 %v118, 112
  %v414 = vpop.permute.xlu0 %413
  %415 = vrot.lane.b32.xlu0 %v121, 112
  %v416 = vpop.permute.xlu0 %415
  %417 = vrot.lane.b32.xlu0 %v118, 104
  %v418 = vpop.permute.xlu0 %417
  %419 = vrot.lane.b32.xlu0 %v121, 104
  %v420 = vpop.permute.xlu0 %419
  %421 = vrot.lane.b32.xlu0 %v118, 96
  %v422 = vpop.permute.xlu0 %421
  %423 = vrot.lane.b32.xlu0 %v121, 96
  %v424 = vpop.permute.xlu0 %423
  %425 = vrot.lane.b32.xlu0 %v410, 96
  %v426 = vpop.permute.xlu0 %425
  %427 = vrot.lane.b32.xlu0 %v412, 96
  %v428 = vpop.permute.xlu0 %427
  %429 = vrot.lane.b32.xlu0 %v414, 96
  %v430 = vpop.permute.xlu0 %429
  %431 = vrot.lane.b32.xlu0 %v416, 96
  %v432 = vpop.permute.xlu0 %431
  %433 = vrot.lane.b32.xlu0 %v418, 96
  %v434 = vpop.permute.xlu0 %433
  %435 = vrot.lane.b32.xlu0 %v420, 96
  %v436 = vpop.permute.xlu0 %435
  %v445 = vcombine.low %v422, %v430
  %v446 = vcombine.high %v422, %v430
  %v448 = vunpack.c.l.s4 1983009808
  %v449 = vunpack.c.0.s8 %v448
  %v450 = vlaneseq
  %v451 = vshrl.u32 %v450, 7
  %v452 = vsub.s32 %v449, %v451
  %v453 = vrot.slane %v445, %v452
  %v455 = vunpack.c.l.s4 1983009808
  %v456 = vunpack.c.0.s8 %v455
  %v457 = vlaneseq
  %v458 = vshrl.u32 %v457, 7
  %v459 = vsub.s32 %v456, %v458
  %v460 = vrot.slane %v446, %v459
  %v461 = vcombine.low %v426, %v434
  %v462 = vcombine.high %v426, %v434
  %v464 = vunpack.c.l.s4 1983009808
  %v465 = vunpack.c.0.s8 %v464
  %v466 = vlaneseq
  %v467 = vshrl.u32 %v466, 7
  %v468 = vsub.s32 %v465, %v467
  %v469 = vrot.slane %v461, %v468
  %v471 = vunpack.c.l.s4 1983009808
  %v472 = vunpack.c.0.s8 %v471
  %v473 = vlaneseq
  %v474 = vshrl.u32 %v473, 7
  %v475 = vsub.s32 %v472, %v474
  %v476 = vrot.slane %v462, %v475
  %v477 = vcombine.low %v453, %v469
  %v478 = vcombine.high %v453, %v469
  %v480 = vunpack.c.l.s4 1934713408
  %v481 = vunpack.c.0.s8 %v480
  %v482 = vlaneseq
  %v483 = vshrl.u32 %v482, 7
  %v484 = vsub.s32 %v481, %v483
  %v485 = vrot.slane %v477, %v484
  %v487 = vunpack.c.l.s4 1934713408
  %v488 = vunpack.c.0.s8 %v487
  %v489 = vlaneseq
  %v490 = vshrl.u32 %v489, 7
  %v491 = vsub.s32 %v488, %v490
  %v492 = vrot.slane %v478, %v491
  %v493 = vcombine.low %v460, %v476
  %v494 = vcombine.high %v460, %v476
  %v496 = vunpack.c.l.s4 1934713408
  %v497 = vunpack.c.0.s8 %v496
  %v498 = vlaneseq
  %v499 = vshrl.u32 %v498, 7
  %v500 = vsub.s32 %v497, %v499
  %v501 = vrot.slane %v493, %v500
  %v503 = vunpack.c.l.s4 1934713408
  %v504 = vunpack.c.0.s8 %v503
  %v505 = vlaneseq
  %v506 = vshrl.u32 %v505, 7
  %v507 = vsub.s32 %v504, %v506
  %v508 = vrot.slane %v494, %v507
  %v509 = vcombine.high %v485, 0.0
  %v510 = vcombine.high %v492, 0.0
  %v511 = vcombine.high %v508, 0.0
  %v512 = vcombine.low %v424, %v432
  %v513 = vcombine.high %v424, %v432
  %v515 = vunpack.c.l.s4 1983009808
  %v516 = vunpack.c.0.s8 %v515
  %v517 = vlaneseq
  %v518 = vshrl.u32 %v517, 7
  %v519 = vsub.s32 %v516, %v518
  %v520 = vrot.slane %v512, %v519
  %v522 = vunpack.c.l.s4 1983009808
  %v523 = vunpack.c.0.s8 %v522
  %v524 = vlaneseq
  %v525 = vshrl.u32 %v524, 7
  %v526 = vsub.s32 %v523, %v525
  %v527 = vrot.slane %v513, %v526
  %v528 = vcombine.low %v428, %v436
  %v529 = vcombine.high %v428, %v436
  %v531 = vunpack.c.l.s4 1983009808
  %v532 = vunpack.c.0.s8 %v531
  %v533 = vlaneseq
  %v534 = vshrl.u32 %v533, 7
  %v535 = vsub.s32 %v532, %v534
  %v536 = vrot.slane %v528, %v535
  %v538 = vunpack.c.l.s4 1983009808
  %v539 = vunpack.c.0.s8 %v538
  %v540 = vlaneseq
  %v541 = vshrl.u32 %v540, 7
  %v542 = vsub.s32 %v539, %v541
  %v543 = vrot.slane %v529, %v542
  %v544 = vcombine.low %v520, %v536
  %v545 = vcombine.high %v520, %v536
  %v547 = vunpack.c.l.s4 1934713408
  %v548 = vunpack.c.0.s8 %v547
  %v549 = vlaneseq
  %v550 = vshrl.u32 %v549, 7
  %v551 = vsub.s32 %v548, %v550
  %v552 = vrot.slane %v544, %v551
  %v554 = vunpack.c.l.s4 1934713408
  %v555 = vunpack.c.0.s8 %v554
  %v556 = vlaneseq
  %v557 = vshrl.u32 %v556, 7
  %v558 = vsub.s32 %v555, %v557
  %v559 = vrot.slane %v545, %v558
  %v560 = vcombine.low %v527, %v543
  %v562 = vunpack.c.l.s4 1934713408
  %v563 = vunpack.c.0.s8 %v562
  %v564 = vlaneseq
  %v565 = vshrl.u32 %v564, 7
  %v566 = vsub.s32 %v563, %v565
  %v567 = vrot.slane %v560, %v566
  %v568 = vcombine.high %v552, 0.0
  %v569 = vcombine.high %v559, 0.0
  %v570 = vcombine.high %v567, 0.0
  %v571 = vcombine.low %v485, %v492
  %v573 = vunpack.c.l.s4 1983009808
  %v574 = vunpack.c.0.s8 %v573
  %v575 = vlaneseq
  %v576 = vshrl.u32 %v575, 7
  %v577 = vsub.s32 %v574, %v576
  %v578 = vrot.slane %v571, %v577
  %v579 = vcombine.low %v509, %v510
  %v581 = vunpack.c.l.s4 1983009808
  %v582 = vunpack.c.0.s8 %v581
  %v583 = vlaneseq
  %v584 = vshrl.u32 %v583, 7
  %v585 = vsub.s32 %v582, %v584
  %v586 = vrot.slane %v579, %v585
  %v587 = vcombine.low %v501, %v508
  %v589 = vunpack.c.l.s4 1983009808
  %v590 = vunpack.c.0.s8 %v589
  %v591 = vlaneseq
  %v592 = vshrl.u32 %v591, 7
  %v593 = vsub.s32 %v590, %v592
  %v594 = vrot.slane %v587, %v593
  %v595 = vcombine.high %v501, 0.0
  %v597 = vunpack.c.l.s4 1983009808
  %v598 = vunpack.c.0.s8 %v597
  %v599 = vlaneseq
  %v600 = vshrl.u32 %v599, 7
  %v601 = vsub.s32 %v598, %v600
  %v602 = vrot.slane %v595, %v601
  %v603 = vcombine.low %v578, %v586
  %v604 = vcombine.high %v578, %v586
  %v606 = vunpack.c.l.s4 1934713408
  %v607 = vunpack.c.0.s8 %v606
  %v608 = vlaneseq
  %v609 = vshrl.u32 %v608, 7
  %v610 = vsub.s32 %v607, %v609
  %v611 = vrot.slane %v603, %v610
  %v613 = vunpack.c.l.s4 1934713408
  %v614 = vunpack.c.0.s8 %v613
  %v615 = vlaneseq
  %v616 = vshrl.u32 %v615, 7
  %v617 = vsub.s32 %v614, %v616
  %v618 = vrot.slane %v604, %v617
  %v619 = vcombine.low %v594, %v602
  %v620 = vcombine.high %v594, %v602
  %v622 = vunpack.c.l.s4 1934713408
  %v623 = vunpack.c.0.s8 %v622
  %v624 = vlaneseq
  %v625 = vshrl.u32 %v624, 7
  %v626 = vsub.s32 %v623, %v625
  %v627 = vrot.slane %v619, %v626
  %v629 = vunpack.c.l.s4 1934713408
  %v630 = vunpack.c.0.s8 %v629
  %v631 = vlaneseq
  %v632 = vshrl.u32 %v631, 7
  %v633 = vsub.s32 %v630, %v632
  %v634 = vrot.slane %v620, %v633
  %v635 = vcombine.low %v611, %v627
  %v636 = vcombine.high %v611, %v627
  %v637 = vcombine.low %v618, %v634
  %v638 = vcombine.high %v618, %v634
  %v639 = vcombine.low %v511, %v568
  %v641 = vunpack.c.l.s4 1983009808
  %v642 = vunpack.c.0.s8 %v641
  %v643 = vlaneseq
  %v644 = vshrl.u32 %v643, 7
  %v645 = vsub.s32 %v642, %v644
  %v646 = vrot.slane %v639, %v645
  %v647 = vcombine.low %v552, %v559
  %v649 = vunpack.c.l.s4 1983009808
  %v650 = vunpack.c.0.s8 %v649
  %v651 = vlaneseq
  %v652 = vshrl.u32 %v651, 7
  %v653 = vsub.s32 %v650, %v652
  %v654 = vrot.slane %v647, %v653
  %v655 = vcombine.low %v569, %v570
  %v657 = vunpack.c.l.s4 1983009808
  %v658 = vunpack.c.0.s8 %v657
  %v659 = vlaneseq
  %v660 = vshrl.u32 %v659, 7
  %v661 = vsub.s32 %v658, %v660
  %v662 = vrot.slane %v655, %v661
  %v664 = vunpack.c.l.s4 1983009808
  %v665 = vunpack.c.0.s8 %v664
  %v666 = vlaneseq
  %v667 = vshrl.u32 %v666, 7
  %v668 = vsub.s32 %v665, %v667
  %v669 = vrot.slane %v567, %v668
  %v670 = vcombine.low %v646, %v654
  %v671 = vcombine.high %v646, %v654
  %v673 = vunpack.c.l.s4 1934713408
  %v674 = vunpack.c.0.s8 %v673
  %v675 = vlaneseq
  %v676 = vshrl.u32 %v675, 7
  %v677 = vsub.s32 %v674, %v676
  %v678 = vrot.slane %v670, %v677
  %v680 = vunpack.c.l.s4 1934713408
  %v681 = vunpack.c.0.s8 %v680
  %v682 = vlaneseq
  %v683 = vshrl.u32 %v682, 7
  %v684 = vsub.s32 %v681, %v683
  %v685 = vrot.slane %v671, %v684
  %v686 = vcombine.low %v662, %v669
  %v687 = vcombine.high %v662, %v669
  %v689 = vunpack.c.l.s4 1934713408
  %v690 = vunpack.c.0.s8 %v689
  %v691 = vlaneseq
  %v692 = vshrl.u32 %v691, 7
  %v693 = vsub.s32 %v690, %v692
  %v694 = vrot.slane %v686, %v693
  %v696 = vunpack.c.l.s4 1934713408
  %v697 = vunpack.c.0.s8 %v696
  %v698 = vlaneseq
  %v699 = vshrl.u32 %v698, 7
  %v700 = vsub.s32 %v697, %v699
  %v701 = vrot.slane %v687, %v700
  %v702 = vcombine.low %v678, %v694
  %v703 = vcombine.high %v678, %v694
  %v704 = vcombine.low %v685, %v701
  %v705 = vcombine.high %v685, %v701
  %706 = vrot.lane.b32.xlu0 %v118, 64
  %v707 = vpop.permute.xlu0 %706
  %708 = vrot.lane.b32.xlu0 %v121, 64
  %v709 = vpop.permute.xlu0 %708
  %710 = vrot.lane.b32.xlu0 %v410, 64
  %v711 = vpop.permute.xlu0 %710
  %712 = vrot.lane.b32.xlu0 %v412, 64
  %v713 = vpop.permute.xlu0 %712
  %714 = vrot.lane.b32.xlu0 %v414, 64
  %v715 = vpop.permute.xlu0 %714
  %716 = vrot.lane.b32.xlu0 %v416, 64
  %v717 = vpop.permute.xlu0 %716
  %718 = vrot.lane.b32.xlu0 %v418, 64
  %v719 = vpop.permute.xlu0 %718
  %720 = vrot.lane.b32.xlu0 %v420, 64
  %v721 = vpop.permute.xlu0 %720
  %v730 = vcombine.low %v707, %v715
  %v731 = vcombine.high %v707, %v715
  %v733 = vunpack.c.l.s4 1983009808
  %v734 = vunpack.c.0.s8 %v733
  %v735 = vlaneseq
  %v736 = vshrl.u32 %v735, 7
  %v737 = vsub.s32 %v734, %v736
  %v738 = vrot.slane %v730, %v737
  %v740 = vunpack.c.l.s4 1983009808
  %v741 = vunpack.c.0.s8 %v740
  %v742 = vlaneseq
  %v743 = vshrl.u32 %v742, 7
  %v744 = vsub.s32 %v741, %v743
  %v745 = vrot.slane %v731, %v744
  %v746 = vcombine.low %v711, %v719
  %v747 = vcombine.high %v711, %v719
  %v749 = vunpack.c.l.s4 1983009808
  %v750 = vunpack.c.0.s8 %v749
  %v751 = vlaneseq
  %v752 = vshrl.u32 %v751, 7
  %v753 = vsub.s32 %v750, %v752
  %v754 = vrot.slane %v746, %v753
  %v756 = vunpack.c.l.s4 1983009808
  %v757 = vunpack.c.0.s8 %v756
  %v758 = vlaneseq
  %v759 = vshrl.u32 %v758, 7
  %v760 = vsub.s32 %v757, %v759
  %v761 = vrot.slane %v747, %v760
  %v762 = vcombine.low %v738, %v754
  %v763 = vcombine.high %v738, %v754
  %v765 = vunpack.c.l.s4 1934713408
  %v766 = vunpack.c.0.s8 %v765
  %v767 = vlaneseq
  %v768 = vshrl.u32 %v767, 7
  %v769 = vsub.s32 %v766, %v768
  %v770 = vrot.slane %v762, %v769
  %v772 = vunpack.c.l.s4 1934713408
  %v773 = vunpack.c.0.s8 %v772
  %v774 = vlaneseq
  %v775 = vshrl.u32 %v774, 7
  %v776 = vsub.s32 %v773, %v775
  %v777 = vrot.slane %v763, %v776
  %v778 = vcombine.low %v745, %v761
  %v779 = vcombine.high %v745, %v761
  %v781 = vunpack.c.l.s4 1934713408
  %v782 = vunpack.c.0.s8 %v781
  %v783 = vlaneseq
  %v784 = vshrl.u32 %v783, 7
  %v785 = vsub.s32 %v782, %v784
  %v786 = vrot.slane %v778, %v785
  %v788 = vunpack.c.l.s4 1934713408
  %v789 = vunpack.c.0.s8 %v788
  %v790 = vlaneseq
  %v791 = vshrl.u32 %v790, 7
  %v792 = vsub.s32 %v789, %v791
  %v793 = vrot.slane %v779, %v792
  %v794 = vcombine.high %v770, 0.0
  %v795 = vcombine.high %v777, 0.0
  %v796 = vcombine.high %v793, 0.0
  %v797 = vcombine.low %v709, %v717
  %v798 = vcombine.high %v709, %v717
  %v800 = vunpack.c.l.s4 1983009808
  %v801 = vunpack.c.0.s8 %v800
  %v802 = vlaneseq
  %v803 = vshrl.u32 %v802, 7
  %v804 = vsub.s32 %v801, %v803
  %v805 = vrot.slane %v797, %v804
  %v807 = vunpack.c.l.s4 1983009808
  %v808 = vunpack.c.0.s8 %v807
  %v809 = vlaneseq
  %v810 = vshrl.u32 %v809, 7
  %v811 = vsub.s32 %v808, %v810
  %v812 = vrot.slane %v798, %v811
  %v813 = vcombine.low %v713, %v721
  %v814 = vcombine.high %v713, %v721
  %v816 = vunpack.c.l.s4 1983009808
  %v817 = vunpack.c.0.s8 %v816
  %v818 = vlaneseq
  %v819 = vshrl.u32 %v818, 7
  %v820 = vsub.s32 %v817, %v819
  %v821 = vrot.slane %v813, %v820
  %v823 = vunpack.c.l.s4 1983009808
  %v824 = vunpack.c.0.s8 %v823
  %v825 = vlaneseq
  %v826 = vshrl.u32 %v825, 7
  %v827 = vsub.s32 %v824, %v826
  %v828 = vrot.slane %v814, %v827
  %v829 = vcombine.low %v805, %v821
  %v830 = vcombine.high %v805, %v821
  %v832 = vunpack.c.l.s4 1934713408
  %v833 = vunpack.c.0.s8 %v832
  %v834 = vlaneseq
  %v835 = vshrl.u32 %v834, 7
  %v836 = vsub.s32 %v833, %v835
  %v837 = vrot.slane %v829, %v836
  %v839 = vunpack.c.l.s4 1934713408
  %v840 = vunpack.c.0.s8 %v839
  %v841 = vlaneseq
  %v842 = vshrl.u32 %v841, 7
  %v843 = vsub.s32 %v840, %v842
  %v844 = vrot.slane %v830, %v843
  %v845 = vcombine.low %v812, %v828
  %v847 = vunpack.c.l.s4 1934713408
  %v848 = vunpack.c.0.s8 %v847
  %v849 = vlaneseq
  %v850 = vshrl.u32 %v849, 7
  %v851 = vsub.s32 %v848, %v850
  %v852 = vrot.slane %v845, %v851
  %v853 = vcombine.high %v837, 0.0
  %v854 = vcombine.high %v844, 0.0
  %v855 = vcombine.high %v852, 0.0
  %v856 = vcombine.low %v770, %v777
  %v858 = vunpack.c.l.s4 1983009808
  %v859 = vunpack.c.0.s8 %v858
  %v860 = vlaneseq
  %v861 = vshrl.u32 %v860, 7
  %v862 = vsub.s32 %v859, %v861
  %v863 = vrot.slane %v856, %v862
  %v864 = vcombine.low %v794, %v795
  %v866 = vunpack.c.l.s4 1983009808
  %v867 = vunpack.c.0.s8 %v866
  %v868 = vlaneseq
  %v869 = vshrl.u32 %v868, 7
  %v870 = vsub.s32 %v867, %v869
  %v871 = vrot.slane %v864, %v870
  %v872 = vcombine.low %v786, %v793
  %v874 = vunpack.c.l.s4 1983009808
  %v875 = vunpack.c.0.s8 %v874
  %v876 = vlaneseq
  %v877 = vshrl.u32 %v876, 7
  %v878 = vsub.s32 %v875, %v877
  %v879 = vrot.slane %v872, %v878
  %v880 = vcombine.high %v786, 0.0
  %v882 = vunpack.c.l.s4 1983009808
  %v883 = vunpack.c.0.s8 %v882
  %v884 = vlaneseq
  %v885 = vshrl.u32 %v884, 7
  %v886 = vsub.s32 %v883, %v885
  %v887 = vrot.slane %v880, %v886
  %v888 = vcombine.low %v863, %v871
  %v889 = vcombine.high %v863, %v871
  %v891 = vunpack.c.l.s4 1934713408
  %v892 = vunpack.c.0.s8 %v891
  %v893 = vlaneseq
  %v894 = vshrl.u32 %v893, 7
  %v895 = vsub.s32 %v892, %v894
  %v896 = vrot.slane %v888, %v895
  %v898 = vunpack.c.l.s4 1934713408
  %v899 = vunpack.c.0.s8 %v898
  %v900 = vlaneseq
  %v901 = vshrl.u32 %v900, 7
  %v902 = vsub.s32 %v899, %v901
  %v903 = vrot.slane %v889, %v902
  %v904 = vcombine.low %v879, %v887
  %v905 = vcombine.high %v879, %v887
  %v907 = vunpack.c.l.s4 1934713408
  %v908 = vunpack.c.0.s8 %v907
  %v909 = vlaneseq
  %v910 = vshrl.u32 %v909, 7
  %v911 = vsub.s32 %v908, %v910
  %v912 = vrot.slane %v904, %v911
  %v914 = vunpack.c.l.s4 1934713408
  %v915 = vunpack.c.0.s8 %v914
  %v916 = vlaneseq
  %v917 = vshrl.u32 %v916, 7
  %v918 = vsub.s32 %v915, %v917
  %v919 = vrot.slane %v905, %v918
  %v920 = vcombine.low %v896, %v912
  %v921 = vcombine.high %v896, %v912
  %v922 = vcombine.low %v903, %v919
  %v923 = vcombine.high %v903, %v919
  %v924 = vcombine.low %v796, %v853
  %v926 = vunpack.c.l.s4 1983009808
  %v927 = vunpack.c.0.s8 %v926
  %v928 = vlaneseq
  %v929 = vshrl.u32 %v928, 7
  %v930 = vsub.s32 %v927, %v929
  %v931 = vrot.slane %v924, %v930
  %v932 = vcombine.low %v837, %v844
  %v934 = vunpack.c.l.s4 1983009808
  %v935 = vunpack.c.0.s8 %v934
  %v936 = vlaneseq
  %v937 = vshrl.u32 %v936, 7
  %v938 = vsub.s32 %v935, %v937
  %v939 = vrot.slane %v932, %v938
  %v940 = vcombine.low %v854, %v855
  %v942 = vunpack.c.l.s4 1983009808
  %v943 = vunpack.c.0.s8 %v942
  %v944 = vlaneseq
  %v945 = vshrl.u32 %v944, 7
  %v946 = vsub.s32 %v943, %v945
  %v947 = vrot.slane %v940, %v946
  %v949 = vunpack.c.l.s4 1983009808
  %v950 = vunpack.c.0.s8 %v949
  %v951 = vlaneseq
  %v952 = vshrl.u32 %v951, 7
  %v953 = vsub.s32 %v950, %v952
  %v954 = vrot.slane %v852, %v953
  %v955 = vcombine.low %v931, %v939
  %v956 = vcombine.high %v931, %v939
  %v958 = vunpack.c.l.s4 1934713408
  %v959 = vunpack.c.0.s8 %v958
  %v960 = vlaneseq
  %v961 = vshrl.u32 %v960, 7
  %v962 = vsub.s32 %v959, %v961
  %v963 = vrot.slane %v955, %v962
  %v965 = vunpack.c.l.s4 1934713408
  %v966 = vunpack.c.0.s8 %v965
  %v967 = vlaneseq
  %v968 = vshrl.u32 %v967, 7
  %v969 = vsub.s32 %v966, %v968
  %v970 = vrot.slane %v956, %v969
  %v971 = vcombine.low %v947, %v954
  %v972 = vcombine.high %v947, %v954
  %v974 = vunpack.c.l.s4 1934713408
  %v975 = vunpack.c.0.s8 %v974
  %v976 = vlaneseq
  %v977 = vshrl.u32 %v976, 7
  %v978 = vsub.s32 %v975, %v977
  %v979 = vrot.slane %v971, %v978
  %v981 = vunpack.c.l.s4 1934713408
  %v982 = vunpack.c.0.s8 %v981
  %v983 = vlaneseq
  %v984 = vshrl.u32 %v983, 7
  %v985 = vsub.s32 %v982, %v984
  %v986 = vrot.slane %v972, %v985
  %v987 = vcombine.low %v963, %v979
  %v988 = vcombine.high %v963, %v979
  %v989 = vcombine.low %v970, %v986
  %v990 = vcombine.high %v970, %v986
  %v991 = vpack.c.bf16 %v336, %v336
  %v992 = vpack.c.bf16 %v337, %v337
  %v993 = vpack.c.bf16 %v338, %v338
  %v994 = vpack.c.bf16 %v339, %v339
  %v995 = vpack.c.bf16 %v403, %v403
  %v996 = vpack.c.bf16 %v404, %v404
  %v997 = vpack.c.bf16 %v405, %v405
  %v998 = vpack.c.bf16 %v406, %v406
  %v999 = vpack.c.bf16 %v635, %v635
  %v1000 = vpack.c.bf16 %v636, %v636
  %v1001 = vpack.c.bf16 %v637, %v637
  %v1002 = vpack.c.bf16 %v638, %v638
  %v1003 = vpack.c.bf16 %v702, %v702
  %v1004 = vpack.c.bf16 %v703, %v703
  %v1005 = vpack.c.bf16 %v704, %v704
  %v1006 = vpack.c.bf16 %v705, %v705
  %vm1007 = vcmask 64512
  %v1009 = vsel %vm1007, %v991, 0
  %v1012 = vsel %vm1007, %v999, 0
  %1014 = vmatprep.subr.bf16.mxu0 0
  %1015 = vmatpush1.bf16.xpose.msra.mxu0 0
  %1016 = vmatprep.subr.bf16.mxu0 0
  %1017 = vmatpush1.bf16.xpose.msra.mxu0 0
  %1018 = vmatprep.subr.bf16.mxu0 0
  %1019 = vmatpush1.bf16.xpose.msra.mxu0 0
  %1020 = vmatprep.subr.bf16.mxu0 0
  %1021 = vmatpush1.bf16.xpose.msra.mxu0 0
  %1022 = vmatprep.subr.bf16.mxu0 0
  %1023 = vmatpush1.bf16.xpose.msra.mxu0 0
  %1024 = vmatprep.subr.bf16.mxu0 0
  %1025 = vmatpush1.bf16.xpose.msra.mxu0 0
  %1026 = vmatprep.subr.bf16.mxu0 0
  %1027 = vmatpush1.bf16.xpose.msra.mxu0 0
  %1028 = vmatprep.subr.bf16.mxu0 0
  %1029 = vmatpush1.bf16.xpose.msra.mxu0 %v1012
  %1030 = vmatprep.subr.bf16.mxu0 0
  %1031 = vmatpush2.bf16.xpose.msra.mxu0 0
  %1032 = vmatprep.subr.bf16.mxu0 0
  %1033 = vmatpush2.bf16.xpose.msra.mxu0 0
  %1034 = vmatprep.subr.bf16.mxu0 0
  %1035 = vmatpush2.bf16.xpose.msra.mxu0 0
  %1036 = vmatprep.subr.bf16.mxu0 0
  %1037 = vmatpush2.bf16.xpose.msra.mxu0 0
  %1038 = vmatprep.subr.bf16.mxu0 0
  %1039 = vmatpush2.bf16.xpose.msra.mxu0 0
  %1040 = vmatprep.subr.bf16.mxu0 0
  %1041 = vmatpush2.bf16.xpose.msra.mxu0 0
  %1042 = vmatprep.subr.bf16.mxu0 0
  %1043 = vmatpush2.bf16.xpose.msra.mxu0 0
  %1044 = vmatprep.subr.bf16.mxu0 0
  %1045 = vmatpush2.bf16.xpose.msra.mxu0 0
  %1046 = vmatprep.mubr.bf16.mxu0 0
  %1047 = vmatmul.mubr.bf16.gmra.mxu0 %v1009
  %v1048 = vpop.f32.mrf.mxu0
  %v1049 = vadd.f32 0.0, %v1048
  %v1050 = vpop.f32.mrf.mxu0
  %v1051 = vpop.f32.mrf.mxu0
  %v1052 = vpop.f32.mrf.mxu0
  %1053 = vdwg.mxu0
  %v1055 = vsel %vm1007, %v992, 0
  %v1058 = vsel %vm1007, %v1000, 0
  %1060 = vmatprep.subr.bf16.mxu0 0
  %1061 = vmatpush1.bf16.xpose.msra.mxu0 0
  %1062 = vmatprep.subr.bf16.mxu0 0
  %1063 = vmatpush1.bf16.xpose.msra.mxu0 0
  %1064 = vmatprep.subr.bf16.mxu0 0
  %1065 = vmatpush1.bf16.xpose.msra.mxu0 0
  %1066 = vmatprep.subr.bf16.mxu0 0
  %1067 = vmatpush1.bf16.xpose.msra.mxu0 0
  %1068 = vmatprep.subr.bf16.mxu0 0
  %1069 = vmatpush1.bf16.xpose.msra.mxu0 0
  %1070 = vmatprep.subr.bf16.mxu0 0
  %1071 = vmatpush1.bf16.xpose.msra.mxu0 0
  %1072 = vmatprep.subr.bf16.mxu0 0
  %1073 = vmatpush1.bf16.xpose.msra.mxu0 0
  %1074 = vmatprep.subr.bf16.mxu0 0
  %1075 = vmatpush1.bf16.xpose.msra.mxu0 %v1058
  %1076 = vmatprep.subr.bf16.mxu0 0
  %1077 = vmatpush2.bf16.xpose.msra.mxu0 0
  %1078 = vmatprep.subr.bf16.mxu0 0
  %1079 = vmatpush2.bf16.xpose.msra.mxu0 0
  %1080 = vmatprep.subr.bf16.mxu0 0
  %1081 = vmatpush2.bf16.xpose.msra.mxu0 0
  %1082 = vmatprep.subr.bf16.mxu0 0
  %1083 = vmatpush2.bf16.xpose.msra.mxu0 0
  %1084 = vmatprep.subr.bf16.mxu0 0
  %1085 = vmatpush2.bf16.xpose.msra.mxu0 0
  %1086 = vmatprep.subr.bf16.mxu0 0
  %1087 = vmatpush2.bf16.xpose.msra.mxu0 0
  %1088 = vmatprep.subr.bf16.mxu0 0
  %1089 = vmatpush2.bf16.xpose.msra.mxu0 0
  %1090 = vmatprep.subr.bf16.mxu0 0
  %1091 = vmatpush2.bf16.xpose.msra.mxu0 0
  %1092 = vmatprep.mubr.bf16.mxu0 0
  %1093 = vmatmul.mubr.bf16.gmra.mxu0 %v1055
  %v1094 = vpop.f32.mrf.mxu0
  %v1095 = vadd.f32 0.0, %v1094
  %v1096 = vpop.f32.mrf.mxu0
  %v1097 = vpop.f32.mrf.mxu0
  %v1098 = vpop.f32.mrf.mxu0
  %1099 = vdwg.mxu0
  %v1101 = vsel %vm1007, %v993, 0
  %v1104 = vsel %vm1007, %v1001, 0
  %1106 = vmatprep.subr.bf16.mxu0 0
  %1107 = vmatpush1.bf16.xpose.msra.mxu0 0
  %1108 = vmatprep.subr.bf16.mxu0 0
  %1109 = vmatpush1.bf16.xpose.msra.mxu0 0
  %1110 = vmatprep.subr.bf16.mxu0 0
  %1111 = vmatpush1.bf16.xpose.msra.mxu0 0
  %1112 = vmatprep.subr.bf16.mxu0 0
  %1113 = vmatpush1.bf16.xpose.msra.mxu0 0
  %1114 = vmatprep.subr.bf16.mxu0 0
  %1115 = vmatpush1.bf16.xpose.msra.mxu0 0
  %1116 = vmatprep.subr.bf16.mxu0 0
  %1117 = vmatpush1.bf16.xpose.msra.mxu0 0
  %1118 = vmatprep.subr.bf16.mxu0 0
  %1119 = vmatpush1.bf16.xpose.msra.mxu0 0
  %1120 = vmatprep.subr.bf16.mxu0 0
  %1121 = vmatpush1.bf16.xpose.msra.mxu0 %v1104
  %1122 = vmatprep.subr.bf16.mxu0 0
  %1123 = vmatpush2.bf16.xpose.msra.mxu0 0
  %1124 = vmatprep.subr.bf16.mxu0 0
  %1125 = vmatpush2.bf16.xpose.msra.mxu0 0
  %1126 = vmatprep.subr.bf16.mxu0 0
  %1127 = vmatpush2.bf16.xpose.msra.mxu0 0
  %1128 = vmatprep.subr.bf16.mxu0 0
  %1129 = vmatpush2.bf16.xpose.msra.mxu0 0
  %1130 = vmatprep.subr.bf16.mxu0 0
  %1131 = vmatpush2.bf16.xpose.msra.mxu0 0
  %1132 = vmatprep.subr.bf16.mxu0 0
  %1133 = vmatpush2.bf16.xpose.msra.mxu0 0
  %1134 = vmatprep.subr.bf16.mxu0 0
  %1135 = vmatpush2.bf16.xpose.msra.mxu0 0
  %1136 = vmatprep.subr.bf16.mxu0 0
  %1137 = vmatpush2.bf16.xpose.msra.mxu0 0
  %1138 = vmatprep.mubr.bf16.mxu0 0
  %1139 = vmatmul.mubr.bf16.gmra.mxu0 %v1101
  %v1140 = vpop.f32.mrf.mxu0
  %v1141 = vadd.f32 0.0, %v1140
  %v1142 = vpop.f32.mrf.mxu0
  %v1143 = vpop.f32.mrf.mxu0
  %v1144 = vpop.f32.mrf.mxu0
  %1145 = vdwg.mxu0
  %v1147 = vsel %vm1007, %v994, 0
  %v1150 = vsel %vm1007, %v1002, 0
  %1152 = vmatprep.subr.bf16.mxu0 0
  %1153 = vmatpush1.bf16.xpose.msra.mxu0 0
  %1154 = vmatprep.subr.bf16.mxu0 0
  %1155 = vmatpush1.bf16.xpose.msra.mxu0 0
  %1156 = vmatprep.subr.bf16.mxu0 0
  %1157 = vmatpush1.bf16.xpose.msra.mxu0 0
  %1158 = vmatprep.subr.bf16.mxu0 0
  %1159 = vmatpush1.bf16.xpose.msra.mxu0 0
  %1160 = vmatprep.subr.bf16.mxu0 0
  %1161 = vmatpush1.bf16.xpose.msra.mxu0 0
  %1162 = vmatprep.subr.bf16.mxu0 0
  %1163 = vmatpush1.bf16.xpose.msra.mxu0 0
  %1164 = vmatprep.subr.bf16.mxu0 0
  %1165 = vmatpush1.bf16.xpose.msra.mxu0 0
  %1166 = vmatprep.subr.bf16.mxu0 0
  %1167 = vmatpush1.bf16.xpose.msra.mxu0 %v1150
  %1168 = vmatprep.subr.bf16.mxu0 0
  %1169 = vmatpush2.bf16.xpose.msra.mxu0 0
  %1170 = vmatprep.subr.bf16.mxu0 0
  %1171 = vmatpush2.bf16.xpose.msra.mxu0 0
  %1172 = vmatprep.subr.bf16.mxu0 0
  %1173 = vmatpush2.bf16.xpose.msra.mxu0 0
  %1174 = vmatprep.subr.bf16.mxu0 0
  %1175 = vmatpush2.bf16.xpose.msra.mxu0 0
  %1176 = vmatprep.subr.bf16.mxu0 0
  %1177 = vmatpush2.bf16.xpose.msra.mxu0 0
  %1178 = vmatprep.subr.bf16.mxu0 0
  %1179 = vmatpush2.bf16.xpose.msra.mxu0 0
  %1180 = vmatprep.subr.bf16.mxu0 0
  %1181 = vmatpush2.bf16.xpose.msra.mxu0 0
  %1182 = vmatprep.subr.bf16.mxu0 0
  %1183 = vmatpush2.bf16.xpose.msra.mxu0 0
  %1184 = vmatprep.mubr.bf16.mxu0 0
  %1185 = vmatmul.mubr.bf16.gmra.mxu0 %v1147
  %v1186 = vpop.f32.mrf.mxu0
  %v1187 = vadd.f32 0.0, %v1186
  %v1188 = vpop.f32.mrf.mxu0
  %v1189 = vpop.f32.mrf.mxu0
  %v1190 = vpop.f32.mrf.mxu0
  %1191 = vdwg.mxu0
  %v1193 = vsel %vm1007, %v995, 0
  %v1196 = vsel %vm1007, %v1003, 0
  %1198 = vmatprep.subr.bf16.mxu0 0
  %1199 = vmatpush1.bf16.xpose.msra.mxu0 0
  %1200 = vmatprep.subr.bf16.mxu0 0
  %1201 = vmatpush1.bf16.xpose.msra.mxu0 0
  %1202 = vmatprep.subr.bf16.mxu0 0
  %1203 = vmatpush1.bf16.xpose.msra.mxu0 0
  %1204 = vmatprep.subr.bf16.mxu0 0
  %1205 = vmatpush1.bf16.xpose.msra.mxu0 0
  %1206 = vmatprep.subr.bf16.mxu0 0
  %1207 = vmatpush1.bf16.xpose.msra.mxu0 0
  %1208 = vmatprep.subr.bf16.mxu0 0
  %1209 = vmatpush1.bf16.xpose.msra.mxu0 0
  %1210 = vmatprep.subr.bf16.mxu0 0
  %1211 = vmatpush1.bf16.xpose.msra.mxu0 0
  %1212 = vmatprep.subr.bf16.mxu0 0
  %1213 = vmatpush1.bf16.xpose.msra.mxu0 %v1196
  %1214 = vmatprep.subr.bf16.mxu0 0
  %1215 = vmatpush2.bf16.xpose.msra.mxu0 0
  %1216 = vmatprep.subr.bf16.mxu0 0
  %1217 = vmatpush2.bf16.xpose.msra.mxu0 0
  %1218 = vmatprep.subr.bf16.mxu0 0
  %1219 = vmatpush2.bf16.xpose.msra.mxu0 0
  %1220 = vmatprep.subr.bf16.mxu0 0
  %1221 = vmatpush2.bf16.xpose.msra.mxu0 0
  %1222 = vmatprep.subr.bf16.mxu0 0
  %1223 = vmatpush2.bf16.xpose.msra.mxu0 0
  %1224 = vmatprep.subr.bf16.mxu0 0
  %1225 = vmatpush2.bf16.xpose.msra.mxu0 0
  %1226 = vmatprep.subr.bf16.mxu0 0
  %1227 = vmatpush2.bf16.xpose.msra.mxu0 0
  %1228 = vmatprep.subr.bf16.mxu0 0
  %1229 = vmatpush2.bf16.xpose.msra.mxu0 0
  %1230 = vmatprep.mubr.bf16.mxu0 0
  %1231 = vmatmul.mubr.bf16.gmra.mxu0 %v1193
  %v1232 = vpop.f32.mrf.mxu0
  %v1233 = vadd.f32 0.0, %v1232
  %v1234 = vpop.f32.mrf.mxu0
  %v1235 = vpop.f32.mrf.mxu0
  %v1236 = vpop.f32.mrf.mxu0
  %1237 = vdwg.mxu0
  %v1239 = vsel %vm1007, %v996, 0
  %v1242 = vsel %vm1007, %v1004, 0
  %1244 = vmatprep.subr.bf16.mxu0 0
  %1245 = vmatpush1.bf16.xpose.msra.mxu0 0
  %1246 = vmatprep.subr.bf16.mxu0 0
  %1247 = vmatpush1.bf16.xpose.msra.mxu0 0
  %1248 = vmatprep.subr.bf16.mxu0 0
  %1249 = vmatpush1.bf16.xpose.msra.mxu0 0
  %1250 = vmatprep.subr.bf16.mxu0 0
  %1251 = vmatpush1.bf16.xpose.msra.mxu0 0
  %1252 = vmatprep.subr.bf16.mxu0 0
  %1253 = vmatpush1.bf16.xpose.msra.mxu0 0
  %1254 = vmatprep.subr.bf16.mxu0 0
  %1255 = vmatpush1.bf16.xpose.msra.mxu0 0
  %1256 = vmatprep.subr.bf16.mxu0 0
  %1257 = vmatpush1.bf16.xpose.msra.mxu0 0
  %1258 = vmatprep.subr.bf16.mxu0 0
  %1259 = vmatpush1.bf16.xpose.msra.mxu0 %v1242
  %1260 = vmatprep.subr.bf16.mxu0 0
  %1261 = vmatpush2.bf16.xpose.msra.mxu0 0
  %1262 = vmatprep.subr.bf16.mxu0 0
  %1263 = vmatpush2.bf16.xpose.msra.mxu0 0
  %1264 = vmatprep.subr.bf16.mxu0 0
  %1265 = vmatpush2.bf16.xpose.msra.mxu0 0
  %1266 = vmatprep.subr.bf16.mxu0 0
  %1267 = vmatpush2.bf16.xpose.msra.mxu0 0
  %1268 = vmatprep.subr.bf16.mxu0 0
  %1269 = vmatpush2.bf16.xpose.msra.mxu0 0
  %1270 = vmatprep.subr.bf16.mxu0 0
  %1271 = vmatpush2.bf16.xpose.msra.mxu0 0
  %1272 = vmatprep.subr.bf16.mxu0 0
  %1273 = vmatpush2.bf16.xpose.msra.mxu0 0
  %1274 = vmatprep.subr.bf16.mxu0 0
  %1275 = vmatpush2.bf16.xpose.msra.mxu0 0
  %1276 = vmatprep.mubr.bf16.mxu0 0
  %1277 = vmatmul.mubr.bf16.gmra.mxu0 %v1239
  %v1278 = vpop.f32.mrf.mxu0
  %v1279 = vadd.f32 0.0, %v1278
  %v1280 = vpop.f32.mrf.mxu0
  %v1281 = vpop.f32.mrf.mxu0
  %v1282 = vpop.f32.mrf.mxu0
  %1283 = vdwg.mxu0
  %v1285 = vsel %vm1007, %v997, 0
  %v1288 = vsel %vm1007, %v1005, 0
  %1290 = vmatprep.subr.bf16.mxu0 0
  %1291 = vmatpush1.bf16.xpose.msra.mxu0 0
  %1292 = vmatprep.subr.bf16.mxu0 0
  %1293 = vmatpush1.bf16.xpose.msra.mxu0 0
  %1294 = vmatprep.subr.bf16.mxu0 0
  %1295 = vmatpush1.bf16.xpose.msra.mxu0 0
  %1296 = vmatprep.subr.bf16.mxu0 0
  %1297 = vmatpush1.bf16.xpose.msra.mxu0 0
  %1298 = vmatprep.subr.bf16.mxu0 0
  %1299 = vmatpush1.bf16.xpose.msra.mxu0 0
  %1300 = vmatprep.subr.bf16.mxu0 0
  %1301 = vmatpush1.bf16.xpose.msra.mxu0 0
  %1302 = vmatprep.subr.bf16.mxu0 0
  %1303 = vmatpush1.bf16.xpose.msra.mxu0 0
  %1304 = vmatprep.subr.bf16.mxu0 0
  %1305 = vmatpush1.bf16.xpose.msra.mxu0 %v1288
  %1306 = vmatprep.subr.bf16.mxu0 0
  %1307 = vmatpush2.bf16.xpose.msra.mxu0 0
  %1308 = vmatprep.subr.bf16.mxu0 0
  %1309 = vmatpush2.bf16.xpose.msra.mxu0 0
  %1310 = vmatprep.subr.bf16.mxu0 0
  %1311 = vmatpush2.bf16.xpose.msra.mxu0 0
  %1312 = vmatprep.subr.bf16.mxu0 0
  %1313 = vmatpush2.bf16.xpose.msra.mxu0 0
  %1314 = vmatprep.subr.bf16.mxu0 0
  %1315 = vmatpush2.bf16.xpose.msra.mxu0 0
  %1316 = vmatprep.subr.bf16.mxu0 0
  %1317 = vmatpush2.bf16.xpose.msra.mxu0 0
  %1318 = vmatprep.subr.bf16.mxu0 0
  %1319 = vmatpush2.bf16.xpose.msra.mxu0 0
  %1320 = vmatprep.subr.bf16.mxu0 0
  %1321 = vmatpush2.bf16.xpose.msra.mxu0 0
  %1322 = vmatprep.mubr.bf16.mxu0 0
  %1323 = vmatmul.mubr.bf16.gmra.mxu0 %v1285
  %v1324 = vpop.f32.mrf.mxu0
  %v1325 = vadd.f32 0.0, %v1324
  %v1326 = vpop.f32.mrf.mxu0
  %v1327 = vpop.f32.mrf.mxu0
  %v1328 = vpop.f32.mrf.mxu0
  %1329 = vdwg.mxu0
  %v1331 = vsel %vm1007, %v998, 0
  %v1334 = vsel %vm1007, %v1006, 0
  %1336 = vmatprep.subr.bf16.mxu0 0
  %1337 = vmatpush1.bf16.xpose.msra.mxu0 0
  %1338 = vmatprep.subr.bf16.mxu0 0
  %1339 = vmatpush1.bf16.xpose.msra.mxu0 0
  %1340 = vmatprep.subr.bf16.mxu0 0
  %1341 = vmatpush1.bf16.xpose.msra.mxu0 0
  %1342 = vmatprep.subr.bf16.mxu0 0
  %1343 = vmatpush1.bf16.xpose.msra.mxu0 0
  %1344 = vmatprep.subr.bf16.mxu0 0
  %1345 = vmatpush1.bf16.xpose.msra.mxu0 0
  %1346 = vmatprep.subr.bf16.mxu0 0
  %1347 = vmatpush1.bf16.xpose.msra.mxu0 0
  %1348 = vmatprep.subr.bf16.mxu0 0
  %1349 = vmatpush1.bf16.xpose.msra.mxu0 0
  %1350 = vmatprep.subr.bf16.mxu0 0
  %1351 = vmatpush1.bf16.xpose.msra.mxu0 %v1334
  %1352 = vmatprep.subr.bf16.mxu0 0
  %1353 = vmatpush2.bf16.xpose.msra.mxu0 0
  %1354 = vmatprep.subr.bf16.mxu0 0
  %1355 = vmatpush2.bf16.xpose.msra.mxu0 0
  %1356 = vmatprep.subr.bf16.mxu0 0
  %1357 = vmatpush2.bf16.xpose.msra.mxu0 0
  %1358 = vmatprep.subr.bf16.mxu0 0
  %1359 = vmatpush2.bf16.xpose.msra.mxu0 0
  %1360 = vmatprep.subr.bf16.mxu0 0
  %1361 = vmatpush2.bf16.xpose.msra.mxu0 0
  %1362 = vmatprep.subr.bf16.mxu0 0
  %1363 = vmatpush2.bf16.xpose.msra.mxu0 0
  %1364 = vmatprep.subr.bf16.mxu0 0
  %1365 = vmatpush2.bf16.xpose.msra.mxu0 0
  %1366 = vmatprep.subr.bf16.mxu0 0
  %1367 = vmatpush2.bf16.xpose.msra.mxu0 0
  %1368 = vmatprep.mubr.bf16.mxu0 0
  %1369 = vmatmul.mubr.bf16.gmra.mxu0 %v1331
  %v1370 = vpop.f32.mrf.mxu0
  %v1371 = vadd.f32 0.0, %v1370
  %v1372 = vpop.f32.mrf.mxu0
  %v1373 = vpop.f32.mrf.mxu0
  %v1374 = vpop.f32.mrf.mxu0
  %1375 = vdwg.mxu0
  %vm1376 = vcmask 55296
  %v1377 = vsel %vm1376, %v1049, -inf
  %1378 = vmax.xlane.f32.xlu0 %v1377
  %v1379 = vpop.xlane.xlu0 %1378
  %v1380 = vsel %vm1376, %v1095, -inf
  %1381 = vmax.xlane.f32.xlu0 %v1380
  %v1382 = vpop.xlane.xlu0 %1381
  %v1383 = vsel %vm1376, %v1141, -inf
  %1384 = vmax.xlane.f32.xlu0 %v1383
  %v1385 = vpop.xlane.xlu0 %1384
  %v1386 = vsel %vm1376, %v1187, -inf
  %1387 = vmax.xlane.f32.xlu0 %v1386
  %v1388 = vpop.xlane.xlu0 %1387
  %v1389 = vsel %vm1376, %v1233, -inf
  %1390 = vmax.xlane.f32.xlu0 %v1389
  %v1391 = vpop.xlane.xlu0 %1390
  %v1392 = vsel %vm1376, %v1279, -inf
  %1393 = vmax.xlane.f32.xlu0 %v1392
  %v1394 = vpop.xlane.xlu0 %1393
  %v1395 = vsel %vm1376, %v1325, -inf
  %1396 = vmax.xlane.f32.xlu0 %v1395
  %v1397 = vpop.xlane.xlu0 %1396
  %v1398 = vsel %vm1376, %v1371, -inf
  %1399 = vmax.xlane.f32.xlu0 %v1398
  %v1400 = vpop.xlane.xlu0 %1399
  %v1401 = vsub.f32 %v1049, %v1379
  %v1402 = vsub.f32 %v1095, %v1382
  %v1403 = vsub.f32 %v1141, %v1385
  %v1404 = vsub.f32 %v1187, %v1388
  %v1405 = vsub.f32 %v1233, %v1391
  %v1406 = vsub.f32 %v1279, %v1394
  %v1407 = vsub.f32 %v1325, %v1397
  %v1408 = vsub.f32 %v1371, %v1400
  %v1409 = vmul.f32 %v1401, 1.442695
  %v1410 = vpow.pop %v1409
  %v1411 = vmul.f32 %v1402, 1.442695
  %v1412 = vpow.pop %v1411
  %v1413 = vmul.f32 %v1403, 1.442695
  %v1414 = vpow.pop %v1413
  %v1415 = vmul.f32 %v1404, 1.442695
  %v1416 = vpow.pop %v1415
  %v1417 = vmul.f32 %v1405, 1.442695
  %v1418 = vpow.pop %v1417
  %v1419 = vmul.f32 %v1406, 1.442695
  %v1420 = vpow.pop %v1419
  %v1421 = vmul.f32 %v1407, 1.442695
  %v1422 = vpow.pop %v1421
  %v1423 = vmul.f32 %v1408, 1.442695
  %v1424 = vpow.pop %v1423
  %v1425 = vsel %vm1376, %v1410, 0.0
  %1426 = vadd.xlane.f32.xlu0 %v1425
  %v1427 = vpop.xlane.xlu0 %1426
  %v1428 = vsel %vm1376, %v1412, 0.0
  %1429 = vadd.xlane.f32.xlu0 %v1428
  %v1430 = vpop.xlane.xlu0 %1429
  %v1431 = vsel %vm1376, %v1414, 0.0
  %1432 = vadd.xlane.f32.xlu0 %v1431
  %v1433 = vpop.xlane.xlu0 %1432
  %v1434 = vsel %vm1376, %v1416, 0.0
  %1435 = vadd.xlane.f32.xlu0 %v1434
  %v1436 = vpop.xlane.xlu0 %1435
  %v1437 = vsel %vm1376, %v1418, 0.0
  %1438 = vadd.xlane.f32.xlu0 %v1437
  %v1439 = vpop.xlane.xlu0 %1438
  %v1440 = vsel %vm1376, %v1420, 0.0
  %1441 = vadd.xlane.f32.xlu0 %v1440
  %v1442 = vpop.xlane.xlu0 %1441
  %v1443 = vsel %vm1376, %v1422, 0.0
  %1444 = vadd.xlane.f32.xlu0 %v1443
  %v1445 = vpop.xlane.xlu0 %1444
  %v1446 = vsel %vm1376, %v1424, 0.0
  %1447 = vadd.xlane.f32.xlu0 %v1446
  %v1448 = vpop.xlane.xlu0 %1447
  %v1449 = vrcp.pop %v1427
  %v1450 = vrcp.pop %v1430
  %v1451 = vrcp.pop %v1433
  %v1452 = vrcp.pop %v1436
  %v1453 = vrcp.pop %v1439
  %v1454 = vrcp.pop %v1442
  %v1455 = vrcp.pop %v1445
  %v1456 = vrcp.pop %v1448
  %v1457 = vmul.f32 %v1410, %v1449
  %v1458 = vmul.f32 %v1412, %v1450
  %v1459 = vmul.f32 %v1414, %v1451
  %v1460 = vmul.f32 %v1416, %v1452
  %v1461 = vmul.f32 %v1418, %v1453
  %v1462 = vmul.f32 %v1420, %v1454
  %v1463 = vmul.f32 %v1422, %v1455
  %v1464 = vmul.f32 %v1424, %v1456
  %v1465 = vpack.c.bf16 %v1457, %v1457
  %v1466 = vpack.c.bf16 %v1458, %v1458
  %v1467 = vpack.c.bf16 %v1459, %v1459
  %v1468 = vpack.c.bf16 %v1460, %v1460
  %v1469 = vpack.c.bf16 %v1461, %v1461
  %v1470 = vpack.c.bf16 %v1462, %v1462
  %v1471 = vpack.c.bf16 %v1463, %v1463
  %v1472 = vpack.c.bf16 %v1464, %v1464
  %v1473 = vpack.c.bf16 %v920, %v920
  %v1474 = vpack.c.bf16 %v921, %v921
  %v1475 = vpack.c.bf16 %v922, %v922
  %v1476 = vpack.c.bf16 %v923, %v923
  %v1477 = vpack.c.bf16 %v987, %v987
  %v1478 = vpack.c.bf16 %v988, %v988
  %v1479 = vpack.c.bf16 %v989, %v989
  %v1480 = vpack.c.bf16 %v990, %v990
  %vm1481 = vcmask 56320
  %v1483 = vsel %vm1481, %v1465, 0
  %vm1485 = vcmask 1042432
  %vm1486 = vcmask 1043456
  %v1487 = vsel %vm1485, 4294967295, 65535
  %v1488 = vsel %vm1486, %v1487, 0
  %v1490 = vand.u32 %v1473, %v1488
  %1492 = vmatprep.subr.bf16.mxu0 0
  %1493 = vmatpush1.bf16.msra.mxu0 0
  %1494 = vmatprep.subr.bf16.mxu0 0
  %1495 = vmatpush1.bf16.msra.mxu0 0
  %1496 = vmatprep.subr.bf16.mxu0 0
  %1497 = vmatpush1.bf16.msra.mxu0 0
  %1498 = vmatprep.subr.bf16.mxu0 0
  %1499 = vmatpush1.bf16.msra.mxu0 0
  %1500 = vmatprep.subr.bf16.mxu0 0
  %1501 = vmatpush1.bf16.msra.mxu0 0
  %1502 = vmatprep.subr.bf16.mxu0 0
  %1503 = vmatpush1.bf16.msra.mxu0 0
  %1504 = vmatprep.subr.bf16.mxu0 0
  %1505 = vmatpush1.bf16.msra.mxu0 0
  %1506 = vmatprep.subr.bf16.mxu0 0
  %1507 = vmatpush1.bf16.msra.mxu0 %v1490
  %1508 = vmatprep.subr.bf16.mxu0 0
  %1509 = vmatpush2.bf16.msra.mxu0 0
  %1510 = vmatprep.subr.bf16.mxu0 0
  %1511 = vmatpush2.bf16.msra.mxu0 0
  %1512 = vmatprep.subr.bf16.mxu0 0
  %1513 = vmatpush2.bf16.msra.mxu0 0
  %1514 = vmatprep.subr.bf16.mxu0 0
  %1515 = vmatpush2.bf16.msra.mxu0 0
  %1516 = vmatprep.subr.bf16.mxu0 0
  %1517 = vmatpush2.bf16.msra.mxu0 0
  %1518 = vmatprep.subr.bf16.mxu0 0
  %1519 = vmatpush2.bf16.msra.mxu0 0
  %1520 = vmatprep.subr.bf16.mxu0 0
  %1521 = vmatpush2.bf16.msra.mxu0 0
  %1522 = vmatprep.subr.bf16.mxu0 0
  %1523 = vmatpush2.bf16.msra.mxu0 0
  %1524 = vmatprep.mubr.bf16.mxu0 0
  %1525 = vmatmul.mubr.bf16.gmra.mxu0 %v1483
  %v1526 = vpop.f32.mrf.mxu0
  %v1527 = vadd.f32 0.0, %v1526
  %v1528 = vpop.f32.mrf.mxu0
  %v1529 = vpop.f32.mrf.mxu0
  %v1530 = vpop.f32.mrf.mxu0
  %1531 = vdwg.mxu0
  %v1533 = vsel %vm1481, %v1466, 0
  %v1536 = vand.u32 %v1474, %v1488
  %1538 = vmatprep.subr.bf16.mxu0 0
  %1539 = vmatpush1.bf16.msra.mxu0 0
  %1540 = vmatprep.subr.bf16.mxu0 0
  %1541 = vmatpush1.bf16.msra.mxu0 0
  %1542 = vmatprep.subr.bf16.mxu0 0
  %1543 = vmatpush1.bf16.msra.mxu0 0
  %1544 = vmatprep.subr.bf16.mxu0 0
  %1545 = vmatpush1.bf16.msra.mxu0 0
  %1546 = vmatprep.subr.bf16.mxu0 0
  %1547 = vmatpush1.bf16.msra.mxu0 0
  %1548 = vmatprep.subr.bf16.mxu0 0
  %1549 = vmatpush1.bf16.msra.mxu0 0
  %1550 = vmatprep.subr.bf16.mxu0 0
  %1551 = vmatpush1.bf16.msra.mxu0 0
  %1552 = vmatprep.subr.bf16.mxu0 0
  %1553 = vmatpush1.bf16.msra.mxu0 %v1536
  %1554 = vmatprep.subr.bf16.mxu0 0
  %1555 = vmatpush2.bf16.msra.mxu0 0
  %1556 = vmatprep.subr.bf16.mxu0 0
  %1557 = vmatpush2.bf16.msra.mxu0 0
  %1558 = vmatprep.subr.bf16.mxu0 0
  %1559 = vmatpush2.bf16.msra.mxu0 0
  %1560 = vmatprep.subr.bf16.mxu0 0
  %1561 = vmatpush2.bf16.msra.mxu0 0
  %1562 = vmatprep.subr.bf16.mxu0 0
  %1563 = vmatpush2.bf16.msra.mxu0 0
  %1564 = vmatprep.subr.bf16.mxu0 0
  %1565 = vmatpush2.bf16.msra.mxu0 0
  %1566 = vmatprep.subr.bf16.mxu0 0
  %1567 = vmatpush2.bf16.msra.mxu0 0
  %1568 = vmatprep.subr.bf16.mxu0 0
  %1569 = vmatpush2.bf16.msra.mxu0 0
  %1570 = vmatprep.mubr.bf16.mxu0 0
  %1571 = vmatmul.mubr.bf16.gmra.mxu0 %v1533
  %v1572 = vpop.f32.mrf.mxu0
  %v1573 = vadd.f32 0.0, %v1572
  %v1574 = vpop.f32.mrf.mxu0
  %v1575 = vpop.f32.mrf.mxu0
  %v1576 = vpop.f32.mrf.mxu0
  %1577 = vdwg.mxu0
  %v1579 = vsel %vm1481, %v1467, 0
  %v1582 = vand.u32 %v1475, %v1488
  %1584 = vmatprep.subr.bf16.mxu0 0
  %1585 = vmatpush1.bf16.msra.mxu0 0
  %1586 = vmatprep.subr.bf16.mxu0 0
  %1587 = vmatpush1.bf16.msra.mxu0 0
  %1588 = vmatprep.subr.bf16.mxu0 0
  %1589 = vmatpush1.bf16.msra.mxu0 0
  %1590 = vmatprep.subr.bf16.mxu0 0
  %1591 = vmatpush1.bf16.msra.mxu0 0
  %1592 = vmatprep.subr.bf16.mxu0 0
  %1593 = vmatpush1.bf16.msra.mxu0 0
  %1594 = vmatprep.subr.bf16.mxu0 0
  %1595 = vmatpush1.bf16.msra.mxu0 0
  %1596 = vmatprep.subr.bf16.mxu0 0
  %1597 = vmatpush1.bf16.msra.mxu0 0
  %1598 = vmatprep.subr.bf16.mxu0 0
  %1599 = vmatpush1.bf16.msra.mxu0 %v1582
  %1600 = vmatprep.subr.bf16.mxu0 0
  %1601 = vmatpush2.bf16.msra.mxu0 0
  %1602 = vmatprep.subr.bf16.mxu0 0
  %1603 = vmatpush2.bf16.msra.mxu0 0
  %1604 = vmatprep.subr.bf16.mxu0 0
  %1605 = vmatpush2.bf16.msra.mxu0 0
  %1606 = vmatprep.subr.bf16.mxu0 0
  %1607 = vmatpush2.bf16.msra.mxu0 0
  %1608 = vmatprep.subr.bf16.mxu0 0
  %1609 = vmatpush2.bf16.msra.mxu0 0
  %1610 = vmatprep.subr.bf16.mxu0 0
  %1611 = vmatpush2.bf16.msra.mxu0 0
  %1612 = vmatprep.subr.bf16.mxu0 0
  %1613 = vmatpush2.bf16.msra.mxu0 0
  %1614 = vmatprep.subr.bf16.mxu0 0
  %1615 = vmatpush2.bf16.msra.mxu0 0
  %1616 = vmatprep.mubr.bf16.mxu0 0
  %1617 = vmatmul.mubr.bf16.gmra.mxu0 %v1579
  %v1618 = vpop.f32.mrf.mxu0
  %v1619 = vadd.f32 0.0, %v1618
  %v1620 = vpop.f32.mrf.mxu0
  %v1621 = vpop.f32.mrf.mxu0
  %v1622 = vpop.f32.mrf.mxu0
  %1623 = vdwg.mxu0
  %v1625 = vsel %vm1481, %v1468, 0
  %v1628 = vand.u32 %v1476, %v1488
  %1630 = vmatprep.subr.bf16.mxu0 0
  %1631 = vmatpush1.bf16.msra.mxu0 0
  %1632 = vmatprep.subr.bf16.mxu0 0
  %1633 = vmatpush1.bf16.msra.mxu0 0
  %1634 = vmatprep.subr.bf16.mxu0 0
  %1635 = vmatpush1.bf16.msra.mxu0 0
  %1636 = vmatprep.subr.bf16.mxu0 0
  %1637 = vmatpush1.bf16.msra.mxu0 0
  %1638 = vmatprep.subr.bf16.mxu0 0
  %1639 = vmatpush1.bf16.msra.mxu0 0
  %1640 = vmatprep.subr.bf16.mxu0 0
  %1641 = vmatpush1.bf16.msra.mxu0 0
  %1642 = vmatprep.subr.bf16.mxu0 0
  %1643 = vmatpush1.bf16.msra.mxu0 0
  %1644 = vmatprep.subr.bf16.mxu0 0
  %1645 = vmatpush1.bf16.msra.mxu0 %v1628
  %1646 = vmatprep.subr.bf16.mxu0 0
  %1647 = vmatpush2.bf16.msra.mxu0 0
  %1648 = vmatprep.subr.bf16.mxu0 0
  %1649 = vmatpush2.bf16.msra.mxu0 0
  %1650 = vmatprep.subr.bf16.mxu0 0
  %1651 = vmatpush2.bf16.msra.mxu0 0
  %1652 = vmatprep.subr.bf16.mxu0 0
  %1653 = vmatpush2.bf16.msra.mxu0 0
  %1654 = vmatprep.subr.bf16.mxu0 0
  %1655 = vmatpush2.bf16.msra.mxu0 0
  %1656 = vmatprep.subr.bf16.mxu0 0
  %1657 = vmatpush2.bf16.msra.mxu0 0
  %1658 = vmatprep.subr.bf16.mxu0 0
  %1659 = vmatpush2.bf16.msra.mxu0 0
  %1660 = vmatprep.subr.bf16.mxu0 0
  %1661 = vmatpush2.bf16.msra.mxu0 0
  %1662 = vmatprep.mubr.bf16.mxu0 0
  %1663 = vmatmul.mubr.bf16.gmra.mxu0 %v1625
  %v1664 = vpop.f32.mrf.mxu0
  %v1665 = vadd.f32 0.0, %v1664
  %v1666 = vpop.f32.mrf.mxu0
  %v1667 = vpop.f32.mrf.mxu0
  %v1668 = vpop.f32.mrf.mxu0
  %1669 = vdwg.mxu0
  %v1671 = vsel %vm1481, %v1469, 0
  %v1674 = vand.u32 %v1477, %v1488
  %1676 = vmatprep.subr.bf16.mxu0 0
  %1677 = vmatpush1.bf16.msra.mxu0 0
  %1678 = vmatprep.subr.bf16.mxu0 0
  %1679 = vmatpush1.bf16.msra.mxu0 0
  %1680 = vmatprep.subr.bf16.mxu0 0
  %1681 = vmatpush1.bf16.msra.mxu0 0
  %1682 = vmatprep.subr.bf16.mxu0 0
  %1683 = vmatpush1.bf16.msra.mxu0 0
  %1684 = vmatprep.subr.bf16.mxu0 0
  %1685 = vmatpush1.bf16.msra.mxu0 0
  %1686 = vmatprep.subr.bf16.mxu0 0
  %1687 = vmatpush1.bf16.msra.mxu0 0
  %1688 = vmatprep.subr.bf16.mxu0 0
  %1689 = vmatpush1.bf16.msra.mxu0 0
  %1690 = vmatprep.subr.bf16.mxu0 0
  %1691 = vmatpush1.bf16.msra.mxu0 %v1674
  %1692 = vmatprep.subr.bf16.mxu0 0
  %1693 = vmatpush2.bf16.msra.mxu0 0
  %1694 = vmatprep.subr.bf16.mxu0 0
  %1695 = vmatpush2.bf16.msra.mxu0 0
  %1696 = vmatprep.subr.bf16.mxu0 0
  %1697 = vmatpush2.bf16.msra.mxu0 0
  %1698 = vmatprep.subr.bf16.mxu0 0
  %1699 = vmatpush2.bf16.msra.mxu0 0
  %1700 = vmatprep.subr.bf16.mxu0 0
  %1701 = vmatpush2.bf16.msra.mxu0 0
  %1702 = vmatprep.subr.bf16.mxu0 0
  %1703 = vmatpush2.bf16.msra.mxu0 0
  %1704 = vmatprep.subr.bf16.mxu0 0
  %1705 = vmatpush2.bf16.msra.mxu0 0
  %1706 = vmatprep.subr.bf16.mxu0 0
  %1707 = vmatpush2.bf16.msra.mxu0 0
  %1708 = vmatprep.mubr.bf16.mxu0 0
  %1709 = vmatmul.mubr.bf16.gmra.mxu0 %v1671
  %v1710 = vpop.f32.mrf.mxu0
  %v1711 = vadd.f32 0.0, %v1710
  %v1712 = vpop.f32.mrf.mxu0
  %v1713 = vpop.f32.mrf.mxu0
  %v1714 = vpop.f32.mrf.mxu0
  %1715 = vdwg.mxu0
  %v1717 = vsel %vm1481, %v1470, 0
  %v1720 = vand.u32 %v1478, %v1488
  %1722 = vmatprep.subr.bf16.mxu0 0
  %1723 = vmatpush1.bf16.msra.mxu0 0
  %1724 = vmatprep.subr.bf16.mxu0 0
  %1725 = vmatpush1.bf16.msra.mxu0 0
  %1726 = vmatprep.subr.bf16.mxu0 0
  %1727 = vmatpush1.bf16.msra.mxu0 0
  %1728 = vmatprep.subr.bf16.mxu0 0
  %1729 = vmatpush1.bf16.msra.mxu0 0
  %1730 = vmatprep.subr.bf16.mxu0 0
  %1731 = vmatpush1.bf16.msra.mxu0 0
  %1732 = vmatprep.subr.bf16.mxu0 0
  %1733 = vmatpush1.bf16.msra.mxu0 0
  %1734 = vmatprep.subr.bf16.mxu0 0
  %1735 = vmatpush1.bf16.msra.mxu0 0
  %1736 = vmatprep.subr.bf16.mxu0 0
  %1737 = vmatpush1.bf16.msra.mxu0 %v1720
  %1738 = vmatprep.subr.bf16.mxu0 0
  %1739 = vmatpush2.bf16.msra.mxu0 0
  %1740 = vmatprep.subr.bf16.mxu0 0
  %1741 = vmatpush2.bf16.msra.mxu0 0
  %1742 = vmatprep.subr.bf16.mxu0 0
  %1743 = vmatpush2.bf16.msra.mxu0 0
  %1744 = vmatprep.subr.bf16.mxu0 0
  %1745 = vmatpush2.bf16.msra.mxu0 0
  %1746 = vmatprep.subr.bf16.mxu0 0
  %1747 = vmatpush2.bf16.msra.mxu0 0
  %1748 = vmatprep.subr.bf16.mxu0 0
  %1749 = vmatpush2.bf16.msra.mxu0 0
  %1750 = vmatprep.subr.bf16.mxu0 0
  %1751 = vmatpush2.bf16.msra.mxu0 0
  %1752 = vmatprep.subr.bf16.mxu0 0
  %1753 = vmatpush2.bf16.msra.mxu0 0
  %1754 = vmatprep.mubr.bf16.mxu0 0
  %1755 = vmatmul.mubr.bf16.gmra.mxu0 %v1717
  %v1756 = vpop.f32.mrf.mxu0
  %v1757 = vadd.f32 0.0, %v1756
  %v1758 = vpop.f32.mrf.mxu0
  %v1759 = vpop.f32.mrf.mxu0
  %v1760 = vpop.f32.mrf.mxu0
  %1761 = vdwg.mxu0
  %v1763 = vsel %vm1481, %v1471, 0
  %v1766 = vand.u32 %v1479, %v1488
  %1768 = vmatprep.subr.bf16.mxu0 0
  %1769 = vmatpush1.bf16.msra.mxu0 0
  %1770 = vmatprep.subr.bf16.mxu0 0
  %1771 = vmatpush1.bf16.msra.mxu0 0
  %1772 = vmatprep.subr.bf16.mxu0 0
  %1773 = vmatpush1.bf16.msra.mxu0 0
  %1774 = vmatprep.subr.bf16.mxu0 0
  %1775 = vmatpush1.bf16.msra.mxu0 0
  %1776 = vmatprep.subr.bf16.mxu0 0
  %1777 = vmatpush1.bf16.msra.mxu0 0
  %1778 = vmatprep.subr.bf16.mxu0 0
  %1779 = vmatpush1.bf16.msra.mxu0 0
  %1780 = vmatprep.subr.bf16.mxu0 0
  %1781 = vmatpush1.bf16.msra.mxu0 0
  %1782 = vmatprep.subr.bf16.mxu0 0
  %1783 = vmatpush1.bf16.msra.mxu0 %v1766
  %1784 = vmatprep.subr.bf16.mxu0 0
  %1785 = vmatpush2.bf16.msra.mxu0 0
  %1786 = vmatprep.subr.bf16.mxu0 0
  %1787 = vmatpush2.bf16.msra.mxu0 0
  %1788 = vmatprep.subr.bf16.mxu0 0
  %1789 = vmatpush2.bf16.msra.mxu0 0
  %1790 = vmatprep.subr.bf16.mxu0 0
  %1791 = vmatpush2.bf16.msra.mxu0 0
  %1792 = vmatprep.subr.bf16.mxu0 0
  %1793 = vmatpush2.bf16.msra.mxu0 0
  %1794 = vmatprep.subr.bf16.mxu0 0
  %1795 = vmatpush2.bf16.msra.mxu0 0
  %1796 = vmatprep.subr.bf16.mxu0 0
  %1797 = vmatpush2.bf16.msra.mxu0 0
  %1798 = vmatprep.subr.bf16.mxu0 0
  %1799 = vmatpush2.bf16.msra.mxu0 0
  %1800 = vmatprep.mubr.bf16.mxu0 0
  %1801 = vmatmul.mubr.bf16.gmra.mxu0 %v1763
  %v1802 = vpop.f32.mrf.mxu0
  %v1803 = vadd.f32 0.0, %v1802
  %v1804 = vpop.f32.mrf.mxu0
  %v1805 = vpop.f32.mrf.mxu0
  %v1806 = vpop.f32.mrf.mxu0
  %1807 = vdwg.mxu0
  %v1809 = vsel %vm1481, %v1472, 0
  %v1812 = vand.u32 %v1480, %v1488
  %1814 = vmatprep.subr.bf16.mxu0 0
  %1815 = vmatpush1.bf16.msra.mxu0 0
  %1816 = vmatprep.subr.bf16.mxu0 0
  %1817 = vmatpush1.bf16.msra.mxu0 0
  %1818 = vmatprep.subr.bf16.mxu0 0
  %1819 = vmatpush1.bf16.msra.mxu0 0
  %1820 = vmatprep.subr.bf16.mxu0 0
  %1821 = vmatpush1.bf16.msra.mxu0 0
  %1822 = vmatprep.subr.bf16.mxu0 0
  %1823 = vmatpush1.bf16.msra.mxu0 0
  %1824 = vmatprep.subr.bf16.mxu0 0
  %1825 = vmatpush1.bf16.msra.mxu0 0
  %1826 = vmatprep.subr.bf16.mxu0 0
  %1827 = vmatpush1.bf16.msra.mxu0 0
  %1828 = vmatprep.subr.bf16.mxu0 0
  %1829 = vmatpush1.bf16.msra.mxu0 %v1812
  %1830 = vmatprep.subr.bf16.mxu0 0
  %1831 = vmatpush2.bf16.msra.mxu0 0
  %1832 = vmatprep.subr.bf16.mxu0 0
  %1833 = vmatpush2.bf16.msra.mxu0 0
  %1834 = vmatprep.subr.bf16.mxu0 0
  %1835 = vmatpush2.bf16.msra.mxu0 0
  %1836 = vmatprep.subr.bf16.mxu0 0
  %1837 = vmatpush2.bf16.msra.mxu0 0
  %1838 = vmatprep.subr.bf16.mxu0 0
  %1839 = vmatpush2.bf16.msra.mxu0 0
  %1840 = vmatprep.subr.bf16.mxu0 0
  %1841 = vmatpush2.bf16.msra.mxu0 0
  %1842 = vmatprep.subr.bf16.mxu0 0
  %1843 = vmatpush2.bf16.msra.mxu0 0
  %1844 = vmatprep.subr.bf16.mxu0 0
  %1845 = vmatpush2.bf16.msra.mxu0 0
  %1846 = vmatprep.mubr.bf16.mxu0 0
  %1847 = vmatmul.mubr.bf16.gmra.mxu0 %v1809
  %v1848 = vpop.f32.mrf.mxu0
  %v1849 = vadd.f32 0.0, %v1848
  %v1850 = vpop.f32.mrf.mxu0
  %v1851 = vpop.f32.mrf.mxu0
  %v1852 = vpop.f32.mrf.mxu0
  %1853 = vdwg.mxu0
  %v1854 = vcombine.low %v1527, %v1619
  %v1855 = vcombine.high %v1527, %v1619
  %v1857 = vunpack.c.l.s4 1983009808
  %v1858 = vunpack.c.0.s8 %v1857
  %v1859 = vlaneseq
  %v1860 = vshrl.u32 %v1859, 7
  %v1861 = vsub.s32 %v1858, %v1860
  %v1862 = vrot.slane %v1854, %v1861
  %v1864 = vunpack.c.l.s4 1983009808
  %v1865 = vunpack.c.0.s8 %v1864
  %v1866 = vlaneseq
  %v1867 = vshrl.u32 %v1866, 7
  %v1868 = vsub.s32 %v1865, %v1867
  %v1869 = vrot.slane %v1855, %v1868
  %v1870 = vcombine.low %v1573, %v1665
  %v1871 = vcombine.high %v1573, %v1665
  %v1873 = vunpack.c.l.s4 1983009808
  %v1874 = vunpack.c.0.s8 %v1873
  %v1875 = vlaneseq
  %v1876 = vshrl.u32 %v1875, 7
  %v1877 = vsub.s32 %v1874, %v1876
  %v1878 = vrot.slane %v1870, %v1877
  %v1880 = vunpack.c.l.s4 1983009808
  %v1881 = vunpack.c.0.s8 %v1880
  %v1882 = vlaneseq
  %v1883 = vshrl.u32 %v1882, 7
  %v1884 = vsub.s32 %v1881, %v1883
  %v1885 = vrot.slane %v1871, %v1884
  %v1886 = vcombine.low %v1862, %v1878
  %v1887 = vcombine.high %v1862, %v1878
  %v1889 = vunpack.c.l.s4 1934713408
  %v1890 = vunpack.c.0.s8 %v1889
  %v1891 = vlaneseq
  %v1892 = vshrl.u32 %v1891, 7
  %v1893 = vsub.s32 %v1890, %v1892
  %v1894 = vrot.slane %v1886, %v1893
  %v1896 = vunpack.c.l.s4 1934713408
  %v1897 = vunpack.c.0.s8 %v1896
  %v1898 = vlaneseq
  %v1899 = vshrl.u32 %v1898, 7
  %v1900 = vsub.s32 %v1897, %v1899
  %v1901 = vrot.slane %v1887, %v1900
  %v1902 = vcombine.low %v1869, %v1885
  %v1903 = vcombine.high %v1869, %v1885
  %v1905 = vunpack.c.l.s4 1934713408
  %v1906 = vunpack.c.0.s8 %v1905
  %v1907 = vlaneseq
  %v1908 = vshrl.u32 %v1907, 7
  %v1909 = vsub.s32 %v1906, %v1908
  %v1910 = vrot.slane %v1902, %v1909
  %v1911 = vcombine.high %v1894, 0.0
  %v1912 = vcombine.high %v1901, 0.0
  %v1913 = vcombine.high %v1910, 0.0
  %v1915 = vunpack.c.l.s4 1934713408
  %v1916 = vunpack.c.0.s8 %v1915
  %v1917 = vlaneseq
  %v1918 = vshrl.u32 %v1917, 7
  %v1919 = vsub.s32 %v1916, %v1918
  %v1920 = vrot.slane %v1903, %v1919
  %v1921 = vcombine.low %v1711, %v1803
  %v1922 = vcombine.high %v1711, %v1803
  %v1924 = vunpack.c.l.s4 1983009808
  %v1925 = vunpack.c.0.s8 %v1924
  %v1926 = vlaneseq
  %v1927 = vshrl.u32 %v1926, 7
  %v1928 = vsub.s32 %v1925, %v1927
  %v1929 = vrot.slane %v1921, %v1928
  %v1931 = vunpack.c.l.s4 1983009808
  %v1932 = vunpack.c.0.s8 %v1931
  %v1933 = vlaneseq
  %v1934 = vshrl.u32 %v1933, 7
  %v1935 = vsub.s32 %v1932, %v1934
  %v1936 = vrot.slane %v1922, %v1935
  %v1937 = vcombine.low %v1757, %v1849
  %v1938 = vcombine.high %v1757, %v1849
  %v1940 = vunpack.c.l.s4 1983009808
  %v1941 = vunpack.c.0.s8 %v1940
  %v1942 = vlaneseq
  %v1943 = vshrl.u32 %v1942, 7
  %v1944 = vsub.s32 %v1941, %v1943
  %v1945 = vrot.slane %v1937, %v1944
  %v1947 = vunpack.c.l.s4 1983009808
  %v1948 = vunpack.c.0.s8 %v1947
  %v1949 = vlaneseq
  %v1950 = vshrl.u32 %v1949, 7
  %v1951 = vsub.s32 %v1948, %v1950
  %v1952 = vrot.slane %v1938, %v1951
  %v1953 = vcombine.low %v1929, %v1945
  %v1954 = vcombine.high %v1929, %v1945
  %v1956 = vunpack.c.l.s4 1934713408
  %v1957 = vunpack.c.0.s8 %v1956
  %v1958 = vlaneseq
  %v1959 = vshrl.u32 %v1958, 7
  %v1960 = vsub.s32 %v1957, %v1959
  %v1961 = vrot.slane %v1953, %v1960
  %v1963 = vunpack.c.l.s4 1934713408
  %v1964 = vunpack.c.0.s8 %v1963
  %v1965 = vlaneseq
  %v1966 = vshrl.u32 %v1965, 7
  %v1967 = vsub.s32 %v1964, %v1966
  %v1968 = vrot.slane %v1954, %v1967
  %v1969 = vcombine.low %v1936, %v1952
  %v1970 = vcombine.high %v1936, %v1952
  %v1972 = vunpack.c.l.s4 1934713408
  %v1973 = vunpack.c.0.s8 %v1972
  %v1974 = vlaneseq
  %v1975 = vshrl.u32 %v1974, 7
  %v1976 = vsub.s32 %v1973, %v1975
  %v1977 = vrot.slane %v1969, %v1976
  %v1978 = vcombine.high %v1961, 0.0
  %v1979 = vcombine.high %v1968, 0.0
  %v1980 = vcombine.low %v1894, %v1901
  %v1982 = vunpack.c.l.s4 1983009808
  %v1983 = vunpack.c.0.s8 %v1982
  %v1984 = vlaneseq
  %v1985 = vshrl.u32 %v1984, 7
  %v1986 = vsub.s32 %v1983, %v1985
  %v1987 = vrot.slane %v1980, %v1986
  %v1988 = vcombine.low %v1911, %v1912
  %v1990 = vunpack.c.l.s4 1983009808
  %v1991 = vunpack.c.0.s8 %v1990
  %v1992 = vlaneseq
  %v1993 = vshrl.u32 %v1992, 7
  %v1994 = vsub.s32 %v1991, %v1993
  %v1995 = vrot.slane %v1988, %v1994
  %v1996 = vcombine.low %v1910, %v1920
  %v1998 = vunpack.c.l.s4 1983009808
  %v1999 = vunpack.c.0.s8 %v1998
  %v2000 = vlaneseq
  %v2001 = vshrl.u32 %v2000, 7
  %v2002 = vsub.s32 %v1999, %v2001
  %v2003 = vrot.slane %v1996, %v2002
  %v2004 = vcombine.low %v1913, %v1961
  %v2006 = vunpack.c.l.s4 1983009808
  %v2007 = vunpack.c.0.s8 %v2006
  %v2008 = vlaneseq
  %v2009 = vshrl.u32 %v2008, 7
  %v2010 = vsub.s32 %v2007, %v2009
  %v2011 = vrot.slane %v2004, %v2010
  %v2012 = vcombine.low %v1987, %v1995
  %v2013 = vcombine.high %v1987, %v1995
  %v2015 = vunpack.c.l.s4 1934713408
  %v2016 = vunpack.c.0.s8 %v2015
  %v2017 = vlaneseq
  %v2018 = vshrl.u32 %v2017, 7
  %v2019 = vsub.s32 %v2016, %v2018
  %v2020 = vrot.slane %v2012, %v2019
  %v2022 = vunpack.c.l.s4 1934713408
  %v2023 = vunpack.c.0.s8 %v2022
  %v2024 = vlaneseq
  %v2025 = vshrl.u32 %v2024, 7
  %v2026 = vsub.s32 %v2023, %v2025
  %v2027 = vrot.slane %v2013, %v2026
  %v2028 = vcombine.low %v2003, %v2011
  %v2029 = vcombine.high %v2003, %v2011
  %v2031 = vunpack.c.l.s4 1934713408
  %v2032 = vunpack.c.0.s8 %v2031
  %v2033 = vlaneseq
  %v2034 = vshrl.u32 %v2033, 7
  %v2035 = vsub.s32 %v2032, %v2034
  %v2036 = vrot.slane %v2028, %v2035
  %v2038 = vunpack.c.l.s4 1934713408
  %v2039 = vunpack.c.0.s8 %v2038
  %v2040 = vlaneseq
  %v2041 = vshrl.u32 %v2040, 7
  %v2042 = vsub.s32 %v2039, %v2041
  %v2043 = vrot.slane %v2029, %v2042
  %v2044 = vcombine.low %v2020, %v2036
  %v2045 = vcombine.high %v2020, %v2036
  %v2046 = vcombine.low %v2027, %v2043
  %v2047 = vcombine.high %v2027, %v2043
  %v2048 = vcombine.low %v1978, %v1979
  %v2050 = vunpack.c.l.s4 1983009808
  %v2051 = vunpack.c.0.s8 %v2050
  %v2052 = vlaneseq
  %v2053 = vshrl.u32 %v2052, 7
  %v2054 = vsub.s32 %v2051, %v2053
  %v2055 = vrot.slane %v2048, %v2054
  %v2056 = vcombine.low %v1968, %v1977
  %v2058 = vunpack.c.l.s4 1983009808
  %v2059 = vunpack.c.0.s8 %v2058
  %v2060 = vlaneseq
  %v2061 = vshrl.u32 %v2060, 7
  %v2062 = vsub.s32 %v2059, %v2061
  %v2063 = vrot.slane %v2056, %v2062
  %v2064 = vcombine.high %v1977, 0.0
  %v2066 = vunpack.c.l.s4 1983009808
  %v2067 = vunpack.c.0.s8 %v2066
  %v2068 = vlaneseq
  %v2069 = vshrl.u32 %v2068, 7
  %v2070 = vsub.s32 %v2067, %v2069
  %v2071 = vrot.slane %v2064, %v2070
  %v2073 = vunpack.c.l.s4 1934713408
  %v2074 = vunpack.c.0.s8 %v2073
  %v2075 = vlaneseq
  %v2076 = vshrl.u32 %v2075, 7
  %v2077 = vsub.s32 %v2074, %v2076
  %v2078 = vrot.slane %v1970, %v2077
  %v2080 = vunpack.c.l.s4 1983009808
  %v2081 = vunpack.c.0.s8 %v2080
  %v2082 = vlaneseq
  %v2083 = vshrl.u32 %v2082, 7
  %v2084 = vsub.s32 %v2081, %v2083
  %v2085 = vrot.slane %v2078, %v2084
  %v2086 = vcombine.low %v2055, %v2063
  %v2087 = vcombine.high %v2055, %v2063
  %v2089 = vunpack.c.l.s4 1934713408
  %v2090 = vunpack.c.0.s8 %v2089
  %v2091 = vlaneseq
  %v2092 = vshrl.u32 %v2091, 7
  %v2093 = vsub.s32 %v2090, %v2092
  %v2094 = vrot.slane %v2086, %v2093
  %v2096 = vunpack.c.l.s4 1934713408
  %v2097 = vunpack.c.0.s8 %v2096
  %v2098 = vlaneseq
  %v2099 = vshrl.u32 %v2098, 7
  %v2100 = vsub.s32 %v2097, %v2099
  %v2101 = vrot.slane %v2087, %v2100
  %v2102 = vcombine.low %v2071, %v2085
  %v2103 = vcombine.high %v2071, %v2085
  %v2105 = vunpack.c.l.s4 1934713408
  %v2106 = vunpack.c.0.s8 %v2105
  %v2107 = vlaneseq
  %v2108 = vshrl.u32 %v2107, 7
  %v2109 = vsub.s32 %v2106, %v2108
  %v2110 = vrot.slane %v2102, %v2109
  %v2112 = vunpack.c.l.s4 1934713408
  %v2113 = vunpack.c.0.s8 %v2112
  %v2114 = vlaneseq
  %v2115 = vshrl.u32 %v2114, 7
  %v2116 = vsub.s32 %v2113, %v2115
  %v2117 = vrot.slane %v2103, %v2116
  %v2118 = vcombine.low %v2094, %v2110
  %v2119 = vcombine.high %v2094, %v2110
  %v2120 = vcombine.low %v2101, %v2117
  %v2121 = vcombine.high %v2101, %v2117
  %2124 = vrot.lane.b32.xlu0 %v2045, 8
  %v2125 = vpop.permute.xlu0 %2124
  %2126 = vrot.lane.b32.xlu0 %v2119, 8
  %v2127 = vpop.permute.xlu0 %2126
  %2132 = vrot.lane.b32.xlu0 %v2046, 16
  %v2133 = vpop.permute.xlu0 %2132
  %2134 = vrot.lane.b32.xlu0 %v2120, 16
  %v2135 = vpop.permute.xlu0 %2134
  %2140 = vrot.lane.b32.xlu0 %v2047, 24
  %v2141 = vpop.permute.xlu0 %2140
  %2142 = vrot.lane.b32.xlu0 %v2121, 24
  %v2143 = vpop.permute.xlu0 %2142
  %v2146 = vsel %vm1007, %v2044, %v2125
  %v2147 = vsel %vm1007, %v2118, %v2127
  %vm2148 = vcmask 130048
  %v2149 = vsel %vm2148, %v2146, %v2133
  %v2150 = vsel %vm2148, %v2147, %v2135
  %vm2151 = vcmask 195584
  %v2152 = vsel %vm2151, %v2149, %v2141
  %v2153 = vsel %vm2151, %v2150, %v2143
  %v2154 = vpack.c.bf16 %v2153, %v2152
  %v2155 = vld [vmem:[%s3] sm:$0xf]
  %v2156 = vld [vmem:[%s3 + $0x4] sm:$0xf]
  %v2157 = vld [vmem:[%s3 + $0x8] sm:$0xf]
  %v2158 = vld [vmem:[%s3 + $0xc] sm:$0xf]
  %v2159 = vld [vmem:[%s4] sm:$0x1]
  %v2161 = vlaneseq
  %v2162 = vshrl.u32 %v2161, 7
  %v2163 = vsub.s32 0, %v2162
  %v2164 = vrot.slane %v2159, %v2163
  %v2170 = vunpack.c.l.b16 %v2155
  %v2171 = vunpack.c.l.b16 %v2156
  %v2172 = vunpack.c.l.b16 %v2157
  %v2173 = vunpack.c.l.b16 %v2158
  %v2174 = vpack.c.b16 %v2171, %v2170
  %v2175 = vpack.c.b16 %v2173, %v2172
  %v2179 = vsel %vm79, %v2154, 0
  %2181 = vmatprep.subr.bf16.mxu0 0
  %2182 = vmatpush1.bf16.msra.mxu0 0
  %2183 = vmatprep.subr.bf16.mxu0 0
  %2184 = vmatpush1.bf16.msra.mxu0 0
  %2185 = vmatprep.subr.bf16.mxu0 0
  %2186 = vmatpush1.bf16.msra.mxu0 0
  %2187 = vmatprep.subr.bf16.mxu0 0
  %2188 = vmatpush1.bf16.msra.mxu0 0
  %2189 = vmatprep.subr.bf16.mxu0 0
  %2190 = vmatpush1.bf16.msra.mxu0 0
  %2191 = vmatprep.subr.bf16.mxu0 0
  %2192 = vmatpush1.bf16.msra.mxu0 0
  %2193 = vmatprep.subr.bf16.mxu0 0
  %2194 = vmatpush1.bf16.msra.mxu0 %v2175
  %2195 = vmatprep.subr.bf16.mxu0 0
  %2196 = vmatpush1.bf16.msra.mxu0 %v2174
  %2197 = vmatprep.subr.bf16.mxu0 0
  %2198 = vmatpush2.bf16.msra.mxu0 0
  %2199 = vmatprep.subr.bf16.mxu0 0
  %2200 = vmatpush2.bf16.msra.mxu0 0
  %2201 = vmatprep.subr.bf16.mxu0 0
  %2202 = vmatpush2.bf16.msra.mxu0 0
  %2203 = vmatprep.subr.bf16.mxu0 0
  %2204 = vmatpush2.bf16.msra.mxu0 0
  %2205 = vmatprep.subr.bf16.mxu0 0
  %2206 = vmatpush2.bf16.msra.mxu0 0
  %2207 = vmatprep.subr.bf16.mxu0 0
  %2208 = vmatpush2.bf16.msra.mxu0 0
  %2209 = vmatprep.subr.bf16.mxu0 0
  %2210 = vmatpush2.bf16.msra.mxu0 0
  %2211 = vmatprep.subr.bf16.mxu0 0
  %2212 = vmatpush2.bf16.msra.mxu0 0
  %2213 = vmatprep.mubr.bf16.mxu0 0
  %2214 = vmatmul.mubr.bf16.gmra.mxu0 %v2179
  %v2215 = vpop.f32.mrf.mxu0
  %v2216 = vadd.f32 %v2164, %v2215
  %v2217 = vpop.f32.mrf.mxu0
  %v2218 = vpop.f32.mrf.mxu0
  %v2219 = vadd.f32 %v2164, %v2218
  %v2220 = vpop.f32.mrf.mxu0
  %2221 = vdwg.mxu0
  %v2222 = vadd.f32 %v53, %v2216
  %v2223 = vadd.f32 %v54, %v2219
  %v2224 = vld [vmem:[%s5] sm:$0x1]
  %v2225 = vld [vmem:[%s6] sm:$0x1]
  %v2226 = vsel %vm79, %v2222, 0.0
  %2227 = vadd.xlane.f32.xlu0 %v2226
  %v2228 = vpop.xlane.xlu0 %2227
  %vm2229 = vcmask 259072
  %v2230 = vsel %vm2229, %v2223, 0.0
  %2231 = vadd.xlane.f32.xlu0 %v2230
  %v2232 = vpop.xlane.xlu0 %2231
  %v2233 = vrcp.pop 32.0
  %v2234 = vmul.f32 %v2228, %v2233
  %v2235 = vmul.f32 %v2232, %v2233
  %v2236 = vmul.f32 %v2222, %v2222
  %v2237 = vmul.f32 %v2223, %v2223
  %v2238 = vsel %vm79, %v2236, 0.0
  %2239 = vadd.xlane.f32.xlu0 %v2238
  %v2240 = vpop.xlane.xlu0 %2239
  %v2241 = vsel %vm2229, %v2237, 0.0
  %2242 = vadd.xlane.f32.xlu0 %v2241
  %v2243 = vpop.xlane.xlu0 %2242
  %v2244 = vmul.f32 %v2240, %v2233
  %v2245 = vmul.f32 %v2243, %v2233
  %v2246 = vsub.f32 %v2222, %v2234
  %v2247 = vsub.f32 %v2223, %v2235
  %v2248 = vmul.f32 %v2234, %v2234
  %v2249 = vmul.f32 %v2235, %v2235
  %v2250 = vsub.f32 %v2244, %v2248
  %v2251 = vsub.f32 %v2245, %v2249
  %v2252 = vadd.f32 %v2250, 1e-05
  %v2253 = vadd.f32 %v2251, 1e-05
  %v2254 = vrsqrt.pop %v2252
  %v2255 = vrsqrt.pop %v2253
  %v2256 = vmul.f32 %v2246, %v2254
  %v2257 = vmul.f32 %v2247, %v2255
  %v2259 = vlaneseq
  %v2260 = vshrl.u32 %v2259, 7
  %v2261 = vsub.s32 0, %v2260
  %v2262 = vrot.slane %v2224, %v2261
  %v2264 = vmul.f32 %v2256, %v2262
  %v2265 = vmul.f32 %v2257, %v2262
  %v2267 = vlaneseq
  %v2268 = vshrl.u32 %v2267, 7
  %v2269 = vsub.s32 0, %v2268
  %v2270 = vrot.slane %v2225, %v2269
  %v2272 = vadd.f32 %v2264, %v2270
  %v2273 = vadd.f32 %v2265, %v2270
  %v2274 = vpack.c.bf16 %v2273, %v2272
  %v2275 = vld [vmem:[%s7] sm:$0xff]
  %v2276 = vld [vmem:[%s7 + $0x8] sm:$0xff]
  %v2277 = vld [vmem:[%s7 + $0x10] sm:$0xff]
  %v2278 = vld [vmem:[%s7 + $0x18] sm:$0xff]
  %v2279 = vld [vmem:[%s7 + $0x20] sm:$0xff]
  %v2280 = vld [vmem:[%s7 + $0x28] sm:$0xff]
  %v2281 = vld [vmem:[%s7 + $0x30] sm:$0xff]
  %v2282 = vld [vmem:[%s7 + $0x38] sm:$0xff]
  %v2283 = vld [vmem:[%s7 + $0x40] sm:$0xff]
  %v2284 = vld [vmem:[%s7 + $0x48] sm:$0xff]
  %v2285 = vld [vmem:[%s7 + $0x50] sm:$0xff]
  %v2286 = vld [vmem:[%s7 + $0x58] sm:$0xff]
  %v2287 = vld [vmem:[%s7 + $0x60] sm:$0xff]
  %v2288 = vld [vmem:[%s7 + $0x68] sm:$0xff]
  %v2289 = vld [vmem:[%s7 + $0x70] sm:$0xff]
  %v2290 = vld [vmem:[%s7 + $0x78] sm:$0xff]
  %v2291 = vld [vmem:[%s7 + $0x80] sm:$0xff]
  %v2292 = vld [vmem:[%s7 + $0x88] sm:$0xff]
  %v2293 = vld [vmem:[%s7 + $0x90] sm:$0xff]
  %v2294 = vld [vmem:[%s7 + $0x98] sm:$0xff]
  %v2295 = vld [vmem:[%s7 + $0xa0] sm:$0xff]
  %v2296 = vld [vmem:[%s7 + $0xa8] sm:$0xff]
  %v2297 = vld [vmem:[%s7 + $0xb0] sm:$0xff]
  %v2298 = vld [vmem:[%s7 + $0xb8] sm:$0xff]
  %v2299 = vld [vmem:[%s7 + $0xc0] sm:$0xff]
  %v2300 = vld [vmem:[%s7 + $0xc8] sm:$0xff]
  %v2301 = vld [vmem:[%s7 + $0xd0] sm:$0xff]
  %v2302 = vld [vmem:[%s7 + $0xd8] sm:$0xff]
  %v2303 = vld [vmem:[%s7 + $0xe0] sm:$0xff]
  %v2304 = vld [vmem:[%s7 + $0xe8] sm:$0xff]
  %v2305 = vld [vmem:[%s7 + $0xf0] sm:$0xff]
  %v2306 = vld [vmem:[%s7 + $0xf8] sm:$0xff]
  %v2307 = vld [vmem:[%s8] sm:$0xff]
  %v2308 = vld [vmem:[%s8 + $0x8] sm:$0xff]
  %v2311 = vlaneseq
  %v2312 = vshrl.u32 %v2311, 7
  %v2313 = vsub.s32 0, %v2312
  %v2314 = vrot.slane %v2307, %v2313
  %v2315 = vlaneseq
  %v2316 = vshrl.u32 %v2315, 7
  %v2317 = vsub.s32 1, %v2316
  %v2318 = vrot.slane %v2307, %v2317
  %v2319 = vlaneseq
  %v2320 = vshrl.u32 %v2319, 7
  %v2321 = vsub.s32 2, %v2320
  %v2322 = vrot.slane %v2307, %v2321
  %v2323 = vlaneseq
  %v2324 = vshrl.u32 %v2323, 7
  %v2325 = vsub.s32 3, %v2324
  %v2326 = vrot.slane %v2307, %v2325
  %v2327 = vlaneseq
  %v2328 = vshrl.u32 %v2327, 7
  %v2329 = vsub.s32 4, %v2328
  %v2330 = vrot.slane %v2307, %v2329
  %v2331 = vlaneseq
  %v2332 = vshrl.u32 %v2331, 7
  %v2333 = vsub.s32 5, %v2332
  %v2334 = vrot.slane %v2307, %v2333
  %v2335 = vlaneseq
  %v2336 = vshrl.u32 %v2335, 7
  %v2337 = vsub.s32 6, %v2336
  %v2338 = vrot.slane %v2307, %v2337
  %v2339 = vlaneseq
  %v2340 = vshrl.u32 %v2339, 7
  %v2341 = vsub.s32 7, %v2340
  %v2342 = vrot.slane %v2307, %v2341
  %v2343 = vlaneseq
  %v2344 = vshrl.u32 %v2343, 7
  %v2345 = vsub.s32 0, %v2344
  %v2346 = vrot.slane %v2308, %v2345
  %v2347 = vlaneseq
  %v2348 = vshrl.u32 %v2347, 7
  %v2349 = vsub.s32 1, %v2348
  %v2350 = vrot.slane %v2308, %v2349
  %v2351 = vlaneseq
  %v2352 = vshrl.u32 %v2351, 7
  %v2353 = vsub.s32 2, %v2352
  %v2354 = vrot.slane %v2308, %v2353
  %v2355 = vlaneseq
  %v2356 = vshrl.u32 %v2355, 7
  %v2357 = vsub.s32 3, %v2356
  %v2358 = vrot.slane %v2308, %v2357
  %v2359 = vlaneseq
  %v2360 = vshrl.u32 %v2359, 7
  %v2361 = vsub.s32 4, %v2360
  %v2362 = vrot.slane %v2308, %v2361
  %v2363 = vlaneseq
  %v2364 = vshrl.u32 %v2363, 7
  %v2365 = vsub.s32 5, %v2364
  %v2366 = vrot.slane %v2308, %v2365
  %v2367 = vlaneseq
  %v2368 = vshrl.u32 %v2367, 7
  %v2369 = vsub.s32 6, %v2368
  %v2370 = vrot.slane %v2308, %v2369
  %v2371 = vlaneseq
  %v2372 = vshrl.u32 %v2371, 7
  %v2373 = vsub.s32 7, %v2372
  %v2374 = vrot.slane %v2308, %v2373
  %v2423 = vunpack.c.l.b16 %v2275
  %v2424 = vunpack.c.h.b16 %v2275
  %v2425 = vunpack.c.l.b16 %v2276
  %v2426 = vunpack.c.h.b16 %v2276
  %v2427 = vunpack.c.l.b16 %v2277
  %v2428 = vunpack.c.h.b16 %v2277
  %v2429 = vunpack.c.l.b16 %v2278
  %v2430 = vunpack.c.h.b16 %v2278
  %v2431 = vunpack.c.l.b16 %v2279
  %v2432 = vunpack.c.h.b16 %v2279
  %v2433 = vunpack.c.l.b16 %v2280
  %v2434 = vunpack.c.h.b16 %v2280
  %v2435 = vunpack.c.l.b16 %v2281
  %v2436 = vunpack.c.h.b16 %v2281
  %v2437 = vunpack.c.l.b16 %v2282
  %v2438 = vunpack.c.h.b16 %v2282
  %v2439 = vunpack.c.l.b16 %v2283
  %v2440 = vunpack.c.h.b16 %v2283
  %v2441 = vunpack.c.l.b16 %v2284
  %v2442 = vunpack.c.h.b16 %v2284
  %v2443 = vunpack.c.l.b16 %v2285
  %v2444 = vunpack.c.h.b16 %v2285
  %v2445 = vunpack.c.l.b16 %v2286
  %v2446 = vunpack.c.h.b16 %v2286
  %v2447 = vunpack.c.l.b16 %v2287
  %v2448 = vunpack.c.h.b16 %v2287
  %v2449 = vunpack.c.l.b16 %v2288
  %v2450 = vunpack.c.h.b16 %v2288
  %v2451 = vunpack.c.l.b16 %v2289
  %v2452 = vunpack.c.h.b16 %v2289
  %v2453 = vunpack.c.l.b16 %v2290
  %v2454 = vunpack.c.h.b16 %v2290
  %v2455 = vunpack.c.l.b16 %v2291
  %v2456 = vunpack.c.h.b16 %v2291
  %v2457 = vunpack.c.l.b16 %v2292
  %v2458 = vunpack.c.h.b16 %v2292
  %v2459 = vunpack.c.l.b16 %v2293
  %v2460 = vunpack.c.h.b16 %v2293
  %v2461 = vunpack.c.l.b16 %v2294
  %v2462 = vunpack.c.h.b16 %v2294
  %v2463 = vunpack.c.l.b16 %v2295
  %v2464 = vunpack.c.h.b16 %v2295
  %v2465 = vunpack.c.l.b16 %v2296
  %v2466 = vunpack.c.h.b16 %v2296
  %v2467 = vunpack.c.l.b16 %v2297
  %v2468 = vunpack.c.h.b16 %v2297
  %v2469 = vunpack.c.l.b16 %v2298
  %v2470 = vunpack.c.h.b16 %v2298
  %v2471 = vunpack.c.l.b16 %v2299
  %v2472 = vunpack.c.h.b16 %v2299
  %v2473 = vunpack.c.l.b16 %v2300
  %v2474 = vunpack.c.h.b16 %v2300
  %v2475 = vunpack.c.l.b16 %v2301
  %v2476 = vunpack.c.h.b16 %v2301
  %v2477 = vunpack.c.l.b16 %v2302
  %v2478 = vunpack.c.h.b16 %v2302
  %v2479 = vunpack.c.l.b16 %v2303
  %v2480 = vunpack.c.h.b16 %v2303
  %v2481 = vunpack.c.l.b16 %v2304
  %v2482 = vunpack.c.h.b16 %v2304
  %v2483 = vunpack.c.l.b16 %v2305
  %v2484 = vunpack.c.h.b16 %v2305
  %v2485 = vunpack.c.l.b16 %v2306
  %v2486 = vunpack.c.h.b16 %v2306
  %v2487 = vpack.c.b16 %v2439, %v2423
  %v2488 = vpack.c.b16 %v2440, %v2424
  %v2489 = vpack.c.b16 %v2441, %v2425
  %v2490 = vpack.c.b16 %v2442, %v2426
  %v2491 = vpack.c.b16 %v2443, %v2427
  %v2492 = vpack.c.b16 %v2444, %v2428
  %v2493 = vpack.c.b16 %v2445, %v2429
  %v2494 = vpack.c.b16 %v2446, %v2430
  %v2495 = vpack.c.b16 %v2447, %v2431
  %v2496 = vpack.c.b16 %v2448, %v2432
  %v2497 = vpack.c.b16 %v2449, %v2433
  %v2498 = vpack.c.b16 %v2450, %v2434
  %v2499 = vpack.c.b16 %v2451, %v2435
  %v2500 = vpack.c.b16 %v2452, %v2436
  %v2501 = vpack.c.b16 %v2453, %v2437
  %v2502 = vpack.c.b16 %v2454, %v2438
  %v2503 = vpack.c.b16 %v2471, %v2455
  %v2504 = vpack.c.b16 %v2472, %v2456
  %v2505 = vpack.c.b16 %v2473, %v2457
  %v2506 = vpack.c.b16 %v2474, %v2458
  %v2507 = vpack.c.b16 %v2475, %v2459
  %v2508 = vpack.c.b16 %v2476, %v2460
  %v2509 = vpack.c.b16 %v2477, %v2461
  %v2510 = vpack.c.b16 %v2478, %v2462
  %v2511 = vpack.c.b16 %v2479, %v2463
  %v2512 = vpack.c.b16 %v2480, %v2464
  %v2513 = vpack.c.b16 %v2481, %v2465
  %v2514 = vpack.c.b16 %v2482, %v2466
  %v2515 = vpack.c.b16 %v2483, %v2467
  %v2516 = vpack.c.b16 %v2484, %v2468
  %v2517 = vpack.c.b16 %v2485, %v2469
  %v2518 = vpack.c.b16 %v2486, %v2470
  %v2552 = vsel %vm79, %v2274, 0
  %2554 = vmatprep.subr.bf16.mxu0 0
  %2555 = vmatpush1.bf16.msra.mxu0 0
  %2556 = vmatprep.subr.bf16.mxu0 0
  %2557 = vmatpush1.bf16.msra.mxu0 0
  %2558 = vmatprep.subr.bf16.mxu0 0
  %2559 = vmatpush1.bf16.msra.mxu0 0
  %2560 = vmatprep.subr.bf16.mxu0 0
  %2561 = vmatpush1.bf16.msra.mxu0 0
  %2562 = vmatprep.subr.bf16.mxu0 0
  %2563 = vmatpush1.bf16.msra.mxu0 0
  %2564 = vmatprep.subr.bf16.mxu0 0
  %2565 = vmatpush1.bf16.msra.mxu0 0
  %2566 = vmatprep.subr.bf16.mxu0 %v2504
  %2567 = vmatpush1.bf16.msra.mxu0 %v2503
  %2568 = vmatprep.subr.bf16.mxu0 %v2488
  %2569 = vmatpush1.bf16.msra.mxu0 %v2487
  %2570 = vmatprep.subr.bf16.mxu0 0
  %2571 = vmatpush2.bf16.msra.mxu0 0
  %2572 = vmatprep.subr.bf16.mxu0 0
  %2573 = vmatpush2.bf16.msra.mxu0 0
  %2574 = vmatprep.subr.bf16.mxu0 0
  %2575 = vmatpush2.bf16.msra.mxu0 0
  %2576 = vmatprep.subr.bf16.mxu0 0
  %2577 = vmatpush2.bf16.msra.mxu0 0
  %2578 = vmatprep.subr.bf16.mxu0 0
  %2579 = vmatpush2.bf16.msra.mxu0 0
  %2580 = vmatprep.subr.bf16.mxu0 0
  %2581 = vmatpush2.bf16.msra.mxu0 0
  %2582 = vmatprep.subr.bf16.mxu0 0
  %2583 = vmatpush2.bf16.msra.mxu0 0
  %2584 = vmatprep.subr.bf16.mxu0 0
  %2585 = vmatpush2.bf16.msra.mxu0 0
  %2586 = vmatprep.mubr.bf16.mxu0 0
  %2587 = vmatmul.mubr.bf16.gmra.mxu0 %v2552
  %v2588 = vpop.f32.mrf.mxu0
  %v2589 = vadd.f32 %v2314, %v2588
  %v2590 = vpop.f32.mrf.mxu0
  %v2591 = vadd.f32 %v2318, %v2590
  %v2592 = vpop.f32.mrf.mxu0
  %v2593 = vadd.f32 %v2314, %v2592
  %v2594 = vpop.f32.mrf.mxu0
  %v2595 = vadd.f32 %v2318, %v2594
  %2596 = vdwg.mxu0
  %2597 = vmatprep.subr.bf16.mxu0 0
  %2598 = vmatpush1.bf16.msra.mxu0 0
  %2599 = vmatprep.subr.bf16.mxu0 0
  %2600 = vmatpush1.bf16.msra.mxu0 0
  %2601 = vmatprep.subr.bf16.mxu0 0
  %2602 = vmatpush1.bf16.msra.mxu0 0
  %2603 = vmatprep.subr.bf16.mxu0 0
  %2604 = vmatpush1.bf16.msra.mxu0 0
  %2605 = vmatprep.subr.bf16.mxu0 0
  %2606 = vmatpush1.bf16.msra.mxu0 0
  %2607 = vmatprep.subr.bf16.mxu0 0
  %2608 = vmatpush1.bf16.msra.mxu0 0
  %2609 = vmatprep.subr.bf16.mxu0 %v2506
  %2610 = vmatpush1.bf16.msra.mxu0 %v2505
  %2611 = vmatprep.subr.bf16.mxu0 %v2490
  %2612 = vmatpush1.bf16.msra.mxu0 %v2489
  %2613 = vmatprep.subr.bf16.mxu0 0
  %2614 = vmatpush2.bf16.msra.mxu0 0
  %2615 = vmatprep.subr.bf16.mxu0 0
  %2616 = vmatpush2.bf16.msra.mxu0 0
  %2617 = vmatprep.subr.bf16.mxu0 0
  %2618 = vmatpush2.bf16.msra.mxu0 0
  %2619 = vmatprep.subr.bf16.mxu0 0
  %2620 = vmatpush2.bf16.msra.mxu0 0
  %2621 = vmatprep.subr.bf16.mxu0 0
  %2622 = vmatpush2.bf16.msra.mxu0 0
  %2623 = vmatprep.subr.bf16.mxu0 0
  %2624 = vmatpush2.bf16.msra.mxu0 0
  %2625 = vmatprep.subr.bf16.mxu0 0
  %2626 = vmatpush2.bf16.msra.mxu0 0
  %2627 = vmatprep.subr.bf16.mxu0 0
  %2628 = vmatpush2.bf16.msra.mxu0 0
  %2629 = vmatprep.mubr.bf16.mxu0 0
  %2630 = vmatmul.mubr.bf16.gmra.mxu0 %v2552
  %v2631 = vpop.f32.mrf.mxu0
  %v2632 = vadd.f32 %v2322, %v2631
  %v2633 = vpop.f32.mrf.mxu0
  %v2634 = vadd.f32 %v2326, %v2633
  %v2635 = vpop.f32.mrf.mxu0
  %v2636 = vadd.f32 %v2322, %v2635
  %v2637 = vpop.f32.mrf.mxu0
  %v2638 = vadd.f32 %v2326, %v2637
  %2639 = vdwg.mxu0
  %2640 = vmatprep.subr.bf16.mxu0 0
  %2641 = vmatpush1.bf16.msra.mxu0 0
  %2642 = vmatprep.subr.bf16.mxu0 0
  %2643 = vmatpush1.bf16.msra.mxu0 0
  %2644 = vmatprep.subr.bf16.mxu0 0
  %2645 = vmatpush1.bf16.msra.mxu0 0
  %2646 = vmatprep.subr.bf16.mxu0 0
  %2647 = vmatpush1.bf16.msra.mxu0 0
  %2648 = vmatprep.subr.bf16.mxu0 0
  %2649 = vmatpush1.bf16.msra.mxu0 0
  %2650 = vmatprep.subr.bf16.mxu0 0
  %2651 = vmatpush1.bf16.msra.mxu0 0
  %2652 = vmatprep.subr.bf16.mxu0 %v2508
  %2653 = vmatpush1.bf16.msra.mxu0 %v2507
  %2654 = vmatprep.subr.bf16.mxu0 %v2492
  %2655 = vmatpush1.bf16.msra.mxu0 %v2491
  %2656 = vmatprep.subr.bf16.mxu0 0
  %2657 = vmatpush2.bf16.msra.mxu0 0
  %2658 = vmatprep.subr.bf16.mxu0 0
  %2659 = vmatpush2.bf16.msra.mxu0 0
  %2660 = vmatprep.subr.bf16.mxu0 0
  %2661 = vmatpush2.bf16.msra.mxu0 0
  %2662 = vmatprep.subr.bf16.mxu0 0
  %2663 = vmatpush2.bf16.msra.mxu0 0
  %2664 = vmatprep.subr.bf16.mxu0 0
  %2665 = vmatpush2.bf16.msra.mxu0 0
  %2666 = vmatprep.subr.bf16.mxu0 0
  %2667 = vmatpush2.bf16.msra.mxu0 0
  %2668 = vmatprep.subr.bf16.mxu0 0
  %2669 = vmatpush2.bf16.msra.mxu0 0
  %2670 = vmatprep.subr.bf16.mxu0 0
  %2671 = vmatpush2.bf16.msra.mxu0 0
  %2672 = vmatprep.mubr.bf16.mxu0 0
  %2673 = vmatmul.mubr.bf16.gmra.mxu0 %v2552
  %v2674 = vpop.f32.mrf.mxu0
  %v2675 = vadd.f32 %v2330, %v2674
  %v2676 = vpop.f32.mrf.mxu0
  %v2677 = vadd.f32 %v2334, %v2676
  %v2678 = vpop.f32.mrf.mxu0
  %v2679 = vadd.f32 %v2330, %v2678
  %v2680 = vpop.f32.mrf.mxu0
  %v2681 = vadd.f32 %v2334, %v2680
  %2682 = vdwg.mxu0
  %2683 = vmatprep.subr.bf16.mxu0 0
  %2684 = vmatpush1.bf16.msra.mxu0 0
  %2685 = vmatprep.subr.bf16.mxu0 0
  %2686 = vmatpush1.bf16.msra.mxu0 0
  %2687 = vmatprep.subr.bf16.mxu0 0
  %2688 = vmatpush1.bf16.msra.mxu0 0
  %2689 = vmatprep.subr.bf16.mxu0 0
  %2690 = vmatpush1.bf16.msra.mxu0 0
  %2691 = vmatprep.subr.bf16.mxu0 0
  %2692 = vmatpush1.bf16.msra.mxu0 0
  %2693 = vmatprep.subr.bf16.mxu0 0
  %2694 = vmatpush1.bf16.msra.mxu0 0
  %2695 = vmatprep.subr.bf16.mxu0 %v2510
  %2696 = vmatpush1.bf16.msra.mxu0 %v2509
  %2697 = vmatprep.subr.bf16.mxu0 %v2494
  %2698 = vmatpush1.bf16.msra.mxu0 %v2493
  %2699 = vmatprep.subr.bf16.mxu0 0
  %2700 = vmatpush2.bf16.msra.mxu0 0
  %2701 = vmatprep.subr.bf16.mxu0 0
  %2702 = vmatpush2.bf16.msra.mxu0 0
  %2703 = vmatprep.subr.bf16.mxu0 0
  %2704 = vmatpush2.bf16.msra.mxu0 0
  %2705 = vmatprep.subr.bf16.mxu0 0
  %2706 = vmatpush2.bf16.msra.mxu0 0
  %2707 = vmatprep.subr.bf16.mxu0 0
  %2708 = vmatpush2.bf16.msra.mxu0 0
  %2709 = vmatprep.subr.bf16.mxu0 0
  %2710 = vmatpush2.bf16.msra.mxu0 0
  %2711 = vmatprep.subr.bf16.mxu0 0
  %2712 = vmatpush2.bf16.msra.mxu0 0
  %2713 = vmatprep.subr.bf16.mxu0 0
  %2714 = vmatpush2.bf16.msra.mxu0 0
  %2715 = vmatprep.mubr.bf16.mxu0 0
  %2716 = vmatmul.mubr.bf16.gmra.mxu0 %v2552
  %v2717 = vpop.f32.mrf.mxu0
  %v2718 = vadd.f32 %v2338, %v2717
  %v2719 = vpop.f32.mrf.mxu0
  %v2720 = vadd.f32 %v2342, %v2719
  %v2721 = vpop.f32.mrf.mxu0
  %v2722 = vadd.f32 %v2338, %v2721
  %v2723 = vpop.f32.mrf.mxu0
  %v2724 = vadd.f32 %v2342, %v2723
  %2725 = vdwg.mxu0
  %2726 = vmatprep.subr.bf16.mxu0 0
  %2727 = vmatpush1.bf16.msra.mxu0 0
  %2728 = vmatprep.subr.bf16.mxu0 0
  %2729 = vmatpush1.bf16.msra.mxu0 0
  %2730 = vmatprep.subr.bf16.mxu0 0
  %2731 = vmatpush1.bf16.msra.mxu0 0
  %2732 = vmatprep.subr.bf16.mxu0 0
  %2733 = vmatpush1.bf16.msra.mxu0 0
  %2734 = vmatprep.subr.bf16.mxu0 0
  %2735 = vmatpush1.bf16.msra.mxu0 0
  %2736 = vmatprep.subr.bf16.mxu0 0
  %2737 = vmatpush1.bf16.msra.mxu0 0
  %2738 = vmatprep.subr.bf16.mxu0 %v2512
  %2739 = vmatpush1.bf16.msra.mxu0 %v2511
  %2740 = vmatprep.subr.bf16.mxu0 %v2496
  %2741 = vmatpush1.bf16.msra.mxu0 %v2495
  %2742 = vmatprep.subr.bf16.mxu0 0
  %2743 = vmatpush2.bf16.msra.mxu0 0
  %2744 = vmatprep.subr.bf16.mxu0 0
  %2745 = vmatpush2.bf16.msra.mxu0 0
  %2746 = vmatprep.subr.bf16.mxu0 0
  %2747 = vmatpush2.bf16.msra.mxu0 0
  %2748 = vmatprep.subr.bf16.mxu0 0
  %2749 = vmatpush2.bf16.msra.mxu0 0
  %2750 = vmatprep.subr.bf16.mxu0 0
  %2751 = vmatpush2.bf16.msra.mxu0 0
  %2752 = vmatprep.subr.bf16.mxu0 0
  %2753 = vmatpush2.bf16.msra.mxu0 0
  %2754 = vmatprep.subr.bf16.mxu0 0
  %2755 = vmatpush2.bf16.msra.mxu0 0
  %2756 = vmatprep.subr.bf16.mxu0 0
  %2757 = vmatpush2.bf16.msra.mxu0 0
  %2758 = vmatprep.mubr.bf16.mxu0 0
  %2759 = vmatmul.mubr.bf16.gmra.mxu0 %v2552
  %v2760 = vpop.f32.mrf.mxu0
  %v2761 = vadd.f32 %v2346, %v2760
  %v2762 = vpop.f32.mrf.mxu0
  %v2763 = vadd.f32 %v2350, %v2762
  %v2764 = vpop.f32.mrf.mxu0
  %v2765 = vadd.f32 %v2346, %v2764
  %v2766 = vpop.f32.mrf.mxu0
  %v2767 = vadd.f32 %v2350, %v2766
  %2768 = vdwg.mxu0
  %2769 = vmatprep.subr.bf16.mxu0 0
  %2770 = vmatpush1.bf16.msra.mxu0 0
  %2771 = vmatprep.subr.bf16.mxu0 0
  %2772 = vmatpush1.bf16.msra.mxu0 0
  %2773 = vmatprep.subr.bf16.mxu0 0
  %2774 = vmatpush1.bf16.msra.mxu0 0
  %2775 = vmatprep.subr.bf16.mxu0 0
  %2776 = vmatpush1.bf16.msra.mxu0 0
  %2777 = vmatprep.subr.bf16.mxu0 0
  %2778 = vmatpush1.bf16.msra.mxu0 0
  %2779 = vmatprep.subr.bf16.mxu0 0
  %2780 = vmatpush1.bf16.msra.mxu0 0
  %2781 = vmatprep.subr.bf16.mxu0 %v2514
  %2782 = vmatpush1.bf16.msra.mxu0 %v2513
  %2783 = vmatprep.subr.bf16.mxu0 %v2498
  %2784 = vmatpush1.bf16.msra.mxu0 %v2497
  %2785 = vmatprep.subr.bf16.mxu0 0
  %2786 = vmatpush2.bf16.msra.mxu0 0
  %2787 = vmatprep.subr.bf16.mxu0 0
  %2788 = vmatpush2.bf16.msra.mxu0 0
  %2789 = vmatprep.subr.bf16.mxu0 0
  %2790 = vmatpush2.bf16.msra.mxu0 0
  %2791 = vmatprep.subr.bf16.mxu0 0
  %2792 = vmatpush2.bf16.msra.mxu0 0
  %2793 = vmatprep.subr.bf16.mxu0 0
  %2794 = vmatpush2.bf16.msra.mxu0 0
  %2795 = vmatprep.subr.bf16.mxu0 0
  %2796 = vmatpush2.bf16.msra.mxu0 0
  %2797 = vmatprep.subr.bf16.mxu0 0
  %2798 = vmatpush2.bf16.msra.mxu0 0
  %2799 = vmatprep.subr.bf16.mxu0 0
  %2800 = vmatpush2.bf16.msra.mxu0 0
  %2801 = vmatprep.mubr.bf16.mxu0 0
  %2802 = vmatmul.mubr.bf16.gmra.mxu0 %v2552
  %v2803 = vpop.f32.mrf.mxu0
  %v2804 = vadd.f32 %v2354, %v2803
  %v2805 = vpop.f32.mrf.mxu0
  %v2806 = vadd.f32 %v2358, %v2805
  %v2807 = vpop.f32.mrf.mxu0
  %v2808 = vadd.f32 %v2354, %v2807
  %v2809 = vpop.f32.mrf.mxu0
  %v2810 = vadd.f32 %v2358, %v2809
  %2811 = vdwg.mxu0
  %2812 = vmatprep.subr.bf16.mxu0 0
  %2813 = vmatpush1.bf16.msra.mxu0 0
  %2814 = vmatprep.subr.bf16.mxu0 0
  %2815 = vmatpush1.bf16.msra.mxu0 0
  %2816 = vmatprep.subr.bf16.mxu0 0
  %2817 = vmatpush1.bf16.msra.mxu0 0
  %2818 = vmatprep.subr.bf16.mxu0 0
  %2819 = vmatpush1.bf16.msra.mxu0 0
  %2820 = vmatprep.subr.bf16.mxu0 0
  %2821 = vmatpush1.bf16.msra.mxu0 0
  %2822 = vmatprep.subr.bf16.mxu0 0
  %2823 = vmatpush1.bf16.msra.mxu0 0
  %2824 = vmatprep.subr.bf16.mxu0 %v2516
  %2825 = vmatpush1.bf16.msra.mxu0 %v2515
  %2826 = vmatprep.subr.bf16.mxu0 %v2500
  %2827 = vmatpush1.bf16.msra.mxu0 %v2499
  %2828 = vmatprep.subr.bf16.mxu0 0
  %2829 = vmatpush2.bf16.msra.mxu0 0
  %2830 = vmatprep.subr.bf16.mxu0 0
  %2831 = vmatpush2.bf16.msra.mxu0 0
  %2832 = vmatprep.subr.bf16.mxu0 0
  %2833 = vmatpush2.bf16.msra.mxu0 0
  %2834 = vmatprep.subr.bf16.mxu0 0
  %2835 = vmatpush2.bf16.msra.mxu0 0
  %2836 = vmatprep.subr.bf16.mxu0 0
  %2837 = vmatpush2.bf16.msra.mxu0 0
  %2838 = vmatprep.subr.bf16.mxu0 0
  %2839 = vmatpush2.bf16.msra.mxu0 0
  %2840 = vmatprep.subr.bf16.mxu0 0
  %2841 = vmatpush2.bf16.msra.mxu0 0
  %2842 = vmatprep.subr.bf16.mxu0 0
  %2843 = vmatpush2.bf16.msra.mxu0 0
  %2844 = vmatprep.mubr.bf16.mxu0 0
  %2845 = vmatmul.mubr.bf16.gmra.mxu0 %v2552
  %v2846 = vpop.f32.mrf.mxu0
  %v2847 = vadd.f32 %v2362, %v2846
  %v2848 = vpop.f32.mrf.mxu0
  %v2849 = vadd.f32 %v2366, %v2848
  %v2850 = vpop.f32.mrf.mxu0
  %v2851 = vadd.f32 %v2362, %v2850
  %v2852 = vpop.f32.mrf.mxu0
  %v2853 = vadd.f32 %v2366, %v2852
  %2854 = vdwg.mxu0
  %2855 = vmatprep.subr.bf16.mxu0 0
  %2856 = vmatpush1.bf16.msra.mxu0 0
  %2857 = vmatprep.subr.bf16.mxu0 0
  %2858 = vmatpush1.bf16.msra.mxu0 0
  %2859 = vmatprep.subr.bf16.mxu0 0
  %2860 = vmatpush1.bf16.msra.mxu0 0
  %2861 = vmatprep.subr.bf16.mxu0 0
  %2862 = vmatpush1.bf16.msra.mxu0 0
  %2863 = vmatprep.subr.bf16.mxu0 0
  %2864 = vmatpush1.bf16.msra.mxu0 0
  %2865 = vmatprep.subr.bf16.mxu0 0
  %2866 = vmatpush1.bf16.msra.mxu0 0
  %2867 = vmatprep.subr.bf16.mxu0 %v2518
  %2868 = vmatpush1.bf16.msra.mxu0 %v2517
  %2869 = vmatprep.subr.bf16.mxu0 %v2502
  %2870 = vmatpush1.bf16.msra.mxu0 %v2501
  %2871 = vmatprep.subr.bf16.mxu0 0
  %2872 = vmatpush2.bf16.msra.mxu0 0
  %2873 = vmatprep.subr.bf16.mxu0 0
  %2874 = vmatpush2.bf16.msra.mxu0 0
  %2875 = vmatprep.subr.bf16.mxu0 0
  %2876 = vmatpush2.bf16.msra.mxu0 0
  %2877 = vmatprep.subr.bf16.mxu0 0
  %2878 = vmatpush2.bf16.msra.mxu0 0
  %2879 = vmatprep.subr.bf16.mxu0 0
  %2880 = vmatpush2.bf16.msra.mxu0 0
  %2881 = vmatprep.subr.bf16.mxu0 0
  %2882 = vmatpush2.bf16.msra.mxu0 0
  %2883 = vmatprep.subr.bf16.mxu0 0
  %2884 = vmatpush2.bf16.msra.mxu0 0
  %2885 = vmatprep.subr.bf16.mxu0 0
  %2886 = vmatpush2.bf16.msra.mxu0 0
  %2887 = vmatprep.mubr.bf16.mxu0 0
  %2888 = vmatmul.mubr.bf16.gmra.mxu0 %v2552
  %v2889 = vpop.f32.mrf.mxu0
  %v2890 = vadd.f32 %v2370, %v2889
  %v2891 = vpop.f32.mrf.mxu0
  %v2892 = vadd.f32 %v2374, %v2891
  %v2893 = vpop.f32.mrf.mxu0
  %v2894 = vadd.f32 %v2370, %v2893
  %v2895 = vpop.f32.mrf.mxu0
  %v2896 = vadd.f32 %v2374, %v2895
  %2897 = vdwg.mxu0
  %v2898 = vmax.f32 %v2589, 0.0
  %v2899 = vmax.f32 %v2591, 0.0
  %v2900 = vmax.f32 %v2632, 0.0
  %v2901 = vmax.f32 %v2634, 0.0
  %v2902 = vmax.f32 %v2675, 0.0
  %v2903 = vmax.f32 %v2677, 0.0
  %v2904 = vmax.f32 %v2718, 0.0
  %v2905 = vmax.f32 %v2720, 0.0
  %v2906 = vmax.f32 %v2761, 0.0
  %v2907 = vmax.f32 %v2763, 0.0
  %v2908 = vmax.f32 %v2804, 0.0
  %v2909 = vmax.f32 %v2806, 0.0
  %v2910 = vmax.f32 %v2847, 0.0
  %v2911 = vmax.f32 %v2849, 0.0
  %v2912 = vmax.f32 %v2890, 0.0
  %v2913 = vmax.f32 %v2892, 0.0
  %v2914 = vmax.f32 %v2593, 0.0
  %v2915 = vmax.f32 %v2595, 0.0
  %v2916 = vmax.f32 %v2636, 0.0
  %v2917 = vmax.f32 %v2638, 0.0
  %v2918 = vmax.f32 %v2679, 0.0
  %v2919 = vmax.f32 %v2681, 0.0
  %v2920 = vmax.f32 %v2722, 0.0
  %v2921 = vmax.f32 %v2724, 0.0
  %v2922 = vmax.f32 %v2765, 0.0
  %v2923 = vmax.f32 %v2767, 0.0
  %v2924 = vmax.f32 %v2808, 0.0
  %v2925 = vmax.f32 %v2810, 0.0
  %v2926 = vmax.f32 %v2851, 0.0
  %v2927 = vmax.f32 %v2853, 0.0
  %v2928 = vmax.f32 %v2894, 0.0
  %v2929 = vmax.f32 %v2896, 0.0
  %v2930 = vpack.c.bf16 %v2914, %v2898
  %v2931 = vpack.c.bf16 %v2915, %v2899
  %v2932 = vpack.c.bf16 %v2916, %v2900
  %v2933 = vpack.c.bf16 %v2917, %v2901
  %v2934 = vpack.c.bf16 %v2918, %v2902
  %v2935 = vpack.c.bf16 %v2919, %v2903
  %v2936 = vpack.c.bf16 %v2920, %v2904
  %v2937 = vpack.c.bf16 %v2921, %v2905
  %v2938 = vpack.c.bf16 %v2922, %v2906
  %v2939 = vpack.c.bf16 %v2923, %v2907
  %v2940 = vpack.c.bf16 %v2924, %v2908
  %v2941 = vpack.c.bf16 %v2925, %v2909
  %v2942 = vpack.c.bf16 %v2926, %v2910
  %v2943 = vpack.c.bf16 %v2927, %v2911
  %v2944 = vpack.c.bf16 %v2928, %v2912
  %v2945 = vpack.c.bf16 %v2929, %v2913
  %v2946 = vld [vmem:[%s9] sm:$0xf]
  %v2947 = vld [vmem:[%s9 + $0x4] sm:$0xf]
  %v2948 = vld [vmem:[%s9 + $0x8] sm:$0xf]
  %v2949 = vld [vmem:[%s9 + $0xc] sm:$0xf]
  %v2950 = vld [vmem:[%s9 + $0x10] sm:$0xf]
  %v2951 = vld [vmem:[%s9 + $0x14] sm:$0xf]
  %v2952 = vld [vmem:[%s9 + $0x18] sm:$0xf]
  %v2953 = vld [vmem:[%s9 + $0x1c] sm:$0xf]
  %v2954 = vld [vmem:[%s9 + $0x20] sm:$0xf]
  %v2955 = vld [vmem:[%s9 + $0x24] sm:$0xf]
  %v2956 = vld [vmem:[%s9 + $0x28] sm:$0xf]
  %v2957 = vld [vmem:[%s9 + $0x2c] sm:$0xf]
  %v2958 = vld [vmem:[%s9 + $0x30] sm:$0xf]
  %v2959 = vld [vmem:[%s9 + $0x34] sm:$0xf]
  %v2960 = vld [vmem:[%s9 + $0x38] sm:$0xf]
  %v2961 = vld [vmem:[%s9 + $0x3c] sm:$0xf]
  %v2962 = vld [vmem:[%s9 + $0x40] sm:$0xf]
  %v2963 = vld [vmem:[%s9 + $0x44] sm:$0xf]
  %v2964 = vld [vmem:[%s9 + $0x48] sm:$0xf]
  %v2965 = vld [vmem:[%s9 + $0x4c] sm:$0xf]
  %v2966 = vld [vmem:[%s9 + $0x50] sm:$0xf]
  %v2967 = vld [vmem:[%s9 + $0x54] sm:$0xf]
  %v2968 = vld [vmem:[%s9 + $0x58] sm:$0xf]
  %v2969 = vld [vmem:[%s9 + $0x5c] sm:$0xf]
  %v2970 = vld [vmem:[%s9 + $0x60] sm:$0xf]
  %v2971 = vld [vmem:[%s9 + $0x64] sm:$0xf]
  %v2972 = vld [vmem:[%s9 + $0x68] sm:$0xf]
  %v2973 = vld [vmem:[%s9 + $0x6c] sm:$0xf]
  %v2974 = vld [vmem:[%s9 + $0x70] sm:$0xf]
  %v2975 = vld [vmem:[%s9 + $0x74] sm:$0xf]
  %v2976 = vld [vmem:[%s9 + $0x78] sm:$0xf]
  %v2977 = vld [vmem:[%s9 + $0x7c] sm:$0xf]
  %v2978 = vld [vmem:[%s9 + $0x80] sm:$0xf]
  %v2979 = vld [vmem:[%s9 + $0x84] sm:$0xf]
  %v2980 = vld [vmem:[%s9 + $0x88] sm:$0xf]
  %v2981 = vld [vmem:[%s9 + $0x8c] sm:$0xf]
  %v2982 = vld [vmem:[%s9 + $0x90] sm:$0xf]
  %v2983 = vld [vmem:[%s9 + $0x94] sm:$0xf]
  %v2984 = vld [vmem:[%s9 + $0x98] sm:$0xf]
  %v2985 = vld [vmem:[%s9 + $0x9c] sm:$0xf]
  %v2986 = vld [vmem:[%s9 + $0xa0] sm:$0xf]
  %v2987 = vld [vmem:[%s9 + $0xa4] sm:$0xf]
  %v2988 = vld [vmem:[%s9 + $0xa8] sm:$0xf]
  %v2989 = vld [vmem:[%s9 + $0xac] sm:$0xf]
  %v2990 = vld [vmem:[%s9 + $0xb0] sm:$0xf]
  %v2991 = vld [vmem:[%s9 + $0xb4] sm:$0xf]
  %v2992 = vld [vmem:[%s9 + $0xb8] sm:$0xf]
  %v2993 = vld [vmem:[%s9 + $0xbc] sm:$0xf]
  %v2994 = vld [vmem:[%s9 + $0xc0] sm:$0xf]
  %v2995 = vld [vmem:[%s9 + $0xc4] sm:$0xf]
  %v2996 = vld [vmem:[%s9 + $0xc8] sm:$0xf]
  %v2997 = vld [vmem:[%s9 + $0xcc] sm:$0xf]
  %v2998 = vld [vmem:[%s9 + $0xd0] sm:$0xf]
  %v2999 = vld [vmem:[%s9 + $0xd4] sm:$0xf]
  %v3000 = vld [vmem:[%s9 + $0xd8] sm:$0xf]
  %v3001 = vld [vmem:[%s9 + $0xdc] sm:$0xf]
  %v3002 = vld [vmem:[%s9 + $0xe0] sm:$0xf]
  %v3003 = vld [vmem:[%s9 + $0xe4] sm:$0xf]
  %v3004 = vld [vmem:[%s9 + $0xe8] sm:$0xf]
  %v3005 = vld [vmem:[%s9 + $0xec] sm:$0xf]
  %v3006 = vld [vmem:[%s9 + $0xf0] sm:$0xf]
  %v3007 = vld [vmem:[%s9 + $0xf4] sm:$0xf]
  %v3008 = vld [vmem:[%s9 + $0xf8] sm:$0xf]
  %v3009 = vld [vmem:[%s9 + $0xfc] sm:$0xf]
  %v3010 = vld [vmem:[%s9 + $0x100] sm:$0xf]
  %v3011 = vld [vmem:[%s9 + $0x104] sm:$0xf]
  %v3012 = vld [vmem:[%s9 + $0x108] sm:$0xf]
  %v3013 = vld [vmem:[%s9 + $0x10c] sm:$0xf]
  %v3014 = vld [vmem:[%s9 + $0x110] sm:$0xf]
  %v3015 = vld [vmem:[%s9 + $0x114] sm:$0xf]
  %v3016 = vld [vmem:[%s9 + $0x118] sm:$0xf]
  %v3017 = vld [vmem:[%s9 + $0x11c] sm:$0xf]
  %v3018 = vld [vmem:[%s9 + $0x120] sm:$0xf]
  %v3019 = vld [vmem:[%s9 + $0x124] sm:$0xf]
  %v3020 = vld [vmem:[%s9 + $0x128] sm:$0xf]
  %v3021 = vld [vmem:[%s9 + $0x12c] sm:$0xf]
  %v3022 = vld [vmem:[%s9 + $0x130] sm:$0xf]
  %v3023 = vld [vmem:[%s9 + $0x134] sm:$0xf]
  %v3024 = vld [vmem:[%s9 + $0x138] sm:$0xf]
  %v3025 = vld [vmem:[%s9 + $0x13c] sm:$0xf]
  %v3026 = vld [vmem:[%s9 + $0x140] sm:$0xf]
  %v3027 = vld [vmem:[%s9 + $0x144] sm:$0xf]
  %v3028 = vld [vmem:[%s9 + $0x148] sm:$0xf]
  %v3029 = vld [vmem:[%s9 + $0x14c] sm:$0xf]
  %v3030 = vld [vmem:[%s9 + $0x150] sm:$0xf]
  %v3031 = vld [vmem:[%s9 + $0x154] sm:$0xf]
  %v3032 = vld [vmem:[%s9 + $0x158] sm:$0xf]
  %v3033 = vld [vmem:[%s9 + $0x15c] sm:$0xf]
  %v3034 = vld [vmem:[%s9 + $0x160] sm:$0xf]
  %v3035 = vld [vmem:[%s9 + $0x164] sm:$0xf]
  %v3036 = vld [vmem:[%s9 + $0x168] sm:$0xf]
  %v3037 = vld [vmem:[%s9 + $0x16c] sm:$0xf]
  %v3038 = vld [vmem:[%s9 + $0x170] sm:$0xf]
  %v3039 = vld [vmem:[%s9 + $0x174] sm:$0xf]
  %v3040 = vld [vmem:[%s9 + $0x178] sm:$0xf]
  %v3041 = vld [vmem:[%s9 + $0x17c] sm:$0xf]
  %v3042 = vld [vmem:[%s9 + $0x180] sm:$0xf]
  %v3043 = vld [vmem:[%s9 + $0x184] sm:$0xf]
  %v3044 = vld [vmem:[%s9 + $0x188] sm:$0xf]
  %v3045 = vld [vmem:[%s9 + $0x18c] sm:$0xf]
  %v3046 = vld [vmem:[%s9 + $0x190] sm:$0xf]
  %v3047 = vld [vmem:[%s9 + $0x194] sm:$0xf]
  %v3048 = vld [vmem:[%s9 + $0x198] sm:$0xf]
  %v3049 = vld [vmem:[%s9 + $0x19c] sm:$0xf]
  %v3050 = vld [vmem:[%s9 + $0x1a0] sm:$0xf]
  %v3051 = vld [vmem:[%s9 + $0x1a4] sm:$0xf]
  %v3052 = vld [vmem:[%s9 + $0x1a8] sm:$0xf]
  %v3053 = vld [vmem:[%s9 + $0x1ac] sm:$0xf]
  %v3054 = vld [vmem:[%s9 + $0x1b0] sm:$0xf]
  %v3055 = vld [vmem:[%s9 + $0x1b4] sm:$0xf]
  %v3056 = vld [vmem:[%s9 + $0x1b8] sm:$0xf]
  %v3057 = vld [vmem:[%s9 + $0x1bc] sm:$0xf]
  %v3058 = vld [vmem:[%s9 + $0x1c0] sm:$0xf]
  %v3059 = vld [vmem:[%s9 + $0x1c4] sm:$0xf]
  %v3060 = vld [vmem:[%s9 + $0x1c8] sm:$0xf]
  %v3061 = vld [vmem:[%s9 + $0x1cc] sm:$0xf]
  %v3062 = vld [vmem:[%s9 + $0x1d0] sm:$0xf]
  %v3063 = vld [vmem:[%s9 + $0x1d4] sm:$0xf]
  %v3064 = vld [vmem:[%s9 + $0x1d8] sm:$0xf]
  %v3065 = vld [vmem:[%s9 + $0x1dc] sm:$0xf]
  %v3066 = vld [vmem:[%s9 + $0x1e0] sm:$0xf]
  %v3067 = vld [vmem:[%s9 + $0x1e4] sm:$0xf]
  %v3068 = vld [vmem:[%s9 + $0x1e8] sm:$0xf]
  %v3069 = vld [vmem:[%s9 + $0x1ec] sm:$0xf]
  %v3070 = vld [vmem:[%s9 + $0x1f0] sm:$0xf]
  %v3071 = vld [vmem:[%s9 + $0x1f4] sm:$0xf]
  %v3072 = vld [vmem:[%s9 + $0x1f8] sm:$0xf]
  %v3073 = vld [vmem:[%s9 + $0x1fc] sm:$0xf]
  %v3074 = vld [vmem:[%s9 + $0x200] sm:$0xf]
  %v3075 = vld [vmem:[%s9 + $0x204] sm:$0xf]
  %v3076 = vld [vmem:[%s9 + $0x208] sm:$0xf]
  %v3077 = vld [vmem:[%s9 + $0x20c] sm:$0xf]
  %v3078 = vld [vmem:[%s9 + $0x210] sm:$0xf]
  %v3079 = vld [vmem:[%s9 + $0x214] sm:$0xf]
  %v3080 = vld [vmem:[%s9 + $0x218] sm:$0xf]
  %v3081 = vld [vmem:[%s9 + $0x21c] sm:$0xf]
  %v3082 = vld [vmem:[%s9 + $0x220] sm:$0xf]
  %v3083 = vld [vmem:[%s9 + $0x224] sm:$0xf]
  %v3084 = vld [vmem:[%s9 + $0x228] sm:$0xf]
  %v3085 = vld [vmem:[%s9 + $0x22c] sm:$0xf]
  %v3086 = vld [vmem:[%s9 + $0x230] sm:$0xf]
  %v3087 = vld [vmem:[%s9 + $0x234] sm:$0xf]
  %v3088 = vld [vmem:[%s9 + $0x238] sm:$0xf]
  %v3089 = vld [vmem:[%s9 + $0x23c] sm:$0xf]
  %v3090 = vld [vmem:[%s9 + $0x240] sm:$0xf]
  %v3091 = vld [vmem:[%s9 + $0x244] sm:$0xf]
  %v3092 = vld [vmem:[%s9 + $0x248] sm:$0xf]
  %v3093 = vld [vmem:[%s9 + $0x24c] sm:$0xf]
  %v3094 = vld [vmem:[%s9 + $0x250] sm:$0xf]
  %v3095 = vld [vmem:[%s9 + $0x254] sm:$0xf]
  %v3096 = vld [vmem:[%s9 + $0x258] sm:$0xf]
  %v3097 = vld [vmem:[%s9 + $0x25c] sm:$0xf]
  %v3098 = vld [vmem:[%s9 + $0x260] sm:$0xf]
  %v3099 = vld [vmem:[%s9 + $0x264] sm:$0xf]
  %v3100 = vld [vmem:[%s9 + $0x268] sm:$0xf]
  %v3101 = vld [vmem:[%s9 + $0x26c] sm:$0xf]
  %v3102 = vld [vmem:[%s9 + $0x270] sm:$0xf]
  %v3103 = vld [vmem:[%s9 + $0x274] sm:$0xf]
  %v3104 = vld [vmem:[%s9 + $0x278] sm:$0xf]
  %v3105 = vld [vmem:[%s9 + $0x27c] sm:$0xf]
  %v3106 = vld [vmem:[%s9 + $0x280] sm:$0xf]
  %v3107 = vld [vmem:[%s9 + $0x284] sm:$0xf]
  %v3108 = vld [vmem:[%s9 + $0x288] sm:$0xf]
  %v3109 = vld [vmem:[%s9 + $0x28c] sm:$0xf]
  %v3110 = vld [vmem:[%s9 + $0x290] sm:$0xf]
  %v3111 = vld [vmem:[%s9 + $0x294] sm:$0xf]
  %v3112 = vld [vmem:[%s9 + $0x298] sm:$0xf]
  %v3113 = vld [vmem:[%s9 + $0x29c] sm:$0xf]
  %v3114 = vld [vmem:[%s9 + $0x2a0] sm:$0xf]
  %v3115 = vld [vmem:[%s9 + $0x2a4] sm:$0xf]
  %v3116 = vld [vmem:[%s9 + $0x2a8] sm:$0xf]
  %v3117 = vld [vmem:[%s9 + $0x2ac] sm:$0xf]
  %v3118 = vld [vmem:[%s9 + $0x2b0] sm:$0xf]
  %v3119 = vld [vmem:[%s9 + $0x2b4] sm:$0xf]
  %v3120 = vld [vmem:[%s9 + $0x2b8] sm:$0xf]
  %v3121 = vld [vmem:[%s9 + $0x2bc] sm:$0xf]
  %v3122 = vld [vmem:[%s9 + $0x2c0] sm:$0xf]
  %v3123 = vld [vmem:[%s9 + $0x2c4] sm:$0xf]
  %v3124 = vld [vmem:[%s9 + $0x2c8] sm:$0xf]
  %v3125 = vld [vmem:[%s9 + $0x2cc] sm:$0xf]
  %v3126 = vld [vmem:[%s9 + $0x2d0] sm:$0xf]
  %v3127 = vld [vmem:[%s9 + $0x2d4] sm:$0xf]
  %v3128 = vld [vmem:[%s9 + $0x2d8] sm:$0xf]
  %v3129 = vld [vmem:[%s9 + $0x2dc] sm:$0xf]
  %v3130 = vld [vmem:[%s9 + $0x2e0] sm:$0xf]
  %v3131 = vld [vmem:[%s9 + $0x2e4] sm:$0xf]
  %v3132 = vld [vmem:[%s9 + $0x2e8] sm:$0xf]
  %v3133 = vld [vmem:[%s9 + $0x2ec] sm:$0xf]
  %v3134 = vld [vmem:[%s9 + $0x2f0] sm:$0xf]
  %v3135 = vld [vmem:[%s9 + $0x2f4] sm:$0xf]
  %v3136 = vld [vmem:[%s9 + $0x2f8] sm:$0xf]
  %v3137 = vld [vmem:[%s9 + $0x2fc] sm:$0xf]
  %v3138 = vld [vmem:[%s9 + $0x300] sm:$0xf]
  %v3139 = vld [vmem:[%s9 + $0x304] sm:$0xf]
  %v3140 = vld [vmem:[%s9 + $0x308] sm:$0xf]
  %v3141 = vld [vmem:[%s9 + $0x30c] sm:$0xf]
  %v3142 = vld [vmem:[%s9 + $0x310] sm:$0xf]
  %v3143 = vld [vmem:[%s9 + $0x314] sm:$0xf]
  %v3144 = vld [vmem:[%s9 + $0x318] sm:$0xf]
  %v3145 = vld [vmem:[%s9 + $0x31c] sm:$0xf]
  %v3146 = vld [vmem:[%s9 + $0x320] sm:$0xf]
  %v3147 = vld [vmem:[%s9 + $0x324] sm:$0xf]
  %v3148 = vld [vmem:[%s9 + $0x328] sm:$0xf]
  %v3149 = vld [vmem:[%s9 + $0x32c] sm:$0xf]
  %v3150 = vld [vmem:[%s9 + $0x330] sm:$0xf]
  %v3151 = vld [vmem:[%s9 + $0x334] sm:$0xf]
  %v3152 = vld [vmem:[%s9 + $0x338] sm:$0xf]
  %v3153 = vld [vmem:[%s9 + $0x33c] sm:$0xf]
  %v3154 = vld [vmem:[%s9 + $0x340] sm:$0xf]
  %v3155 = vld [vmem:[%s9 + $0x344] sm:$0xf]
  %v3156 = vld [vmem:[%s9 + $0x348] sm:$0xf]
  %v3157 = vld [vmem:[%s9 + $0x34c] sm:$0xf]
  %v3158 = vld [vmem:[%s9 + $0x350] sm:$0xf]
  %v3159 = vld [vmem:[%s9 + $0x354] sm:$0xf]
  %v3160 = vld [vmem:[%s9 + $0x358] sm:$0xf]
  %v3161 = vld [vmem:[%s9 + $0x35c] sm:$0xf]
  %v3162 = vld [vmem:[%s9 + $0x360] sm:$0xf]
  %v3163 = vld [vmem:[%s9 + $0x364] sm:$0xf]
  %v3164 = vld [vmem:[%s9 + $0x368] sm:$0xf]
  %v3165 = vld [vmem:[%s9 + $0x36c] sm:$0xf]
  %v3166 = vld [vmem:[%s9 + $0x370] sm:$0xf]
  %v3167 = vld [vmem:[%s9 + $0x374] sm:$0xf]
  %v3168 = vld [vmem:[%s9 + $0x378] sm:$0xf]
  %v3169 = vld [vmem:[%s9 + $0x37c] sm:$0xf]
  %v3170 = vld [vmem:[%s9 + $0x380] sm:$0xf]
  %v3171 = vld [vmem:[%s9 + $0x384] sm:$0xf]
  %v3172 = vld [vmem:[%s9 + $0x388] sm:$0xf]
  %v3173 = vld [vmem:[%s9 + $0x38c] sm:$0xf]
  %v3174 = vld [vmem:[%s9 + $0x390] sm:$0xf]
  %v3175 = vld [vmem:[%s9 + $0x394] sm:$0xf]
  %v3176 = vld [vmem:[%s9 + $0x398] sm:$0xf]
  %v3177 = vld [vmem:[%s9 + $0x39c] sm:$0xf]
  %v3178 = vld [vmem:[%s9 + $0x3a0] sm:$0xf]
  %v3179 = vld [vmem:[%s9 + $0x3a4] sm:$0xf]
  %v3180 = vld [vmem:[%s9 + $0x3a8] sm:$0xf]
  %v3181 = vld [vmem:[%s9 + $0x3ac] sm:$0xf]
  %v3182 = vld [vmem:[%s9 + $0x3b0] sm:$0xf]
  %v3183 = vld [vmem:[%s9 + $0x3b4] sm:$0xf]
  %v3184 = vld [vmem:[%s9 + $0x3b8] sm:$0xf]
  %v3185 = vld [vmem:[%s9 + $0x3bc] sm:$0xf]
  %v3186 = vld [vmem:[%s9 + $0x3c0] sm:$0xf]
  %v3187 = vld [vmem:[%s9 + $0x3c4] sm:$0xf]
  %v3188 = vld [vmem:[%s9 + $0x3c8] sm:$0xf]
  %v3189 = vld [vmem:[%s9 + $0x3cc] sm:$0xf]
  %v3190 = vld [vmem:[%s9 + $0x3d0] sm:$0xf]
  %v3191 = vld [vmem:[%s9 + $0x3d4] sm:$0xf]
  %v3192 = vld [vmem:[%s9 + $0x3d8] sm:$0xf]
  %v3193 = vld [vmem:[%s9 + $0x3dc] sm:$0xf]
  %v3194 = vld [vmem:[%s9 + $0x3e0] sm:$0xf]
  %v3195 = vld [vmem:[%s9 + $0x3e4] sm:$0xf]
  %v3196 = vld [vmem:[%s9 + $0x3e8] sm:$0xf]
  %v3197 = vld [vmem:[%s9 + $0x3ec] sm:$0xf]
  %v3198 = vld [vmem:[%s9 + $0x3f0] sm:$0xf]
  %v3199 = vld [vmem:[%s9 + $0x3f4] sm:$0xf]
  %v3200 = vld [vmem:[%s9 + $0x3f8] sm:$0xf]
  %v3201 = vld [vmem:[%s9 + $0x3fc] sm:$0xf]
  %v3202 = vld [vmem:[%s10] sm:$0x1]
  %v3204 = vlaneseq
  %v3205 = vshrl.u32 %v3204, 7
  %v3206 = vsub.s32 0, %v3205
  %v3207 = vrot.slane %v3202, %v3206
  %v3465 = vunpack.c.l.b16 %v2946
  %v3466 = vunpack.c.l.b16 %v2947
  %v3467 = vunpack.c.l.b16 %v2948
  %v3468 = vunpack.c.l.b16 %v2949
  %v3469 = vunpack.c.l.b16 %v2950
  %v3470 = vunpack.c.l.b16 %v2951
  %v3471 = vunpack.c.l.b16 %v2952
  %v3472 = vunpack.c.l.b16 %v2953
  %v3473 = vunpack.c.l.b16 %v2954
  %v3474 = vunpack.c.l.b16 %v2955
  %v3475 = vunpack.c.l.b16 %v2956
  %v3476 = vunpack.c.l.b16 %v2957
  %v3477 = vunpack.c.l.b16 %v2958
  %v3478 = vunpack.c.l.b16 %v2959
  %v3479 = vunpack.c.l.b16 %v2960
  %v3480 = vunpack.c.l.b16 %v2961
  %v3481 = vunpack.c.l.b16 %v2962
  %v3482 = vunpack.c.l.b16 %v2963
  %v3483 = vunpack.c.l.b16 %v2964
  %v3484 = vunpack.c.l.b16 %v2965
  %v3485 = vunpack.c.l.b16 %v2966
  %v3486 = vunpack.c.l.b16 %v2967
  %v3487 = vunpack.c.l.b16 %v2968
  %v3488 = vunpack.c.l.b16 %v2969
  %v3489 = vunpack.c.l.b16 %v2970
  %v3490 = vunpack.c.l.b16 %v2971
  %v3491 = vunpack.c.l.b16 %v2972
  %v3492 = vunpack.c.l.b16 %v2973
  %v3493 = vunpack.c.l.b16 %v2974
  %v3494 = vunpack.c.l.b16 %v2975
  %v3495 = vunpack.c.l.b16 %v2976
  %v3496 = vunpack.c.l.b16 %v2977
  %v3497 = vunpack.c.l.b16 %v2978
  %v3498 = vunpack.c.l.b16 %v2979
  %v3499 = vunpack.c.l.b16 %v2980
  %v3500 = vunpack.c.l.b16 %v2981
  %v3501 = vunpack.c.l.b16 %v2982
  %v3502 = vunpack.c.l.b16 %v2983
  %v3503 = vunpack.c.l.b16 %v2984
  %v3504 = vunpack.c.l.b16 %v2985
  %v3505 = vunpack.c.l.b16 %v2986
  %v3506 = vunpack.c.l.b16 %v2987
  %v3507 = vunpack.c.l.b16 %v2988
  %v3508 = vunpack.c.l.b16 %v2989
  %v3509 = vunpack.c.l.b16 %v2990
  %v3510 = vunpack.c.l.b16 %v2991
  %v3511 = vunpack.c.l.b16 %v2992
  %v3512 = vunpack.c.l.b16 %v2993
  %v3513 = vunpack.c.l.b16 %v2994
  %v3514 = vunpack.c.l.b16 %v2995
  %v3515 = vunpack.c.l.b16 %v2996
  %v3516 = vunpack.c.l.b16 %v2997
  %v3517 = vunpack.c.l.b16 %v2998
  %v3518 = vunpack.c.l.b16 %v2999
  %v3519 = vunpack.c.l.b16 %v3000
  %v3520 = vunpack.c.l.b16 %v3001
  %v3521 = vunpack.c.l.b16 %v3002
  %v3522 = vunpack.c.l.b16 %v3003
  %v3523 = vunpack.c.l.b16 %v3004
  %v3524 = vunpack.c.l.b16 %v3005
  %v3525 = vunpack.c.l.b16 %v3006
  %v3526 = vunpack.c.l.b16 %v3007
  %v3527 = vunpack.c.l.b16 %v3008
  %v3528 = vunpack.c.l.b16 %v3009
  %v3529 = vunpack.c.l.b16 %v3010
  %v3530 = vunpack.c.l.b16 %v3011
  %v3531 = vunpack.c.l.b16 %v3012
  %v3532 = vunpack.c.l.b16 %v3013
  %v3533 = vunpack.c.l.b16 %v3014
  %v3534 = vunpack.c.l.b16 %v3015
  %v3535 = vunpack.c.l.b16 %v3016
  %v3536 = vunpack.c.l.b16 %v3017
  %v3537 = vunpack.c.l.b16 %v3018
  %v3538 = vunpack.c.l.b16 %v3019
  %v3539 = vunpack.c.l.b16 %v3020
  %v3540 = vunpack.c.l.b16 %v3021
  %v3541 = vunpack.c.l.b16 %v3022
  %v3542 = vunpack.c.l.b16 %v3023
  %v3543 = vunpack.c.l.b16 %v3024
  %v3544 = vunpack.c.l.b16 %v3025
  %v3545 = vunpack.c.l.b16 %v3026
  %v3546 = vunpack.c.l.b16 %v3027
  %v3547 = vunpack.c.l.b16 %v3028
  %v3548 = vunpack.c.l.b16 %v3029
  %v3549 = vunpack.c.l.b16 %v3030
  %v3550 = vunpack.c.l.b16 %v3031
  %v3551 = vunpack.c.l.b16 %v3032
  %v3552 = vunpack.c.l.b16 %v3033
  %v3553 = vunpack.c.l.b16 %v3034
  %v3554 = vunpack.c.l.b16 %v3035
  %v3555 = vunpack.c.l.b16 %v3036
  %v3556 = vunpack.c.l.b16 %v3037
  %v3557 = vunpack.c.l.b16 %v3038
  %v3558 = vunpack.c.l.b16 %v3039
  %v3559 = vunpack.c.l.b16 %v3040
  %v3560 = vunpack.c.l.b16 %v3041
  %v3561 = vunpack.c.l.b16 %v3042
  %v3562 = vunpack.c.l.b16 %v3043
  %v3563 = vunpack.c.l.b16 %v3044
  %v3564 = vunpack.c.l.b16 %v3045
  %v3565 = vunpack.c.l.b16 %v3046
  %v3566 = vunpack.c.l.b16 %v3047
  %v3567 = vunpack.c.l.b16 %v3048
  %v3568 = vunpack.c.l.b16 %v3049
  %v3569 = vunpack.c.l.b16 %v3050
  %v3570 = vunpack.c.l.b16 %v3051
  %v3571 = vunpack.c.l.b16 %v3052
  %v3572 = vunpack.c.l.b16 %v3053
  %v3573 = vunpack.c.l.b16 %v3054
  %v3574 = vunpack.c.l.b16 %v3055
  %v3575 = vunpack.c.l.b16 %v3056
  %v3576 = vunpack.c.l.b16 %v3057
  %v3577 = vunpack.c.l.b16 %v3058
  %v3578 = vunpack.c.l.b16 %v3059
  %v3579 = vunpack.c.l.b16 %v3060
  %v3580 = vunpack.c.l.b16 %v3061
  %v3581 = vunpack.c.l.b16 %v3062
  %v3582 = vunpack.c.l.b16 %v3063
  %v3583 = vunpack.c.l.b16 %v3064
  %v3584 = vunpack.c.l.b16 %v3065
  %v3585 = vunpack.c.l.b16 %v3066
  %v3586 = vunpack.c.l.b16 %v3067
  %v3587 = vunpack.c.l.b16 %v3068
  %v3588 = vunpack.c.l.b16 %v3069
  %v3589 = vunpack.c.l.b16 %v3070
  %v3590 = vunpack.c.l.b16 %v3071
  %v3591 = vunpack.c.l.b16 %v3072
  %v3592 = vunpack.c.l.b16 %v3073
  %v3593 = vunpack.c.l.b16 %v3074
  %v3594 = vunpack.c.l.b16 %v3075
  %v3595 = vunpack.c.l.b16 %v3076
  %v3596 = vunpack.c.l.b16 %v3077
  %v3597 = vunpack.c.l.b16 %v3078
  %v3598 = vunpack.c.l.b16 %v3079
  %v3599 = vunpack.c.l.b16 %v3080
  %v3600 = vunpack.c.l.b16 %v3081
  %v3601 = vunpack.c.l.b16 %v3082
  %v3602 = vunpack.c.l.b16 %v3083
  %v3603 = vunpack.c.l.b16 %v3084
  %v3604 = vunpack.c.l.b16 %v3085
  %v3605 = vunpack.c.l.b16 %v3086
  %v3606 = vunpack.c.l.b16 %v3087
  %v3607 = vunpack.c.l.b16 %v3088
  %v3608 = vunpack.c.l.b16 %v3089
  %v3609 = vunpack.c.l.b16 %v3090
  %v3610 = vunpack.c.l.b16 %v3091
  %v3611 = vunpack.c.l.b16 %v3092
  %v3612 = vunpack.c.l.b16 %v3093
  %v3613 = vunpack.c.l.b16 %v3094
  %v3614 = vunpack.c.l.b16 %v3095
  %v3615 = vunpack.c.l.b16 %v3096
  %v3616 = vunpack.c.l.b16 %v3097
  %v3617 = vunpack.c.l.b16 %v3098
  %v3618 = vunpack.c.l.b16 %v3099
  %v3619 = vunpack.c.l.b16 %v3100
  %v3620 = vunpack.c.l.b16 %v3101
  %v3621 = vunpack.c.l.b16 %v3102
  %v3622 = vunpack.c.l.b16 %v3103
  %v3623 = vunpack.c.l.b16 %v3104
  %v3624 = vunpack.c.l.b16 %v3105
  %v3625 = vunpack.c.l.b16 %v3106
  %v3626 = vunpack.c.l.b16 %v3107
  %v3627 = vunpack.c.l.b16 %v3108
  %v3628 = vunpack.c.l.b16 %v3109
  %v3629 = vunpack.c.l.b16 %v3110
  %v3630 = vunpack.c.l.b16 %v3111
  %v3631 = vunpack.c.l.b16 %v3112
  %v3632 = vunpack.c.l.b16 %v3113
  %v3633 = vunpack.c.l.b16 %v3114
  %v3634 = vunpack.c.l.b16 %v3115
  %v3635 = vunpack.c.l.b16 %v3116
  %v3636 = vunpack.c.l.b16 %v3117
  %v3637 = vunpack.c.l.b16 %v3118
  %v3638 = vunpack.c.l.b16 %v3119
  %v3639 = vunpack.c.l.b16 %v3120
  %v3640 = vunpack.c.l.b16 %v3121
  %v3641 = vunpack.c.l.b16 %v3122
  %v3642 = vunpack.c.l.b16 %v3123
  %v3643 = vunpack.c.l.b16 %v3124
  %v3644 = vunpack.c.l.b16 %v3125
  %v3645 = vunpack.c.l.b16 %v3126
  %v3646 = vunpack.c.l.b16 %v3127
  %v3647 = vunpack.c.l.b16 %v3128
  %v3648 = vunpack.c.l.b16 %v3129
  %v3649 = vunpack.c.l.b16 %v3130
  %v3650 = vunpack.c.l.b16 %v3131
  %v3651 = vunpack.c.l.b16 %v3132
  %v3652 = vunpack.c.l.b16 %v3133
  %v3653 = vunpack.c.l.b16 %v3134
  %v3654 = vunpack.c.l.b16 %v3135
  %v3655 = vunpack.c.l.b16 %v3136
  %v3656 = vunpack.c.l.b16 %v3137
  %v3657 = vunpack.c.l.b16 %v3138
  %v3658 = vunpack.c.l.b16 %v3139
  %v3659 = vunpack.c.l.b16 %v3140
  %v3660 = vunpack.c.l.b16 %v3141
  %v3661 = vunpack.c.l.b16 %v3142
  %v3662 = vunpack.c.l.b16 %v3143
  %v3663 = vunpack.c.l.b16 %v3144
  %v3664 = vunpack.c.l.b16 %v3145
  %v3665 = vunpack.c.l.b16 %v3146
  %v3666 = vunpack.c.l.b16 %v3147
  %v3667 = vunpack.c.l.b16 %v3148
  %v3668 = vunpack.c.l.b16 %v3149
  %v3669 = vunpack.c.l.b16 %v3150
  %v3670 = vunpack.c.l.b16 %v3151
  %v3671 = vunpack.c.l.b16 %v3152
  %v3672 = vunpack.c.l.b16 %v3153
  %v3673 = vunpack.c.l.b16 %v3154
  %v3674 = vunpack.c.l.b16 %v3155
  %v3675 = vunpack.c.l.b16 %v3156
  %v3676 = vunpack.c.l.b16 %v3157
  %v3677 = vunpack.c.l.b16 %v3158
  %v3678 = vunpack.c.l.b16 %v3159
  %v3679 = vunpack.c.l.b16 %v3160
  %v3680 = vunpack.c.l.b16 %v3161
  %v3681 = vunpack.c.l.b16 %v3162
  %v3682 = vunpack.c.l.b16 %v3163
  %v3683 = vunpack.c.l.b16 %v3164
  %v3684 = vunpack.c.l.b16 %v3165
  %v3685 = vunpack.c.l.b16 %v3166
  %v3686 = vunpack.c.l.b16 %v3167
  %v3687 = vunpack.c.l.b16 %v3168
  %v3688 = vunpack.c.l.b16 %v3169
  %v3689 = vunpack.c.l.b16 %v3170
  %v3690 = vunpack.c.l.b16 %v3171
  %v3691 = vunpack.c.l.b16 %v3172
  %v3692 = vunpack.c.l.b16 %v3173
  %v3693 = vunpack.c.l.b16 %v3174
  %v3694 = vunpack.c.l.b16 %v3175
  %v3695 = vunpack.c.l.b16 %v3176
  %v3696 = vunpack.c.l.b16 %v3177
  %v3697 = vunpack.c.l.b16 %v3178
  %v3698 = vunpack.c.l.b16 %v3179
  %v3699 = vunpack.c.l.b16 %v3180
  %v3700 = vunpack.c.l.b16 %v3181
  %v3701 = vunpack.c.l.b16 %v3182
  %v3702 = vunpack.c.l.b16 %v3183
  %v3703 = vunpack.c.l.b16 %v3184
  %v3704 = vunpack.c.l.b16 %v3185
  %v3705 = vunpack.c.l.b16 %v3186
  %v3706 = vunpack.c.l.b16 %v3187
  %v3707 = vunpack.c.l.b16 %v3188
  %v3708 = vunpack.c.l.b16 %v3189
  %v3709 = vunpack.c.l.b16 %v3190
  %v3710 = vunpack.c.l.b16 %v3191
  %v3711 = vunpack.c.l.b16 %v3192
  %v3712 = vunpack.c.l.b16 %v3193
  %v3713 = vunpack.c.l.b16 %v3194
  %v3714 = vunpack.c.l.b16 %v3195
  %v3715 = vunpack.c.l.b16 %v3196
  %v3716 = vunpack.c.l.b16 %v3197
  %v3717 = vunpack.c.l.b16 %v3198
  %v3718 = vunpack.c.l.b16 %v3199
  %v3719 = vunpack.c.l.b16 %v3200
  %v3720 = vunpack.c.l.b16 %v3201
  %v3721 = vpack.c.b16 %v3466, %v3465
  %v3722 = vpack.c.b16 %v3468, %v3467
  %v3723 = vpack.c.b16 %v3470, %v3469
  %v3724 = vpack.c.b16 %v3472, %v3471
  %v3725 = vpack.c.b16 %v3474, %v3473
  %v3726 = vpack.c.b16 %v3476, %v3475
  %v3727 = vpack.c.b16 %v3478, %v3477
  %v3728 = vpack.c.b16 %v3480, %v3479
  %v3729 = vpack.c.b16 %v3482, %v3481
  %v3730 = vpack.c.b16 %v3484, %v3483
  %v3731 = vpack.c.b16 %v3486, %v3485
  %v3732 = vpack.c.b16 %v3488, %v3487
  %v3733 = vpack.c.b16 %v3490, %v3489
  %v3734 = vpack.c.b16 %v3492, %v3491
  %v3735 = vpack.c.b16 %v3494, %v3493
  %v3736 = vpack.c.b16 %v3496, %v3495
  %v3737 = vpack.c.b16 %v3498, %v3497
  %v3738 = vpack.c.b16 %v3500, %v3499
  %v3739 = vpack.c.b16 %v3502, %v3501
  %v3740 = vpack.c.b16 %v3504, %v3503
  %v3741 = vpack.c.b16 %v3506, %v3505
  %v3742 = vpack.c.b16 %v3508, %v3507
  %v3743 = vpack.c.b16 %v3510, %v3509
  %v3744 = vpack.c.b16 %v3512, %v3511
  %v3745 = vpack.c.b16 %v3514, %v3513
  %v3746 = vpack.c.b16 %v3516, %v3515
  %v3747 = vpack.c.b16 %v3518, %v3517
  %v3748 = vpack.c.b16 %v3520, %v3519
  %v3749 = vpack.c.b16 %v3522, %v3521
  %v3750 = vpack.c.b16 %v3524, %v3523
  %v3751 = vpack.c.b16 %v3526, %v3525
  %v3752 = vpack.c.b16 %v3528, %v3527
  %v3753 = vpack.c.b16 %v3530, %v3529
  %v3754 = vpack.c.b16 %v3532, %v3531
  %v3755 = vpack.c.b16 %v3534, %v3533
  %v3756 = vpack.c.b16 %v3536, %v3535
  %v3757 = vpack.c.b16 %v3538, %v3537
  %v3758 = vpack.c.b16 %v3540, %v3539
  %v3759 = vpack.c.b16 %v3542, %v3541
  %v3760 = vpack.c.b16 %v3544, %v3543
  %v3761 = vpack.c.b16 %v3546, %v3545
  %v3762 = vpack.c.b16 %v3548, %v3547
  %v3763 = vpack.c.b16 %v3550, %v3549
  %v3764 = vpack.c.b16 %v3552, %v3551
  %v3765 = vpack.c.b16 %v3554, %v3553
  %v3766 = vpack.c.b16 %v3556, %v3555
  %v3767 = vpack.c.b16 %v3558, %v3557
  %v3768 = vpack.c.b16 %v3560, %v3559
  %v3769 = vpack.c.b16 %v3562, %v3561
  %v3770 = vpack.c.b16 %v3564, %v3563
  %v3771 = vpack.c.b16 %v3566, %v3565
  %v3772 = vpack.c.b16 %v3568, %v3567
  %v3773 = vpack.c.b16 %v3570, %v3569
  %v3774 = vpack.c.b16 %v3572, %v3571
  %v3775 = vpack.c.b16 %v3574, %v3573
  %v3776 = vpack.c.b16 %v3576, %v3575
  %v3777 = vpack.c.b16 %v3578, %v3577
  %v3778 = vpack.c.b16 %v3580, %v3579
  %v3779 = vpack.c.b16 %v3582, %v3581
  %v3780 = vpack.c.b16 %v3584, %v3583
  %v3781 = vpack.c.b16 %v3586, %v3585
  %v3782 = vpack.c.b16 %v3588, %v3587
  %v3783 = vpack.c.b16 %v3590, %v3589
  %v3784 = vpack.c.b16 %v3592, %v3591
  %v3785 = vpack.c.b16 %v3594, %v3593
  %v3786 = vpack.c.b16 %v3596, %v3595
  %v3787 = vpack.c.b16 %v3598, %v3597
  %v3788 = vpack.c.b16 %v3600, %v3599
  %v3789 = vpack.c.b16 %v3602, %v3601
  %v3790 = vpack.c.b16 %v3604, %v3603
  %v3791 = vpack.c.b16 %v3606, %v3605
  %v3792 = vpack.c.b16 %v3608, %v3607
  %v3793 = vpack.c.b16 %v3610, %v3609
  %v3794 = vpack.c.b16 %v3612, %v3611
  %v3795 = vpack.c.b16 %v3614, %v3613
  %v3796 = vpack.c.b16 %v3616, %v3615
  %v3797 = vpack.c.b16 %v3618, %v3617
  %v3798 = vpack.c.b16 %v3620, %v3619
  %v3799 = vpack.c.b16 %v3622, %v3621
  %v3800 = vpack.c.b16 %v3624, %v3623
  %v3801 = vpack.c.b16 %v3626, %v3625
  %v3802 = vpack.c.b16 %v3628, %v3627
  %v3803 = vpack.c.b16 %v3630, %v3629
  %v3804 = vpack.c.b16 %v3632, %v3631
  %v3805 = vpack.c.b16 %v3634, %v3633
  %v3806 = vpack.c.b16 %v3636, %v3635
  %v3807 = vpack.c.b16 %v3638, %v3637
  %v3808 = vpack.c.b16 %v3640, %v3639
  %v3809 = vpack.c.b16 %v3642, %v3641
  %v3810 = vpack.c.b16 %v3644, %v3643
  %v3811 = vpack.c.b16 %v3646, %v3645
  %v3812 = vpack.c.b16 %v3648, %v3647
  %v3813 = vpack.c.b16 %v3650, %v3649
  %v3814 = vpack.c.b16 %v3652, %v3651
  %v3815 = vpack.c.b16 %v3654, %v3653
  %v3816 = vpack.c.b16 %v3656, %v3655
  %v3817 = vpack.c.b16 %v3658, %v3657
  %v3818 = vpack.c.b16 %v3660, %v3659
  %v3819 = vpack.c.b16 %v3662, %v3661
  %v3820 = vpack.c.b16 %v3664, %v3663
  %v3821 = vpack.c.b16 %v3666, %v3665
  %v3822 = vpack.c.b16 %v3668, %v3667
  %v3823 = vpack.c.b16 %v3670, %v3669
  %v3824 = vpack.c.b16 %v3672, %v3671
  %v3825 = vpack.c.b16 %v3674, %v3673
  %v3826 = vpack.c.b16 %v3676, %v3675
  %v3827 = vpack.c.b16 %v3678, %v3677
  %v3828 = vpack.c.b16 %v3680, %v3679
  %v3829 = vpack.c.b16 %v3682, %v3681
  %v3830 = vpack.c.b16 %v3684, %v3683
  %v3831 = vpack.c.b16 %v3686, %v3685
  %v3832 = vpack.c.b16 %v3688, %v3687
  %v3833 = vpack.c.b16 %v3690, %v3689
  %v3834 = vpack.c.b16 %v3692, %v3691
  %v3835 = vpack.c.b16 %v3694, %v3693
  %v3836 = vpack.c.b16 %v3696, %v3695
  %v3837 = vpack.c.b16 %v3698, %v3697
  %v3838 = vpack.c.b16 %v3700, %v3699
  %v3839 = vpack.c.b16 %v3702, %v3701
  %v3840 = vpack.c.b16 %v3704, %v3703
  %v3841 = vpack.c.b16 %v3706, %v3705
  %v3842 = vpack.c.b16 %v3708, %v3707
  %v3843 = vpack.c.b16 %v3710, %v3709
  %v3844 = vpack.c.b16 %v3712, %v3711
  %v3845 = vpack.c.b16 %v3714, %v3713
  %v3846 = vpack.c.b16 %v3716, %v3715
  %v3847 = vpack.c.b16 %v3718, %v3717
  %v3848 = vpack.c.b16 %v3720, %v3719
  %3977 = vmatprep.subr.bf16.mxu0 0
  %3978 = vmatpush1.bf16.msra.mxu0 %v3728
  %3979 = vmatprep.subr.bf16.mxu0 0
  %3980 = vmatpush1.bf16.msra.mxu0 %v3727
  %3981 = vmatprep.subr.bf16.mxu0 0
  %3982 = vmatpush1.bf16.msra.mxu0 %v3726
  %3983 = vmatprep.subr.bf16.mxu0 0
  %3984 = vmatpush1.bf16.msra.mxu0 %v3725
  %3985 = vmatprep.subr.bf16.mxu0 0
  %3986 = vmatpush1.bf16.msra.mxu0 %v3724
  %3987 = vmatprep.subr.bf16.mxu0 0
  %3988 = vmatpush1.bf16.msra.mxu0 %v3723
  %3989 = vmatprep.subr.bf16.mxu0 0
  %3990 = vmatpush1.bf16.msra.mxu0 %v3722
  %3991 = vmatprep.subr.bf16.mxu0 0
  %3992 = vmatpush1.bf16.msra.mxu0 %v3721
  %3993 = vmatprep.subr.bf16.mxu0 0
  %3994 = vmatpush2.bf16.msra.mxu0 %v3736
  %3995 = vmatprep.subr.bf16.mxu0 0
  %3996 = vmatpush2.bf16.msra.mxu0 %v3735
  %3997 = vmatprep.subr.bf16.mxu0 0
  %3998 = vmatpush2.bf16.msra.mxu0 %v3734
  %3999 = vmatprep.subr.bf16.mxu0 0
  %4000 = vmatpush2.bf16.msra.mxu0 %v3733
  %4001 = vmatprep.subr.bf16.mxu0 0
  %4002 = vmatpush2.bf16.msra.mxu0 %v3732
  %4003 = vmatprep.subr.bf16.mxu0 0
  %4004 = vmatpush2.bf16.msra.mxu0 %v3731
  %4005 = vmatprep.subr.bf16.mxu0 0
  %4006 = vmatpush2.bf16.msra.mxu0 %v3730
  %4007 = vmatprep.subr.bf16.mxu0 0
  %4008 = vmatpush2.bf16.msra.mxu0 %v3729
  %4009 = vmatprep.mubr.bf16.mxu0 %v2931
  %4010 = vmatmul.mubr.bf16.gmra.mxu0 %v2930
  %v4011 = vpop.f32.mrf.mxu0
  %v4012 = vadd.f32 %v3207, %v4011
  %v4013 = vpop.f32.mrf.mxu0
  %v4014 = vpop.f32.mrf.mxu0
  %v4015 = vadd.f32 %v3207, %v4014
  %v4016 = vpop.f32.mrf.mxu0
  %4017 = vdwg.mxu0
  %4018 = vmatprep.subr.bf16.mxu0 0
  %4019 = vmatpush1.bf16.msra.mxu0 %v3744
  %4020 = vmatprep.subr.bf16.mxu0 0
  %4021 = vmatpush1.bf16.msra.mxu0 %v3743
  %4022 = vmatprep.subr.bf16.mxu0 0
  %4023 = vmatpush1.bf16.msra.mxu0 %v3742
  %4024 = vmatprep.subr.bf16.mxu0 0
  %4025 = vmatpush1.bf16.msra.mxu0 %v3741
  %4026 = vmatprep.subr.bf16.mxu0 0
  %4027 = vmatpush1.bf16.msra.mxu0 %v3740
  %4028 = vmatprep.subr.bf16.mxu0 0
  %4029 = vmatpush1.bf16.msra.mxu0 %v3739
  %4030 = vmatprep.subr.bf16.mxu0 0
  %4031 = vmatpush1.bf16.msra.mxu0 %v3738
  %4032 = vmatprep.subr.bf16.mxu0 0
  %4033 = vmatpush1.bf16.msra.mxu0 %v3737
  %4034 = vmatprep.subr.bf16.mxu0 0
  %4035 = vmatpush2.bf16.msra.mxu0 %v3752
  %4036 = vmatprep.subr.bf16.mxu0 0
  %4037 = vmatpush2.bf16.msra.mxu0 %v3751
  %4038 = vmatprep.subr.bf16.mxu0 0
  %4039 = vmatpush2.bf16.msra.mxu0 %v3750
  %4040 = vmatprep.subr.bf16.mxu0 0
  %4041 = vmatpush2.bf16.msra.mxu0 %v3749
  %4042 = vmatprep.subr.bf16.mxu0 0
  %4043 = vmatpush2.bf16.msra.mxu0 %v3748
  %4044 = vmatprep.subr.bf16.mxu0 0
  %4045 = vmatpush2.bf16.msra.mxu0 %v3747
  %4046 = vmatprep.subr.bf16.mxu0 0
  %4047 = vmatpush2.bf16.msra.mxu0 %v3746
  %4048 = vmatprep.subr.bf16.mxu0 0
  %4049 = vmatpush2.bf16.msra.mxu0 %v3745
  %4050 = vmatprep.mubr.bf16.mxu0 %v2933
  %4051 = vmatmul.mubr.bf16.gmra.mxu0 %v2932
  %v4052 = vpop.f32.mrf.mxu0
  %v4053 = vadd.f32 %v4012, %v4052
  %v4054 = vpop.f32.mrf.mxu0
  %v4055 = vpop.f32.mrf.mxu0
  %v4056 = vadd.f32 %v4015, %v4055
  %v4057 = vpop.f32.mrf.mxu0
  %4058 = vdwg.mxu0
  %4059 = vmatprep.subr.bf16.mxu0 0
  %4060 = vmatpush1.bf16.msra.mxu0 %v3760
  %4061 = vmatprep.subr.bf16.mxu0 0
  %4062 = vmatpush1.bf16.msra.mxu0 %v3759
  %4063 = vmatprep.subr.bf16.mxu0 0
  %4064 = vmatpush1.bf16.msra.mxu0 %v3758
  %4065 = vmatprep.subr.bf16.mxu0 0
  %4066 = vmatpush1.bf16.msra.mxu0 %v3757
  %4067 = vmatprep.subr.bf16.mxu0 0
  %4068 = vmatpush1.bf16.msra.mxu0 %v3756
  %4069 = vmatprep.subr.bf16.mxu0 0
  %4070 = vmatpush1.bf16.msra.mxu0 %v3755
  %4071 = vmatprep.subr.bf16.mxu0 0
  %4072 = vmatpush1.bf16.msra.mxu0 %v3754
  %4073 = vmatprep.subr.bf16.mxu0 0
  %4074 = vmatpush1.bf16.msra.mxu0 %v3753
  %4075 = vmatprep.subr.bf16.mxu0 0
  %4076 = vmatpush2.bf16.msra.mxu0 %v3768
  %4077 = vmatprep.subr.bf16.mxu0 0
  %4078 = vmatpush2.bf16.msra.mxu0 %v3767
  %4079 = vmatprep.subr.bf16.mxu0 0
  %4080 = vmatpush2.bf16.msra.mxu0 %v3766
  %4081 = vmatprep.subr.bf16.mxu0 0
  %4082 = vmatpush2.bf16.msra.mxu0 %v3765
  %4083 = vmatprep.subr.bf16.mxu0 0
  %4084 = vmatpush2.bf16.msra.mxu0 %v3764
  %4085 = vmatprep.subr.bf16.mxu0 0
  %4086 = vmatpush2.bf16.msra.mxu0 %v3763
  %4087 = vmatprep.subr.bf16.mxu0 0
  %4088 = vmatpush2.bf16.msra.mxu0 %v3762
  %4089 = vmatprep.subr.bf16.mxu0 0
  %4090 = vmatpush2.bf16.msra.mxu0 %v3761
  %4091 = vmatprep.mubr.bf16.mxu0 %v2935
  %4092 = vmatmul.mubr.bf16.gmra.mxu0 %v2934
  %v4093 = vpop.f32.mrf.mxu0
  %v4094 = vadd.f32 %v4053, %v4093
  %v4095 = vpop.f32.mrf.mxu0
  %v4096 = vpop.f32.mrf.mxu0
  %v4097 = vadd.f32 %v4056, %v4096
  %v4098 = vpop.f32.mrf.mxu0
  %4099 = vdwg.mxu0
  %4100 = vmatprep.subr.bf16.mxu0 0
  %4101 = vmatpush1.bf16.msra.mxu0 %v3776
  %4102 = vmatprep.subr.bf16.mxu0 0
  %4103 = vmatpush1.bf16.msra.mxu0 %v3775
  %4104 = vmatprep.subr.bf16.mxu0 0
  %4105 = vmatpush1.bf16.msra.mxu0 %v3774
  %4106 = vmatprep.subr.bf16.mxu0 0
  %4107 = vmatpush1.bf16.msra.mxu0 %v3773
  %4108 = vmatprep.subr.bf16.mxu0 0
  %4109 = vmatpush1.bf16.msra.mxu0 %v3772
  %4110 = vmatprep.subr.bf16.mxu0 0
  %4111 = vmatpush1.bf16.msra.mxu0 %v3771
  %4112 = vmatprep.subr.bf16.mxu0 0
  %4113 = vmatpush1.bf16.msra.mxu0 %v3770
  %4114 = vmatprep.subr.bf16.mxu0 0
  %4115 = vmatpush1.bf16.msra.mxu0 %v3769
  %4116 = vmatprep.subr.bf16.mxu0 0
  %4117 = vmatpush2.bf16.msra.mxu0 %v3784
  %4118 = vmatprep.subr.bf16.mxu0 0
  %4119 = vmatpush2.bf16.msra.mxu0 %v3783
  %4120 = vmatprep.subr.bf16.mxu0 0
  %4121 = vmatpush2.bf16.msra.mxu0 %v3782
  %4122 = vmatprep.subr.bf16.mxu0 0
  %4123 = vmatpush2.bf16.msra.mxu0 %v3781
  %4124 = vmatprep.subr.bf16.mxu0 0
  %4125 = vmatpush2.bf16.msra.mxu0 %v3780
  %4126 = vmatprep.subr.bf16.mxu0 0
  %4127 = vmatpush2.bf16.msra.mxu0 %v3779
  %4128 = vmatprep.subr.bf16.mxu0 0
  %4129 = vmatpush2.bf16.msra.mxu0 %v3778
  %4130 = vmatprep.subr.bf16.mxu0 0
  %4131 = vmatpush2.bf16.msra.mxu0 %v3777
  %4132 = vmatprep.mubr.bf16.mxu0 %v2937
  %4133 = vmatmul.mubr.bf16.gmra.mxu0 %v2936
  %v4134 = vpop.f32.mrf.mxu0
  %v4135 = vadd.f32 %v4094, %v4134
  %v4136 = vpop.f32.mrf.mxu0
  %v4137 = vpop.f32.mrf.mxu0
  %v4138 = vadd.f32 %v4097, %v4137
  %v4139 = vpop.f32.mrf.mxu0
  %4140 = vdwg.mxu0
  %4141 = vmatprep.subr.bf16.mxu0 0
  %4142 = vmatpush1.bf16.msra.mxu0 %v3792
  %4143 = vmatprep.subr.bf16.mxu0 0
  %4144 = vmatpush1.bf16.msra.mxu0 %v3791
  %4145 = vmatprep.subr.bf16.mxu0 0
  %4146 = vmatpush1.bf16.msra.mxu0 %v3790
  %4147 = vmatprep.subr.bf16.mxu0 0
  %4148 = vmatpush1.bf16.msra.mxu0 %v3789
  %4149 = vmatprep.subr.bf16.mxu0 0
  %4150 = vmatpush1.bf16.msra.mxu0 %v3788
  %4151 = vmatprep.subr.bf16.mxu0 0
  %4152 = vmatpush1.bf16.msra.mxu0 %v3787
  %4153 = vmatprep.subr.bf16.mxu0 0
  %4154 = vmatpush1.bf16.msra.mxu0 %v3786
  %4155 = vmatprep.subr.bf16.mxu0 0
  %4156 = vmatpush1.bf16.msra.mxu0 %v3785
  %4157 = vmatprep.subr.bf16.mxu0 0
  %4158 = vmatpush2.bf16.msra.mxu0 %v3800
  %4159 = vmatprep.subr.bf16.mxu0 0
  %4160 = vmatpush2.bf16.msra.mxu0 %v3799
  %4161 = vmatprep.subr.bf16.mxu0 0
  %4162 = vmatpush2.bf16.msra.mxu0 %v3798
  %4163 = vmatprep.subr.bf16.mxu0 0
  %4164 = vmatpush2.bf16.msra.mxu0 %v3797
  %4165 = vmatprep.subr.bf16.mxu0 0
  %4166 = vmatpush2.bf16.msra.mxu0 %v3796
  %4167 = vmatprep.subr.bf16.mxu0 0
  %4168 = vmatpush2.bf16.msra.mxu0 %v3795
  %4169 = vmatprep.subr.bf16.mxu0 0
  %4170 = vmatpush2.bf16.msra.mxu0 %v3794
  %4171 = vmatprep.subr.bf16.mxu0 0
  %4172 = vmatpush2.bf16.msra.mxu0 %v3793
  %4173 = vmatprep.mubr.bf16.mxu0 %v2939
  %4174 = vmatmul.mubr.bf16.gmra.mxu0 %v2938
  %v4175 = vpop.f32.mrf.mxu0
  %v4176 = vadd.f32 %v4135, %v4175
  %v4177 = vpop.f32.mrf.mxu0
  %v4178 = vpop.f32.mrf.mxu0
  %v4179 = vadd.f32 %v4138, %v4178
  %v4180 = vpop.f32.mrf.mxu0
  %4181 = vdwg.mxu0
  %4182 = vmatprep.subr.bf16.mxu0 0
  %4183 = vmatpush1.bf16.msra.mxu0 %v3808
  %4184 = vmatprep.subr.bf16.mxu0 0
  %4185 = vmatpush1.bf16.msra.mxu0 %v3807
  %4186 = vmatprep.subr.bf16.mxu0 0
  %4187 = vmatpush1.bf16.msra.mxu0 %v3806
  %4188 = vmatprep.subr.bf16.mxu0 0
  %4189 = vmatpush1.bf16.msra.mxu0 %v3805
  %4190 = vmatprep.subr.bf16.mxu0 0
  %4191 = vmatpush1.bf16.msra.mxu0 %v3804
  %4192 = vmatprep.subr.bf16.mxu0 0
  %4193 = vmatpush1.bf16.msra.mxu0 %v3803
  %4194 = vmatprep.subr.bf16.mxu0 0
  %4195 = vmatpush1.bf16.msra.mxu0 %v3802
  %4196 = vmatprep.subr.bf16.mxu0 0
  %4197 = vmatpush1.bf16.msra.mxu0 %v3801
  %4198 = vmatprep.subr.bf16.mxu0 0
  %4199 = vmatpush2.bf16.msra.mxu0 %v3816
  %4200 = vmatprep.subr.bf16.mxu0 0
  %4201 = vmatpush2.bf16.msra.mxu0 %v3815
  %4202 = vmatprep.subr.bf16.mxu0 0
  %4203 = vmatpush2.bf16.msra.mxu0 %v3814
  %4204 = vmatprep.subr.bf16.mxu0 0
  %4205 = vmatpush2.bf16.msra.mxu0 %v3813
  %4206 = vmatprep.subr.bf16.mxu0 0
  %4207 = vmatpush2.bf16.msra.mxu0 %v3812
  %4208 = vmatprep.subr.bf16.mxu0 0
  %4209 = vmatpush2.bf16.msra.mxu0 %v3811
  %4210 = vmatprep.subr.bf16.mxu0 0
  %4211 = vmatpush2.bf16.msra.mxu0 %v3810
  %4212 = vmatprep.subr.bf16.mxu0 0
  %4213 = vmatpush2.bf16.msra.mxu0 %v3809
  %4214 = vmatprep.mubr.bf16.mxu0 %v2941
  %4215 = vmatmul.mubr.bf16.gmra.mxu0 %v2940
  %v4216 = vpop.f32.mrf.mxu0
  %v4217 = vadd.f32 %v4176, %v4216
  %v4218 = vpop.f32.mrf.mxu0
  %v4219 = vpop.f32.mrf.mxu0
  %v4220 = vadd.f32 %v4179, %v4219
  %v4221 = vpop.f32.mrf.mxu0
  %4222 = vdwg.mxu0
  %4223 = vmatprep.subr.bf16.mxu0 0
  %4224 = vmatpush1.bf16.msra.mxu0 %v3824
  %4225 = vmatprep.subr.bf16.mxu0 0
  %4226 = vmatpush1.bf16.msra.mxu0 %v3823
  %4227 = vmatprep.subr.bf16.mxu0 0
  %4228 = vmatpush1.bf16.msra.mxu0 %v3822
  %4229 = vmatprep.subr.bf16.mxu0 0
  %4230 = vmatpush1.bf16.msra.mxu0 %v3821
  %4231 = vmatprep.subr.bf16.mxu0 0
  %4232 = vmatpush1.bf16.msra.mxu0 %v3820
  %4233 = vmatprep.subr.bf16.mxu0 0
  %4234 = vmatpush1.bf16.msra.mxu0 %v3819
  %4235 = vmatprep.subr.bf16.mxu0 0
  %4236 = vmatpush1.bf16.msra.mxu0 %v3818
  %4237 = vmatprep.subr.bf16.mxu0 0
  %4238 = vmatpush1.bf16.msra.mxu0 %v3817
  %4239 = vmatprep.subr.bf16.mxu0 0
  %4240 = vmatpush2.bf16.msra.mxu0 %v3832
  %4241 = vmatprep.subr.bf16.mxu0 0
  %4242 = vmatpush2.bf16.msra.mxu0 %v3831
  %4243 = vmatprep.subr.bf16.mxu0 0
  %4244 = vmatpush2.bf16.msra.mxu0 %v3830
  %4245 = vmatprep.subr.bf16.mxu0 0
  %4246 = vmatpush2.bf16.msra.mxu0 %v3829
  %4247 = vmatprep.subr.bf16.mxu0 0
  %4248 = vmatpush2.bf16.msra.mxu0 %v3828
  %4249 = vmatprep.subr.bf16.mxu0 0
  %4250 = vmatpush2.bf16.msra.mxu0 %v3827
  %4251 = vmatprep.subr.bf16.mxu0 0
  %4252 = vmatpush2.bf16.msra.mxu0 %v3826
  %4253 = vmatprep.subr.bf16.mxu0 0
  %4254 = vmatpush2.bf16.msra.mxu0 %v3825
  %4255 = vmatprep.mubr.bf16.mxu0 %v2943
  %4256 = vmatmul.mubr.bf16.gmra.mxu0 %v2942
  %v4257 = vpop.f32.mrf.mxu0
  %v4258 = vadd.f32 %v4217, %v4257
  %v4259 = vpop.f32.mrf.mxu0
  %v4260 = vpop.f32.mrf.mxu0
  %v4261 = vadd.f32 %v4220, %v4260
  %v4262 = vpop.f32.mrf.mxu0
  %4263 = vdwg.mxu0
  %4264 = vmatprep.subr.bf16.mxu0 0
  %4265 = vmatpush1.bf16.msra.mxu0 %v3840
  %4266 = vmatprep.subr.bf16.mxu0 0
  %4267 = vmatpush1.bf16.msra.mxu0 %v3839
  %4268 = vmatprep.subr.bf16.mxu0 0
  %4269 = vmatpush1.bf16.msra.mxu0 %v3838
  %4270 = vmatprep.subr.bf16.mxu0 0
  %4271 = vmatpush1.bf16.msra.mxu0 %v3837
  %4272 = vmatprep.subr.bf16.mxu0 0
  %4273 = vmatpush1.bf16.msra.mxu0 %v3836
  %4274 = vmatprep.subr.bf16.mxu0 0
  %4275 = vmatpush1.bf16.msra.mxu0 %v3835
  %4276 = vmatprep.subr.bf16.mxu0 0
  %4277 = vmatpush1.bf16.msra.mxu0 %v3834
  %4278 = vmatprep.subr.bf16.mxu0 0
  %4279 = vmatpush1.bf16.msra.mxu0 %v3833
  %4280 = vmatprep.subr.bf16.mxu0 0
  %4281 = vmatpush2.bf16.msra.mxu0 %v3848
  %4282 = vmatprep.subr.bf16.mxu0 0
  %4283 = vmatpush2.bf16.msra.mxu0 %v3847
  %4284 = vmatprep.subr.bf16.mxu0 0
  %4285 = vmatpush2.bf16.msra.mxu0 %v3846
  %4286 = vmatprep.subr.bf16.mxu0 0
  %4287 = vmatpush2.bf16.msra.mxu0 %v3845
  %4288 = vmatprep.subr.bf16.mxu0 0
  %4289 = vmatpush2.bf16.msra.mxu0 %v3844
  %4290 = vmatprep.subr.bf16.mxu0 0
  %4291 = vmatpush2.bf16.msra.mxu0 %v3843
  %4292 = vmatprep.subr.bf16.mxu0 0
  %4293 = vmatpush2.bf16.msra.mxu0 %v3842
  %4294 = vmatprep.subr.bf16.mxu0 0
  %4295 = vmatpush2.bf16.msra.mxu0 %v3841
  %4296 = vmatprep.mubr.bf16.mxu0 %v2945
  %4297 = vmatmul.mubr.bf16.gmra.mxu0 %v2944
  %v4298 = vpop.f32.mrf.mxu0
  %v4299 = vadd.f32 %v4258, %v4298
  %v4300 = vpop.f32.mrf.mxu0
  %v4301 = vpop.f32.mrf.mxu0
  %v4302 = vadd.f32 %v4261, %v4301
  %v4303 = vpop.f32.mrf.mxu0
  %4304 = vdwg.mxu0
  %v4305 = vadd.f32 %v2272, %v4299
  %v4306 = vadd.f32 %v2273, %v4302
  %v4307 = vld [vmem:[%s11] sm:$0x1]
  %v4308 = vld [vmem:[%s12] sm:$0x1]
  %v4309 = vsel %vm79, %v4305, 0.0
  %4310 = vadd.xlane.f32.xlu0 %v4309
  %v4311 = vpop.xlane.xlu0 %4310
  %v4312 = vsel %vm2229, %v4306, 0.0
  %4313 = vadd.xlane.f32.xlu0 %v4312
  %v4314 = vpop.xlane.xlu0 %4313
  %v4315 = vmul.f32 %v4311, %v2233
  %v4316 = vmul.f32 %v4314, %v2233
  %v4317 = vmul.f32 %v4305, %v4305
  %v4318 = vmul.f32 %v4306, %v4306
  %v4319 = vsel %vm79, %v4317, 0.0
  %4320 = vadd.xlane.f32.xlu0 %v4319
  %v4321 = vpop.xlane.xlu0 %4320
  %v4322 = vsel %vm2229, %v4318, 0.0
  %4323 = vadd.xlane.f32.xlu0 %v4322
  %v4324 = vpop.xlane.xlu0 %4323
  %v4325 = vmul.f32 %v4321, %v2233
  %v4326 = vmul.f32 %v4324, %v2233
  %v4327 = vsub.f32 %v4305, %v4315
  %v4328 = vsub.f32 %v4306, %v4316
  %v4329 = vmul.f32 %v4315, %v4315
  %v4330 = vmul.f32 %v4316, %v4316
  %v4331 = vsub.f32 %v4325, %v4329
  %v4332 = vsub.f32 %v4326, %v4330
  %v4333 = vadd.f32 %v4331, 1e-05
  %v4334 = vadd.f32 %v4332, 1e-05
  %v4335 = vrsqrt.pop %v4333
  %v4336 = vrsqrt.pop %v4334
  %v4337 = vmul.f32 %v4327, %v4335
  %v4338 = vmul.f32 %v4328, %v4336
  %v4340 = vlaneseq
  %v4341 = vshrl.u32 %v4340, 7
  %v4342 = vsub.s32 0, %v4341
  %v4343 = vrot.slane %v4307, %v4342
  %v4345 = vmul.f32 %v4337, %v4343
  %v4346 = vmul.f32 %v4338, %v4343
  %v4348 = vlaneseq
  %v4349 = vshrl.u32 %v4348, 7
  %v4350 = vsub.s32 0, %v4349
  %v4351 = vrot.slane %v4308, %v4350
  %v4353 = vadd.f32 %v4345, %v4351
  %v4354 = vadd.f32 %v4346, %v4351
  %v4355 = vpack.c.bf16 %v4354, %v4353
  %s4356 = scalar_lea.vmem %s1, 16
  %v4357 = vld [vmem:[%s4356] sm:$0xf]
  %v4358 = vld [vmem:[%s4356 + $0x4] sm:$0xf]
  %v4359 = vld [vmem:[%s4356 + $0x8] sm:$0xf]
  %v4360 = vld [vmem:[%s4356 + $0xc] sm:$0xf]
  %s4361 = scalar_lea.vmem %s2, 1
  %v4362 = vld [vmem:[%s4361] sm:$0x1]
  %v4364 = vlaneseq
  %v4365 = vshrl.u32 %v4364, 7
  %v4366 = vsub.s32 0, %v4365
  %v4367 = vrot.slane %v4362, %v4366
  %v4373 = vunpack.c.l.b16 %v4357
  %v4374 = vunpack.c.l.b16 %v4358
  %v4375 = vunpack.c.l.b16 %v4359
  %v4376 = vunpack.c.l.b16 %v4360
  %v4377 = vpack.c.b16 %v4374, %v4373
  %v4378 = vpack.c.b16 %v4376, %v4375
  %v4382 = vsel %vm79, %v4355, 0
  %4384 = vmatprep.subr.bf16.mxu0 0
  %4385 = vmatpush1.bf16.msra.mxu0 0
  %4386 = vmatprep.subr.bf16.mxu0 0
  %4387 = vmatpush1.bf16.msra.mxu0 0
  %4388 = vmatprep.subr.bf16.mxu0 0
  %4389 = vmatpush1.bf16.msra.mxu0 0
  %4390 = vmatprep.subr.bf16.mxu0 0
  %4391 = vmatpush1.bf16.msra.mxu0 0
  %4392 = vmatprep.subr.bf16.mxu0 0
  %4393 = vmatpush1.bf16.msra.mxu0 0
  %4394 = vmatprep.subr.bf16.mxu0 0
  %4395 = vmatpush1.bf16.msra.mxu0 0
  %4396 = vmatprep.subr.bf16.mxu0 0
  %4397 = vmatpush1.bf16.msra.mxu0 %v4378
  %4398 = vmatprep.subr.bf16.mxu0 0
  %4399 = vmatpush1.bf16.msra.mxu0 %v4377
  %4400 = vmatprep.subr.bf16.mxu0 0
  %4401 = vmatpush2.bf16.msra.mxu0 0
  %4402 = vmatprep.subr.bf16.mxu0 0
  %4403 = vmatpush2.bf16.msra.mxu0 0
  %4404 = vmatprep.subr.bf16.mxu0 0
  %4405 = vmatpush2.bf16.msra.mxu0 0
  %4406 = vmatprep.subr.bf16.mxu0 0
  %4407 = vmatpush2.bf16.msra.mxu0 0
  %4408 = vmatprep.subr.bf16.mxu0 0
  %4409 = vmatpush2.bf16.msra.mxu0 0
  %4410 = vmatprep.subr.bf16.mxu0 0
  %4411 = vmatpush2.bf16.msra.mxu0 0
  %4412 = vmatprep.subr.bf16.mxu0 0
  %4413 = vmatpush2.bf16.msra.mxu0 0
  %4414 = vmatprep.subr.bf16.mxu0 0
  %4415 = vmatpush2.bf16.msra.mxu0 0
  %4416 = vmatprep.mubr.bf16.mxu0 0
  %4417 = vmatmul.mubr.bf16.gmra.mxu0 %v4382
  %v4418 = vpop.f32.mrf.mxu0
  %v4419 = vadd.f32 %v4367, %v4418
  %v4420 = vpop.f32.mrf.mxu0
  %v4421 = vpop.f32.mrf.mxu0
  %v4422 = vadd.f32 %v4367, %v4421
  %v4423 = vpop.f32.mrf.mxu0
  %4424 = vdwg.mxu0
  %v4425 = vmul.f32 %v4419, 0.35355338
  %v4426 = vmul.f32 %v4422, 0.35355338
  %4429 = vrot.lane.b32.xlu0 %v4425, 120
  %v4430 = vpop.permute.xlu0 %4429
  %4431 = vrot.lane.b32.xlu0 %v4426, 120
  %v4432 = vpop.permute.xlu0 %4431
  %4435 = vrot.lane.b32.xlu0 %v4425, 112
  %v4436 = vpop.permute.xlu0 %4435
  %4437 = vrot.lane.b32.xlu0 %v4426, 112
  %v4438 = vpop.permute.xlu0 %4437
  %4441 = vrot.lane.b32.xlu0 %v4425, 104
  %v4442 = vpop.permute.xlu0 %4441
  %4443 = vrot.lane.b32.xlu0 %v4426, 104
  %v4444 = vpop.permute.xlu0 %4443
  %v4447 = vcombine.low %v4425, %v4436
  %v4448 = vcombine.high %v4425, %v4436
  %v4450 = vunpack.c.l.s4 1983009808
  %v4451 = vunpack.c.0.s8 %v4450
  %v4452 = vlaneseq
  %v4453 = vshrl.u32 %v4452, 7
  %v4454 = vsub.s32 %v4451, %v4453
  %v4455 = vrot.slane %v4447, %v4454
  %v4457 = vunpack.c.l.s4 1983009808
  %v4458 = vunpack.c.0.s8 %v4457
  %v4459 = vlaneseq
  %v4460 = vshrl.u32 %v4459, 7
  %v4461 = vsub.s32 %v4458, %v4460
  %v4462 = vrot.slane %v4448, %v4461
  %v4463 = vcombine.low %v4430, %v4442
  %v4464 = vcombine.high %v4430, %v4442
  %v4466 = vunpack.c.l.s4 1983009808
  %v4467 = vunpack.c.0.s8 %v4466
  %v4468 = vlaneseq
  %v4469 = vshrl.u32 %v4468, 7
  %v4470 = vsub.s32 %v4467, %v4469
  %v4471 = vrot.slane %v4463, %v4470
  %v4473 = vunpack.c.l.s4 1983009808
  %v4474 = vunpack.c.0.s8 %v4473
  %v4475 = vlaneseq
  %v4476 = vshrl.u32 %v4475, 7
  %v4477 = vsub.s32 %v4474, %v4476
  %v4478 = vrot.slane %v4464, %v4477
  %v4479 = vcombine.low %v4455, %v4471
  %v4480 = vcombine.high %v4455, %v4471
  %v4482 = vunpack.c.l.s4 1934713408
  %v4483 = vunpack.c.0.s8 %v4482
  %v4484 = vlaneseq
  %v4485 = vshrl.u32 %v4484, 7
  %v4486 = vsub.s32 %v4483, %v4485
  %v4487 = vrot.slane %v4479, %v4486
  %v4489 = vunpack.c.l.s4 1934713408
  %v4490 = vunpack.c.0.s8 %v4489
  %v4491 = vlaneseq
  %v4492 = vshrl.u32 %v4491, 7
  %v4493 = vsub.s32 %v4490, %v4492
  %v4494 = vrot.slane %v4480, %v4493
  %v4495 = vcombine.low %v4462, %v4478
  %v4496 = vcombine.high %v4462, %v4478
  %v4498 = vunpack.c.l.s4 1934713408
  %v4499 = vunpack.c.0.s8 %v4498
  %v4500 = vlaneseq
  %v4501 = vshrl.u32 %v4500, 7
  %v4502 = vsub.s32 %v4499, %v4501
  %v4503 = vrot.slane %v4495, %v4502
  %v4505 = vunpack.c.l.s4 1934713408
  %v4506 = vunpack.c.0.s8 %v4505
  %v4507 = vlaneseq
  %v4508 = vshrl.u32 %v4507, 7
  %v4509 = vsub.s32 %v4506, %v4508
  %v4510 = vrot.slane %v4496, %v4509
  %v4511 = vcombine.high %v4487, 0.0
  %v4512 = vcombine.high %v4494, 0.0
  %v4513 = vcombine.high %v4510, 0.0
  %v4514 = vcombine.low %v4426, %v4438
  %v4515 = vcombine.high %v4426, %v4438
  %v4517 = vunpack.c.l.s4 1983009808
  %v4518 = vunpack.c.0.s8 %v4517
  %v4519 = vlaneseq
  %v4520 = vshrl.u32 %v4519, 7
  %v4521 = vsub.s32 %v4518, %v4520
  %v4522 = vrot.slane %v4514, %v4521
  %v4524 = vunpack.c.l.s4 1983009808
  %v4525 = vunpack.c.0.s8 %v4524
  %v4526 = vlaneseq
  %v4527 = vshrl.u32 %v4526, 7
  %v4528 = vsub.s32 %v4525, %v4527
  %v4529 = vrot.slane %v4515, %v4528
  %v4530 = vcombine.low %v4432, %v4444
  %v4531 = vcombine.high %v4432, %v4444
  %v4533 = vunpack.c.l.s4 1983009808
  %v4534 = vunpack.c.0.s8 %v4533
  %v4535 = vlaneseq
  %v4536 = vshrl.u32 %v4535, 7
  %v4537 = vsub.s32 %v4534, %v4536
  %v4538 = vrot.slane %v4530, %v4537
  %v4540 = vunpack.c.l.s4 1983009808
  %v4541 = vunpack.c.0.s8 %v4540
  %v4542 = vlaneseq
  %v4543 = vshrl.u32 %v4542, 7
  %v4544 = vsub.s32 %v4541, %v4543
  %v4545 = vrot.slane %v4531, %v4544
  %v4546 = vcombine.low %v4522, %v4538
  %v4547 = vcombine.high %v4522, %v4538
  %v4549 = vunpack.c.l.s4 1934713408
  %v4550 = vunpack.c.0.s8 %v4549
  %v4551 = vlaneseq
  %v4552 = vshrl.u32 %v4551, 7
  %v4553 = vsub.s32 %v4550, %v4552
  %v4554 = vrot.slane %v4546, %v4553
  %v4556 = vunpack.c.l.s4 1934713408
  %v4557 = vunpack.c.0.s8 %v4556
  %v4558 = vlaneseq
  %v4559 = vshrl.u32 %v4558, 7
  %v4560 = vsub.s32 %v4557, %v4559
  %v4561 = vrot.slane %v4547, %v4560
  %v4562 = vcombine.low %v4529, %v4545
  %v4564 = vunpack.c.l.s4 1934713408
  %v4565 = vunpack.c.0.s8 %v4564
  %v4566 = vlaneseq
  %v4567 = vshrl.u32 %v4566, 7
  %v4568 = vsub.s32 %v4565, %v4567
  %v4569 = vrot.slane %v4562, %v4568
  %v4570 = vcombine.high %v4554, 0.0
  %v4571 = vcombine.high %v4561, 0.0
  %v4572 = vcombine.high %v4569, 0.0
  %v4573 = vcombine.low %v4487, %v4494
  %v4575 = vunpack.c.l.s4 1983009808
  %v4576 = vunpack.c.0.s8 %v4575
  %v4577 = vlaneseq
  %v4578 = vshrl.u32 %v4577, 7
  %v4579 = vsub.s32 %v4576, %v4578
  %v4580 = vrot.slane %v4573, %v4579
  %v4581 = vcombine.low %v4511, %v4512
  %v4583 = vunpack.c.l.s4 1983009808
  %v4584 = vunpack.c.0.s8 %v4583
  %v4585 = vlaneseq
  %v4586 = vshrl.u32 %v4585, 7
  %v4587 = vsub.s32 %v4584, %v4586
  %v4588 = vrot.slane %v4581, %v4587
  %v4589 = vcombine.low %v4503, %v4510
  %v4591 = vunpack.c.l.s4 1983009808
  %v4592 = vunpack.c.0.s8 %v4591
  %v4593 = vlaneseq
  %v4594 = vshrl.u32 %v4593, 7
  %v4595 = vsub.s32 %v4592, %v4594
  %v4596 = vrot.slane %v4589, %v4595
  %v4597 = vcombine.high %v4503, 0.0
  %v4599 = vunpack.c.l.s4 1983009808
  %v4600 = vunpack.c.0.s8 %v4599
  %v4601 = vlaneseq
  %v4602 = vshrl.u32 %v4601, 7
  %v4603 = vsub.s32 %v4600, %v4602
  %v4604 = vrot.slane %v4597, %v4603
  %v4605 = vcombine.low %v4580, %v4588
  %v4606 = vcombine.high %v4580, %v4588
  %v4608 = vunpack.c.l.s4 1934713408
  %v4609 = vunpack.c.0.s8 %v4608
  %v4610 = vlaneseq
  %v4611 = vshrl.u32 %v4610, 7
  %v4612 = vsub.s32 %v4609, %v4611
  %v4613 = vrot.slane %v4605, %v4612
  %v4615 = vunpack.c.l.s4 1934713408
  %v4616 = vunpack.c.0.s8 %v4615
  %v4617 = vlaneseq
  %v4618 = vshrl.u32 %v4617, 7
  %v4619 = vsub.s32 %v4616, %v4618
  %v4620 = vrot.slane %v4606, %v4619
  %v4621 = vcombine.low %v4596, %v4604
  %v4622 = vcombine.high %v4596, %v4604
  %v4624 = vunpack.c.l.s4 1934713408
  %v4625 = vunpack.c.0.s8 %v4624
  %v4626 = vlaneseq
  %v4627 = vshrl.u32 %v4626, 7
  %v4628 = vsub.s32 %v4625, %v4627
  %v4629 = vrot.slane %v4621, %v4628
  %v4631 = vunpack.c.l.s4 1934713408
  %v4632 = vunpack.c.0.s8 %v4631
  %v4633 = vlaneseq
  %v4634 = vshrl.u32 %v4633, 7
  %v4635 = vsub.s32 %v4632, %v4634
  %v4636 = vrot.slane %v4622, %v4635
  %v4637 = vcombine.low %v4613, %v4629
  %v4638 = vcombine.high %v4613, %v4629
  %v4639 = vcombine.low %v4620, %v4636
  %v4640 = vcombine.high %v4620, %v4636
  %v4641 = vcombine.low %v4513, %v4570
  %v4643 = vunpack.c.l.s4 1983009808
  %v4644 = vunpack.c.0.s8 %v4643
  %v4645 = vlaneseq
  %v4646 = vshrl.u32 %v4645, 7
  %v4647 = vsub.s32 %v4644, %v4646
  %v4648 = vrot.slane %v4641, %v4647
  %v4649 = vcombine.low %v4554, %v4561
  %v4651 = vunpack.c.l.s4 1983009808
  %v4652 = vunpack.c.0.s8 %v4651
  %v4653 = vlaneseq
  %v4654 = vshrl.u32 %v4653, 7
  %v4655 = vsub.s32 %v4652, %v4654
  %v4656 = vrot.slane %v4649, %v4655
  %v4657 = vcombine.low %v4571, %v4572
  %v4659 = vunpack.c.l.s4 1983009808
  %v4660 = vunpack.c.0.s8 %v4659
  %v4661 = vlaneseq
  %v4662 = vshrl.u32 %v4661, 7
  %v4663 = vsub.s32 %v4660, %v4662
  %v4664 = vrot.slane %v4657, %v4663
  %v4666 = vunpack.c.l.s4 1983009808
  %v4667 = vunpack.c.0.s8 %v4666
  %v4668 = vlaneseq
  %v4669 = vshrl.u32 %v4668, 7
  %v4670 = vsub.s32 %v4667, %v4669
  %v4671 = vrot.slane %v4569, %v4670
  %v4672 = vcombine.low %v4648, %v4656
  %v4673 = vcombine.high %v4648, %v4656
  %v4675 = vunpack.c.l.s4 1934713408
  %v4676 = vunpack.c.0.s8 %v4675
  %v4677 = vlaneseq
  %v4678 = vshrl.u32 %v4677, 7
  %v4679 = vsub.s32 %v4676, %v4678
  %v4680 = vrot.slane %v4672, %v4679
  %v4682 = vunpack.c.l.s4 1934713408
  %v4683 = vunpack.c.0.s8 %v4682
  %v4684 = vlaneseq
  %v4685 = vshrl.u32 %v4684, 7
  %v4686 = vsub.s32 %v4683, %v4685
  %v4687 = vrot.slane %v4673, %v4686
  %v4688 = vcombine.low %v4664, %v4671
  %v4689 = vcombine.high %v4664, %v4671
  %v4691 = vunpack.c.l.s4 1934713408
  %v4692 = vunpack.c.0.s8 %v4691
  %v4693 = vlaneseq
  %v4694 = vshrl.u32 %v4693, 7
  %v4695 = vsub.s32 %v4692, %v4694
  %v4696 = vrot.slane %v4688, %v4695
  %v4698 = vunpack.c.l.s4 1934713408
  %v4699 = vunpack.c.0.s8 %v4698
  %v4700 = vlaneseq
  %v4701 = vshrl.u32 %v4700, 7
  %v4702 = vsub.s32 %v4699, %v4701
  %v4703 = vrot.slane %v4689, %v4702
  %v4704 = vcombine.low %v4680, %v4696
  %v4705 = vcombine.high %v4680, %v4696
  %v4706 = vcombine.low %v4687, %v4703
  %v4707 = vcombine.high %v4687, %v4703
  %4710 = vrot.lane.b32.xlu0 %v4419, 120
  %v4711 = vpop.permute.xlu0 %4710
  %4712 = vrot.lane.b32.xlu0 %v4422, 120
  %v4713 = vpop.permute.xlu0 %4712
  %4714 = vrot.lane.b32.xlu0 %v4419, 112
  %v4715 = vpop.permute.xlu0 %4714
  %4716 = vrot.lane.b32.xlu0 %v4422, 112
  %v4717 = vpop.permute.xlu0 %4716
  %4718 = vrot.lane.b32.xlu0 %v4419, 104
  %v4719 = vpop.permute.xlu0 %4718
  %4720 = vrot.lane.b32.xlu0 %v4422, 104
  %v4721 = vpop.permute.xlu0 %4720
  %4722 = vrot.lane.b32.xlu0 %v4419, 96
  %v4723 = vpop.permute.xlu0 %4722
  %4724 = vrot.lane.b32.xlu0 %v4422, 96
  %v4725 = vpop.permute.xlu0 %4724
  %4726 = vrot.lane.b32.xlu0 %v4711, 96
  %v4727 = vpop.permute.xlu0 %4726
  %4728 = vrot.lane.b32.xlu0 %v4713, 96
  %v4729 = vpop.permute.xlu0 %4728
  %4730 = vrot.lane.b32.xlu0 %v4715, 96
  %v4731 = vpop.permute.xlu0 %4730
  %4732 = vrot.lane.b32.xlu0 %v4717, 96
  %v4733 = vpop.permute.xlu0 %4732
  %4734 = vrot.lane.b32.xlu0 %v4719, 96
  %v4735 = vpop.permute.xlu0 %4734
  %4736 = vrot.lane.b32.xlu0 %v4721, 96
  %v4737 = vpop.permute.xlu0 %4736
  %v4746 = vcombine.low %v4723, %v4731
  %v4747 = vcombine.high %v4723, %v4731
  %v4749 = vunpack.c.l.s4 1983009808
  %v4750 = vunpack.c.0.s8 %v4749
  %v4751 = vlaneseq
  %v4752 = vshrl.u32 %v4751, 7
  %v4753 = vsub.s32 %v4750, %v4752
  %v4754 = vrot.slane %v4746, %v4753
  %v4756 = vunpack.c.l.s4 1983009808
  %v4757 = vunpack.c.0.s8 %v4756
  %v4758 = vlaneseq
  %v4759 = vshrl.u32 %v4758, 7
  %v4760 = vsub.s32 %v4757, %v4759
  %v4761 = vrot.slane %v4747, %v4760
  %v4762 = vcombine.low %v4727, %v4735
  %v4763 = vcombine.high %v4727, %v4735
  %v4765 = vunpack.c.l.s4 1983009808
  %v4766 = vunpack.c.0.s8 %v4765
  %v4767 = vlaneseq
  %v4768 = vshrl.u32 %v4767, 7
  %v4769 = vsub.s32 %v4766, %v4768
  %v4770 = vrot.slane %v4762, %v4769
  %v4772 = vunpack.c.l.s4 1983009808
  %v4773 = vunpack.c.0.s8 %v4772
  %v4774 = vlaneseq
  %v4775 = vshrl.u32 %v4774, 7
  %v4776 = vsub.s32 %v4773, %v4775
  %v4777 = vrot.slane %v4763, %v4776
  %v4778 = vcombine.low %v4754, %v4770
  %v4779 = vcombine.high %v4754, %v4770
  %v4781 = vunpack.c.l.s4 1934713408
  %v4782 = vunpack.c.0.s8 %v4781
  %v4783 = vlaneseq
  %v4784 = vshrl.u32 %v4783, 7
  %v4785 = vsub.s32 %v4782, %v4784
  %v4786 = vrot.slane %v4778, %v4785
  %v4788 = vunpack.c.l.s4 1934713408
  %v4789 = vunpack.c.0.s8 %v4788
  %v4790 = vlaneseq
  %v4791 = vshrl.u32 %v4790, 7
  %v4792 = vsub.s32 %v4789, %v4791
  %v4793 = vrot.slane %v4779, %v4792
  %v4794 = vcombine.low %v4761, %v4777
  %v4795 = vcombine.high %v4761, %v4777
  %v4797 = vunpack.c.l.s4 1934713408
  %v4798 = vunpack.c.0.s8 %v4797
  %v4799 = vlaneseq
  %v4800 = vshrl.u32 %v4799, 7
  %v4801 = vsub.s32 %v4798, %v4800
  %v4802 = vrot.slane %v4794, %v4801
  %v4804 = vunpack.c.l.s4 1934713408
  %v4805 = vunpack.c.0.s8 %v4804
  %v4806 = vlaneseq
  %v4807 = vshrl.u32 %v4806, 7
  %v4808 = vsub.s32 %v4805, %v4807
  %v4809 = vrot.slane %v4795, %v4808
  %v4810 = vcombine.high %v4786, 0.0
  %v4811 = vcombine.high %v4793, 0.0
  %v4812 = vcombine.high %v4809, 0.0
  %v4813 = vcombine.low %v4725, %v4733
  %v4814 = vcombine.high %v4725, %v4733
  %v4816 = vunpack.c.l.s4 1983009808
  %v4817 = vunpack.c.0.s8 %v4816
  %v4818 = vlaneseq
  %v4819 = vshrl.u32 %v4818, 7
  %v4820 = vsub.s32 %v4817, %v4819
  %v4821 = vrot.slane %v4813, %v4820
  %v4823 = vunpack.c.l.s4 1983009808
  %v4824 = vunpack.c.0.s8 %v4823
  %v4825 = vlaneseq
  %v4826 = vshrl.u32 %v4825, 7
  %v4827 = vsub.s32 %v4824, %v4826
  %v4828 = vrot.slane %v4814, %v4827
  %v4829 = vcombine.low %v4729, %v4737
  %v4830 = vcombine.high %v4729, %v4737
  %v4832 = vunpack.c.l.s4 1983009808
  %v4833 = vunpack.c.0.s8 %v4832
  %v4834 = vlaneseq
  %v4835 = vshrl.u32 %v4834, 7
  %v4836 = vsub.s32 %v4833, %v4835
  %v4837 = vrot.slane %v4829, %v4836
  %v4839 = vunpack.c.l.s4 1983009808
  %v4840 = vunpack.c.0.s8 %v4839
  %v4841 = vlaneseq
  %v4842 = vshrl.u32 %v4841, 7
  %v4843 = vsub.s32 %v4840, %v4842
  %v4844 = vrot.slane %v4830, %v4843
  %v4845 = vcombine.low %v4821, %v4837
  %v4846 = vcombine.high %v4821, %v4837
  %v4848 = vunpack.c.l.s4 1934713408
  %v4849 = vunpack.c.0.s8 %v4848
  %v4850 = vlaneseq
  %v4851 = vshrl.u32 %v4850, 7
  %v4852 = vsub.s32 %v4849, %v4851
  %v4853 = vrot.slane %v4845, %v4852
  %v4855 = vunpack.c.l.s4 1934713408
  %v4856 = vunpack.c.0.s8 %v4855
  %v4857 = vlaneseq
  %v4858 = vshrl.u32 %v4857, 7
  %v4859 = vsub.s32 %v4856, %v4858
  %v4860 = vrot.slane %v4846, %v4859
  %v4861 = vcombine.low %v4828, %v4844
  %v4863 = vunpack.c.l.s4 1934713408
  %v4864 = vunpack.c.0.s8 %v4863
  %v4865 = vlaneseq
  %v4866 = vshrl.u32 %v4865, 7
  %v4867 = vsub.s32 %v4864, %v4866
  %v4868 = vrot.slane %v4861, %v4867
  %v4869 = vcombine.high %v4853, 0.0
  %v4870 = vcombine.high %v4860, 0.0
  %v4871 = vcombine.high %v4868, 0.0
  %v4872 = vcombine.low %v4786, %v4793
  %v4874 = vunpack.c.l.s4 1983009808
  %v4875 = vunpack.c.0.s8 %v4874
  %v4876 = vlaneseq
  %v4877 = vshrl.u32 %v4876, 7
  %v4878 = vsub.s32 %v4875, %v4877
  %v4879 = vrot.slane %v4872, %v4878
  %v4880 = vcombine.low %v4810, %v4811
  %v4882 = vunpack.c.l.s4 1983009808
  %v4883 = vunpack.c.0.s8 %v4882
  %v4884 = vlaneseq
  %v4885 = vshrl.u32 %v4884, 7
  %v4886 = vsub.s32 %v4883, %v4885
  %v4887 = vrot.slane %v4880, %v4886
  %v4888 = vcombine.low %v4802, %v4809
  %v4890 = vunpack.c.l.s4 1983009808
  %v4891 = vunpack.c.0.s8 %v4890
  %v4892 = vlaneseq
  %v4893 = vshrl.u32 %v4892, 7
  %v4894 = vsub.s32 %v4891, %v4893
  %v4895 = vrot.slane %v4888, %v4894
  %v4896 = vcombine.high %v4802, 0.0
  %v4898 = vunpack.c.l.s4 1983009808
  %v4899 = vunpack.c.0.s8 %v4898
  %v4900 = vlaneseq
  %v4901 = vshrl.u32 %v4900, 7
  %v4902 = vsub.s32 %v4899, %v4901
  %v4903 = vrot.slane %v4896, %v4902
  %v4904 = vcombine.low %v4879, %v4887
  %v4905 = vcombine.high %v4879, %v4887
  %v4907 = vunpack.c.l.s4 1934713408
  %v4908 = vunpack.c.0.s8 %v4907
  %v4909 = vlaneseq
  %v4910 = vshrl.u32 %v4909, 7
  %v4911 = vsub.s32 %v4908, %v4910
  %v4912 = vrot.slane %v4904, %v4911
  %v4914 = vunpack.c.l.s4 1934713408
  %v4915 = vunpack.c.0.s8 %v4914
  %v4916 = vlaneseq
  %v4917 = vshrl.u32 %v4916, 7
  %v4918 = vsub.s32 %v4915, %v4917
  %v4919 = vrot.slane %v4905, %v4918
  %v4920 = vcombine.low %v4895, %v4903
  %v4921 = vcombine.high %v4895, %v4903
  %v4923 = vunpack.c.l.s4 1934713408
  %v4924 = vunpack.c.0.s8 %v4923
  %v4925 = vlaneseq
  %v4926 = vshrl.u32 %v4925, 7
  %v4927 = vsub.s32 %v4924, %v4926
  %v4928 = vrot.slane %v4920, %v4927
  %v4930 = vunpack.c.l.s4 1934713408
  %v4931 = vunpack.c.0.s8 %v4930
  %v4932 = vlaneseq
  %v4933 = vshrl.u32 %v4932, 7
  %v4934 = vsub.s32 %v4931, %v4933
  %v4935 = vrot.slane %v4921, %v4934
  %v4936 = vcombine.low %v4912, %v4928
  %v4937 = vcombine.high %v4912, %v4928
  %v4938 = vcombine.low %v4919, %v4935
  %v4939 = vcombine.high %v4919, %v4935
  %v4940 = vcombine.low %v4812, %v4869
  %v4942 = vunpack.c.l.s4 1983009808
  %v4943 = vunpack.c.0.s8 %v4942
  %v4944 = vlaneseq
  %v4945 = vshrl.u32 %v4944, 7
  %v4946 = vsub.s32 %v4943, %v4945
  %v4947 = vrot.slane %v4940, %v4946
  %v4948 = vcombine.low %v4853, %v4860
  %v4950 = vunpack.c.l.s4 1983009808
  %v4951 = vunpack.c.0.s8 %v4950
  %v4952 = vlaneseq
  %v4953 = vshrl.u32 %v4952, 7
  %v4954 = vsub.s32 %v4951, %v4953
  %v4955 = vrot.slane %v4948, %v4954
  %v4956 = vcombine.low %v4870, %v4871
  %v4958 = vunpack.c.l.s4 1983009808
  %v4959 = vunpack.c.0.s8 %v4958
  %v4960 = vlaneseq
  %v4961 = vshrl.u32 %v4960, 7
  %v4962 = vsub.s32 %v4959, %v4961
  %v4963 = vrot.slane %v4956, %v4962
  %v4965 = vunpack.c.l.s4 1983009808
  %v4966 = vunpack.c.0.s8 %v4965
  %v4967 = vlaneseq
  %v4968 = vshrl.u32 %v4967, 7
  %v4969 = vsub.s32 %v4966, %v4968
  %v4970 = vrot.slane %v4868, %v4969
  %v4971 = vcombine.low %v4947, %v4955
  %v4972 = vcombine.high %v4947, %v4955
  %v4974 = vunpack.c.l.s4 1934713408
  %v4975 = vunpack.c.0.s8 %v4974
  %v4976 = vlaneseq
  %v4977 = vshrl.u32 %v4976, 7
  %v4978 = vsub.s32 %v4975, %v4977
  %v4979 = vrot.slane %v4971, %v4978
  %v4981 = vunpack.c.l.s4 1934713408
  %v4982 = vunpack.c.0.s8 %v4981
  %v4983 = vlaneseq
  %v4984 = vshrl.u32 %v4983, 7
  %v4985 = vsub.s32 %v4982, %v4984
  %v4986 = vrot.slane %v4972, %v4985
  %v4987 = vcombine.low %v4963, %v4970
  %v4988 = vcombine.high %v4963, %v4970
  %v4990 = vunpack.c.l.s4 1934713408
  %v4991 = vunpack.c.0.s8 %v4990
  %v4992 = vlaneseq
  %v4993 = vshrl.u32 %v4992, 7
  %v4994 = vsub.s32 %v4991, %v4993
  %v4995 = vrot.slane %v4987, %v4994
  %v4997 = vunpack.c.l.s4 1934713408
  %v4998 = vunpack.c.0.s8 %v4997
  %v4999 = vlaneseq
  %v5000 = vshrl.u32 %v4999, 7
  %v5001 = vsub.s32 %v4998, %v5000
  %v5002 = vrot.slane %v4988, %v5001
  %v5003 = vcombine.low %v4979, %v4995
  %v5004 = vcombine.high %v4979, %v4995
  %v5005 = vcombine.low %v4986, %v5002
  %v5006 = vcombine.high %v4986, %v5002
  %5007 = vrot.lane.b32.xlu0 %v4419, 64
  %v5008 = vpop.permute.xlu0 %5007
  %5009 = vrot.lane.b32.xlu0 %v4422, 64
  %v5010 = vpop.permute.xlu0 %5009
  %5011 = vrot.lane.b32.xlu0 %v4711, 64
  %v5012 = vpop.permute.xlu0 %5011
  %5013 = vrot.lane.b32.xlu0 %v4713, 64
  %v5014 = vpop.permute.xlu0 %5013
  %5015 = vrot.lane.b32.xlu0 %v4715, 64
  %v5016 = vpop.permute.xlu0 %5015
  %5017 = vrot.lane.b32.xlu0 %v4717, 64
  %v5018 = vpop.permute.xlu0 %5017
  %5019 = vrot.lane.b32.xlu0 %v4719, 64
  %v5020 = vpop.permute.xlu0 %5019
  %5021 = vrot.lane.b32.xlu0 %v4721, 64
  %v5022 = vpop.permute.xlu0 %5021
  %v5031 = vcombine.low %v5008, %v5016
  %v5032 = vcombine.high %v5008, %v5016
  %v5034 = vunpack.c.l.s4 1983009808
  %v5035 = vunpack.c.0.s8 %v5034
  %v5036 = vlaneseq
  %v5037 = vshrl.u32 %v5036, 7
  %v5038 = vsub.s32 %v5035, %v5037
  %v5039 = vrot.slane %v5031, %v5038
  %v5041 = vunpack.c.l.s4 1983009808
  %v5042 = vunpack.c.0.s8 %v5041
  %v5043 = vlaneseq
  %v5044 = vshrl.u32 %v5043, 7
  %v5045 = vsub.s32 %v5042, %v5044
  %v5046 = vrot.slane %v5032, %v5045
  %v5047 = vcombine.low %v5012, %v5020
  %v5048 = vcombine.high %v5012, %v5020
  %v5050 = vunpack.c.l.s4 1983009808
  %v5051 = vunpack.c.0.s8 %v5050
  %v5052 = vlaneseq
  %v5053 = vshrl.u32 %v5052, 7
  %v5054 = vsub.s32 %v5051, %v5053
  %v5055 = vrot.slane %v5047, %v5054
  %v5057 = vunpack.c.l.s4 1983009808
  %v5058 = vunpack.c.0.s8 %v5057
  %v5059 = vlaneseq
  %v5060 = vshrl.u32 %v5059, 7
  %v5061 = vsub.s32 %v5058, %v5060
  %v5062 = vrot.slane %v5048, %v5061
  %v5063 = vcombine.low %v5039, %v5055
  %v5064 = vcombine.high %v5039, %v5055
  %v5066 = vunpack.c.l.s4 1934713408
  %v5067 = vunpack.c.0.s8 %v5066
  %v5068 = vlaneseq
  %v5069 = vshrl.u32 %v5068, 7
  %v5070 = vsub.s32 %v5067, %v5069
  %v5071 = vrot.slane %v5063, %v5070
  %v5073 = vunpack.c.l.s4 1934713408
  %v5074 = vunpack.c.0.s8 %v5073
  %v5075 = vlaneseq
  %v5076 = vshrl.u32 %v5075, 7
  %v5077 = vsub.s32 %v5074, %v5076
  %v5078 = vrot.slane %v5064, %v5077
  %v5079 = vcombine.low %v5046, %v5062
  %v5080 = vcombine.high %v5046, %v5062
  %v5082 = vunpack.c.l.s4 1934713408
  %v5083 = vunpack.c.0.s8 %v5082
  %v5084 = vlaneseq
  %v5085 = vshrl.u32 %v5084, 7
  %v5086 = vsub.s32 %v5083, %v5085
  %v5087 = vrot.slane %v5079, %v5086
  %v5089 = vunpack.c.l.s4 1934713408
  %v5090 = vunpack.c.0.s8 %v5089
  %v5091 = vlaneseq
  %v5092 = vshrl.u32 %v5091, 7
  %v5093 = vsub.s32 %v5090, %v5092
  %v5094 = vrot.slane %v5080, %v5093
  %v5095 = vcombine.high %v5071, 0.0
  %v5096 = vcombine.high %v5078, 0.0
  %v5097 = vcombine.high %v5094, 0.0
  %v5098 = vcombine.low %v5010, %v5018
  %v5099 = vcombine.high %v5010, %v5018
  %v5101 = vunpack.c.l.s4 1983009808
  %v5102 = vunpack.c.0.s8 %v5101
  %v5103 = vlaneseq
  %v5104 = vshrl.u32 %v5103, 7
  %v5105 = vsub.s32 %v5102, %v5104
  %v5106 = vrot.slane %v5098, %v5105
  %v5108 = vunpack.c.l.s4 1983009808
  %v5109 = vunpack.c.0.s8 %v5108
  %v5110 = vlaneseq
  %v5111 = vshrl.u32 %v5110, 7
  %v5112 = vsub.s32 %v5109, %v5111
  %v5113 = vrot.slane %v5099, %v5112
  %v5114 = vcombine.low %v5014, %v5022
  %v5115 = vcombine.high %v5014, %v5022
  %v5117 = vunpack.c.l.s4 1983009808
  %v5118 = vunpack.c.0.s8 %v5117
  %v5119 = vlaneseq
  %v5120 = vshrl.u32 %v5119, 7
  %v5121 = vsub.s32 %v5118, %v5120
  %v5122 = vrot.slane %v5114, %v5121
  %v5124 = vunpack.c.l.s4 1983009808
  %v5125 = vunpack.c.0.s8 %v5124
  %v5126 = vlaneseq
  %v5127 = vshrl.u32 %v5126, 7
  %v5128 = vsub.s32 %v5125, %v5127
  %v5129 = vrot.slane %v5115, %v5128
  %v5130 = vcombine.low %v5106, %v5122
  %v5131 = vcombine.high %v5106, %v5122
  %v5133 = vunpack.c.l.s4 1934713408
  %v5134 = vunpack.c.0.s8 %v5133
  %v5135 = vlaneseq
  %v5136 = vshrl.u32 %v5135, 7
  %v5137 = vsub.s32 %v5134, %v5136
  %v5138 = vrot.slane %v5130, %v5137
  %v5140 = vunpack.c.l.s4 1934713408
  %v5141 = vunpack.c.0.s8 %v5140
  %v5142 = vlaneseq
  %v5143 = vshrl.u32 %v5142, 7
  %v5144 = vsub.s32 %v5141, %v5143
  %v5145 = vrot.slane %v5131, %v5144
  %v5146 = vcombine.low %v5113, %v5129
  %v5148 = vunpack.c.l.s4 1934713408
  %v5149 = vunpack.c.0.s8 %v5148
  %v5150 = vlaneseq
  %v5151 = vshrl.u32 %v5150, 7
  %v5152 = vsub.s32 %v5149, %v5151
  %v5153 = vrot.slane %v5146, %v5152
  %v5154 = vcombine.high %v5138, 0.0
  %v5155 = vcombine.high %v5145, 0.0
  %v5156 = vcombine.high %v5153, 0.0
  %v5157 = vcombine.low %v5071, %v5078
  %v5159 = vunpack.c.l.s4 1983009808
  %v5160 = vunpack.c.0.s8 %v5159
  %v5161 = vlaneseq
  %v5162 = vshrl.u32 %v5161, 7
  %v5163 = vsub.s32 %v5160, %v5162
  %v5164 = vrot.slane %v5157, %v5163
  %v5165 = vcombine.low %v5095, %v5096
  %v5167 = vunpack.c.l.s4 1983009808
  %v5168 = vunpack.c.0.s8 %v5167
  %v5169 = vlaneseq
  %v5170 = vshrl.u32 %v5169, 7
  %v5171 = vsub.s32 %v5168, %v5170
  %v5172 = vrot.slane %v5165, %v5171
  %v5173 = vcombine.low %v5087, %v5094
  %v5175 = vunpack.c.l.s4 1983009808
  %v5176 = vunpack.c.0.s8 %v5175
  %v5177 = vlaneseq
  %v5178 = vshrl.u32 %v5177, 7
  %v5179 = vsub.s32 %v5176, %v5178
  %v5180 = vrot.slane %v5173, %v5179
  %v5181 = vcombine.high %v5087, 0.0
  %v5183 = vunpack.c.l.s4 1983009808
  %v5184 = vunpack.c.0.s8 %v5183
  %v5185 = vlaneseq
  %v5186 = vshrl.u32 %v5185, 7
  %v5187 = vsub.s32 %v5184, %v5186
  %v5188 = vrot.slane %v5181, %v5187
  %v5189 = vcombine.low %v5164, %v5172
  %v5190 = vcombine.high %v5164, %v5172
  %v5192 = vunpack.c.l.s4 1934713408
  %v5193 = vunpack.c.0.s8 %v5192
  %v5194 = vlaneseq
  %v5195 = vshrl.u32 %v5194, 7
  %v5196 = vsub.s32 %v5193, %v5195
  %v5197 = vrot.slane %v5189, %v5196
  %v5199 = vunpack.c.l.s4 1934713408
  %v5200 = vunpack.c.0.s8 %v5199
  %v5201 = vlaneseq
  %v5202 = vshrl.u32 %v5201, 7
  %v5203 = vsub.s32 %v5200, %v5202
  %v5204 = vrot.slane %v5190, %v5203
  %v5205 = vcombine.low %v5180, %v5188
  %v5206 = vcombine.high %v5180, %v5188
  %v5208 = vunpack.c.l.s4 1934713408
  %v5209 = vunpack.c.0.s8 %v5208
  %v5210 = vlaneseq
  %v5211 = vshrl.u32 %v5210, 7
  %v5212 = vsub.s32 %v5209, %v5211
  %v5213 = vrot.slane %v5205, %v5212
  %v5215 = vunpack.c.l.s4 1934713408
  %v5216 = vunpack.c.0.s8 %v5215
  %v5217 = vlaneseq
  %v5218 = vshrl.u32 %v5217, 7
  %v5219 = vsub.s32 %v5216, %v5218
  %v5220 = vrot.slane %v5206, %v5219
  %v5221 = vcombine.low %v5197, %v5213
  %v5222 = vcombine.high %v5197, %v5213
  %v5223 = vcombine.low %v5204, %v5220
  %v5224 = vcombine.high %v5204, %v5220
  %v5225 = vcombine.low %v5097, %v5154
  %v5227 = vunpack.c.l.s4 1983009808
  %v5228 = vunpack.c.0.s8 %v5227
  %v5229 = vlaneseq
  %v5230 = vshrl.u32 %v5229, 7
  %v5231 = vsub.s32 %v5228, %v5230
  %v5232 = vrot.slane %v5225, %v5231
  %v5233 = vcombine.low %v5138, %v5145
  %v5235 = vunpack.c.l.s4 1983009808
  %v5236 = vunpack.c.0.s8 %v5235
  %v5237 = vlaneseq
  %v5238 = vshrl.u32 %v5237, 7
  %v5239 = vsub.s32 %v5236, %v5238
  %v5240 = vrot.slane %v5233, %v5239
  %v5241 = vcombine.low %v5155, %v5156
  %v5243 = vunpack.c.l.s4 1983009808
  %v5244 = vunpack.c.0.s8 %v5243
  %v5245 = vlaneseq
  %v5246 = vshrl.u32 %v5245, 7
  %v5247 = vsub.s32 %v5244, %v5246
  %v5248 = vrot.slane %v5241, %v5247
  %v5250 = vunpack.c.l.s4 1983009808
  %v5251 = vunpack.c.0.s8 %v5250
  %v5252 = vlaneseq
  %v5253 = vshrl.u32 %v5252, 7
  %v5254 = vsub.s32 %v5251, %v5253
  %v5255 = vrot.slane %v5153, %v5254
  %v5256 = vcombine.low %v5232, %v5240
  %v5257 = vcombine.high %v5232, %v5240
  %v5259 = vunpack.c.l.s4 1934713408
  %v5260 = vunpack.c.0.s8 %v5259
  %v5261 = vlaneseq
  %v5262 = vshrl.u32 %v5261, 7
  %v5263 = vsub.s32 %v5260, %v5262
  %v5264 = vrot.slane %v5256, %v5263
  %v5266 = vunpack.c.l.s4 1934713408
  %v5267 = vunpack.c.0.s8 %v5266
  %v5268 = vlaneseq
  %v5269 = vshrl.u32 %v5268, 7
  %v5270 = vsub.s32 %v5267, %v5269
  %v5271 = vrot.slane %v5257, %v5270
  %v5272 = vcombine.low %v5248, %v5255
  %v5273 = vcombine.high %v5248, %v5255
  %v5275 = vunpack.c.l.s4 1934713408
  %v5276 = vunpack.c.0.s8 %v5275
  %v5277 = vlaneseq
  %v5278 = vshrl.u32 %v5277, 7
  %v5279 = vsub.s32 %v5276, %v5278
  %v5280 = vrot.slane %v5272, %v5279
  %v5282 = vunpack.c.l.s4 1934713408
  %v5283 = vunpack.c.0.s8 %v5282
  %v5284 = vlaneseq
  %v5285 = vshrl.u32 %v5284, 7
  %v5286 = vsub.s32 %v5283, %v5285
  %v5287 = vrot.slane %v5273, %v5286
  %v5288 = vcombine.low %v5264, %v5280
  %v5289 = vcombine.high %v5264, %v5280
  %v5290 = vcombine.low %v5271, %v5287
  %v5291 = vcombine.high %v5271, %v5287
  %v5292 = vpack.c.bf16 %v4637, %v4637
  %v5293 = vpack.c.bf16 %v4638, %v4638
  %v5294 = vpack.c.bf16 %v4639, %v4639
  %v5295 = vpack.c.bf16 %v4640, %v4640
  %v5296 = vpack.c.bf16 %v4704, %v4704
  %v5297 = vpack.c.bf16 %v4705, %v4705
  %v5298 = vpack.c.bf16 %v4706, %v4706
  %v5299 = vpack.c.bf16 %v4707, %v4707
  %v5300 = vpack.c.bf16 %v4936, %v4936
  %v5301 = vpack.c.bf16 %v4937, %v4937
  %v5302 = vpack.c.bf16 %v4938, %v4938
  %v5303 = vpack.c.bf16 %v4939, %v4939
  %v5304 = vpack.c.bf16 %v5003, %v5003
  %v5305 = vpack.c.bf16 %v5004, %v5004
  %v5306 = vpack.c.bf16 %v5005, %v5005
  %v5307 = vpack.c.bf16 %v5006, %v5006
  %v5309 = vsel %vm1007, %v5292, 0
  %v5312 = vsel %vm1007, %v5300, 0
  %5314 = vmatprep.subr.bf16.mxu0 0
  %5315 = vmatpush1.bf16.xpose.msra.mxu0 0
  %5316 = vmatprep.subr.bf16.mxu0 0
  %5317 = vmatpush1.bf16.xpose.msra.mxu0 0
  %5318 = vmatprep.subr.bf16.mxu0 0
  %5319 = vmatpush1.bf16.xpose.msra.mxu0 0
  %5320 = vmatprep.subr.bf16.mxu0 0
  %5321 = vmatpush1.bf16.xpose.msra.mxu0 0
  %5322 = vmatprep.subr.bf16.mxu0 0
  %5323 = vmatpush1.bf16.xpose.msra.mxu0 0
  %5324 = vmatprep.subr.bf16.mxu0 0
  %5325 = vmatpush1.bf16.xpose.msra.mxu0 0
  %5326 = vmatprep.subr.bf16.mxu0 0
  %5327 = vmatpush1.bf16.xpose.msra.mxu0 0
  %5328 = vmatprep.subr.bf16.mxu0 0
  %5329 = vmatpush1.bf16.xpose.msra.mxu0 %v5312
  %5330 = vmatprep.subr.bf16.mxu0 0
  %5331 = vmatpush2.bf16.xpose.msra.mxu0 0
  %5332 = vmatprep.subr.bf16.mxu0 0
  %5333 = vmatpush2.bf16.xpose.msra.mxu0 0
  %5334 = vmatprep.subr.bf16.mxu0 0
  %5335 = vmatpush2.bf16.xpose.msra.mxu0 0
  %5336 = vmatprep.subr.bf16.mxu0 0
  %5337 = vmatpush2.bf16.xpose.msra.mxu0 0
  %5338 = vmatprep.subr.bf16.mxu0 0
  %5339 = vmatpush2.bf16.xpose.msra.mxu0 0
  %5340 = vmatprep.subr.bf16.mxu0 0
  %5341 = vmatpush2.bf16.xpose.msra.mxu0 0
  %5342 = vmatprep.subr.bf16.mxu0 0
  %5343 = vmatpush2.bf16.xpose.msra.mxu0 0
  %5344 = vmatprep.subr.bf16.mxu0 0
  %5345 = vmatpush2.bf16.xpose.msra.mxu0 0
  %5346 = vmatprep.mubr.bf16.mxu0 0
  %5347 = vmatmul.mubr.bf16.gmra.mxu0 %v5309
  %v5348 = vpop.f32.mrf.mxu0
  %v5349 = vadd.f32 0.0, %v5348
  %v5350 = vpop.f32.mrf.mxu0
  %v5351 = vpop.f32.mrf.mxu0
  %v5352 = vpop.f32.mrf.mxu0
  %5353 = vdwg.mxu0
  %v5355 = vsel %vm1007, %v5293, 0
  %v5358 = vsel %vm1007, %v5301, 0
  %5360 = vmatprep.subr.bf16.mxu0 0
  %5361 = vmatpush1.bf16.xpose.msra.mxu0 0
  %5362 = vmatprep.subr.bf16.mxu0 0
  %5363 = vmatpush1.bf16.xpose.msra.mxu0 0
  %5364 = vmatprep.subr.bf16.mxu0 0
  %5365 = vmatpush1.bf16.xpose.msra.mxu0 0
  %5366 = vmatprep.subr.bf16.mxu0 0
  %5367 = vmatpush1.bf16.xpose.msra.mxu0 0
  %5368 = vmatprep.subr.bf16.mxu0 0
  %5369 = vmatpush1.bf16.xpose.msra.mxu0 0
  %5370 = vmatprep.subr.bf16.mxu0 0
  %5371 = vmatpush1.bf16.xpose.msra.mxu0 0
  %5372 = vmatprep.subr.bf16.mxu0 0
  %5373 = vmatpush1.bf16.xpose.msra.mxu0 0
  %5374 = vmatprep.subr.bf16.mxu0 0
  %5375 = vmatpush1.bf16.xpose.msra.mxu0 %v5358
  %5376 = vmatprep.subr.bf16.mxu0 0
  %5377 = vmatpush2.bf16.xpose.msra.mxu0 0
  %5378 = vmatprep.subr.bf16.mxu0 0
  %5379 = vmatpush2.bf16.xpose.msra.mxu0 0
  %5380 = vmatprep.subr.bf16.mxu0 0
  %5381 = vmatpush2.bf16.xpose.msra.mxu0 0
  %5382 = vmatprep.subr.bf16.mxu0 0
  %5383 = vmatpush2.bf16.xpose.msra.mxu0 0
  %5384 = vmatprep.subr.bf16.mxu0 0
  %5385 = vmatpush2.bf16.xpose.msra.mxu0 0
  %5386 = vmatprep.subr.bf16.mxu0 0
  %5387 = vmatpush2.bf16.xpose.msra.mxu0 0
  %5388 = vmatprep.subr.bf16.mxu0 0
  %5389 = vmatpush2.bf16.xpose.msra.mxu0 0
  %5390 = vmatprep.subr.bf16.mxu0 0
  %5391 = vmatpush2.bf16.xpose.msra.mxu0 0
  %5392 = vmatprep.mubr.bf16.mxu0 0
  %5393 = vmatmul.mubr.bf16.gmra.mxu0 %v5355
  %v5394 = vpop.f32.mrf.mxu0
  %v5395 = vadd.f32 0.0, %v5394
  %v5396 = vpop.f32.mrf.mxu0
  %v5397 = vpop.f32.mrf.mxu0
  %v5398 = vpop.f32.mrf.mxu0
  %5399 = vdwg.mxu0
  %v5401 = vsel %vm1007, %v5294, 0
  %v5404 = vsel %vm1007, %v5302, 0
  %5406 = vmatprep.subr.bf16.mxu0 0
  %5407 = vmatpush1.bf16.xpose.msra.mxu0 0
  %5408 = vmatprep.subr.bf16.mxu0 0
  %5409 = vmatpush1.bf16.xpose.msra.mxu0 0
  %5410 = vmatprep.subr.bf16.mxu0 0
  %5411 = vmatpush1.bf16.xpose.msra.mxu0 0
  %5412 = vmatprep.subr.bf16.mxu0 0
  %5413 = vmatpush1.bf16.xpose.msra.mxu0 0
  %5414 = vmatprep.subr.bf16.mxu0 0
  %5415 = vmatpush1.bf16.xpose.msra.mxu0 0
  %5416 = vmatprep.subr.bf16.mxu0 0
  %5417 = vmatpush1.bf16.xpose.msra.mxu0 0
  %5418 = vmatprep.subr.bf16.mxu0 0
  %5419 = vmatpush1.bf16.xpose.msra.mxu0 0
  %5420 = vmatprep.subr.bf16.mxu0 0
  %5421 = vmatpush1.bf16.xpose.msra.mxu0 %v5404
  %5422 = vmatprep.subr.bf16.mxu0 0
  %5423 = vmatpush2.bf16.xpose.msra.mxu0 0
  %5424 = vmatprep.subr.bf16.mxu0 0
  %5425 = vmatpush2.bf16.xpose.msra.mxu0 0
  %5426 = vmatprep.subr.bf16.mxu0 0
  %5427 = vmatpush2.bf16.xpose.msra.mxu0 0
  %5428 = vmatprep.subr.bf16.mxu0 0
  %5429 = vmatpush2.bf16.xpose.msra.mxu0 0
  %5430 = vmatprep.subr.bf16.mxu0 0
  %5431 = vmatpush2.bf16.xpose.msra.mxu0 0
  %5432 = vmatprep.subr.bf16.mxu0 0
  %5433 = vmatpush2.bf16.xpose.msra.mxu0 0
  %5434 = vmatprep.subr.bf16.mxu0 0
  %5435 = vmatpush2.bf16.xpose.msra.mxu0 0
  %5436 = vmatprep.subr.bf16.mxu0 0
  %5437 = vmatpush2.bf16.xpose.msra.mxu0 0
  %5438 = vmatprep.mubr.bf16.mxu0 0
  %5439 = vmatmul.mubr.bf16.gmra.mxu0 %v5401
  %v5440 = vpop.f32.mrf.mxu0
  %v5441 = vadd.f32 0.0, %v5440
  %v5442 = vpop.f32.mrf.mxu0
  %v5443 = vpop.f32.mrf.mxu0
  %v5444 = vpop.f32.mrf.mxu0
  %5445 = vdwg.mxu0
  %v5447 = vsel %vm1007, %v5295, 0
  %v5450 = vsel %vm1007, %v5303, 0
  %5452 = vmatprep.subr.bf16.mxu0 0
  %5453 = vmatpush1.bf16.xpose.msra.mxu0 0
  %5454 = vmatprep.subr.bf16.mxu0 0
  %5455 = vmatpush1.bf16.xpose.msra.mxu0 0
  %5456 = vmatprep.subr.bf16.mxu0 0
  %5457 = vmatpush1.bf16.xpose.msra.mxu0 0
  %5458 = vmatprep.subr.bf16.mxu0 0
  %5459 = vmatpush1.bf16.xpose.msra.mxu0 0
  %5460 = vmatprep.subr.bf16.mxu0 0
  %5461 = vmatpush1.bf16.xpose.msra.mxu0 0
  %5462 = vmatprep.subr.bf16.mxu0 0
  %5463 = vmatpush1.bf16.xpose.msra.mxu0 0
  %5464 = vmatprep.subr.bf16.mxu0 0
  %5465 = vmatpush1.bf16.xpose.msra.mxu0 0
  %5466 = vmatprep.subr.bf16.mxu0 0
  %5467 = vmatpush1.bf16.xpose.msra.mxu0 %v5450
  %5468 = vmatprep.subr.bf16.mxu0 0
  %5469 = vmatpush2.bf16.xpose.msra.mxu0 0
  %5470 = vmatprep.subr.bf16.mxu0 0
  %5471 = vmatpush2.bf16.xpose.msra.mxu0 0
  %5472 = vmatprep.subr.bf16.mxu0 0
  %5473 = vmatpush2.bf16.xpose.msra.mxu0 0
  %5474 = vmatprep.subr.bf16.mxu0 0
  %5475 = vmatpush2.bf16.xpose.msra.mxu0 0
  %5476 = vmatprep.subr.bf16.mxu0 0
  %5477 = vmatpush2.bf16.xpose.msra.mxu0 0
  %5478 = vmatprep.subr.bf16.mxu0 0
  %5479 = vmatpush2.bf16.xpose.msra.mxu0 0
  %5480 = vmatprep.subr.bf16.mxu0 0
  %5481 = vmatpush2.bf16.xpose.msra.mxu0 0
  %5482 = vmatprep.subr.bf16.mxu0 0
  %5483 = vmatpush2.bf16.xpose.msra.mxu0 0
  %5484 = vmatprep.mubr.bf16.mxu0 0
  %5485 = vmatmul.mubr.bf16.gmra.mxu0 %v5447
  %v5486 = vpop.f32.mrf.mxu0
  %v5487 = vadd.f32 0.0, %v5486
  %v5488 = vpop.f32.mrf.mxu0
  %v5489 = vpop.f32.mrf.mxu0
  %v5490 = vpop.f32.mrf.mxu0
  %5491 = vdwg.mxu0
  %v5493 = vsel %vm1007, %v5296, 0
  %v5496 = vsel %vm1007, %v5304, 0
  %5498 = vmatprep.subr.bf16.mxu0 0
  %5499 = vmatpush1.bf16.xpose.msra.mxu0 0
  %5500 = vmatprep.subr.bf16.mxu0 0
  %5501 = vmatpush1.bf16.xpose.msra.mxu0 0
  %5502 = vmatprep.subr.bf16.mxu0 0
  %5503 = vmatpush1.bf16.xpose.msra.mxu0 0
  %5504 = vmatprep.subr.bf16.mxu0 0
  %5505 = vmatpush1.bf16.xpose.msra.mxu0 0
  %5506 = vmatprep.subr.bf16.mxu0 0
  %5507 = vmatpush1.bf16.xpose.msra.mxu0 0
  %5508 = vmatprep.subr.bf16.mxu0 0
  %5509 = vmatpush1.bf16.xpose.msra.mxu0 0
  %5510 = vmatprep.subr.bf16.mxu0 0
  %5511 = vmatpush1.bf16.xpose.msra.mxu0 0
  %5512 = vmatprep.subr.bf16.mxu0 0
  %5513 = vmatpush1.bf16.xpose.msra.mxu0 %v5496
  %5514 = vmatprep.subr.bf16.mxu0 0
  %5515 = vmatpush2.bf16.xpose.msra.mxu0 0
  %5516 = vmatprep.subr.bf16.mxu0 0
  %5517 = vmatpush2.bf16.xpose.msra.mxu0 0
  %5518 = vmatprep.subr.bf16.mxu0 0
  %5519 = vmatpush2.bf16.xpose.msra.mxu0 0
  %5520 = vmatprep.subr.bf16.mxu0 0
  %5521 = vmatpush2.bf16.xpose.msra.mxu0 0
  %5522 = vmatprep.subr.bf16.mxu0 0
  %5523 = vmatpush2.bf16.xpose.msra.mxu0 0
  %5524 = vmatprep.subr.bf16.mxu0 0
  %5525 = vmatpush2.bf16.xpose.msra.mxu0 0
  %5526 = vmatprep.subr.bf16.mxu0 0
  %5527 = vmatpush2.bf16.xpose.msra.mxu0 0
  %5528 = vmatprep.subr.bf16.mxu0 0
  %5529 = vmatpush2.bf16.xpose.msra.mxu0 0
  %5530 = vmatprep.mubr.bf16.mxu0 0
  %5531 = vmatmul.mubr.bf16.gmra.mxu0 %v5493
  %v5532 = vpop.f32.mrf.mxu0
  %v5533 = vadd.f32 0.0, %v5532
  %v5534 = vpop.f32.mrf.mxu0
  %v5535 = vpop.f32.mrf.mxu0
  %v5536 = vpop.f32.mrf.mxu0
  %5537 = vdwg.mxu0
  %v5539 = vsel %vm1007, %v5297, 0
  %v5542 = vsel %vm1007, %v5305, 0
  %5544 = vmatprep.subr.bf16.mxu0 0
  %5545 = vmatpush1.bf16.xpose.msra.mxu0 0
  %5546 = vmatprep.subr.bf16.mxu0 0
  %5547 = vmatpush1.bf16.xpose.msra.mxu0 0
  %5548 = vmatprep.subr.bf16.mxu0 0
  %5549 = vmatpush1.bf16.xpose.msra.mxu0 0
  %5550 = vmatprep.subr.bf16.mxu0 0
  %5551 = vmatpush1.bf16.xpose.msra.mxu0 0
  %5552 = vmatprep.subr.bf16.mxu0 0
  %5553 = vmatpush1.bf16.xpose.msra.mxu0 0
  %5554 = vmatprep.subr.bf16.mxu0 0
  %5555 = vmatpush1.bf16.xpose.msra.mxu0 0
  %5556 = vmatprep.subr.bf16.mxu0 0
  %5557 = vmatpush1.bf16.xpose.msra.mxu0 0
  %5558 = vmatprep.subr.bf16.mxu0 0
  %5559 = vmatpush1.bf16.xpose.msra.mxu0 %v5542
  %5560 = vmatprep.subr.bf16.mxu0 0
  %5561 = vmatpush2.bf16.xpose.msra.mxu0 0
  %5562 = vmatprep.subr.bf16.mxu0 0
  %5563 = vmatpush2.bf16.xpose.msra.mxu0 0
  %5564 = vmatprep.subr.bf16.mxu0 0
  %5565 = vmatpush2.bf16.xpose.msra.mxu0 0
  %5566 = vmatprep.subr.bf16.mxu0 0
  %5567 = vmatpush2.bf16.xpose.msra.mxu0 0
  %5568 = vmatprep.subr.bf16.mxu0 0
  %5569 = vmatpush2.bf16.xpose.msra.mxu0 0
  %5570 = vmatprep.subr.bf16.mxu0 0
  %5571 = vmatpush2.bf16.xpose.msra.mxu0 0
  %5572 = vmatprep.subr.bf16.mxu0 0
  %5573 = vmatpush2.bf16.xpose.msra.mxu0 0
  %5574 = vmatprep.subr.bf16.mxu0 0
  %5575 = vmatpush2.bf16.xpose.msra.mxu0 0
  %5576 = vmatprep.mubr.bf16.mxu0 0
  %5577 = vmatmul.mubr.bf16.gmra.mxu0 %v5539
  %v5578 = vpop.f32.mrf.mxu0
  %v5579 = vadd.f32 0.0, %v5578
  %v5580 = vpop.f32.mrf.mxu0
  %v5581 = vpop.f32.mrf.mxu0
  %v5582 = vpop.f32.mrf.mxu0
  %5583 = vdwg.mxu0
  %v5585 = vsel %vm1007, %v5298, 0
  %v5588 = vsel %vm1007, %v5306, 0
  %5590 = vmatprep.subr.bf16.mxu0 0
  %5591 = vmatpush1.bf16.xpose.msra.mxu0 0
  %5592 = vmatprep.subr.bf16.mxu0 0
  %5593 = vmatpush1.bf16.xpose.msra.mxu0 0
  %5594 = vmatprep.subr.bf16.mxu0 0
  %5595 = vmatpush1.bf16.xpose.msra.mxu0 0
  %5596 = vmatprep.subr.bf16.mxu0 0
  %5597 = vmatpush1.bf16.xpose.msra.mxu0 0
  %5598 = vmatprep.subr.bf16.mxu0 0
  %5599 = vmatpush1.bf16.xpose.msra.mxu0 0
  %5600 = vmatprep.subr.bf16.mxu0 0
  %5601 = vmatpush1.bf16.xpose.msra.mxu0 0
  %5602 = vmatprep.subr.bf16.mxu0 0
  %5603 = vmatpush1.bf16.xpose.msra.mxu0 0
  %5604 = vmatprep.subr.bf16.mxu0 0
  %5605 = vmatpush1.bf16.xpose.msra.mxu0 %v5588
  %5606 = vmatprep.subr.bf16.mxu0 0
  %5607 = vmatpush2.bf16.xpose.msra.mxu0 0
  %5608 = vmatprep.subr.bf16.mxu0 0
  %5609 = vmatpush2.bf16.xpose.msra.mxu0 0
  %5610 = vmatprep.subr.bf16.mxu0 0
  %5611 = vmatpush2.bf16.xpose.msra.mxu0 0
  %5612 = vmatprep.subr.bf16.mxu0 0
  %5613 = vmatpush2.bf16.xpose.msra.mxu0 0
  %5614 = vmatprep.subr.bf16.mxu0 0
  %5615 = vmatpush2.bf16.xpose.msra.mxu0 0
  %5616 = vmatprep.subr.bf16.mxu0 0
  %5617 = vmatpush2.bf16.xpose.msra.mxu0 0
  %5618 = vmatprep.subr.bf16.mxu0 0
  %5619 = vmatpush2.bf16.xpose.msra.mxu0 0
  %5620 = vmatprep.subr.bf16.mxu0 0
  %5621 = vmatpush2.bf16.xpose.msra.mxu0 0
  %5622 = vmatprep.mubr.bf16.mxu0 0
  %5623 = vmatmul.mubr.bf16.gmra.mxu0 %v5585
  %v5624 = vpop.f32.mrf.mxu0
  %v5625 = vadd.f32 0.0, %v5624
  %v5626 = vpop.f32.mrf.mxu0
  %v5627 = vpop.f32.mrf.mxu0
  %v5628 = vpop.f32.mrf.mxu0
  %5629 = vdwg.mxu0
  %v5631 = vsel %vm1007, %v5299, 0
  %v5634 = vsel %vm1007, %v5307, 0
  %5636 = vmatprep.subr.bf16.mxu0 0
  %5637 = vmatpush1.bf16.xpose.msra.mxu0 0
  %5638 = vmatprep.subr.bf16.mxu0 0
  %5639 = vmatpush1.bf16.xpose.msra.mxu0 0
  %5640 = vmatprep.subr.bf16.mxu0 0
  %5641 = vmatpush1.bf16.xpose.msra.mxu0 0
  %5642 = vmatprep.subr.bf16.mxu0 0
  %5643 = vmatpush1.bf16.xpose.msra.mxu0 0
  %5644 = vmatprep.subr.bf16.mxu0 0
  %5645 = vmatpush1.bf16.xpose.msra.mxu0 0
  %5646 = vmatprep.subr.bf16.mxu0 0
  %5647 = vmatpush1.bf16.xpose.msra.mxu0 0
  %5648 = vmatprep.subr.bf16.mxu0 0
  %5649 = vmatpush1.bf16.xpose.msra.mxu0 0
  %5650 = vmatprep.subr.bf16.mxu0 0
  %5651 = vmatpush1.bf16.xpose.msra.mxu0 %v5634
  %5652 = vmatprep.subr.bf16.mxu0 0
  %5653 = vmatpush2.bf16.xpose.msra.mxu0 0
  %5654 = vmatprep.subr.bf16.mxu0 0
  %5655 = vmatpush2.bf16.xpose.msra.mxu0 0
  %5656 = vmatprep.subr.bf16.mxu0 0
  %5657 = vmatpush2.bf16.xpose.msra.mxu0 0
  %5658 = vmatprep.subr.bf16.mxu0 0
  %5659 = vmatpush2.bf16.xpose.msra.mxu0 0
  %5660 = vmatprep.subr.bf16.mxu0 0
  %5661 = vmatpush2.bf16.xpose.msra.mxu0 0
  %5662 = vmatprep.subr.bf16.mxu0 0
  %5663 = vmatpush2.bf16.xpose.msra.mxu0 0
  %5664 = vmatprep.subr.bf16.mxu0 0
  %5665 = vmatpush2.bf16.xpose.msra.mxu0 0
  %5666 = vmatprep.subr.bf16.mxu0 0
  %5667 = vmatpush2.bf16.xpose.msra.mxu0 0
  %5668 = vmatprep.mubr.bf16.mxu0 0
  %5669 = vmatmul.mubr.bf16.gmra.mxu0 %v5631
  %v5670 = vpop.f32.mrf.mxu0
  %v5671 = vadd.f32 0.0, %v5670
  %v5672 = vpop.f32.mrf.mxu0
  %v5673 = vpop.f32.mrf.mxu0
  %v5674 = vpop.f32.mrf.mxu0
  %5675 = vdwg.mxu0
  %v5676 = vsel %vm1376, %v5349, -inf
  %5677 = vmax.xlane.f32.xlu0 %v5676
  %v5678 = vpop.xlane.xlu0 %5677
  %v5679 = vsel %vm1376, %v5395, -inf
  %5680 = vmax.xlane.f32.xlu0 %v5679
  %v5681 = vpop.xlane.xlu0 %5680
  %v5682 = vsel %vm1376, %v5441, -inf
  %5683 = vmax.xlane.f32.xlu0 %v5682
  %v5684 = vpop.xlane.xlu0 %5683
  %v5685 = vsel %vm1376, %v5487, -inf
  %5686 = vmax.xlane.f32.xlu0 %v5685
  %v5687 = vpop.xlane.xlu0 %5686
  %v5688 = vsel %vm1376, %v5533, -inf
  %5689 = vmax.xlane.f32.xlu0 %v5688
  %v5690 = vpop.xlane.xlu0 %5689
  %v5691 = vsel %vm1376, %v5579, -inf
  %5692 = vmax.xlane.f32.xlu0 %v5691
  %v5693 = vpop.xlane.xlu0 %5692
  %v5694 = vsel %vm1376, %v5625, -inf
  %5695 = vmax.xlane.f32.xlu0 %v5694
  %v5696 = vpop.xlane.xlu0 %5695
  %v5697 = vsel %vm1376, %v5671, -inf
  %5698 = vmax.xlane.f32.xlu0 %v5697
  %v5699 = vpop.xlane.xlu0 %5698
  %v5700 = vsub.f32 %v5349, %v5678
  %v5701 = vsub.f32 %v5395, %v5681
  %v5702 = vsub.f32 %v5441, %v5684
  %v5703 = vsub.f32 %v5487, %v5687
  %v5704 = vsub.f32 %v5533, %v5690
  %v5705 = vsub.f32 %v5579, %v5693
  %v5706 = vsub.f32 %v5625, %v5696
  %v5707 = vsub.f32 %v5671, %v5699
  %v5708 = vmul.f32 %v5700, 1.442695
  %v5709 = vpow.pop %v5708
  %v5710 = vmul.f32 %v5701, 1.442695
  %v5711 = vpow.pop %v5710
  %v5712 = vmul.f32 %v5702, 1.442695
  %v5713 = vpow.pop %v5712
  %v5714 = vmul.f32 %v5703, 1.442695
  %v5715 = vpow.pop %v5714
  %v5716 = vmul.f32 %v5704, 1.442695
  %v5717 = vpow.pop %v5716
  %v5718 = vmul.f32 %v5705, 1.442695
  %v5719 = vpow.pop %v5718
  %v5720 = vmul.f32 %v5706, 1.442695
  %v5721 = vpow.pop %v5720
  %v5722 = vmul.f32 %v5707, 1.442695
  %v5723 = vpow.pop %v5722
  %v5724 = vsel %vm1376, %v5709, 0.0
  %5725 = vadd.xlane.f32.xlu0 %v5724
  %v5726 = vpop.xlane.xlu0 %5725
  %v5727 = vsel %vm1376, %v5711, 0.0
  %5728 = vadd.xlane.f32.xlu0 %v5727
  %v5729 = vpop.xlane.xlu0 %5728
  %v5730 = vsel %vm1376, %v5713, 0.0
  %5731 = vadd.xlane.f32.xlu0 %v5730
  %v5732 = vpop.xlane.xlu0 %5731
  %v5733 = vsel %vm1376, %v5715, 0.0
  %5734 = vadd.xlane.f32.xlu0 %v5733
  %v5735 = vpop.xlane.xlu0 %5734
  %v5736 = vsel %vm1376, %v5717, 0.0
  %5737 = vadd.xlane.f32.xlu0 %v5736
  %v5738 = vpop.xlane.xlu0 %5737
  %v5739 = vsel %vm1376, %v5719, 0.0
  %5740 = vadd.xlane.f32.xlu0 %v5739
  %v5741 = vpop.xlane.xlu0 %5740
  %v5742 = vsel %vm1376, %v5721, 0.0
  %5743 = vadd.xlane.f32.xlu0 %v5742
  %v5744 = vpop.xlane.xlu0 %5743
  %v5745 = vsel %vm1376, %v5723, 0.0
  %5746 = vadd.xlane.f32.xlu0 %v5745
  %v5747 = vpop.xlane.xlu0 %5746
  %v5748 = vrcp.pop %v5726
  %v5749 = vmul.f32 1.0, %v5748
  %v5750 = vrcp.pop %v5729
  %v5751 = vmul.f32 1.0, %v5750
  %v5752 = vrcp.pop %v5732
  %v5753 = vmul.f32 1.0, %v5752
  %v5754 = vrcp.pop %v5735
  %v5755 = vmul.f32 1.0, %v5754
  %v5756 = vrcp.pop %v5738
  %v5757 = vmul.f32 1.0, %v5756
  %v5758 = vrcp.pop %v5741
  %v5759 = vmul.f32 1.0, %v5758
  %v5760 = vrcp.pop %v5744
  %v5761 = vmul.f32 1.0, %v5760
  %v5762 = vrcp.pop %v5747
  %v5763 = vmul.f32 1.0, %v5762
  %v5764 = vmul.f32 %v5709, %v5749
  %v5765 = vmul.f32 %v5711, %v5751
  %v5766 = vmul.f32 %v5713, %v5753
  %v5767 = vmul.f32 %v5715, %v5755
  %v5768 = vmul.f32 %v5717, %v5757
  %v5769 = vmul.f32 %v5719, %v5759
  %v5770 = vmul.f32 %v5721, %v5761
  %v5771 = vmul.f32 %v5723, %v5763
  %v5772 = vpack.c.bf16 %v5764, %v5764
  %v5773 = vpack.c.bf16 %v5765, %v5765
  %v5774 = vpack.c.bf16 %v5766, %v5766
  %v5775 = vpack.c.bf16 %v5767, %v5767
  %v5776 = vpack.c.bf16 %v5768, %v5768
  %v5777 = vpack.c.bf16 %v5769, %v5769
  %v5778 = vpack.c.bf16 %v5770, %v5770
  %v5779 = vpack.c.bf16 %v5771, %v5771
  %v5780 = vpack.c.bf16 %v5221, %v5221
  %v5781 = vpack.c.bf16 %v5222, %v5222
  %v5782 = vpack.c.bf16 %v5223, %v5223
  %v5783 = vpack.c.bf16 %v5224, %v5224
  %v5784 = vpack.c.bf16 %v5288, %v5288
  %v5785 = vpack.c.bf16 %v5289, %v5289
  %v5786 = vpack.c.bf16 %v5290, %v5290
  %v5787 = vpack.c.bf16 %v5291, %v5291
  %v5789 = vsel %vm1481, %v5772, 0
  %v5792 = vand.u32 %v5780, %v1488
  %5794 = vmatprep.subr.bf16.mxu0 0
  %5795 = vmatpush1.bf16.msra.mxu0 0
  %5796 = vmatprep.subr.bf16.mxu0 0
  %5797 = vmatpush1.bf16.msra.mxu0 0
  %5798 = vmatprep.subr.bf16.mxu0 0
  %5799 = vmatpush1.bf16.msra.mxu0 0
  %5800 = vmatprep.subr.bf16.mxu0 0
  %5801 = vmatpush1.bf16.msra.mxu0 0
  %5802 = vmatprep.subr.bf16.mxu0 0
  %5803 = vmatpush1.bf16.msra.mxu0 0
  %5804 = vmatprep.subr.bf16.mxu0 0
  %5805 = vmatpush1.bf16.msra.mxu0 0
  %5806 = vmatprep.subr.bf16.mxu0 0
  %5807 = vmatpush1.bf16.msra.mxu0 0
  %5808 = vmatprep.subr.bf16.mxu0 0
  %5809 = vmatpush1.bf16.msra.mxu0 %v5792
  %5810 = vmatprep.subr.bf16.mxu0 0
  %5811 = vmatpush2.bf16.msra.mxu0 0
  %5812 = vmatprep.subr.bf16.mxu0 0
  %5813 = vmatpush2.bf16.msra.mxu0 0
  %5814 = vmatprep.subr.bf16.mxu0 0
  %5815 = vmatpush2.bf16.msra.mxu0 0
  %5816 = vmatprep.subr.bf16.mxu0 0
  %5817 = vmatpush2.bf16.msra.mxu0 0
  %5818 = vmatprep.subr.bf16.mxu0 0
  %5819 = vmatpush2.bf16.msra.mxu0 0
  %5820 = vmatprep.subr.bf16.mxu0 0
  %5821 = vmatpush2.bf16.msra.mxu0 0
  %5822 = vmatprep.subr.bf16.mxu0 0
  %5823 = vmatpush2.bf16.msra.mxu0 0
  %5824 = vmatprep.subr.bf16.mxu0 0
  %5825 = vmatpush2.bf16.msra.mxu0 0
  %5826 = vmatprep.mubr.bf16.mxu0 0
  %5827 = vmatmul.mubr.bf16.gmra.mxu0 %v5789
  %v5828 = vpop.f32.mrf.mxu0
  %v5829 = vadd.f32 0.0, %v5828
  %v5830 = vpop.f32.mrf.mxu0
  %v5831 = vpop.f32.mrf.mxu0
  %v5832 = vpop.f32.mrf.mxu0
  %5833 = vdwg.mxu0
  %v5835 = vsel %vm1481, %v5773, 0
  %v5838 = vand.u32 %v5781, %v1488
  %5840 = vmatprep.subr.bf16.mxu0 0
  %5841 = vmatpush1.bf16.msra.mxu0 0
  %5842 = vmatprep.subr.bf16.mxu0 0
  %5843 = vmatpush1.bf16.msra.mxu0 0
  %5844 = vmatprep.subr.bf16.mxu0 0
  %5845 = vmatpush1.bf16.msra.mxu0 0
  %5846 = vmatprep.subr.bf16.mxu0 0
  %5847 = vmatpush1.bf16.msra.mxu0 0
  %5848 = vmatprep.subr.bf16.mxu0 0
  %5849 = vmatpush1.bf16.msra.mxu0 0
  %5850 = vmatprep.subr.bf16.mxu0 0
  %5851 = vmatpush1.bf16.msra.mxu0 0
  %5852 = vmatprep.subr.bf16.mxu0 0
  %5853 = vmatpush1.bf16.msra.mxu0 0
  %5854 = vmatprep.subr.bf16.mxu0 0
  %5855 = vmatpush1.bf16.msra.mxu0 %v5838
  %5856 = vmatprep.subr.bf16.mxu0 0
  %5857 = vmatpush2.bf16.msra.mxu0 0
  %5858 = vmatprep.subr.bf16.mxu0 0
  %5859 = vmatpush2.bf16.msra.mxu0 0
  %5860 = vmatprep.subr.bf16.mxu0 0
  %5861 = vmatpush2.bf16.msra.mxu0 0
  %5862 = vmatprep.subr.bf16.mxu0 0
  %5863 = vmatpush2.bf16.msra.mxu0 0
  %5864 = vmatprep.subr.bf16.mxu0 0
  %5865 = vmatpush2.bf16.msra.mxu0 0
  %5866 = vmatprep.subr.bf16.mxu0 0
  %5867 = vmatpush2.bf16.msra.mxu0 0
  %5868 = vmatprep.subr.bf16.mxu0 0
  %5869 = vmatpush2.bf16.msra.mxu0 0
  %5870 = vmatprep.subr.bf16.mxu0 0
  %5871 = vmatpush2.bf16.msra.mxu0 0
  %5872 = vmatprep.mubr.bf16.mxu0 0
  %5873 = vmatmul.mubr.bf16.gmra.mxu0 %v5835
  %v5874 = vpop.f32.mrf.mxu0
  %v5875 = vadd.f32 0.0, %v5874
  %v5876 = vpop.f32.mrf.mxu0
  %v5877 = vpop.f32.mrf.mxu0
  %v5878 = vpop.f32.mrf.mxu0
  %5879 = vdwg.mxu0
  %v5881 = vsel %vm1481, %v5774, 0
  %v5884 = vand.u32 %v5782, %v1488
  %5886 = vmatprep.subr.bf16.mxu0 0
  %5887 = vmatpush1.bf16.msra.mxu0 0
  %5888 = vmatprep.subr.bf16.mxu0 0
  %5889 = vmatpush1.bf16.msra.mxu0 0
  %5890 = vmatprep.subr.bf16.mxu0 0
  %5891 = vmatpush1.bf16.msra.mxu0 0
  %5892 = vmatprep.subr.bf16.mxu0 0
  %5893 = vmatpush1.bf16.msra.mxu0 0
  %5894 = vmatprep.subr.bf16.mxu0 0
  %5895 = vmatpush1.bf16.msra.mxu0 0
  %5896 = vmatprep.subr.bf16.mxu0 0
  %5897 = vmatpush1.bf16.msra.mxu0 0
  %5898 = vmatprep.subr.bf16.mxu0 0
  %5899 = vmatpush1.bf16.msra.mxu0 0
  %5900 = vmatprep.subr.bf16.mxu0 0
  %5901 = vmatpush1.bf16.msra.mxu0 %v5884
  %5902 = vmatprep.subr.bf16.mxu0 0
  %5903 = vmatpush2.bf16.msra.mxu0 0
  %5904 = vmatprep.subr.bf16.mxu0 0
  %5905 = vmatpush2.bf16.msra.mxu0 0
  %5906 = vmatprep.subr.bf16.mxu0 0
  %5907 = vmatpush2.bf16.msra.mxu0 0
  %5908 = vmatprep.subr.bf16.mxu0 0
  %5909 = vmatpush2.bf16.msra.mxu0 0
  %5910 = vmatprep.subr.bf16.mxu0 0
  %5911 = vmatpush2.bf16.msra.mxu0 0
  %5912 = vmatprep.subr.bf16.mxu0 0
  %5913 = vmatpush2.bf16.msra.mxu0 0
  %5914 = vmatprep.subr.bf16.mxu0 0
  %5915 = vmatpush2.bf16.msra.mxu0 0
  %5916 = vmatprep.subr.bf16.mxu0 0
  %5917 = vmatpush2.bf16.msra.mxu0 0
  %5918 = vmatprep.mubr.bf16.mxu0 0
  %5919 = vmatmul.mubr.bf16.gmra.mxu0 %v5881
  %v5920 = vpop.f32.mrf.mxu0
  %v5921 = vadd.f32 0.0, %v5920
  %v5922 = vpop.f32.mrf.mxu0
  %v5923 = vpop.f32.mrf.mxu0
  %v5924 = vpop.f32.mrf.mxu0
  %5925 = vdwg.mxu0
  %v5927 = vsel %vm1481, %v5775, 0
  %v5930 = vand.u32 %v5783, %v1488
  %5932 = vmatprep.subr.bf16.mxu0 0
  %5933 = vmatpush1.bf16.msra.mxu0 0
  %5934 = vmatprep.subr.bf16.mxu0 0
  %5935 = vmatpush1.bf16.msra.mxu0 0
  %5936 = vmatprep.subr.bf16.mxu0 0
  %5937 = vmatpush1.bf16.msra.mxu0 0
  %5938 = vmatprep.subr.bf16.mxu0 0
  %5939 = vmatpush1.bf16.msra.mxu0 0
  %5940 = vmatprep.subr.bf16.mxu0 0
  %5941 = vmatpush1.bf16.msra.mxu0 0
  %5942 = vmatprep.subr.bf16.mxu0 0
  %5943 = vmatpush1.bf16.msra.mxu0 0
  %5944 = vmatprep.subr.bf16.mxu0 0
  %5945 = vmatpush1.bf16.msra.mxu0 0
  %5946 = vmatprep.subr.bf16.mxu0 0
  %5947 = vmatpush1.bf16.msra.mxu0 %v5930
  %5948 = vmatprep.subr.bf16.mxu0 0
  %5949 = vmatpush2.bf16.msra.mxu0 0
  %5950 = vmatprep.subr.bf16.mxu0 0
  %5951 = vmatpush2.bf16.msra.mxu0 0
  %5952 = vmatprep.subr.bf16.mxu0 0
  %5953 = vmatpush2.bf16.msra.mxu0 0
  %5954 = vmatprep.subr.bf16.mxu0 0
  %5955 = vmatpush2.bf16.msra.mxu0 0
  %5956 = vmatprep.subr.bf16.mxu0 0
  %5957 = vmatpush2.bf16.msra.mxu0 0
  %5958 = vmatprep.subr.bf16.mxu0 0
  %5959 = vmatpush2.bf16.msra.mxu0 0
  %5960 = vmatprep.subr.bf16.mxu0 0
  %5961 = vmatpush2.bf16.msra.mxu0 0
  %5962 = vmatprep.subr.bf16.mxu0 0
  %5963 = vmatpush2.bf16.msra.mxu0 0
  %5964 = vmatprep.mubr.bf16.mxu0 0
  %5965 = vmatmul.mubr.bf16.gmra.mxu0 %v5927
  %v5966 = vpop.f32.mrf.mxu0
  %v5967 = vadd.f32 0.0, %v5966
  %v5968 = vpop.f32.mrf.mxu0
  %v5969 = vpop.f32.mrf.mxu0
  %v5970 = vpop.f32.mrf.mxu0
  %5971 = vdwg.mxu0
  %v5973 = vsel %vm1481, %v5776, 0
  %v5976 = vand.u32 %v5784, %v1488
  %5978 = vmatprep.subr.bf16.mxu0 0
  %5979 = vmatpush1.bf16.msra.mxu0 0
  %5980 = vmatprep.subr.bf16.mxu0 0
  %5981 = vmatpush1.bf16.msra.mxu0 0
  %5982 = vmatprep.subr.bf16.mxu0 0
  %5983 = vmatpush1.bf16.msra.mxu0 0
  %5984 = vmatprep.subr.bf16.mxu0 0
  %5985 = vmatpush1.bf16.msra.mxu0 0
  %5986 = vmatprep.subr.bf16.mxu0 0
  %5987 = vmatpush1.bf16.msra.mxu0 0
  %5988 = vmatprep.subr.bf16.mxu0 0
  %5989 = vmatpush1.bf16.msra.mxu0 0
  %5990 = vmatprep.subr.bf16.mxu0 0
  %5991 = vmatpush1.bf16.msra.mxu0 0
  %5992 = vmatprep.subr.bf16.mxu0 0
  %5993 = vmatpush1.bf16.msra.mxu0 %v5976
  %5994 = vmatprep.subr.bf16.mxu0 0
  %5995 = vmatpush2.bf16.msra.mxu0 0
  %5996 = vmatprep.subr.bf16.mxu0 0
  %5997 = vmatpush2.bf16.msra.mxu0 0
  %5998 = vmatprep.subr.bf16.mxu0 0
  %5999 = vmatpush2.bf16.msra.mxu0 0
  %6000 = vmatprep.subr.bf16.mxu0 0
  %6001 = vmatpush2.bf16.msra.mxu0 0
  %6002 = vmatprep.subr.bf16.mxu0 0
  %6003 = vmatpush2.bf16.msra.mxu0 0
  %6004 = vmatprep.subr.bf16.mxu0 0
  %6005 = vmatpush2.bf16.msra.mxu0 0
  %6006 = vmatprep.subr.bf16.mxu0 0
  %6007 = vmatpush2.bf16.msra.mxu0 0
  %6008 = vmatprep.subr.bf16.mxu0 0
  %6009 = vmatpush2.bf16.msra.mxu0 0
  %6010 = vmatprep.mubr.bf16.mxu0 0
  %6011 = vmatmul.mubr.bf16.gmra.mxu0 %v5973
  %v6012 = vpop.f32.mrf.mxu0
  %v6013 = vadd.f32 0.0, %v6012
  %v6014 = vpop.f32.mrf.mxu0
  %v6015 = vpop.f32.mrf.mxu0
  %v6016 = vpop.f32.mrf.mxu0
  %6017 = vdwg.mxu0
  %v6019 = vsel %vm1481, %v5777, 0
  %v6022 = vand.u32 %v5785, %v1488
  %6024 = vmatprep.subr.bf16.mxu0 0
  %6025 = vmatpush1.bf16.msra.mxu0 0
  %6026 = vmatprep.subr.bf16.mxu0 0
  %6027 = vmatpush1.bf16.msra.mxu0 0
  %6028 = vmatprep.subr.bf16.mxu0 0
  %6029 = vmatpush1.bf16.msra.mxu0 0
  %6030 = vmatprep.subr.bf16.mxu0 0
  %6031 = vmatpush1.bf16.msra.mxu0 0
  %6032 = vmatprep.subr.bf16.mxu0 0
  %6033 = vmatpush1.bf16.msra.mxu0 0
  %6034 = vmatprep.subr.bf16.mxu0 0
  %6035 = vmatpush1.bf16.msra.mxu0 0
  %6036 = vmatprep.subr.bf16.mxu0 0
  %6037 = vmatpush1.bf16.msra.mxu0 0
  %6038 = vmatprep.subr.bf16.mxu0 0
  %6039 = vmatpush1.bf16.msra.mxu0 %v6022
  %6040 = vmatprep.subr.bf16.mxu0 0
  %6041 = vmatpush2.bf16.msra.mxu0 0
  %6042 = vmatprep.subr.bf16.mxu0 0
  %6043 = vmatpush2.bf16.msra.mxu0 0
  %6044 = vmatprep.subr.bf16.mxu0 0
  %6045 = vmatpush2.bf16.msra.mxu0 0
  %6046 = vmatprep.subr.bf16.mxu0 0
  %6047 = vmatpush2.bf16.msra.mxu0 0
  %6048 = vmatprep.subr.bf16.mxu0 0
  %6049 = vmatpush2.bf16.msra.mxu0 0
  %6050 = vmatprep.subr.bf16.mxu0 0
  %6051 = vmatpush2.bf16.msra.mxu0 0
  %6052 = vmatprep.subr.bf16.mxu0 0
  %6053 = vmatpush2.bf16.msra.mxu0 0
  %6054 = vmatprep.subr.bf16.mxu0 0
  %6055 = vmatpush2.bf16.msra.mxu0 0
  %6056 = vmatprep.mubr.bf16.mxu0 0
  %6057 = vmatmul.mubr.bf16.gmra.mxu0 %v6019
  %v6058 = vpop.f32.mrf.mxu0
  %v6059 = vadd.f32 0.0, %v6058
  %v6060 = vpop.f32.mrf.mxu0
  %v6061 = vpop.f32.mrf.mxu0
  %v6062 = vpop.f32.mrf.mxu0
  %6063 = vdwg.mxu0
  %v6065 = vsel %vm1481, %v5778, 0
  %v6068 = vand.u32 %v5786, %v1488
  %6070 = vmatprep.subr.bf16.mxu0 0
  %6071 = vmatpush1.bf16.msra.mxu0 0
  %6072 = vmatprep.subr.bf16.mxu0 0
  %6073 = vmatpush1.bf16.msra.mxu0 0
  %6074 = vmatprep.subr.bf16.mxu0 0
  %6075 = vmatpush1.bf16.msra.mxu0 0
  %6076 = vmatprep.subr.bf16.mxu0 0
  %6077 = vmatpush1.bf16.msra.mxu0 0
  %6078 = vmatprep.subr.bf16.mxu0 0
  %6079 = vmatpush1.bf16.msra.mxu0 0
  %6080 = vmatprep.subr.bf16.mxu0 0
  %6081 = vmatpush1.bf16.msra.mxu0 0
  %6082 = vmatprep.subr.bf16.mxu0 0
  %6083 = vmatpush1.bf16.msra.mxu0 0
  %6084 = vmatprep.subr.bf16.mxu0 0
  %6085 = vmatpush1.bf16.msra.mxu0 %v6068
  %6086 = vmatprep.subr.bf16.mxu0 0
  %6087 = vmatpush2.bf16.msra.mxu0 0
  %6088 = vmatprep.subr.bf16.mxu0 0
  %6089 = vmatpush2.bf16.msra.mxu0 0
  %6090 = vmatprep.subr.bf16.mxu0 0
  %6091 = vmatpush2.bf16.msra.mxu0 0
  %6092 = vmatprep.subr.bf16.mxu0 0
  %6093 = vmatpush2.bf16.msra.mxu0 0
  %6094 = vmatprep.subr.bf16.mxu0 0
  %6095 = vmatpush2.bf16.msra.mxu0 0
  %6096 = vmatprep.subr.bf16.mxu0 0
  %6097 = vmatpush2.bf16.msra.mxu0 0
  %6098 = vmatprep.subr.bf16.mxu0 0
  %6099 = vmatpush2.bf16.msra.mxu0 0
  %6100 = vmatprep.subr.bf16.mxu0 0
  %6101 = vmatpush2.bf16.msra.mxu0 0
  %6102 = vmatprep.mubr.bf16.mxu0 0
  %6103 = vmatmul.mubr.bf16.gmra.mxu0 %v6065
  %v6104 = vpop.f32.mrf.mxu0
  %v6105 = vadd.f32 0.0, %v6104
  %v6106 = vpop.f32.mrf.mxu0
  %v6107 = vpop.f32.mrf.mxu0
  %v6108 = vpop.f32.mrf.mxu0
  %6109 = vdwg.mxu0
  %v6111 = vsel %vm1481, %v5779, 0
  %v6114 = vand.u32 %v5787, %v1488
  %6116 = vmatprep.subr.bf16.mxu0 0
  %6117 = vmatpush1.bf16.msra.mxu0 0
  %6118 = vmatprep.subr.bf16.mxu0 0
  %6119 = vmatpush1.bf16.msra.mxu0 0
  %6120 = vmatprep.subr.bf16.mxu0 0
  %6121 = vmatpush1.bf16.msra.mxu0 0
  %6122 = vmatprep.subr.bf16.mxu0 0
  %6123 = vmatpush1.bf16.msra.mxu0 0
  %6124 = vmatprep.subr.bf16.mxu0 0
  %6125 = vmatpush1.bf16.msra.mxu0 0
  %6126 = vmatprep.subr.bf16.mxu0 0
  %6127 = vmatpush1.bf16.msra.mxu0 0
  %6128 = vmatprep.subr.bf16.mxu0 0
  %6129 = vmatpush1.bf16.msra.mxu0 0
  %6130 = vmatprep.subr.bf16.mxu0 0
  %6131 = vmatpush1.bf16.msra.mxu0 %v6114
  %6132 = vmatprep.subr.bf16.mxu0 0
  %6133 = vmatpush2.bf16.msra.mxu0 0
  %6134 = vmatprep.subr.bf16.mxu0 0
  %6135 = vmatpush2.bf16.msra.mxu0 0
  %6136 = vmatprep.subr.bf16.mxu0 0
  %6137 = vmatpush2.bf16.msra.mxu0 0
  %6138 = vmatprep.subr.bf16.mxu0 0
  %6139 = vmatpush2.bf16.msra.mxu0 0
  %6140 = vmatprep.subr.bf16.mxu0 0
  %6141 = vmatpush2.bf16.msra.mxu0 0
  %6142 = vmatprep.subr.bf16.mxu0 0
  %6143 = vmatpush2.bf16.msra.mxu0 0
  %6144 = vmatprep.subr.bf16.mxu0 0
  %6145 = vmatpush2.bf16.msra.mxu0 0
  %6146 = vmatprep.subr.bf16.mxu0 0
  %6147 = vmatpush2.bf16.msra.mxu0 0
  %6148 = vmatprep.mubr.bf16.mxu0 0
  %6149 = vmatmul.mubr.bf16.gmra.mxu0 %v6111
  %v6150 = vpop.f32.mrf.mxu0
  %v6151 = vadd.f32 0.0, %v6150
  %v6152 = vpop.f32.mrf.mxu0
  %v6153 = vpop.f32.mrf.mxu0
  %v6154 = vpop.f32.mrf.mxu0
  %6155 = vdwg.mxu0
  %v6156 = vcombine.low %v5829, %v5921
  %v6157 = vcombine.high %v5829, %v5921
  %v6159 = vunpack.c.l.s4 1983009808
  %v6160 = vunpack.c.0.s8 %v6159
  %v6161 = vlaneseq
  %v6162 = vshrl.u32 %v6161, 7
  %v6163 = vsub.s32 %v6160, %v6162
  %v6164 = vrot.slane %v6156, %v6163
  %v6166 = vunpack.c.l.s4 1983009808
  %v6167 = vunpack.c.0.s8 %v6166
  %v6168 = vlaneseq
  %v6169 = vshrl.u32 %v6168, 7
  %v6170 = vsub.s32 %v6167, %v6169
  %v6171 = vrot.slane %v6157, %v6170
  %v6172 = vcombine.low %v5875, %v5967
  %v6173 = vcombine.high %v5875, %v5967
  %v6175 = vunpack.c.l.s4 1983009808
  %v6176 = vunpack.c.0.s8 %v6175
  %v6177 = vlaneseq
  %v6178 = vshrl.u32 %v6177, 7
  %v6179 = vsub.s32 %v6176, %v6178
  %v6180 = vrot.slane %v6172, %v6179
  %v6182 = vunpack.c.l.s4 1983009808
  %v6183 = vunpack.c.0.s8 %v6182
  %v6184 = vlaneseq
  %v6185 = vshrl.u32 %v6184, 7
  %v6186 = vsub.s32 %v6183, %v6185
  %v6187 = vrot.slane %v6173, %v6186
  %v6188 = vcombine.low %v6164, %v6180
  %v6189 = vcombine.high %v6164, %v6180
  %v6191 = vunpack.c.l.s4 1934713408
  %v6192 = vunpack.c.0.s8 %v6191
  %v6193 = vlaneseq
  %v6194 = vshrl.u32 %v6193, 7
  %v6195 = vsub.s32 %v6192, %v6194
  %v6196 = vrot.slane %v6188, %v6195
  %v6198 = vunpack.c.l.s4 1934713408
  %v6199 = vunpack.c.0.s8 %v6198
  %v6200 = vlaneseq
  %v6201 = vshrl.u32 %v6200, 7
  %v6202 = vsub.s32 %v6199, %v6201
  %v6203 = vrot.slane %v6189, %v6202
  %v6204 = vcombine.low %v6171, %v6187
  %v6205 = vcombine.high %v6171, %v6187
  %v6207 = vunpack.c.l.s4 1934713408
  %v6208 = vunpack.c.0.s8 %v6207
  %v6209 = vlaneseq
  %v6210 = vshrl.u32 %v6209, 7
  %v6211 = vsub.s32 %v6208, %v6210
  %v6212 = vrot.slane %v6204, %v6211
  %v6213 = vcombine.high %v6196, 0.0
  %v6214 = vcombine.high %v6203, 0.0
  %v6215 = vcombine.high %v6212, 0.0
  %v6217 = vunpack.c.l.s4 1934713408
  %v6218 = vunpack.c.0.s8 %v6217
  %v6219 = vlaneseq
  %v6220 = vshrl.u32 %v6219, 7
  %v6221 = vsub.s32 %v6218, %v6220
  %v6222 = vrot.slane %v6205, %v6221
  %v6223 = vcombine.low %v6013, %v6105
  %v6224 = vcombine.high %v6013, %v6105
  %v6226 = vunpack.c.l.s4 1983009808
  %v6227 = vunpack.c.0.s8 %v6226
  %v6228 = vlaneseq
  %v6229 = vshrl.u32 %v6228, 7
  %v6230 = vsub.s32 %v6227, %v6229
  %v6231 = vrot.slane %v6223, %v6230
  %v6233 = vunpack.c.l.s4 1983009808
  %v6234 = vunpack.c.0.s8 %v6233
  %v6235 = vlaneseq
  %v6236 = vshrl.u32 %v6235, 7
  %v6237 = vsub.s32 %v6234, %v6236
  %v6238 = vrot.slane %v6224, %v6237
  %v6239 = vcombine.low %v6059, %v6151
  %v6240 = vcombine.high %v6059, %v6151
  %v6242 = vunpack.c.l.s4 1983009808
  %v6243 = vunpack.c.0.s8 %v6242
  %v6244 = vlaneseq
  %v6245 = vshrl.u32 %v6244, 7
  %v6246 = vsub.s32 %v6243, %v6245
  %v6247 = vrot.slane %v6239, %v6246
  %v6249 = vunpack.c.l.s4 1983009808
  %v6250 = vunpack.c.0.s8 %v6249
  %v6251 = vlaneseq
  %v6252 = vshrl.u32 %v6251, 7
  %v6253 = vsub.s32 %v6250, %v6252
  %v6254 = vrot.slane %v6240, %v6253
  %v6255 = vcombine.low %v6231, %v6247
  %v6256 = vcombine.high %v6231, %v6247
  %v6258 = vunpack.c.l.s4 1934713408
  %v6259 = vunpack.c.0.s8 %v6258
  %v6260 = vlaneseq
  %v6261 = vshrl.u32 %v6260, 7
  %v6262 = vsub.s32 %v6259, %v6261
  %v6263 = vrot.slane %v6255, %v6262
  %v6265 = vunpack.c.l.s4 1934713408
  %v6266 = vunpack.c.0.s8 %v6265
  %v6267 = vlaneseq
  %v6268 = vshrl.u32 %v6267, 7
  %v6269 = vsub.s32 %v6266, %v6268
  %v6270 = vrot.slane %v6256, %v6269
  %v6271 = vcombine.low %v6238, %v6254
  %v6272 = vcombine.high %v6238, %v6254
  %v6274 = vunpack.c.l.s4 1934713408
  %v6275 = vunpack.c.0.s8 %v6274
  %v6276 = vlaneseq
  %v6277 = vshrl.u32 %v6276, 7
  %v6278 = vsub.s32 %v6275, %v6277
  %v6279 = vrot.slane %v6271, %v6278
  %v6280 = vcombine.high %v6263, 0.0
  %v6281 = vcombine.high %v6270, 0.0
  %v6282 = vcombine.low %v6196, %v6203
  %v6284 = vunpack.c.l.s4 1983009808
  %v6285 = vunpack.c.0.s8 %v6284
  %v6286 = vlaneseq
  %v6287 = vshrl.u32 %v6286, 7
  %v6288 = vsub.s32 %v6285, %v6287
  %v6289 = vrot.slane %v6282, %v6288
  %v6290 = vcombine.low %v6213, %v6214
  %v6292 = vunpack.c.l.s4 1983009808
  %v6293 = vunpack.c.0.s8 %v6292
  %v6294 = vlaneseq
  %v6295 = vshrl.u32 %v6294, 7
  %v6296 = vsub.s32 %v6293, %v6295
  %v6297 = vrot.slane %v6290, %v6296
  %v6298 = vcombine.low %v6212, %v6222
  %v6300 = vunpack.c.l.s4 1983009808
  %v6301 = vunpack.c.0.s8 %v6300
  %v6302 = vlaneseq
  %v6303 = vshrl.u32 %v6302, 7
  %v6304 = vsub.s32 %v6301, %v6303
  %v6305 = vrot.slane %v6298, %v6304
  %v6306 = vcombine.low %v6215, %v6263
  %v6308 = vunpack.c.l.s4 1983009808
  %v6309 = vunpack.c.0.s8 %v6308
  %v6310 = vlaneseq
  %v6311 = vshrl.u32 %v6310, 7
  %v6312 = vsub.s32 %v6309, %v6311
  %v6313 = vrot.slane %v6306, %v6312
  %v6314 = vcombine.low %v6289, %v6297
  %v6315 = vcombine.high %v6289, %v6297
  %v6317 = vunpack.c.l.s4 1934713408
  %v6318 = vunpack.c.0.s8 %v6317
  %v6319 = vlaneseq
  %v6320 = vshrl.u32 %v6319, 7
  %v6321 = vsub.s32 %v6318, %v6320
  %v6322 = vrot.slane %v6314, %v6321
  %v6324 = vunpack.c.l.s4 1934713408
  %v6325 = vunpack.c.0.s8 %v6324
  %v6326 = vlaneseq
  %v6327 = vshrl.u32 %v6326, 7
  %v6328 = vsub.s32 %v6325, %v6327
  %v6329 = vrot.slane %v6315, %v6328
  %v6330 = vcombine.low %v6305, %v6313
  %v6331 = vcombine.high %v6305, %v6313
  %v6333 = vunpack.c.l.s4 1934713408
  %v6334 = vunpack.c.0.s8 %v6333
  %v6335 = vlaneseq
  %v6336 = vshrl.u32 %v6335, 7
  %v6337 = vsub.s32 %v6334, %v6336
  %v6338 = vrot.slane %v6330, %v6337
  %v6340 = vunpack.c.l.s4 1934713408
  %v6341 = vunpack.c.0.s8 %v6340
  %v6342 = vlaneseq
  %v6343 = vshrl.u32 %v6342, 7
  %v6344 = vsub.s32 %v6341, %v6343
  %v6345 = vrot.slane %v6331, %v6344
  %v6346 = vcombine.low %v6322, %v6338
  %v6347 = vcombine.high %v6322, %v6338
  %v6348 = vcombine.low %v6329, %v6345
  %v6349 = vcombine.high %v6329, %v6345
  %v6350 = vcombine.low %v6280, %v6281
  %v6352 = vunpack.c.l.s4 1983009808
  %v6353 = vunpack.c.0.s8 %v6352
  %v6354 = vlaneseq
  %v6355 = vshrl.u32 %v6354, 7
  %v6356 = vsub.s32 %v6353, %v6355
  %v6357 = vrot.slane %v6350, %v6356
  %v6358 = vcombine.low %v6270, %v6279
  %v6360 = vunpack.c.l.s4 1983009808
  %v6361 = vunpack.c.0.s8 %v6360
  %v6362 = vlaneseq
  %v6363 = vshrl.u32 %v6362, 7
  %v6364 = vsub.s32 %v6361, %v6363
  %v6365 = vrot.slane %v6358, %v6364
  %v6366 = vcombine.high %v6279, 0.0
  %v6368 = vunpack.c.l.s4 1983009808
  %v6369 = vunpack.c.0.s8 %v6368
  %v6370 = vlaneseq
  %v6371 = vshrl.u32 %v6370, 7
  %v6372 = vsub.s32 %v6369, %v6371
  %v6373 = vrot.slane %v6366, %v6372
  %v6375 = vunpack.c.l.s4 1934713408
  %v6376 = vunpack.c.0.s8 %v6375
  %v6377 = vlaneseq
  %v6378 = vshrl.u32 %v6377, 7
  %v6379 = vsub.s32 %v6376, %v6378
  %v6380 = vrot.slane %v6272, %v6379
  %v6382 = vunpack.c.l.s4 1983009808
  %v6383 = vunpack.c.0.s8 %v6382
  %v6384 = vlaneseq
  %v6385 = vshrl.u32 %v6384, 7
  %v6386 = vsub.s32 %v6383, %v6385
  %v6387 = vrot.slane %v6380, %v6386
  %v6388 = vcombine.low %v6357, %v6365
  %v6389 = vcombine.high %v6357, %v6365
  %v6391 = vunpack.c.l.s4 1934713408
  %v6392 = vunpack.c.0.s8 %v6391
  %v6393 = vlaneseq
  %v6394 = vshrl.u32 %v6393, 7
  %v6395 = vsub.s32 %v6392, %v6394
  %v6396 = vrot.slane %v6388, %v6395
  %v6398 = vunpack.c.l.s4 1934713408
  %v6399 = vunpack.c.0.s8 %v6398
  %v6400 = vlaneseq
  %v6401 = vshrl.u32 %v6400, 7
  %v6402 = vsub.s32 %v6399, %v6401
  %v6403 = vrot.slane %v6389, %v6402
  %v6404 = vcombine.low %v6373, %v6387
  %v6405 = vcombine.high %v6373, %v6387
  %v6407 = vunpack.c.l.s4 1934713408
  %v6408 = vunpack.c.0.s8 %v6407
  %v6409 = vlaneseq
  %v6410 = vshrl.u32 %v6409, 7
  %v6411 = vsub.s32 %v6408, %v6410
  %v6412 = vrot.slane %v6404, %v6411
  %v6414 = vunpack.c.l.s4 1934713408
  %v6415 = vunpack.c.0.s8 %v6414
  %v6416 = vlaneseq
  %v6417 = vshrl.u32 %v6416, 7
  %v6418 = vsub.s32 %v6415, %v6417
  %v6419 = vrot.slane %v6405, %v6418
  %v6420 = vcombine.low %v6396, %v6412
  %v6421 = vcombine.high %v6396, %v6412
  %v6422 = vcombine.low %v6403, %v6419
  %v6423 = vcombine.high %v6403, %v6419
  %6426 = vrot.lane.b32.xlu0 %v6347, 8
  %v6427 = vpop.permute.xlu0 %6426
  %6428 = vrot.lane.b32.xlu0 %v6421, 8
  %v6429 = vpop.permute.xlu0 %6428
  %6434 = vrot.lane.b32.xlu0 %v6348, 16
  %v6435 = vpop.permute.xlu0 %6434
  %6436 = vrot.lane.b32.xlu0 %v6422, 16
  %v6437 = vpop.permute.xlu0 %6436
  %6442 = vrot.lane.b32.xlu0 %v6349, 24
  %v6443 = vpop.permute.xlu0 %6442
  %6444 = vrot.lane.b32.xlu0 %v6423, 24
  %v6445 = vpop.permute.xlu0 %6444
  %v6448 = vsel %vm1007, %v6346, %v6427
  %v6449 = vsel %vm1007, %v6420, %v6429
  %v6450 = vsel %vm2148, %v6448, %v6435
  %v6451 = vsel %vm2148, %v6449, %v6437
  %v6452 = vsel %vm2151, %v6450, %v6443
  %v6453 = vsel %vm2151, %v6451, %v6445
  %v6454 = vpack.c.bf16 %v6453, %v6452
  %s6455 = scalar_lea.vmem %s3, 16
  %v6456 = vld [vmem:[%s6455] sm:$0xf]
  %v6457 = vld [vmem:[%s6455 + $0x4] sm:$0xf]
  %v6458 = vld [vmem:[%s6455 + $0x8] sm:$0xf]
  %v6459 = vld [vmem:[%s6455 + $0xc] sm:$0xf]
  %s6460 = scalar_lea.vmem %s4, 1
  %v6461 = vld [vmem:[%s6460] sm:$0x1]
  %v6463 = vlaneseq
  %v6464 = vshrl.u32 %v6463, 7
  %v6465 = vsub.s32 0, %v6464
  %v6466 = vrot.slane %v6461, %v6465
  %v6472 = vunpack.c.l.b16 %v6456
  %v6473 = vunpack.c.l.b16 %v6457
  %v6474 = vunpack.c.l.b16 %v6458
  %v6475 = vunpack.c.l.b16 %v6459
  %v6476 = vpack.c.b16 %v6473, %v6472
  %v6477 = vpack.c.b16 %v6475, %v6474
  %v6481 = vsel %vm79, %v6454, 0
  %6483 = vmatprep.subr.bf16.mxu0 0
  %6484 = vmatpush1.bf16.msra.mxu0 0
  %6485 = vmatprep.subr.bf16.mxu0 0
  %6486 = vmatpush1.bf16.msra.mxu0 0
  %6487 = vmatprep.subr.bf16.mxu0 0
  %6488 = vmatpush1.bf16.msra.mxu0 0
  %6489 = vmatprep.subr.bf16.mxu0 0
  %6490 = vmatpush1.bf16.msra.mxu0 0
  %6491 = vmatprep.subr.bf16.mxu0 0
  %6492 = vmatpush1.bf16.msra.mxu0 0
  %6493 = vmatprep.subr.bf16.mxu0 0
  %6494 = vmatpush1.bf16.msra.mxu0 0
  %6495 = vmatprep.subr.bf16.mxu0 0
  %6496 = vmatpush1.bf16.msra.mxu0 %v6477
  %6497 = vmatprep.subr.bf16.mxu0 0
  %6498 = vmatpush1.bf16.msra.mxu0 %v6476
  %6499 = vmatprep.subr.bf16.mxu0 0
  %6500 = vmatpush2.bf16.msra.mxu0 0
  %6501 = vmatprep.subr.bf16.mxu0 0
  %6502 = vmatpush2.bf16.msra.mxu0 0
  %6503 = vmatprep.subr.bf16.mxu0 0
  %6504 = vmatpush2.bf16.msra.mxu0 0
  %6505 = vmatprep.subr.bf16.mxu0 0
  %6506 = vmatpush2.bf16.msra.mxu0 0
  %6507 = vmatprep.subr.bf16.mxu0 0
  %6508 = vmatpush2.bf16.msra.mxu0 0
  %6509 = vmatprep.subr.bf16.mxu0 0
  %6510 = vmatpush2.bf16.msra.mxu0 0
  %6511 = vmatprep.subr.bf16.mxu0 0
  %6512 = vmatpush2.bf16.msra.mxu0 0
  %6513 = vmatprep.subr.bf16.mxu0 0
  %6514 = vmatpush2.bf16.msra.mxu0 0
  %6515 = vmatprep.mubr.bf16.mxu0 0
  %6516 = vmatmul.mubr.bf16.gmra.mxu0 %v6481
  %v6517 = vpop.f32.mrf.mxu0
  %v6518 = vadd.f32 %v6466, %v6517
  %v6519 = vpop.f32.mrf.mxu0
  %v6520 = vpop.f32.mrf.mxu0
  %v6521 = vadd.f32 %v6466, %v6520
  %v6522 = vpop.f32.mrf.mxu0
  %6523 = vdwg.mxu0
  %v6524 = vadd.f32 %v4353, %v6518
  %v6525 = vadd.f32 %v4354, %v6521
  %s6526 = scalar_lea.vmem %s5, 1
  %v6527 = vld [vmem:[%s6526] sm:$0x1]
  %s6528 = scalar_lea.vmem %s6, 1
  %v6529 = vld [vmem:[%s6528] sm:$0x1]
  %v6530 = vsel %vm79, %v6524, 0.0
  %6531 = vadd.xlane.f32.xlu0 %v6530
  %v6532 = vpop.xlane.xlu0 %6531
  %v6533 = vsel %vm2229, %v6525, 0.0
  %6534 = vadd.xlane.f32.xlu0 %v6533
  %v6535 = vpop.xlane.xlu0 %6534
  %v6536 = vmul.f32 %v6532, %v2233
  %v6537 = vmul.f32 %v6535, %v2233
  %v6538 = vmul.f32 %v6524, %v6524
  %v6539 = vmul.f32 %v6525, %v6525
  %v6540 = vsel %vm79, %v6538, 0.0
  %6541 = vadd.xlane.f32.xlu0 %v6540
  %v6542 = vpop.xlane.xlu0 %6541
  %v6543 = vsel %vm2229, %v6539, 0.0
  %6544 = vadd.xlane.f32.xlu0 %v6543
  %v6545 = vpop.xlane.xlu0 %6544
  %v6546 = vmul.f32 %v6542, %v2233
  %v6547 = vmul.f32 %v6545, %v2233
  %v6548 = vsub.f32 %v6524, %v6536
  %v6549 = vsub.f32 %v6525, %v6537
  %v6550 = vmul.f32 %v6536, %v6536
  %v6551 = vmul.f32 %v6537, %v6537
  %v6552 = vsub.f32 %v6546, %v6550
  %v6553 = vsub.f32 %v6547, %v6551
  %v6554 = vadd.f32 %v6552, 1e-05
  %v6555 = vadd.f32 %v6553, 1e-05
  %v6556 = vrsqrt.pop %v6554
  %v6557 = vrsqrt.pop %v6555
  %v6558 = vmul.f32 %v6548, %v6556
  %v6559 = vmul.f32 %v6549, %v6557
  %v6561 = vlaneseq
  %v6562 = vshrl.u32 %v6561, 7
  %v6563 = vsub.s32 0, %v6562
  %v6564 = vrot.slane %v6527, %v6563
  %v6566 = vmul.f32 %v6558, %v6564
  %v6567 = vmul.f32 %v6559, %v6564
  %v6569 = vlaneseq
  %v6570 = vshrl.u32 %v6569, 7
  %v6571 = vsub.s32 0, %v6570
  %v6572 = vrot.slane %v6529, %v6571
  %v6574 = vadd.f32 %v6566, %v6572
  %v6575 = vadd.f32 %v6567, %v6572
  %v6576 = vpack.c.bf16 %v6575, %v6574
  %s6577 = scalar_lea.vmem %s7, 256
  %v6578 = vld [vmem:[%s6577] sm:$0xff]
  %v6579 = vld [vmem:[%s6577 + $0x8] sm:$0xff]
  %v6580 = vld [vmem:[%s6577 + $0x10] sm:$0xff]
  %v6581 = vld [vmem:[%s6577 + $0x18] sm:$0xff]
  %v6582 = vld [vmem:[%s6577 + $0x20] sm:$0xff]
  %v6583 = vld [vmem:[%s6577 + $0x28] sm:$0xff]
  %v6584 = vld [vmem:[%s6577 + $0x30] sm:$0xff]
  %v6585 = vld [vmem:[%s6577 + $0x38] sm:$0xff]
  %v6586 = vld [vmem:[%s6577 + $0x40] sm:$0xff]
  %v6587 = vld [vmem:[%s6577 + $0x48] sm:$0xff]
  %v6588 = vld [vmem:[%s6577 + $0x50] sm:$0xff]
  %v6589 = vld [vmem:[%s6577 + $0x58] sm:$0xff]
  %v6590 = vld [vmem:[%s6577 + $0x60] sm:$0xff]
  %v6591 = vld [vmem:[%s6577 + $0x68] sm:$0xff]
  %v6592 = vld [vmem:[%s6577 + $0x70] sm:$0xff]
  %v6593 = vld [vmem:[%s6577 + $0x78] sm:$0xff]
  %v6594 = vld [vmem:[%s6577 + $0x80] sm:$0xff]
  %v6595 = vld [vmem:[%s6577 + $0x88] sm:$0xff]
  %v6596 = vld [vmem:[%s6577 + $0x90] sm:$0xff]
  %v6597 = vld [vmem:[%s6577 + $0x98] sm:$0xff]
  %v6598 = vld [vmem:[%s6577 + $0xa0] sm:$0xff]
  %v6599 = vld [vmem:[%s6577 + $0xa8] sm:$0xff]
  %v6600 = vld [vmem:[%s6577 + $0xb0] sm:$0xff]
  %v6601 = vld [vmem:[%s6577 + $0xb8] sm:$0xff]
  %v6602 = vld [vmem:[%s6577 + $0xc0] sm:$0xff]
  %v6603 = vld [vmem:[%s6577 + $0xc8] sm:$0xff]
  %v6604 = vld [vmem:[%s6577 + $0xd0] sm:$0xff]
  %v6605 = vld [vmem:[%s6577 + $0xd8] sm:$0xff]
  %v6606 = vld [vmem:[%s6577 + $0xe0] sm:$0xff]
  %v6607 = vld [vmem:[%s6577 + $0xe8] sm:$0xff]
  %v6608 = vld [vmem:[%s6577 + $0xf0] sm:$0xff]
  %v6609 = vld [vmem:[%s6577 + $0xf8] sm:$0xff]
  %s6610 = scalar_lea.vmem %s8, 16
  %v6611 = vld [vmem:[%s6610] sm:$0xff]
  %v6612 = vld [vmem:[%s6610 + $0x8] sm:$0xff]
  %v6615 = vlaneseq
  %v6616 = vshrl.u32 %v6615, 7
  %v6617 = vsub.s32 0, %v6616
  %v6618 = vrot.slane %v6611, %v6617
  %v6619 = vlaneseq
  %v6620 = vshrl.u32 %v6619, 7
  %v6621 = vsub.s32 1, %v6620
  %v6622 = vrot.slane %v6611, %v6621
  %v6623 = vlaneseq
  %v6624 = vshrl.u32 %v6623, 7
  %v6625 = vsub.s32 2, %v6624
  %v6626 = vrot.slane %v6611, %v6625
  %v6627 = vlaneseq
  %v6628 = vshrl.u32 %v6627, 7
  %v6629 = vsub.s32 3, %v6628
  %v6630 = vrot.slane %v6611, %v6629
  %v6631 = vlaneseq
  %v6632 = vshrl.u32 %v6631, 7
  %v6633 = vsub.s32 4, %v6632
  %v6634 = vrot.slane %v6611, %v6633
  %v6635 = vlaneseq
  %v6636 = vshrl.u32 %v6635, 7
  %v6637 = vsub.s32 5, %v6636
  %v6638 = vrot.slane %v6611, %v6637
  %v6639 = vlaneseq
  %v6640 = vshrl.u32 %v6639, 7
  %v6641 = vsub.s32 6, %v6640
  %v6642 = vrot.slane %v6611, %v6641
  %v6643 = vlaneseq
  %v6644 = vshrl.u32 %v6643, 7
  %v6645 = vsub.s32 7, %v6644
  %v6646 = vrot.slane %v6611, %v6645
  %v6647 = vlaneseq
  %v6648 = vshrl.u32 %v6647, 7
  %v6649 = vsub.s32 0, %v6648
  %v6650 = vrot.slane %v6612, %v6649
  %v6651 = vlaneseq
  %v6652 = vshrl.u32 %v6651, 7
  %v6653 = vsub.s32 1, %v6652
  %v6654 = vrot.slane %v6612, %v6653
  %v6655 = vlaneseq
  %v6656 = vshrl.u32 %v6655, 7
  %v6657 = vsub.s32 2, %v6656
  %v6658 = vrot.slane %v6612, %v6657
  %v6659 = vlaneseq
  %v6660 = vshrl.u32 %v6659, 7
  %v6661 = vsub.s32 3, %v6660
  %v6662 = vrot.slane %v6612, %v6661
  %v6663 = vlaneseq
  %v6664 = vshrl.u32 %v6663, 7
  %v6665 = vsub.s32 4, %v6664
  %v6666 = vrot.slane %v6612, %v6665
  %v6667 = vlaneseq
  %v6668 = vshrl.u32 %v6667, 7
  %v6669 = vsub.s32 5, %v6668
  %v6670 = vrot.slane %v6612, %v6669
  %v6671 = vlaneseq
  %v6672 = vshrl.u32 %v6671, 7
  %v6673 = vsub.s32 6, %v6672
  %v6674 = vrot.slane %v6612, %v6673
  %v6675 = vlaneseq
  %v6676 = vshrl.u32 %v6675, 7
  %v6677 = vsub.s32 7, %v6676
  %v6678 = vrot.slane %v6612, %v6677
  %v6727 = vunpack.c.l.b16 %v6578
  %v6728 = vunpack.c.h.b16 %v6578
  %v6729 = vunpack.c.l.b16 %v6579
  %v6730 = vunpack.c.h.b16 %v6579
  %v6731 = vunpack.c.l.b16 %v6580
  %v6732 = vunpack.c.h.b16 %v6580
  %v6733 = vunpack.c.l.b16 %v6581
  %v6734 = vunpack.c.h.b16 %v6581
  %v6735 = vunpack.c.l.b16 %v6582
  %v6736 = vunpack.c.h.b16 %v6582
  %v6737 = vunpack.c.l.b16 %v6583
  %v6738 = vunpack.c.h.b16 %v6583
  %v6739 = vunpack.c.l.b16 %v6584
  %v6740 = vunpack.c.h.b16 %v6584
  %v6741 = vunpack.c.l.b16 %v6585
  %v6742 = vunpack.c.h.b16 %v6585
  %v6743 = vunpack.c.l.b16 %v6586
  %v6744 = vunpack.c.h.b16 %v6586
  %v6745 = vunpack.c.l.b16 %v6587
  %v6746 = vunpack.c.h.b16 %v6587
  %v6747 = vunpack.c.l.b16 %v6588
  %v6748 = vunpack.c.h.b16 %v6588
  %v6749 = vunpack.c.l.b16 %v6589
  %v6750 = vunpack.c.h.b16 %v6589
  %v6751 = vunpack.c.l.b16 %v6590
  %v6752 = vunpack.c.h.b16 %v6590
  %v6753 = vunpack.c.l.b16 %v6591
  %v6754 = vunpack.c.h.b16 %v6591
  %v6755 = vunpack.c.l.b16 %v6592
  %v6756 = vunpack.c.h.b16 %v6592
  %v6757 = vunpack.c.l.b16 %v6593
  %v6758 = vunpack.c.h.b16 %v6593
  %v6759 = vunpack.c.l.b16 %v6594
  %v6760 = vunpack.c.h.b16 %v6594
  %v6761 = vunpack.c.l.b16 %v6595
  %v6762 = vunpack.c.h.b16 %v6595
  %v6763 = vunpack.c.l.b16 %v6596
  %v6764 = vunpack.c.h.b16 %v6596
  %v6765 = vunpack.c.l.b16 %v6597
  %v6766 = vunpack.c.h.b16 %v6597
  %v6767 = vunpack.c.l.b16 %v6598
  %v6768 = vunpack.c.h.b16 %v6598
  %v6769 = vunpack.c.l.b16 %v6599
  %v6770 = vunpack.c.h.b16 %v6599
  %v6771 = vunpack.c.l.b16 %v6600
  %v6772 = vunpack.c.h.b16 %v6600
  %v6773 = vunpack.c.l.b16 %v6601
  %v6774 = vunpack.c.h.b16 %v6601
  %v6775 = vunpack.c.l.b16 %v6602
  %v6776 = vunpack.c.h.b16 %v6602
  %v6777 = vunpack.c.l.b16 %v6603
  %v6778 = vunpack.c.h.b16 %v6603
  %v6779 = vunpack.c.l.b16 %v6604
  %v6780 = vunpack.c.h.b16 %v6604
  %v6781 = vunpack.c.l.b16 %v6605
  %v6782 = vunpack.c.h.b16 %v6605
  %v6783 = vunpack.c.l.b16 %v6606
  %v6784 = vunpack.c.h.b16 %v6606
  %v6785 = vunpack.c.l.b16 %v6607
  %v6786 = vunpack.c.h.b16 %v6607
  %v6787 = vunpack.c.l.b16 %v6608
  %v6788 = vunpack.c.h.b16 %v6608
  %v6789 = vunpack.c.l.b16 %v6609
  %v6790 = vunpack.c.h.b16 %v6609
  %v6791 = vpack.c.b16 %v6743, %v6727
  %v6792 = vpack.c.b16 %v6744, %v6728
  %v6793 = vpack.c.b16 %v6745, %v6729
  %v6794 = vpack.c.b16 %v6746, %v6730
  %v6795 = vpack.c.b16 %v6747, %v6731
  %v6796 = vpack.c.b16 %v6748, %v6732
  %v6797 = vpack.c.b16 %v6749, %v6733
  %v6798 = vpack.c.b16 %v6750, %v6734
  %v6799 = vpack.c.b16 %v6751, %v6735
  %v6800 = vpack.c.b16 %v6752, %v6736
  %v6801 = vpack.c.b16 %v6753, %v6737
  %v6802 = vpack.c.b16 %v6754, %v6738
  %v6803 = vpack.c.b16 %v6755, %v6739
  %v6804 = vpack.c.b16 %v6756, %v6740
  %v6805 = vpack.c.b16 %v6757, %v6741
  %v6806 = vpack.c.b16 %v6758, %v6742
  %v6807 = vpack.c.b16 %v6775, %v6759
  %v6808 = vpack.c.b16 %v6776, %v6760
  %v6809 = vpack.c.b16 %v6777, %v6761
  %v6810 = vpack.c.b16 %v6778, %v6762
  %v6811 = vpack.c.b16 %v6779, %v6763
  %v6812 = vpack.c.b16 %v6780, %v6764
  %v6813 = vpack.c.b16 %v6781, %v6765
  %v6814 = vpack.c.b16 %v6782, %v6766
  %v6815 = vpack.c.b16 %v6783, %v6767
  %v6816 = vpack.c.b16 %v6784, %v6768
  %v6817 = vpack.c.b16 %v6785, %v6769
  %v6818 = vpack.c.b16 %v6786, %v6770
  %v6819 = vpack.c.b16 %v6787, %v6771
  %v6820 = vpack.c.b16 %v6788, %v6772
  %v6821 = vpack.c.b16 %v6789, %v6773
  %v6822 = vpack.c.b16 %v6790, %v6774
  %v6856 = vsel %vm79, %v6576, 0
  %6858 = vmatprep.subr.bf16.mxu0 0
  %6859 = vmatpush1.bf16.msra.mxu0 0
  %6860 = vmatprep.subr.bf16.mxu0 0
  %6861 = vmatpush1.bf16.msra.mxu0 0
  %6862 = vmatprep.subr.bf16.mxu0 0
  %6863 = vmatpush1.bf16.msra.mxu0 0
  %6864 = vmatprep.subr.bf16.mxu0 0
  %6865 = vmatpush1.bf16.msra.mxu0 0
  %6866 = vmatprep.subr.bf16.mxu0 0
  %6867 = vmatpush1.bf16.msra.mxu0 0
  %6868 = vmatprep.subr.bf16.mxu0 0
  %6869 = vmatpush1.bf16.msra.mxu0 0
  %6870 = vmatprep.subr.bf16.mxu0 %v6808
  %6871 = vmatpush1.bf16.msra.mxu0 %v6807
  %6872 = vmatprep.subr.bf16.mxu0 %v6792
  %6873 = vmatpush1.bf16.msra.mxu0 %v6791
  %6874 = vmatprep.subr.bf16.mxu0 0
  %6875 = vmatpush2.bf16.msra.mxu0 0
  %6876 = vmatprep.subr.bf16.mxu0 0
  %6877 = vmatpush2.bf16.msra.mxu0 0
  %6878 = vmatprep.subr.bf16.mxu0 0
  %6879 = vmatpush2.bf16.msra.mxu0 0
  %6880 = vmatprep.subr.bf16.mxu0 0
  %6881 = vmatpush2.bf16.msra.mxu0 0
  %6882 = vmatprep.subr.bf16.mxu0 0
  %6883 = vmatpush2.bf16.msra.mxu0 0
  %6884 = vmatprep.subr.bf16.mxu0 0
  %6885 = vmatpush2.bf16.msra.mxu0 0
  %6886 = vmatprep.subr.bf16.mxu0 0
  %6887 = vmatpush2.bf16.msra.mxu0 0
  %6888 = vmatprep.subr.bf16.mxu0 0
  %6889 = vmatpush2.bf16.msra.mxu0 0
  %6890 = vmatprep.mubr.bf16.mxu0 0
  %6891 = vmatmul.mubr.bf16.gmra.mxu0 %v6856
  %v6892 = vpop.f32.mrf.mxu0
  %v6893 = vadd.f32 %v6618, %v6892
  %v6894 = vpop.f32.mrf.mxu0
  %v6895 = vadd.f32 %v6622, %v6894
  %v6896 = vpop.f32.mrf.mxu0
  %v6897 = vadd.f32 %v6618, %v6896
  %v6898 = vpop.f32.mrf.mxu0
  %v6899 = vadd.f32 %v6622, %v6898
  %6900 = vdwg.mxu0
  %6901 = vmatprep.subr.bf16.mxu0 0
  %6902 = vmatpush1.bf16.msra.mxu0 0
  %6903 = vmatprep.subr.bf16.mxu0 0
  %6904 = vmatpush1.bf16.msra.mxu0 0
  %6905 = vmatprep.subr.bf16.mxu0 0
  %6906 = vmatpush1.bf16.msra.mxu0 0
  %6907 = vmatprep.subr.bf16.mxu0 0
  %6908 = vmatpush1.bf16.msra.mxu0 0
  %6909 = vmatprep.subr.bf16.mxu0 0
  %6910 = vmatpush1.bf16.msra.mxu0 0
  %6911 = vmatprep.subr.bf16.mxu0 0
  %6912 = vmatpush1.bf16.msra.mxu0 0
  %6913 = vmatprep.subr.bf16.mxu0 %v6810
  %6914 = vmatpush1.bf16.msra.mxu0 %v6809
  %6915 = vmatprep.subr.bf16.mxu0 %v6794
  %6916 = vmatpush1.bf16.msra.mxu0 %v6793
  %6917 = vmatprep.subr.bf16.mxu0 0
  %6918 = vmatpush2.bf16.msra.mxu0 0
  %6919 = vmatprep.subr.bf16.mxu0 0
  %6920 = vmatpush2.bf16.msra.mxu0 0
  %6921 = vmatprep.subr.bf16.mxu0 0
  %6922 = vmatpush2.bf16.msra.mxu0 0
  %6923 = vmatprep.subr.bf16.mxu0 0
  %6924 = vmatpush2.bf16.msra.mxu0 0
  %6925 = vmatprep.subr.bf16.mxu0 0
  %6926 = vmatpush2.bf16.msra.mxu0 0
  %6927 = vmatprep.subr.bf16.mxu0 0
  %6928 = vmatpush2.bf16.msra.mxu0 0
  %6929 = vmatprep.subr.bf16.mxu0 0
  %6930 = vmatpush2.bf16.msra.mxu0 0
  %6931 = vmatprep.subr.bf16.mxu0 0
  %6932 = vmatpush2.bf16.msra.mxu0 0
  %6933 = vmatprep.mubr.bf16.mxu0 0
  %6934 = vmatmul.mubr.bf16.gmra.mxu0 %v6856
  %v6935 = vpop.f32.mrf.mxu0
  %v6936 = vadd.f32 %v6626, %v6935
  %v6937 = vpop.f32.mrf.mxu0
  %v6938 = vadd.f32 %v6630, %v6937
  %v6939 = vpop.f32.mrf.mxu0
  %v6940 = vadd.f32 %v6626, %v6939
  %v6941 = vpop.f32.mrf.mxu0
  %v6942 = vadd.f32 %v6630, %v6941
  %6943 = vdwg.mxu0
  %6944 = vmatprep.subr.bf16.mxu0 0
  %6945 = vmatpush1.bf16.msra.mxu0 0
  %6946 = vmatprep.subr.bf16.mxu0 0
  %6947 = vmatpush1.bf16.msra.mxu0 0
  %6948 = vmatprep.subr.bf16.mxu0 0
  %6949 = vmatpush1.bf16.msra.mxu0 0
  %6950 = vmatprep.subr.bf16.mxu0 0
  %6951 = vmatpush1.bf16.msra.mxu0 0
  %6952 = vmatprep.subr.bf16.mxu0 0
  %6953 = vmatpush1.bf16.msra.mxu0 0
  %6954 = vmatprep.subr.bf16.mxu0 0
  %6955 = vmatpush1.bf16.msra.mxu0 0
  %6956 = vmatprep.subr.bf16.mxu0 %v6812
  %6957 = vmatpush1.bf16.msra.mxu0 %v6811
  %6958 = vmatprep.subr.bf16.mxu0 %v6796
  %6959 = vmatpush1.bf16.msra.mxu0 %v6795
  %6960 = vmatprep.subr.bf16.mxu0 0
  %6961 = vmatpush2.bf16.msra.mxu0 0
  %6962 = vmatprep.subr.bf16.mxu0 0
  %6963 = vmatpush2.bf16.msra.mxu0 0
  %6964 = vmatprep.subr.bf16.mxu0 0
  %6965 = vmatpush2.bf16.msra.mxu0 0
  %6966 = vmatprep.subr.bf16.mxu0 0
  %6967 = vmatpush2.bf16.msra.mxu0 0
  %6968 = vmatprep.subr.bf16.mxu0 0
  %6969 = vmatpush2.bf16.msra.mxu0 0
  %6970 = vmatprep.subr.bf16.mxu0 0
  %6971 = vmatpush2.bf16.msra.mxu0 0
  %6972 = vmatprep.subr.bf16.mxu0 0
  %6973 = vmatpush2.bf16.msra.mxu0 0
  %6974 = vmatprep.subr.bf16.mxu0 0
  %6975 = vmatpush2.bf16.msra.mxu0 0
  %6976 = vmatprep.mubr.bf16.mxu0 0
  %6977 = vmatmul.mubr.bf16.gmra.mxu0 %v6856
  %v6978 = vpop.f32.mrf.mxu0
  %v6979 = vadd.f32 %v6634, %v6978
  %v6980 = vpop.f32.mrf.mxu0
  %v6981 = vadd.f32 %v6638, %v6980
  %v6982 = vpop.f32.mrf.mxu0
  %v6983 = vadd.f32 %v6634, %v6982
  %v6984 = vpop.f32.mrf.mxu0
  %v6985 = vadd.f32 %v6638, %v6984
  %6986 = vdwg.mxu0
  %6987 = vmatprep.subr.bf16.mxu0 0
  %6988 = vmatpush1.bf16.msra.mxu0 0
  %6989 = vmatprep.subr.bf16.mxu0 0
  %6990 = vmatpush1.bf16.msra.mxu0 0
  %6991 = vmatprep.subr.bf16.mxu0 0
  %6992 = vmatpush1.bf16.msra.mxu0 0
  %6993 = vmatprep.subr.bf16.mxu0 0
  %6994 = vmatpush1.bf16.msra.mxu0 0
  %6995 = vmatprep.subr.bf16.mxu0 0
  %6996 = vmatpush1.bf16.msra.mxu0 0
  %6997 = vmatprep.subr.bf16.mxu0 0
  %6998 = vmatpush1.bf16.msra.mxu0 0
  %6999 = vmatprep.subr.bf16.mxu0 %v6814
  %7000 = vmatpush1.bf16.msra.mxu0 %v6813
  %7001 = vmatprep.subr.bf16.mxu0 %v6798
  %7002 = vmatpush1.bf16.msra.mxu0 %v6797
  %7003 = vmatprep.subr.bf16.mxu0 0
  %7004 = vmatpush2.bf16.msra.mxu0 0
  %7005 = vmatprep.subr.bf16.mxu0 0
  %7006 = vmatpush2.bf16.msra.mxu0 0
  %7007 = vmatprep.subr.bf16.mxu0 0
  %7008 = vmatpush2.bf16.msra.mxu0 0
  %7009 = vmatprep.subr.bf16.mxu0 0
  %7010 = vmatpush2.bf16.msra.mxu0 0
  %7011 = vmatprep.subr.bf16.mxu0 0
  %7012 = vmatpush2.bf16.msra.mxu0 0
  %7013 = vmatprep.subr.bf16.mxu0 0
  %7014 = vmatpush2.bf16.msra.mxu0 0
  %7015 = vmatprep.subr.bf16.mxu0 0
  %7016 = vmatpush2.bf16.msra.mxu0 0
  %7017 = vmatprep.subr.bf16.mxu0 0
  %7018 = vmatpush2.bf16.msra.mxu0 0
  %7019 = vmatprep.mubr.bf16.mxu0 0
  %7020 = vmatmul.mubr.bf16.gmra.mxu0 %v6856
  %v7021 = vpop.f32.mrf.mxu0
  %v7022 = vadd.f32 %v6642, %v7021
  %v7023 = vpop.f32.mrf.mxu0
  %v7024 = vadd.f32 %v6646, %v7023
  %v7025 = vpop.f32.mrf.mxu0
  %v7026 = vadd.f32 %v6642, %v7025
  %v7027 = vpop.f32.mrf.mxu0
  %v7028 = vadd.f32 %v6646, %v7027
  %7029 = vdwg.mxu0
  %7030 = vmatprep.subr.bf16.mxu0 0
  %7031 = vmatpush1.bf16.msra.mxu0 0
  %7032 = vmatprep.subr.bf16.mxu0 0
  %7033 = vmatpush1.bf16.msra.mxu0 0
  %7034 = vmatprep.subr.bf16.mxu0 0
  %7035 = vmatpush1.bf16.msra.mxu0 0
  %7036 = vmatprep.subr.bf16.mxu0 0
  %7037 = vmatpush1.bf16.msra.mxu0 0
  %7038 = vmatprep.subr.bf16.mxu0 0
  %7039 = vmatpush1.bf16.msra.mxu0 0
  %7040 = vmatprep.subr.bf16.mxu0 0
  %7041 = vmatpush1.bf16.msra.mxu0 0
  %7042 = vmatprep.subr.bf16.mxu0 %v6816
  %7043 = vmatpush1.bf16.msra.mxu0 %v6815
  %7044 = vmatprep.subr.bf16.mxu0 %v6800
  %7045 = vmatpush1.bf16.msra.mxu0 %v6799
  %7046 = vmatprep.subr.bf16.mxu0 0
  %7047 = vmatpush2.bf16.msra.mxu0 0
  %7048 = vmatprep.subr.bf16.mxu0 0
  %7049 = vmatpush2.bf16.msra.mxu0 0
  %7050 = vmatprep.subr.bf16.mxu0 0
  %7051 = vmatpush2.bf16.msra.mxu0 0
  %7052 = vmatprep.subr.bf16.mxu0 0
  %7053 = vmatpush2.bf16.msra.mxu0 0
  %7054 = vmatprep.subr.bf16.mxu0 0
  %7055 = vmatpush2.bf16.msra.mxu0 0
  %7056 = vmatprep.subr.bf16.mxu0 0
  %7057 = vmatpush2.bf16.msra.mxu0 0
  %7058 = vmatprep.subr.bf16.mxu0 0
  %7059 = vmatpush2.bf16.msra.mxu0 0
  %7060 = vmatprep.subr.bf16.mxu0 0
  %7061 = vmatpush2.bf16.msra.mxu0 0
  %7062 = vmatprep.mubr.bf16.mxu0 0
  %7063 = vmatmul.mubr.bf16.gmra.mxu0 %v6856
  %v7064 = vpop.f32.mrf.mxu0
  %v7065 = vadd.f32 %v6650, %v7064
  %v7066 = vpop.f32.mrf.mxu0
  %v7067 = vadd.f32 %v6654, %v7066
  %v7068 = vpop.f32.mrf.mxu0
  %v7069 = vadd.f32 %v6650, %v7068
  %v7070 = vpop.f32.mrf.mxu0
  %v7071 = vadd.f32 %v6654, %v7070
  %7072 = vdwg.mxu0
  %7073 = vmatprep.subr.bf16.mxu0 0
  %7074 = vmatpush1.bf16.msra.mxu0 0
  %7075 = vmatprep.subr.bf16.mxu0 0
  %7076 = vmatpush1.bf16.msra.mxu0 0
  %7077 = vmatprep.subr.bf16.mxu0 0
  %7078 = vmatpush1.bf16.msra.mxu0 0
  %7079 = vmatprep.subr.bf16.mxu0 0
  %7080 = vmatpush1.bf16.msra.mxu0 0
  %7081 = vmatprep.subr.bf16.mxu0 0
  %7082 = vmatpush1.bf16.msra.mxu0 0
  %7083 = vmatprep.subr.bf16.mxu0 0
  %7084 = vmatpush1.bf16.msra.mxu0 0
  %7085 = vmatprep.subr.bf16.mxu0 %v6818
  %7086 = vmatpush1.bf16.msra.mxu0 %v6817
  %7087 = vmatprep.subr.bf16.mxu0 %v6802
  %7088 = vmatpush1.bf16.msra.mxu0 %v6801
  %7089 = vmatprep.subr.bf16.mxu0 0
  %7090 = vmatpush2.bf16.msra.mxu0 0
  %7091 = vmatprep.subr.bf16.mxu0 0
  %7092 = vmatpush2.bf16.msra.mxu0 0
  %7093 = vmatprep.subr.bf16.mxu0 0
  %7094 = vmatpush2.bf16.msra.mxu0 0
  %7095 = vmatprep.subr.bf16.mxu0 0
  %7096 = vmatpush2.bf16.msra.mxu0 0
  %7097 = vmatprep.subr.bf16.mxu0 0
  %7098 = vmatpush2.bf16.msra.mxu0 0
  %7099 = vmatprep.subr.bf16.mxu0 0
  %7100 = vmatpush2.bf16.msra.mxu0 0
  %7101 = vmatprep.subr.bf16.mxu0 0
  %7102 = vmatpush2.bf16.msra.mxu0 0
  %7103 = vmatprep.subr.bf16.mxu0 0
  %7104 = vmatpush2.bf16.msra.mxu0 0
  %7105 = vmatprep.mubr.bf16.mxu0 0
  %7106 = vmatmul.mubr.bf16.gmra.mxu0 %v6856
  %v7107 = vpop.f32.mrf.mxu0
  %v7108 = vadd.f32 %v6658, %v7107
  %v7109 = vpop.f32.mrf.mxu0
  %v7110 = vadd.f32 %v6662, %v7109
  %v7111 = vpop.f32.mrf.mxu0
  %v7112 = vadd.f32 %v6658, %v7111
  %v7113 = vpop.f32.mrf.mxu0
  %v7114 = vadd.f32 %v6662, %v7113
  %7115 = vdwg.mxu0
  %7116 = vmatprep.subr.bf16.mxu0 0
  %7117 = vmatpush1.bf16.msra.mxu0 0
  %7118 = vmatprep.subr.bf16.mxu0 0
  %7119 = vmatpush1.bf16.msra.mxu0 0
  %7120 = vmatprep.subr.bf16.mxu0 0
  %7121 = vmatpush1.bf16.msra.mxu0 0
  %7122 = vmatprep.subr.bf16.mxu0 0
  %7123 = vmatpush1.bf16.msra.mxu0 0
  %7124 = vmatprep.subr.bf16.mxu0 0
  %7125 = vmatpush1.bf16.msra.mxu0 0
  %7126 = vmatprep.subr.bf16.mxu0 0
  %7127 = vmatpush1.bf16.msra.mxu0 0
  %7128 = vmatprep.subr.bf16.mxu0 %v6820
  %7129 = vmatpush1.bf16.msra.mxu0 %v6819
  %7130 = vmatprep.subr.bf16.mxu0 %v6804
  %7131 = vmatpush1.bf16.msra.mxu0 %v6803
  %7132 = vmatprep.subr.bf16.mxu0 0
  %7133 = vmatpush2.bf16.msra.mxu0 0
  %7134 = vmatprep.subr.bf16.mxu0 0
  %7135 = vmatpush2.bf16.msra.mxu0 0
  %7136 = vmatprep.subr.bf16.mxu0 0
  %7137 = vmatpush2.bf16.msra.mxu0 0
  %7138 = vmatprep.subr.bf16.mxu0 0
  %7139 = vmatpush2.bf16.msra.mxu0 0
  %7140 = vmatprep.subr.bf16.mxu0 0
  %7141 = vmatpush2.bf16.msra.mxu0 0
  %7142 = vmatprep.subr.bf16.mxu0 0
  %7143 = vmatpush2.bf16.msra.mxu0 0
  %7144 = vmatprep.subr.bf16.mxu0 0
  %7145 = vmatpush2.bf16.msra.mxu0 0
  %7146 = vmatprep.subr.bf16.mxu0 0
  %7147 = vmatpush2.bf16.msra.mxu0 0
  %7148 = vmatprep.mubr.bf16.mxu0 0
  %7149 = vmatmul.mubr.bf16.gmra.mxu0 %v6856
  %v7150 = vpop.f32.mrf.mxu0
  %v7151 = vadd.f32 %v6666, %v7150
  %v7152 = vpop.f32.mrf.mxu0
  %v7153 = vadd.f32 %v6670, %v7152
  %v7154 = vpop.f32.mrf.mxu0
  %v7155 = vadd.f32 %v6666, %v7154
  %v7156 = vpop.f32.mrf.mxu0
  %v7157 = vadd.f32 %v6670, %v7156
  %7158 = vdwg.mxu0
  %7159 = vmatprep.subr.bf16.mxu0 0
  %7160 = vmatpush1.bf16.msra.mxu0 0
  %7161 = vmatprep.subr.bf16.mxu0 0
  %7162 = vmatpush1.bf16.msra.mxu0 0
  %7163 = vmatprep.subr.bf16.mxu0 0
  %7164 = vmatpush1.bf16.msra.mxu0 0
  %7165 = vmatprep.subr.bf16.mxu0 0
  %7166 = vmatpush1.bf16.msra.mxu0 0
  %7167 = vmatprep.subr.bf16.mxu0 0
  %7168 = vmatpush1.bf16.msra.mxu0 0
  %7169 = vmatprep.subr.bf16.mxu0 0
  %7170 = vmatpush1.bf16.msra.mxu0 0
  %7171 = vmatprep.subr.bf16.mxu0 %v6822
  %7172 = vmatpush1.bf16.msra.mxu0 %v6821
  %7173 = vmatprep.subr.bf16.mxu0 %v6806
  %7174 = vmatpush1.bf16.msra.mxu0 %v6805
  %7175 = vmatprep.subr.bf16.mxu0 0
  %7176 = vmatpush2.bf16.msra.mxu0 0
  %7177 = vmatprep.subr.bf16.mxu0 0
  %7178 = vmatpush2.bf16.msra.mxu0 0
  %7179 = vmatprep.subr.bf16.mxu0 0
  %7180 = vmatpush2.bf16.msra.mxu0 0
  %7181 = vmatprep.subr.bf16.mxu0 0
  %7182 = vmatpush2.bf16.msra.mxu0 0
  %7183 = vmatprep.subr.bf16.mxu0 0
  %7184 = vmatpush2.bf16.msra.mxu0 0
  %7185 = vmatprep.subr.bf16.mxu0 0
  %7186 = vmatpush2.bf16.msra.mxu0 0
  %7187 = vmatprep.subr.bf16.mxu0 0
  %7188 = vmatpush2.bf16.msra.mxu0 0
  %7189 = vmatprep.subr.bf16.mxu0 0
  %7190 = vmatpush2.bf16.msra.mxu0 0
  %7191 = vmatprep.mubr.bf16.mxu0 0
  %7192 = vmatmul.mubr.bf16.gmra.mxu0 %v6856
  %v7193 = vpop.f32.mrf.mxu0
  %v7194 = vadd.f32 %v6674, %v7193
  %v7195 = vpop.f32.mrf.mxu0
  %v7196 = vadd.f32 %v6678, %v7195
  %v7197 = vpop.f32.mrf.mxu0
  %v7198 = vadd.f32 %v6674, %v7197
  %v7199 = vpop.f32.mrf.mxu0
  %v7200 = vadd.f32 %v6678, %v7199
  %7201 = vdwg.mxu0
  %v7202 = vmax.f32 %v6893, 0.0
  %v7203 = vmax.f32 %v6895, 0.0
  %v7204 = vmax.f32 %v6936, 0.0
  %v7205 = vmax.f32 %v6938, 0.0
  %v7206 = vmax.f32 %v6979, 0.0
  %v7207 = vmax.f32 %v6981, 0.0
  %v7208 = vmax.f32 %v7022, 0.0
  %v7209 = vmax.f32 %v7024, 0.0
  %v7210 = vmax.f32 %v7065, 0.0
  %v7211 = vmax.f32 %v7067, 0.0
  %v7212 = vmax.f32 %v7108, 0.0
  %v7213 = vmax.f32 %v7110, 0.0
  %v7214 = vmax.f32 %v7151, 0.0
  %v7215 = vmax.f32 %v7153, 0.0
  %v7216 = vmax.f32 %v7194, 0.0
  %v7217 = vmax.f32 %v7196, 0.0
  %v7218 = vmax.f32 %v6897, 0.0
  %v7219 = vmax.f32 %v6899, 0.0
  %v7220 = vmax.f32 %v6940, 0.0
  %v7221 = vmax.f32 %v6942, 0.0
  %v7222 = vmax.f32 %v6983, 0.0
  %v7223 = vmax.f32 %v6985, 0.0
  %v7224 = vmax.f32 %v7026, 0.0
  %v7225 = vmax.f32 %v7028, 0.0
  %v7226 = vmax.f32 %v7069, 0.0
  %v7227 = vmax.f32 %v7071, 0.0
  %v7228 = vmax.f32 %v7112, 0.0
  %v7229 = vmax.f32 %v7114, 0.0
  %v7230 = vmax.f32 %v7155, 0.0
  %v7231 = vmax.f32 %v7157, 0.0
  %v7232 = vmax.f32 %v7198, 0.0
  %v7233 = vmax.f32 %v7200, 0.0
  %v7234 = vpack.c.bf16 %v7218, %v7202
  %v7235 = vpack.c.bf16 %v7219, %v7203
  %v7236 = vpack.c.bf16 %v7220, %v7204
  %v7237 = vpack.c.bf16 %v7221, %v7205
  %v7238 = vpack.c.bf16 %v7222, %v7206
  %v7239 = vpack.c.bf16 %v7223, %v7207
  %v7240 = vpack.c.bf16 %v7224, %v7208
  %v7241 = vpack.c.bf16 %v7225, %v7209
  %v7242 = vpack.c.bf16 %v7226, %v7210
  %v7243 = vpack.c.bf16 %v7227, %v7211
  %v7244 = vpack.c.bf16 %v7228, %v7212
  %v7245 = vpack.c.bf16 %v7229, %v7213
  %v7246 = vpack.c.bf16 %v7230, %v7214
  %v7247 = vpack.c.bf16 %v7231, %v7215
  %v7248 = vpack.c.bf16 %v7232, %v7216
  %v7249 = vpack.c.bf16 %v7233, %v7217
  %s7250 = scalar_lea.vmem %s9, 1024
  %v7251 = vld [vmem:[%s7250] sm:$0xf]
  %v7252 = vld [vmem:[%s7250 + $0x4] sm:$0xf]
  %v7253 = vld [vmem:[%s7250 + $0x8] sm:$0xf]
  %v7254 = vld [vmem:[%s7250 + $0xc] sm:$0xf]
  %v7255 = vld [vmem:[%s7250 + $0x10] sm:$0xf]
  %v7256 = vld [vmem:[%s7250 + $0x14] sm:$0xf]
  %v7257 = vld [vmem:[%s7250 + $0x18] sm:$0xf]
  %v7258 = vld [vmem:[%s7250 + $0x1c] sm:$0xf]
  %v7259 = vld [vmem:[%s7250 + $0x20] sm:$0xf]
  %v7260 = vld [vmem:[%s7250 + $0x24] sm:$0xf]
  %v7261 = vld [vmem:[%s7250 + $0x28] sm:$0xf]
  %v7262 = vld [vmem:[%s7250 + $0x2c] sm:$0xf]
  %v7263 = vld [vmem:[%s7250 + $0x30] sm:$0xf]
  %v7264 = vld [vmem:[%s7250 + $0x34] sm:$0xf]
  %v7265 = vld [vmem:[%s7250 + $0x38] sm:$0xf]
  %v7266 = vld [vmem:[%s7250 + $0x3c] sm:$0xf]
  %v7267 = vld [vmem:[%s7250 + $0x40] sm:$0xf]
  %v7268 = vld [vmem:[%s7250 + $0x44] sm:$0xf]
  %v7269 = vld [vmem:[%s7250 + $0x48] sm:$0xf]
  %v7270 = vld [vmem:[%s7250 + $0x4c] sm:$0xf]
  %v7271 = vld [vmem:[%s7250 + $0x50] sm:$0xf]
  %v7272 = vld [vmem:[%s7250 + $0x54] sm:$0xf]
  %v7273 = vld [vmem:[%s7250 + $0x58] sm:$0xf]
  %v7274 = vld [vmem:[%s7250 + $0x5c] sm:$0xf]
  %v7275 = vld [vmem:[%s7250 + $0x60] sm:$0xf]
  %v7276 = vld [vmem:[%s7250 + $0x64] sm:$0xf]
  %v7277 = vld [vmem:[%s7250 + $0x68] sm:$0xf]
  %v7278 = vld [vmem:[%s7250 + $0x6c] sm:$0xf]
  %v7279 = vld [vmem:[%s7250 + $0x70] sm:$0xf]
  %v7280 = vld [vmem:[%s7250 + $0x74] sm:$0xf]
  %v7281 = vld [vmem:[%s7250 + $0x78] sm:$0xf]
  %v7282 = vld [vmem:[%s7250 + $0x7c] sm:$0xf]
  %v7283 = vld [vmem:[%s7250 + $0x80] sm:$0xf]
  %v7284 = vld [vmem:[%s7250 + $0x84] sm:$0xf]
  %v7285 = vld [vmem:[%s7250 + $0x88] sm:$0xf]
  %v7286 = vld [vmem:[%s7250 + $0x8c] sm:$0xf]
  %v7287 = vld [vmem:[%s7250 + $0x90] sm:$0xf]
  %v7288 = vld [vmem:[%s7250 + $0x94] sm:$0xf]
  %v7289 = vld [vmem:[%s7250 + $0x98] sm:$0xf]
  %v7290 = vld [vmem:[%s7250 + $0x9c] sm:$0xf]
  %v7291 = vld [vmem:[%s7250 + $0xa0] sm:$0xf]
  %v7292 = vld [vmem:[%s7250 + $0xa4] sm:$0xf]
  %v7293 = vld [vmem:[%s7250 + $0xa8] sm:$0xf]
  %v7294 = vld [vmem:[%s7250 + $0xac] sm:$0xf]
  %v7295 = vld [vmem:[%s7250 + $0xb0] sm:$0xf]
  %v7296 = vld [vmem:[%s7250 + $0xb4] sm:$0xf]
  %v7297 = vld [vmem:[%s7250 + $0xb8] sm:$0xf]
  %v7298 = vld [vmem:[%s7250 + $0xbc] sm:$0xf]
  %v7299 = vld [vmem:[%s7250 + $0xc0] sm:$0xf]
  %v7300 = vld [vmem:[%s7250 + $0xc4] sm:$0xf]
  %v7301 = vld [vmem:[%s7250 + $0xc8] sm:$0xf]
  %v7302 = vld [vmem:[%s7250 + $0xcc] sm:$0xf]
  %v7303 = vld [vmem:[%s7250 + $0xd0] sm:$0xf]
  %v7304 = vld [vmem:[%s7250 + $0xd4] sm:$0xf]
  %v7305 = vld [vmem:[%s7250 + $0xd8] sm:$0xf]
  %v7306 = vld [vmem:[%s7250 + $0xdc] sm:$0xf]
  %v7307 = vld [vmem:[%s7250 + $0xe0] sm:$0xf]
  %v7308 = vld [vmem:[%s7250 + $0xe4] sm:$0xf]
  %v7309 = vld [vmem:[%s7250 + $0xe8] sm:$0xf]
  %v7310 = vld [vmem:[%s7250 + $0xec] sm:$0xf]
  %v7311 = vld [vmem:[%s7250 + $0xf0] sm:$0xf]
  %v7312 = vld [vmem:[%s7250 + $0xf4] sm:$0xf]
  %v7313 = vld [vmem:[%s7250 + $0xf8] sm:$0xf]
  %v7314 = vld [vmem:[%s7250 + $0xfc] sm:$0xf]
  %v7315 = vld [vmem:[%s7250 + $0x100] sm:$0xf]
  %v7316 = vld [vmem:[%s7250 + $0x104] sm:$0xf]
  %v7317 = vld [vmem:[%s7250 + $0x108] sm:$0xf]
  %v7318 = vld [vmem:[%s7250 + $0x10c] sm:$0xf]
  %v7319 = vld [vmem:[%s7250 + $0x110] sm:$0xf]
  %v7320 = vld [vmem:[%s7250 + $0x114] sm:$0xf]
  %v7321 = vld [vmem:[%s7250 + $0x118] sm:$0xf]
  %v7322 = vld [vmem:[%s7250 + $0x11c] sm:$0xf]
  %v7323 = vld [vmem:[%s7250 + $0x120] sm:$0xf]
  %v7324 = vld [vmem:[%s7250 + $0x124] sm:$0xf]
  %v7325 = vld [vmem:[%s7250 + $0x128] sm:$0xf]
  %v7326 = vld [vmem:[%s7250 + $0x12c] sm:$0xf]
  %v7327 = vld [vmem:[%s7250 + $0x130] sm:$0xf]
  %v7328 = vld [vmem:[%s7250 + $0x134] sm:$0xf]
  %v7329 = vld [vmem:[%s7250 + $0x138] sm:$0xf]
  %v7330 = vld [vmem:[%s7250 + $0x13c] sm:$0xf]
  %v7331 = vld [vmem:[%s7250 + $0x140] sm:$0xf]
  %v7332 = vld [vmem:[%s7250 + $0x144] sm:$0xf]
  %v7333 = vld [vmem:[%s7250 + $0x148] sm:$0xf]
  %v7334 = vld [vmem:[%s7250 + $0x14c] sm:$0xf]
  %v7335 = vld [vmem:[%s7250 + $0x150] sm:$0xf]
  %v7336 = vld [vmem:[%s7250 + $0x154] sm:$0xf]
  %v7337 = vld [vmem:[%s7250 + $0x158] sm:$0xf]
  %v7338 = vld [vmem:[%s7250 + $0x15c] sm:$0xf]
  %v7339 = vld [vmem:[%s7250 + $0x160] sm:$0xf]
  %v7340 = vld [vmem:[%s7250 + $0x164] sm:$0xf]
  %v7341 = vld [vmem:[%s7250 + $0x168] sm:$0xf]
  %v7342 = vld [vmem:[%s7250 + $0x16c] sm:$0xf]
  %v7343 = vld [vmem:[%s7250 + $0x170] sm:$0xf]
  %v7344 = vld [vmem:[%s7250 + $0x174] sm:$0xf]
  %v7345 = vld [vmem:[%s7250 + $0x178] sm:$0xf]
  %v7346 = vld [vmem:[%s7250 + $0x17c] sm:$0xf]
  %v7347 = vld [vmem:[%s7250 + $0x180] sm:$0xf]
  %v7348 = vld [vmem:[%s7250 + $0x184] sm:$0xf]
  %v7349 = vld [vmem:[%s7250 + $0x188] sm:$0xf]
  %v7350 = vld [vmem:[%s7250 + $0x18c] sm:$0xf]
  %v7351 = vld [vmem:[%s7250 + $0x190] sm:$0xf]
  %v7352 = vld [vmem:[%s7250 + $0x194] sm:$0xf]
  %v7353 = vld [vmem:[%s7250 + $0x198] sm:$0xf]
  %v7354 = vld [vmem:[%s7250 + $0x19c] sm:$0xf]
  %v7355 = vld [vmem:[%s7250 + $0x1a0] sm:$0xf]
  %v7356 = vld [vmem:[%s7250 + $0x1a4] sm:$0xf]
  %v7357 = vld [vmem:[%s7250 + $0x1a8] sm:$0xf]
  %v7358 = vld [vmem:[%s7250 + $0x1ac] sm:$0xf]
  %v7359 = vld [vmem:[%s7250 + $0x1b0] sm:$0xf]
  %v7360 = vld [vmem:[%s7250 + $0x1b4] sm:$0xf]
  %v7361 = vld [vmem:[%s7250 + $0x1b8] sm:$0xf]
  %v7362 = vld [vmem:[%s7250 + $0x1bc] sm:$0xf]
  %v7363 = vld [vmem:[%s7250 + $0x1c0] sm:$0xf]
  %v7364 = vld [vmem:[%s7250 + $0x1c4] sm:$0xf]
  %v7365 = vld [vmem:[%s7250 + $0x1c8] sm:$0xf]
  %v7366 = vld [vmem:[%s7250 + $0x1cc] sm:$0xf]
  %v7367 = vld [vmem:[%s7250 + $0x1d0] sm:$0xf]
  %v7368 = vld [vmem:[%s7250 + $0x1d4] sm:$0xf]
  %v7369 = vld [vmem:[%s7250 + $0x1d8] sm:$0xf]
  %v7370 = vld [vmem:[%s7250 + $0x1dc] sm:$0xf]
  %v7371 = vld [vmem:[%s7250 + $0x1e0] sm:$0xf]
  %v7372 = vld [vmem:[%s7250 + $0x1e4] sm:$0xf]
  %v7373 = vld [vmem:[%s7250 + $0x1e8] sm:$0xf]
  %v7374 = vld [vmem:[%s7250 + $0x1ec] sm:$0xf]
  %v7375 = vld [vmem:[%s7250 + $0x1f0] sm:$0xf]
  %v7376 = vld [vmem:[%s7250 + $0x1f4] sm:$0xf]
  %v7377 = vld [vmem:[%s7250 + $0x1f8] sm:$0xf]
  %v7378 = vld [vmem:[%s7250 + $0x1fc] sm:$0xf]
  %v7379 = vld [vmem:[%s7250 + $0x200] sm:$0xf]
  %v7380 = vld [vmem:[%s7250 + $0x204] sm:$0xf]
  %v7381 = vld [vmem:[%s7250 + $0x208] sm:$0xf]
  %v7382 = vld [vmem:[%s7250 + $0x20c] sm:$0xf]
  %v7383 = vld [vmem:[%s7250 + $0x210] sm:$0xf]
  %v7384 = vld [vmem:[%s7250 + $0x214] sm:$0xf]
  %v7385 = vld [vmem:[%s7250 + $0x218] sm:$0xf]
  %v7386 = vld [vmem:[%s7250 + $0x21c] sm:$0xf]
  %v7387 = vld [vmem:[%s7250 + $0x220] sm:$0xf]
  %v7388 = vld [vmem:[%s7250 + $0x224] sm:$0xf]
  %v7389 = vld [vmem:[%s7250 + $0x228] sm:$0xf]
  %v7390 = vld [vmem:[%s7250 + $0x22c] sm:$0xf]
  %v7391 = vld [vmem:[%s7250 + $0x230] sm:$0xf]
  %v7392 = vld [vmem:[%s7250 + $0x234] sm:$0xf]
  %v7393 = vld [vmem:[%s7250 + $0x238] sm:$0xf]
  %v7394 = vld [vmem:[%s7250 + $0x23c] sm:$0xf]
  %v7395 = vld [vmem:[%s7250 + $0x240] sm:$0xf]
  %v7396 = vld [vmem:[%s7250 + $0x244] sm:$0xf]
  %v7397 = vld [vmem:[%s7250 + $0x248] sm:$0xf]
  %v7398 = vld [vmem:[%s7250 + $0x24c] sm:$0xf]
  %v7399 = vld [vmem:[%s7250 + $0x250] sm:$0xf]
  %v7400 = vld [vmem:[%s7250 + $0x254] sm:$0xf]
  %v7401 = vld [vmem:[%s7250 + $0x258] sm:$0xf]
  %v7402 = vld [vmem:[%s7250 + $0x25c] sm:$0xf]
  %v7403 = vld [vmem:[%s7250 + $0x260] sm:$0xf]
  %v7404 = vld [vmem:[%s7250 + $0x264] sm:$0xf]
  %v7405 = vld [vmem:[%s7250 + $0x268] sm:$0xf]
  %v7406 = vld [vmem:[%s7250 + $0x26c] sm:$0xf]
  %v7407 = vld [vmem:[%s7250 + $0x270] sm:$0xf]
  %v7408 = vld [vmem:[%s7250 + $0x274] sm:$0xf]
  %v7409 = vld [vmem:[%s7250 + $0x278] sm:$0xf]
  %v7410 = vld [vmem:[%s7250 + $0x27c] sm:$0xf]
  %v7411 = vld [vmem:[%s7250 + $0x280] sm:$0xf]
  %v7412 = vld [vmem:[%s7250 + $0x284] sm:$0xf]
  %v7413 = vld [vmem:[%s7250 + $0x288] sm:$0xf]
  %v7414 = vld [vmem:[%s7250 + $0x28c] sm:$0xf]
  %v7415 = vld [vmem:[%s7250 + $0x290] sm:$0xf]
  %v7416 = vld [vmem:[%s7250 + $0x294] sm:$0xf]
  %v7417 = vld [vmem:[%s7250 + $0x298] sm:$0xf]
  %v7418 = vld [vmem:[%s7250 + $0x29c] sm:$0xf]
  %v7419 = vld [vmem:[%s7250 + $0x2a0] sm:$0xf]
  %v7420 = vld [vmem:[%s7250 + $0x2a4] sm:$0xf]
  %v7421 = vld [vmem:[%s7250 + $0x2a8] sm:$0xf]
  %v7422 = vld [vmem:[%s7250 + $0x2ac] sm:$0xf]
  %v7423 = vld [vmem:[%s7250 + $0x2b0] sm:$0xf]
  %v7424 = vld [vmem:[%s7250 + $0x2b4] sm:$0xf]
  %v7425 = vld [vmem:[%s7250 + $0x2b8] sm:$0xf]
  %v7426 = vld [vmem:[%s7250 + $0x2bc] sm:$0xf]
  %v7427 = vld [vmem:[%s7250 + $0x2c0] sm:$0xf]
  %v7428 = vld [vmem:[%s7250 + $0x2c4] sm:$0xf]
  %v7429 = vld [vmem:[%s7250 + $0x2c8] sm:$0xf]
  %v7430 = vld [vmem:[%s7250 + $0x2cc] sm:$0xf]
  %v7431 = vld [vmem:[%s7250 + $0x2d0] sm:$0xf]
  %v7432 = vld [vmem:[%s7250 + $0x2d4] sm:$0xf]
  %v7433 = vld [vmem:[%s7250 + $0x2d8] sm:$0xf]
  %v7434 = vld [vmem:[%s7250 + $0x2dc] sm:$0xf]
  %v7435 = vld [vmem:[%s7250 + $0x2e0] sm:$0xf]
  %v7436 = vld [vmem:[%s7250 + $0x2e4] sm:$0xf]
  %v7437 = vld [vmem:[%s7250 + $0x2e8] sm:$0xf]
  %v7438 = vld [vmem:[%s7250 + $0x2ec] sm:$0xf]
  %v7439 = vld [vmem:[%s7250 + $0x2f0] sm:$0xf]
  %v7440 = vld [vmem:[%s7250 + $0x2f4] sm:$0xf]
  %v7441 = vld [vmem:[%s7250 + $0x2f8] sm:$0xf]
  %v7442 = vld [vmem:[%s7250 + $0x2fc] sm:$0xf]
  %v7443 = vld [vmem:[%s7250 + $0x300] sm:$0xf]
  %v7444 = vld [vmem:[%s7250 + $0x304] sm:$0xf]
  %v7445 = vld [vmem:[%s7250 + $0x308] sm:$0xf]
  %v7446 = vld [vmem:[%s7250 + $0x30c] sm:$0xf]
  %v7447 = vld [vmem:[%s7250 + $0x310] sm:$0xf]
  %v7448 = vld [vmem:[%s7250 + $0x314] sm:$0xf]
  %v7449 = vld [vmem:[%s7250 + $0x318] sm:$0xf]
  %v7450 = vld [vmem:[%s7250 + $0x31c] sm:$0xf]
  %v7451 = vld [vmem:[%s7250 + $0x320] sm:$0xf]
  %v7452 = vld [vmem:[%s7250 + $0x324] sm:$0xf]
  %v7453 = vld [vmem:[%s7250 + $0x328] sm:$0xf]
  %v7454 = vld [vmem:[%s7250 + $0x32c] sm:$0xf]
  %v7455 = vld [vmem:[%s7250 + $0x330] sm:$0xf]
  %v7456 = vld [vmem:[%s7250 + $0x334] sm:$0xf]
  %v7457 = vld [vmem:[%s7250 + $0x338] sm:$0xf]
  %v7458 = vld [vmem:[%s7250 + $0x33c] sm:$0xf]
  %v7459 = vld [vmem:[%s7250 + $0x340] sm:$0xf]
  %v7460 = vld [vmem:[%s7250 + $0x344] sm:$0xf]
  %v7461 = vld [vmem:[%s7250 + $0x348] sm:$0xf]
  %v7462 = vld [vmem:[%s7250 + $0x34c] sm:$0xf]
  %v7463 = vld [vmem:[%s7250 + $0x350] sm:$0xf]
  %v7464 = vld [vmem:[%s7250 + $0x354] sm:$0xf]
  %v7465 = vld [vmem:[%s7250 + $0x358] sm:$0xf]
  %v7466 = vld [vmem:[%s7250 + $0x35c] sm:$0xf]
  %v7467 = vld [vmem:[%s7250 + $0x360] sm:$0xf]
  %v7468 = vld [vmem:[%s7250 + $0x364] sm:$0xf]
  %v7469 = vld [vmem:[%s7250 + $0x368] sm:$0xf]
  %v7470 = vld [vmem:[%s7250 + $0x36c] sm:$0xf]
  %v7471 = vld [vmem:[%s7250 + $0x370] sm:$0xf]
  %v7472 = vld [vmem:[%s7250 + $0x374] sm:$0xf]
  %v7473 = vld [vmem:[%s7250 + $0x378] sm:$0xf]
  %v7474 = vld [vmem:[%s7250 + $0x37c] sm:$0xf]
  %v7475 = vld [vmem:[%s7250 + $0x380] sm:$0xf]
  %v7476 = vld [vmem:[%s7250 + $0x384] sm:$0xf]
  %v7477 = vld [vmem:[%s7250 + $0x388] sm:$0xf]
  %v7478 = vld [vmem:[%s7250 + $0x38c] sm:$0xf]
  %v7479 = vld [vmem:[%s7250 + $0x390] sm:$0xf]
  %v7480 = vld [vmem:[%s7250 + $0x394] sm:$0xf]
  %v7481 = vld [vmem:[%s7250 + $0x398] sm:$0xf]
  %v7482 = vld [vmem:[%s7250 + $0x39c] sm:$0xf]
  %v7483 = vld [vmem:[%s7250 + $0x3a0] sm:$0xf]
  %v7484 = vld [vmem:[%s7250 + $0x3a4] sm:$0xf]
  %v7485 = vld [vmem:[%s7250 + $0x3a8] sm:$0xf]
  %v7486 = vld [vmem:[%s7250 + $0x3ac] sm:$0xf]
  %v7487 = vld [vmem:[%s7250 + $0x3b0] sm:$0xf]
  %v7488 = vld [vmem:[%s7250 + $0x3b4] sm:$0xf]
  %v7489 = vld [vmem:[%s7250 + $0x3b8] sm:$0xf]
  %v7490 = vld [vmem:[%s7250 + $0x3bc] sm:$0xf]
  %v7491 = vld [vmem:[%s7250 + $0x3c0] sm:$0xf]
  %v7492 = vld [vmem:[%s7250 + $0x3c4] sm:$0xf]
  %v7493 = vld [vmem:[%s7250 + $0x3c8] sm:$0xf]
  %v7494 = vld [vmem:[%s7250 + $0x3cc] sm:$0xf]
  %v7495 = vld [vmem:[%s7250 + $0x3d0] sm:$0xf]
  %v7496 = vld [vmem:[%s7250 + $0x3d4] sm:$0xf]
  %v7497 = vld [vmem:[%s7250 + $0x3d8] sm:$0xf]
  %v7498 = vld [vmem:[%s7250 + $0x3dc] sm:$0xf]
  %v7499 = vld [vmem:[%s7250 + $0x3e0] sm:$0xf]
  %v7500 = vld [vmem:[%s7250 + $0x3e4] sm:$0xf]
  %v7501 = vld [vmem:[%s7250 + $0x3e8] sm:$0xf]
  %v7502 = vld [vmem:[%s7250 + $0x3ec] sm:$0xf]
  %v7503 = vld [vmem:[%s7250 + $0x3f0] sm:$0xf]
  %v7504 = vld [vmem:[%s7250 + $0x3f4] sm:$0xf]
  %v7505 = vld [vmem:[%s7250 + $0x3f8] sm:$0xf]
  %v7506 = vld [vmem:[%s7250 + $0x3fc] sm:$0xf]
  %s7507 = scalar_lea.vmem %s10, 1
  %v7508 = vld [vmem:[%s7507] sm:$0x1]
  %v7510 = vlaneseq
  %v7511 = vshrl.u32 %v7510, 7
  %v7512 = vsub.s32 0, %v7511
  %v7513 = vrot.slane %v7508, %v7512
  %v7771 = vunpack.c.l.b16 %v7251
  %v7772 = vunpack.c.l.b16 %v7252
  %v7773 = vunpack.c.l.b16 %v7253
  %v7774 = vunpack.c.l.b16 %v7254
  %v7775 = vunpack.c.l.b16 %v7255
  %v7776 = vunpack.c.l.b16 %v7256
  %v7777 = vunpack.c.l.b16 %v7257
  %v7778 = vunpack.c.l.b16 %v7258
  %v7779 = vunpack.c.l.b16 %v7259
  %v7780 = vunpack.c.l.b16 %v7260
  %v7781 = vunpack.c.l.b16 %v7261
  %v7782 = vunpack.c.l.b16 %v7262
  %v7783 = vunpack.c.l.b16 %v7263
  %v7784 = vunpack.c.l.b16 %v7264
  %v7785 = vunpack.c.l.b16 %v7265
  %v7786 = vunpack.c.l.b16 %v7266
  %v7787 = vunpack.c.l.b16 %v7267
  %v7788 = vunpack.c.l.b16 %v7268
  %v7789 = vunpack.c.l.b16 %v7269
  %v7790 = vunpack.c.l.b16 %v7270
  %v7791 = vunpack.c.l.b16 %v7271
  %v7792 = vunpack.c.l.b16 %v7272
  %v7793 = vunpack.c.l.b16 %v7273
  %v7794 = vunpack.c.l.b16 %v7274
  %v7795 = vunpack.c.l.b16 %v7275
  %v7796 = vunpack.c.l.b16 %v7276
  %v7797 = vunpack.c.l.b16 %v7277
  %v7798 = vunpack.c.l.b16 %v7278
  %v7799 = vunpack.c.l.b16 %v7279
  %v7800 = vunpack.c.l.b16 %v7280
  %v7801 = vunpack.c.l.b16 %v7281
  %v7802 = vunpack.c.l.b16 %v7282
  %v7803 = vunpack.c.l.b16 %v7283
  %v7804 = vunpack.c.l.b16 %v7284
  %v7805 = vunpack.c.l.b16 %v7285
  %v7806 = vunpack.c.l.b16 %v7286
  %v7807 = vunpack.c.l.b16 %v7287
  %v7808 = vunpack.c.l.b16 %v7288
  %v7809 = vunpack.c.l.b16 %v7289
  %v7810 = vunpack.c.l.b16 %v7290
  %v7811 = vunpack.c.l.b16 %v7291
  %v7812 = vunpack.c.l.b16 %v7292
  %v7813 = vunpack.c.l.b16 %v7293
  %v7814 = vunpack.c.l.b16 %v7294
  %v7815 = vunpack.c.l.b16 %v7295
  %v7816 = vunpack.c.l.b16 %v7296
  %v7817 = vunpack.c.l.b16 %v7297
  %v7818 = vunpack.c.l.b16 %v7298
  %v7819 = vunpack.c.l.b16 %v7299
  %v7820 = vunpack.c.l.b16 %v7300
  %v7821 = vunpack.c.l.b16 %v7301
  %v7822 = vunpack.c.l.b16 %v7302
  %v7823 = vunpack.c.l.b16 %v7303
  %v7824 = vunpack.c.l.b16 %v7304
  %v7825 = vunpack.c.l.b16 %v7305
  %v7826 = vunpack.c.l.b16 %v7306
  %v7827 = vunpack.c.l.b16 %v7307
  %v7828 = vunpack.c.l.b16 %v7308
  %v7829 = vunpack.c.l.b16 %v7309
  %v7830 = vunpack.c.l.b16 %v7310
  %v7831 = vunpack.c.l.b16 %v7311
  %v7832 = vunpack.c.l.b16 %v7312
  %v7833 = vunpack.c.l.b16 %v7313
  %v7834 = vunpack.c.l.b16 %v7314
  %v7835 = vunpack.c.l.b16 %v7315
  %v7836 = vunpack.c.l.b16 %v7316
  %v7837 = vunpack.c.l.b16 %v7317
  %v7838 = vunpack.c.l.b16 %v7318
  %v7839 = vunpack.c.l.b16 %v7319
  %v7840 = vunpack.c.l.b16 %v7320
  %v7841 = vunpack.c.l.b16 %v7321
  %v7842 = vunpack.c.l.b16 %v7322
  %v7843 = vunpack.c.l.b16 %v7323
  %v7844 = vunpack.c.l.b16 %v7324
  %v7845 = vunpack.c.l.b16 %v7325
  %v7846 = vunpack.c.l.b16 %v7326
  %v7847 = vunpack.c.l.b16 %v7327
  %v7848 = vunpack.c.l.b16 %v7328
  %v7849 = vunpack.c.l.b16 %v7329
  %v7850 = vunpack.c.l.b16 %v7330
  %v7851 = vunpack.c.l.b16 %v7331
  %v7852 = vunpack.c.l.b16 %v7332
  %v7853 = vunpack.c.l.b16 %v7333
  %v7854 = vunpack.c.l.b16 %v7334
  %v7855 = vunpack.c.l.b16 %v7335
  %v7856 = vunpack.c.l.b16 %v7336
  %v7857 = vunpack.c.l.b16 %v7337
  %v7858 = vunpack.c.l.b16 %v7338
  %v7859 = vunpack.c.l.b16 %v7339
  %v7860 = vunpack.c.l.b16 %v7340
  %v7861 = vunpack.c.l.b16 %v7341
  %v7862 = vunpack.c.l.b16 %v7342
  %v7863 = vunpack.c.l.b16 %v7343
  %v7864 = vunpack.c.l.b16 %v7344
  %v7865 = vunpack.c.l.b16 %v7345
  %v7866 = vunpack.c.l.b16 %v7346
  %v7867 = vunpack.c.l.b16 %v7347
  %v7868 = vunpack.c.l.b16 %v7348
  %v7869 = vunpack.c.l.b16 %v7349
  %v7870 = vunpack.c.l.b16 %v7350
  %v7871 = vunpack.c.l.b16 %v7351
  %v7872 = vunpack.c.l.b16 %v7352
  %v7873 = vunpack.c.l.b16 %v7353
  %v7874 = vunpack.c.l.b16 %v7354
  %v7875 = vunpack.c.l.b16 %v7355
  %v7876 = vunpack.c.l.b16 %v7356
  %v7877 = vunpack.c.l.b16 %v7357
  %v7878 = vunpack.c.l.b16 %v7358
  %v7879 = vunpack.c.l.b16 %v7359
  %v7880 = vunpack.c.l.b16 %v7360
  %v7881 = vunpack.c.l.b16 %v7361
  %v7882 = vunpack.c.l.b16 %v7362
  %v7883 = vunpack.c.l.b16 %v7363
  %v7884 = vunpack.c.l.b16 %v7364
  %v7885 = vunpack.c.l.b16 %v7365
  %v7886 = vunpack.c.l.b16 %v7366
  %v7887 = vunpack.c.l.b16 %v7367
  %v7888 = vunpack.c.l.b16 %v7368
  %v7889 = vunpack.c.l.b16 %v7369
  %v7890 = vunpack.c.l.b16 %v7370
  %v7891 = vunpack.c.l.b16 %v7371
  %v7892 = vunpack.c.l.b16 %v7372
  %v7893 = vunpack.c.l.b16 %v7373
  %v7894 = vunpack.c.l.b16 %v7374
  %v7895 = vunpack.c.l.b16 %v7375
  %v7896 = vunpack.c.l.b16 %v7376
  %v7897 = vunpack.c.l.b16 %v7377
  %v7898 = vunpack.c.l.b16 %v7378
  %v7899 = vunpack.c.l.b16 %v7379
  %v7900 = vunpack.c.l.b16 %v7380
  %v7901 = vunpack.c.l.b16 %v7381
  %v7902 = vunpack.c.l.b16 %v7382
  %v7903 = vunpack.c.l.b16 %v7383
  %v7904 = vunpack.c.l.b16 %v7384
  %v7905 = vunpack.c.l.b16 %v7385
  %v7906 = vunpack.c.l.b16 %v7386
  %v7907 = vunpack.c.l.b16 %v7387
  %v7908 = vunpack.c.l.b16 %v7388
  %v7909 = vunpack.c.l.b16 %v7389
  %v7910 = vunpack.c.l.b16 %v7390
  %v7911 = vunpack.c.l.b16 %v7391
  %v7912 = vunpack.c.l.b16 %v7392
  %v7913 = vunpack.c.l.b16 %v7393
  %v7914 = vunpack.c.l.b16 %v7394
  %v7915 = vunpack.c.l.b16 %v7395
  %v7916 = vunpack.c.l.b16 %v7396
  %v7917 = vunpack.c.l.b16 %v7397
  %v7918 = vunpack.c.l.b16 %v7398
  %v7919 = vunpack.c.l.b16 %v7399
  %v7920 = vunpack.c.l.b16 %v7400
  %v7921 = vunpack.c.l.b16 %v7401
  %v7922 = vunpack.c.l.b16 %v7402
  %v7923 = vunpack.c.l.b16 %v7403
  %v7924 = vunpack.c.l.b16 %v7404
  %v7925 = vunpack.c.l.b16 %v7405
  %v7926 = vunpack.c.l.b16 %v7406
  %v7927 = vunpack.c.l.b16 %v7407
  %v7928 = vunpack.c.l.b16 %v7408
  %v7929 = vunpack.c.l.b16 %v7409
  %v7930 = vunpack.c.l.b16 %v7410
  %v7931 = vunpack.c.l.b16 %v7411
  %v7932 = vunpack.c.l.b16 %v7412
  %v7933 = vunpack.c.l.b16 %v7413
  %v7934 = vunpack.c.l.b16 %v7414
  %v7935 = vunpack.c.l.b16 %v7415
  %v7936 = vunpack.c.l.b16 %v7416
  %v7937 = vunpack.c.l.b16 %v7417
  %v7938 = vunpack.c.l.b16 %v7418
  %v7939 = vunpack.c.l.b16 %v7419
  %v7940 = vunpack.c.l.b16 %v7420
  %v7941 = vunpack.c.l.b16 %v7421
  %v7942 = vunpack.c.l.b16 %v7422
  %v7943 = vunpack.c.l.b16 %v7423
  %v7944 = vunpack.c.l.b16 %v7424
  %v7945 = vunpack.c.l.b16 %v7425
  %v7946 = vunpack.c.l.b16 %v7426
  %v7947 = vunpack.c.l.b16 %v7427
  %v7948 = vunpack.c.l.b16 %v7428
  %v7949 = vunpack.c.l.b16 %v7429
  %v7950 = vunpack.c.l.b16 %v7430
  %v7951 = vunpack.c.l.b16 %v7431
  %v7952 = vunpack.c.l.b16 %v7432
  %v7953 = vunpack.c.l.b16 %v7433
  %v7954 = vunpack.c.l.b16 %v7434
  %v7955 = vunpack.c.l.b16 %v7435
  %v7956 = vunpack.c.l.b16 %v7436
  %v7957 = vunpack.c.l.b16 %v7437
  %v7958 = vunpack.c.l.b16 %v7438
  %v7959 = vunpack.c.l.b16 %v7439
  %v7960 = vunpack.c.l.b16 %v7440
  %v7961 = vunpack.c.l.b16 %v7441
  %v7962 = vunpack.c.l.b16 %v7442
  %v7963 = vunpack.c.l.b16 %v7443
  %v7964 = vunpack.c.l.b16 %v7444
  %v7965 = vunpack.c.l.b16 %v7445
  %v7966 = vunpack.c.l.b16 %v7446
  %v7967 = vunpack.c.l.b16 %v7447
  %v7968 = vunpack.c.l.b16 %v7448
  %v7969 = vunpack.c.l.b16 %v7449
  %v7970 = vunpack.c.l.b16 %v7450
  %v7971 = vunpack.c.l.b16 %v7451
  %v7972 = vunpack.c.l.b16 %v7452
  %v7973 = vunpack.c.l.b16 %v7453
  %v7974 = vunpack.c.l.b16 %v7454
  %v7975 = vunpack.c.l.b16 %v7455
  %v7976 = vunpack.c.l.b16 %v7456
  %v7977 = vunpack.c.l.b16 %v7457
  %v7978 = vunpack.c.l.b16 %v7458
  %v7979 = vunpack.c.l.b16 %v7459
  %v7980 = vunpack.c.l.b16 %v7460
  %v7981 = vunpack.c.l.b16 %v7461
  %v7982 = vunpack.c.l.b16 %v7462
  %v7983 = vunpack.c.l.b16 %v7463
  %v7984 = vunpack.c.l.b16 %v7464
  %v7985 = vunpack.c.l.b16 %v7465
  %v7986 = vunpack.c.l.b16 %v7466
  %v7987 = vunpack.c.l.b16 %v7467
  %v7988 = vunpack.c.l.b16 %v7468
  %v7989 = vunpack.c.l.b16 %v7469
  %v7990 = vunpack.c.l.b16 %v7470
  %v7991 = vunpack.c.l.b16 %v7471
  %v7992 = vunpack.c.l.b16 %v7472
  %v7993 = vunpack.c.l.b16 %v7473
  %v7994 = vunpack.c.l.b16 %v7474
  %v7995 = vunpack.c.l.b16 %v7475
  %v7996 = vunpack.c.l.b16 %v7476
  %v7997 = vunpack.c.l.b16 %v7477
  %v7998 = vunpack.c.l.b16 %v7478
  %v7999 = vunpack.c.l.b16 %v7479
  %v8000 = vunpack.c.l.b16 %v7480
  %v8001 = vunpack.c.l.b16 %v7481
  %v8002 = vunpack.c.l.b16 %v7482
  %v8003 = vunpack.c.l.b16 %v7483
  %v8004 = vunpack.c.l.b16 %v7484
  %v8005 = vunpack.c.l.b16 %v7485
  %v8006 = vunpack.c.l.b16 %v7486
  %v8007 = vunpack.c.l.b16 %v7487
  %v8008 = vunpack.c.l.b16 %v7488
  %v8009 = vunpack.c.l.b16 %v7489
  %v8010 = vunpack.c.l.b16 %v7490
  %v8011 = vunpack.c.l.b16 %v7491
  %v8012 = vunpack.c.l.b16 %v7492
  %v8013 = vunpack.c.l.b16 %v7493
  %v8014 = vunpack.c.l.b16 %v7494
  %v8015 = vunpack.c.l.b16 %v7495
  %v8016 = vunpack.c.l.b16 %v7496
  %v8017 = vunpack.c.l.b16 %v7497
  %v8018 = vunpack.c.l.b16 %v7498
  %v8019 = vunpack.c.l.b16 %v7499
  %v8020 = vunpack.c.l.b16 %v7500
  %v8021 = vunpack.c.l.b16 %v7501
  %v8022 = vunpack.c.l.b16 %v7502
  %v8023 = vunpack.c.l.b16 %v7503
  %v8024 = vunpack.c.l.b16 %v7504
  %v8025 = vunpack.c.l.b16 %v7505
  %v8026 = vunpack.c.l.b16 %v7506
  %v8027 = vpack.c.b16 %v7772, %v7771
  %v8028 = vpack.c.b16 %v7774, %v7773
  %v8029 = vpack.c.b16 %v7776, %v7775
  %v8030 = vpack.c.b16 %v7778, %v7777
  %v8031 = vpack.c.b16 %v7780, %v7779
  %v8032 = vpack.c.b16 %v7782, %v7781
  %v8033 = vpack.c.b16 %v7784, %v7783
  %v8034 = vpack.c.b16 %v7786, %v7785
  %v8035 = vpack.c.b16 %v7788, %v7787
  %v8036 = vpack.c.b16 %v7790, %v7789
  %v8037 = vpack.c.b16 %v7792, %v7791
  %v8038 = vpack.c.b16 %v7794, %v7793
  %v8039 = vpack.c.b16 %v7796, %v7795
  %v8040 = vpack.c.b16 %v7798, %v7797
  %v8041 = vpack.c.b16 %v7800, %v7799
  %v8042 = vpack.c.b16 %v7802, %v7801
  %v8043 = vpack.c.b16 %v7804, %v7803
  %v8044 = vpack.c.b16 %v7806, %v7805
  %v8045 = vpack.c.b16 %v7808, %v7807
  %v8046 = vpack.c.b16 %v7810, %v7809
  %v8047 = vpack.c.b16 %v7812, %v7811
  %v8048 = vpack.c.b16 %v7814, %v7813
  %v8049 = vpack.c.b16 %v7816, %v7815
  %v8050 = vpack.c.b16 %v7818, %v7817
  %v8051 = vpack.c.b16 %v7820, %v7819
  %v8052 = vpack.c.b16 %v7822, %v7821
  %v8053 = vpack.c.b16 %v7824, %v7823
  %v8054 = vpack.c.b16 %v7826, %v7825
  %v8055 = vpack.c.b16 %v7828, %v7827
  %v8056 = vpack.c.b16 %v7830, %v7829
  %v8057 = vpack.c.b16 %v7832, %v7831
  %v8058 = vpack.c.b16 %v7834, %v7833
  %v8059 = vpack.c.b16 %v7836, %v7835
  %v8060 = vpack.c.b16 %v7838, %v7837
  %v8061 = vpack.c.b16 %v7840, %v7839
  %v8062 = vpack.c.b16 %v7842, %v7841
  %v8063 = vpack.c.b16 %v7844, %v7843
  %v8064 = vpack.c.b16 %v7846, %v7845
  %v8065 = vpack.c.b16 %v7848, %v7847
  %v8066 = vpack.c.b16 %v7850, %v7849
  %v8067 = vpack.c.b16 %v7852, %v7851
  %v8068 = vpack.c.b16 %v7854, %v7853
  %v8069 = vpack.c.b16 %v7856, %v7855
  %v8070 = vpack.c.b16 %v7858, %v7857
  %v8071 = vpack.c.b16 %v7860, %v7859
  %v8072 = vpack.c.b16 %v7862, %v7861
  %v8073 = vpack.c.b16 %v7864, %v7863
  %v8074 = vpack.c.b16 %v7866, %v7865
  %v8075 = vpack.c.b16 %v7868, %v7867
  %v8076 = vpack.c.b16 %v7870, %v7869
  %v8077 = vpack.c.b16 %v7872, %v7871
  %v8078 = vpack.c.b16 %v7874, %v7873
  %v8079 = vpack.c.b16 %v7876, %v7875
  %v8080 = vpack.c.b16 %v7878, %v7877
  %v8081 = vpack.c.b16 %v7880, %v7879
  %v8082 = vpack.c.b16 %v7882, %v7881
  %v8083 = vpack.c.b16 %v7884, %v7883
  %v8084 = vpack.c.b16 %v7886, %v7885
  %v8085 = vpack.c.b16 %v7888, %v7887
  %v8086 = vpack.c.b16 %v7890, %v7889
  %v8087 = vpack.c.b16 %v7892, %v7891
  %v8088 = vpack.c.b16 %v7894, %v7893
  %v8089 = vpack.c.b16 %v7896, %v7895
  %v8090 = vpack.c.b16 %v7898, %v7897
  %v8091 = vpack.c.b16 %v7900, %v7899
  %v8092 = vpack.c.b16 %v7902, %v7901
  %v8093 = vpack.c.b16 %v7904, %v7903
  %v8094 = vpack.c.b16 %v7906, %v7905
  %v8095 = vpack.c.b16 %v7908, %v7907
  %v8096 = vpack.c.b16 %v7910, %v7909
  %v8097 = vpack.c.b16 %v7912, %v7911
  %v8098 = vpack.c.b16 %v7914, %v7913
  %v8099 = vpack.c.b16 %v7916, %v7915
  %v8100 = vpack.c.b16 %v7918, %v7917
  %v8101 = vpack.c.b16 %v7920, %v7919
  %v8102 = vpack.c.b16 %v7922, %v7921
  %v8103 = vpack.c.b16 %v7924, %v7923
  %v8104 = vpack.c.b16 %v7926, %v7925
  %v8105 = vpack.c.b16 %v7928, %v7927
  %v8106 = vpack.c.b16 %v7930, %v7929
  %v8107 = vpack.c.b16 %v7932, %v7931
  %v8108 = vpack.c.b16 %v7934, %v7933
  %v8109 = vpack.c.b16 %v7936, %v7935
  %v8110 = vpack.c.b16 %v7938, %v7937
  %v8111 = vpack.c.b16 %v7940, %v7939
  %v8112 = vpack.c.b16 %v7942, %v7941
  %v8113 = vpack.c.b16 %v7944, %v7943
  %v8114 = vpack.c.b16 %v7946, %v7945
  %v8115 = vpack.c.b16 %v7948, %v7947
  %v8116 = vpack.c.b16 %v7950, %v7949
  %v8117 = vpack.c.b16 %v7952, %v7951
  %v8118 = vpack.c.b16 %v7954, %v7953
  %v8119 = vpack.c.b16 %v7956, %v7955
  %v8120 = vpack.c.b16 %v7958, %v7957
  %v8121 = vpack.c.b16 %v7960, %v7959
  %v8122 = vpack.c.b16 %v7962, %v7961
  %v8123 = vpack.c.b16 %v7964, %v7963
  %v8124 = vpack.c.b16 %v7966, %v7965
  %v8125 = vpack.c.b16 %v7968, %v7967
  %v8126 = vpack.c.b16 %v7970, %v7969
  %v8127 = vpack.c.b16 %v7972, %v7971
  %v8128 = vpack.c.b16 %v7974, %v7973
  %v8129 = vpack.c.b16 %v7976, %v7975
  %v8130 = vpack.c.b16 %v7978, %v7977
  %v8131 = vpack.c.b16 %v7980, %v7979
  %v8132 = vpack.c.b16 %v7982, %v7981
  %v8133 = vpack.c.b16 %v7984, %v7983
  %v8134 = vpack.c.b16 %v7986, %v7985
  %v8135 = vpack.c.b16 %v7988, %v7987
  %v8136 = vpack.c.b16 %v7990, %v7989
  %v8137 = vpack.c.b16 %v7992, %v7991
  %v8138 = vpack.c.b16 %v7994, %v7993
  %v8139 = vpack.c.b16 %v7996, %v7995
  %v8140 = vpack.c.b16 %v7998, %v7997
  %v8141 = vpack.c.b16 %v8000, %v7999
  %v8142 = vpack.c.b16 %v8002, %v8001
  %v8143 = vpack.c.b16 %v8004, %v8003
  %v8144 = vpack.c.b16 %v8006, %v8005
  %v8145 = vpack.c.b16 %v8008, %v8007
  %v8146 = vpack.c.b16 %v8010, %v8009
  %v8147 = vpack.c.b16 %v8012, %v8011
  %v8148 = vpack.c.b16 %v8014, %v8013
  %v8149 = vpack.c.b16 %v8016, %v8015
  %v8150 = vpack.c.b16 %v8018, %v8017
  %v8151 = vpack.c.b16 %v8020, %v8019
  %v8152 = vpack.c.b16 %v8022, %v8021
  %v8153 = vpack.c.b16 %v8024, %v8023
  %v8154 = vpack.c.b16 %v8026, %v8025
  %8283 = vmatprep.subr.bf16.mxu0 0
  %8284 = vmatpush1.bf16.msra.mxu0 %v8034
  %8285 = vmatprep.subr.bf16.mxu0 0
  %8286 = vmatpush1.bf16.msra.mxu0 %v8033
  %8287 = vmatprep.subr.bf16.mxu0 0
  %8288 = vmatpush1.bf16.msra.mxu0 %v8032
  %8289 = vmatprep.subr.bf16.mxu0 0
  %8290 = vmatpush1.bf16.msra.mxu0 %v8031
  %8291 = vmatprep.subr.bf16.mxu0 0
  %8292 = vmatpush1.bf16.msra.mxu0 %v8030
  %8293 = vmatprep.subr.bf16.mxu0 0
  %8294 = vmatpush1.bf16.msra.mxu0 %v8029
  %8295 = vmatprep.subr.bf16.mxu0 0
  %8296 = vmatpush1.bf16.msra.mxu0 %v8028
  %8297 = vmatprep.subr.bf16.mxu0 0
  %8298 = vmatpush1.bf16.msra.mxu0 %v8027
  %8299 = vmatprep.subr.bf16.mxu0 0
  %8300 = vmatpush2.bf16.msra.mxu0 %v8042
  %8301 = vmatprep.subr.bf16.mxu0 0
  %8302 = vmatpush2.bf16.msra.mxu0 %v8041
  %8303 = vmatprep.subr.bf16.mxu0 0
  %8304 = vmatpush2.bf16.msra.mxu0 %v8040
  %8305 = vmatprep.subr.bf16.mxu0 0
  %8306 = vmatpush2.bf16.msra.mxu0 %v8039
  %8307 = vmatprep.subr.bf16.mxu0 0
  %8308 = vmatpush2.bf16.msra.mxu0 %v8038
  %8309 = vmatprep.subr.bf16.mxu0 0
  %8310 = vmatpush2.bf16.msra.mxu0 %v8037
  %8311 = vmatprep.subr.bf16.mxu0 0
  %8312 = vmatpush2.bf16.msra.mxu0 %v8036
  %8313 = vmatprep.subr.bf16.mxu0 0
  %8314 = vmatpush2.bf16.msra.mxu0 %v8035
  %8315 = vmatprep.mubr.bf16.mxu0 %v7235
  %8316 = vmatmul.mubr.bf16.gmra.mxu0 %v7234
  %v8317 = vpop.f32.mrf.mxu0
  %v8318 = vadd.f32 %v7513, %v8317
  %v8319 = vpop.f32.mrf.mxu0
  %v8320 = vpop.f32.mrf.mxu0
  %v8321 = vadd.f32 %v7513, %v8320
  %v8322 = vpop.f32.mrf.mxu0
  %8323 = vdwg.mxu0
  %8324 = vmatprep.subr.bf16.mxu0 0
  %8325 = vmatpush1.bf16.msra.mxu0 %v8050
  %8326 = vmatprep.subr.bf16.mxu0 0
  %8327 = vmatpush1.bf16.msra.mxu0 %v8049
  %8328 = vmatprep.subr.bf16.mxu0 0
  %8329 = vmatpush1.bf16.msra.mxu0 %v8048
  %8330 = vmatprep.subr.bf16.mxu0 0
  %8331 = vmatpush1.bf16.msra.mxu0 %v8047
  %8332 = vmatprep.subr.bf16.mxu0 0
  %8333 = vmatpush1.bf16.msra.mxu0 %v8046
  %8334 = vmatprep.subr.bf16.mxu0 0
  %8335 = vmatpush1.bf16.msra.mxu0 %v8045
  %8336 = vmatprep.subr.bf16.mxu0 0
  %8337 = vmatpush1.bf16.msra.mxu0 %v8044
  %8338 = vmatprep.subr.bf16.mxu0 0
  %8339 = vmatpush1.bf16.msra.mxu0 %v8043
  %8340 = vmatprep.subr.bf16.mxu0 0
  %8341 = vmatpush2.bf16.msra.mxu0 %v8058
  %8342 = vmatprep.subr.bf16.mxu0 0
  %8343 = vmatpush2.bf16.msra.mxu0 %v8057
  %8344 = vmatprep.subr.bf16.mxu0 0
  %8345 = vmatpush2.bf16.msra.mxu0 %v8056
  %8346 = vmatprep.subr.bf16.mxu0 0
  %8347 = vmatpush2.bf16.msra.mxu0 %v8055
  %8348 = vmatprep.subr.bf16.mxu0 0
  %8349 = vmatpush2.bf16.msra.mxu0 %v8054
  %8350 = vmatprep.subr.bf16.mxu0 0
  %8351 = vmatpush2.bf16.msra.mxu0 %v8053
  %8352 = vmatprep.subr.bf16.mxu0 0
  %8353 = vmatpush2.bf16.msra.mxu0 %v8052
  %8354 = vmatprep.subr.bf16.mxu0 0
  %8355 = vmatpush2.bf16.msra.mxu0 %v8051
  %8356 = vmatprep.mubr.bf16.mxu0 %v7237
  %8357 = vmatmul.mubr.bf16.gmra.mxu0 %v7236
  %v8358 = vpop.f32.mrf.mxu0
  %v8359 = vadd.f32 %v8318, %v8358
  %v8360 = vpop.f32.mrf.mxu0
  %v8361 = vpop.f32.mrf.mxu0
  %v8362 = vadd.f32 %v8321, %v8361
  %v8363 = vpop.f32.mrf.mxu0
  %8364 = vdwg.mxu0
  %8365 = vmatprep.subr.bf16.mxu0 0
  %8366 = vmatpush1.bf16.msra.mxu0 %v8066
  %8367 = vmatprep.subr.bf16.mxu0 0
  %8368 = vmatpush1.bf16.msra.mxu0 %v8065
  %8369 = vmatprep.subr.bf16.mxu0 0
  %8370 = vmatpush1.bf16.msra.mxu0 %v8064
  %8371 = vmatprep.subr.bf16.mxu0 0
  %8372 = vmatpush1.bf16.msra.mxu0 %v8063
  %8373 = vmatprep.subr.bf16.mxu0 0
  %8374 = vmatpush1.bf16.msra.mxu0 %v8062
  %8375 = vmatprep.subr.bf16.mxu0 0
  %8376 = vmatpush1.bf16.msra.mxu0 %v8061
  %8377 = vmatprep.subr.bf16.mxu0 0
  %8378 = vmatpush1.bf16.msra.mxu0 %v8060
  %8379 = vmatprep.subr.bf16.mxu0 0
  %8380 = vmatpush1.bf16.msra.mxu0 %v8059
  %8381 = vmatprep.subr.bf16.mxu0 0
  %8382 = vmatpush2.bf16.msra.mxu0 %v8074
  %8383 = vmatprep.subr.bf16.mxu0 0
  %8384 = vmatpush2.bf16.msra.mxu0 %v8073
  %8385 = vmatprep.subr.bf16.mxu0 0
  %8386 = vmatpush2.bf16.msra.mxu0 %v8072
  %8387 = vmatprep.subr.bf16.mxu0 0
  %8388 = vmatpush2.bf16.msra.mxu0 %v8071
  %8389 = vmatprep.subr.bf16.mxu0 0
  %8390 = vmatpush2.bf16.msra.mxu0 %v8070
  %8391 = vmatprep.subr.bf16.mxu0 0
  %8392 = vmatpush2.bf16.msra.mxu0 %v8069
  %8393 = vmatprep.subr.bf16.mxu0 0
  %8394 = vmatpush2.bf16.msra.mxu0 %v8068
  %8395 = vmatprep.subr.bf16.mxu0 0
  %8396 = vmatpush2.bf16.msra.mxu0 %v8067
  %8397 = vmatprep.mubr.bf16.mxu0 %v7239
  %8398 = vmatmul.mubr.bf16.gmra.mxu0 %v7238
  %v8399 = vpop.f32.mrf.mxu0
  %v8400 = vadd.f32 %v8359, %v8399
  %v8401 = vpop.f32.mrf.mxu0
  %v8402 = vpop.f32.mrf.mxu0
  %v8403 = vadd.f32 %v8362, %v8402
  %v8404 = vpop.f32.mrf.mxu0
  %8405 = vdwg.mxu0
  %8406 = vmatprep.subr.bf16.mxu0 0
  %8407 = vmatpush1.bf16.msra.mxu0 %v8082
  %8408 = vmatprep.subr.bf16.mxu0 0
  %8409 = vmatpush1.bf16.msra.mxu0 %v8081
  %8410 = vmatprep.subr.bf16.mxu0 0
  %8411 = vmatpush1.bf16.msra.mxu0 %v8080
  %8412 = vmatprep.subr.bf16.mxu0 0
  %8413 = vmatpush1.bf16.msra.mxu0 %v8079
  %8414 = vmatprep.subr.bf16.mxu0 0
  %8415 = vmatpush1.bf16.msra.mxu0 %v8078
  %8416 = vmatprep.subr.bf16.mxu0 0
  %8417 = vmatpush1.bf16.msra.mxu0 %v8077
  %8418 = vmatprep.subr.bf16.mxu0 0
  %8419 = vmatpush1.bf16.msra.mxu0 %v8076
  %8420 = vmatprep.subr.bf16.mxu0 0
  %8421 = vmatpush1.bf16.msra.mxu0 %v8075
  %8422 = vmatprep.subr.bf16.mxu0 0
  %8423 = vmatpush2.bf16.msra.mxu0 %v8090
  %8424 = vmatprep.subr.bf16.mxu0 0
  %8425 = vmatpush2.bf16.msra.mxu0 %v8089
  %8426 = vmatprep.subr.bf16.mxu0 0
  %8427 = vmatpush2.bf16.msra.mxu0 %v8088
  %8428 = vmatprep.subr.bf16.mxu0 0
  %8429 = vmatpush2.bf16.msra.mxu0 %v8087
  %8430 = vmatprep.subr.bf16.mxu0 0
  %8431 = vmatpush2.bf16.msra.mxu0 %v8086
  %8432 = vmatprep.subr.bf16.mxu0 0
  %8433 = vmatpush2.bf16.msra.mxu0 %v8085
  %8434 = vmatprep.subr.bf16.mxu0 0
  %8435 = vmatpush2.bf16.msra.mxu0 %v8084
  %8436 = vmatprep.subr.bf16.mxu0 0
  %8437 = vmatpush2.bf16.msra.mxu0 %v8083
  %8438 = vmatprep.mubr.bf16.mxu0 %v7241
  %8439 = vmatmul.mubr.bf16.gmra.mxu0 %v7240
  %v8440 = vpop.f32.mrf.mxu0
  %v8441 = vadd.f32 %v8400, %v8440
  %v8442 = vpop.f32.mrf.mxu0
  %v8443 = vpop.f32.mrf.mxu0
  %v8444 = vadd.f32 %v8403, %v8443
  %v8445 = vpop.f32.mrf.mxu0
  %8446 = vdwg.mxu0
  %8447 = vmatprep.subr.bf16.mxu0 0
  %8448 = vmatpush1.bf16.msra.mxu0 %v8098
  %8449 = vmatprep.subr.bf16.mxu0 0
  %8450 = vmatpush1.bf16.msra.mxu0 %v8097
  %8451 = vmatprep.subr.bf16.mxu0 0
  %8452 = vmatpush1.bf16.msra.mxu0 %v8096
  %8453 = vmatprep.subr.bf16.mxu0 0
  %8454 = vmatpush1.bf16.msra.mxu0 %v8095
  %8455 = vmatprep.subr.bf16.mxu0 0
  %8456 = vmatpush1.bf16.msra.mxu0 %v8094
  %8457 = vmatprep.subr.bf16.mxu0 0
  %8458 = vmatpush1.bf16.msra.mxu0 %v8093
  %8459 = vmatprep.subr.bf16.mxu0 0
  %8460 = vmatpush1.bf16.msra.mxu0 %v8092
  %8461 = vmatprep.subr.bf16.mxu0 0
  %8462 = vmatpush1.bf16.msra.mxu0 %v8091
  %8463 = vmatprep.subr.bf16.mxu0 0
  %8464 = vmatpush2.bf16.msra.mxu0 %v8106
  %8465 = vmatprep.subr.bf16.mxu0 0
  %8466 = vmatpush2.bf16.msra.mxu0 %v8105
  %8467 = vmatprep.subr.bf16.mxu0 0
  %8468 = vmatpush2.bf16.msra.mxu0 %v8104
  %8469 = vmatprep.subr.bf16.mxu0 0
  %8470 = vmatpush2.bf16.msra.mxu0 %v8103
  %8471 = vmatprep.subr.bf16.mxu0 0
  %8472 = vmatpush2.bf16.msra.mxu0 %v8102
  %8473 = vmatprep.subr.bf16.mxu0 0
  %8474 = vmatpush2.bf16.msra.mxu0 %v8101
  %8475 = vmatprep.subr.bf16.mxu0 0
  %8476 = vmatpush2.bf16.msra.mxu0 %v8100
  %8477 = vmatprep.subr.bf16.mxu0 0
  %8478 = vmatpush2.bf16.msra.mxu0 %v8099
  %8479 = vmatprep.mubr.bf16.mxu0 %v7243
  %8480 = vmatmul.mubr.bf16.gmra.mxu0 %v7242
  %v8481 = vpop.f32.mrf.mxu0
  %v8482 = vadd.f32 %v8441, %v8481
  %v8483 = vpop.f32.mrf.mxu0
  %v8484 = vpop.f32.mrf.mxu0
  %v8485 = vadd.f32 %v8444, %v8484
  %v8486 = vpop.f32.mrf.mxu0
  %8487 = vdwg.mxu0
  %8488 = vmatprep.subr.bf16.mxu0 0
  %8489 = vmatpush1.bf16.msra.mxu0 %v8114
  %8490 = vmatprep.subr.bf16.mxu0 0
  %8491 = vmatpush1.bf16.msra.mxu0 %v8113
  %8492 = vmatprep.subr.bf16.mxu0 0
  %8493 = vmatpush1.bf16.msra.mxu0 %v8112
  %8494 = vmatprep.subr.bf16.mxu0 0
  %8495 = vmatpush1.bf16.msra.mxu0 %v8111
  %8496 = vmatprep.subr.bf16.mxu0 0
  %8497 = vmatpush1.bf16.msra.mxu0 %v8110
  %8498 = vmatprep.subr.bf16.mxu0 0
  %8499 = vmatpush1.bf16.msra.mxu0 %v8109
  %8500 = vmatprep.subr.bf16.mxu0 0
  %8501 = vmatpush1.bf16.msra.mxu0 %v8108
  %8502 = vmatprep.subr.bf16.mxu0 0
  %8503 = vmatpush1.bf16.msra.mxu0 %v8107
  %8504 = vmatprep.subr.bf16.mxu0 0
  %8505 = vmatpush2.bf16.msra.mxu0 %v8122
  %8506 = vmatprep.subr.bf16.mxu0 0
  %8507 = vmatpush2.bf16.msra.mxu0 %v8121
  %8508 = vmatprep.subr.bf16.mxu0 0
  %8509 = vmatpush2.bf16.msra.mxu0 %v8120
  %8510 = vmatprep.subr.bf16.mxu0 0
  %8511 = vmatpush2.bf16.msra.mxu0 %v8119
  %8512 = vmatprep.subr.bf16.mxu0 0
  %8513 = vmatpush2.bf16.msra.mxu0 %v8118
  %8514 = vmatprep.subr.bf16.mxu0 0
  %8515 = vmatpush2.bf16.msra.mxu0 %v8117
  %8516 = vmatprep.subr.bf16.mxu0 0
  %8517 = vmatpush2.bf16.msra.mxu0 %v8116
  %8518 = vmatprep.subr.bf16.mxu0 0
  %8519 = vmatpush2.bf16.msra.mxu0 %v8115
  %8520 = vmatprep.mubr.bf16.mxu0 %v7245
  %8521 = vmatmul.mubr.bf16.gmra.mxu0 %v7244
  %v8522 = vpop.f32.mrf.mxu0
  %v8523 = vadd.f32 %v8482, %v8522
  %v8524 = vpop.f32.mrf.mxu0
  %v8525 = vpop.f32.mrf.mxu0
  %v8526 = vadd.f32 %v8485, %v8525
  %v8527 = vpop.f32.mrf.mxu0
  %8528 = vdwg.mxu0
  %8529 = vmatprep.subr.bf16.mxu0 0
  %8530 = vmatpush1.bf16.msra.mxu0 %v8130
  %8531 = vmatprep.subr.bf16.mxu0 0
  %8532 = vmatpush1.bf16.msra.mxu0 %v8129
  %8533 = vmatprep.subr.bf16.mxu0 0
  %8534 = vmatpush1.bf16.msra.mxu0 %v8128
  %8535 = vmatprep.subr.bf16.mxu0 0
  %8536 = vmatpush1.bf16.msra.mxu0 %v8127
  %8537 = vmatprep.subr.bf16.mxu0 0
  %8538 = vmatpush1.bf16.msra.mxu0 %v8126
  %8539 = vmatprep.subr.bf16.mxu0 0
  %8540 = vmatpush1.bf16.msra.mxu0 %v8125
  %8541 = vmatprep.subr.bf16.mxu0 0
  %8542 = vmatpush1.bf16.msra.mxu0 %v8124
  %8543 = vmatprep.subr.bf16.mxu0 0
  %8544 = vmatpush1.bf16.msra.mxu0 %v8123
  %8545 = vmatprep.subr.bf16.mxu0 0
  %8546 = vmatpush2.bf16.msra.mxu0 %v8138
  %8547 = vmatprep.subr.bf16.mxu0 0
  %8548 = vmatpush2.bf16.msra.mxu0 %v8137
  %8549 = vmatprep.subr.bf16.mxu0 0
  %8550 = vmatpush2.bf16.msra.mxu0 %v8136
  %8551 = vmatprep.subr.bf16.mxu0 0
  %8552 = vmatpush2.bf16.msra.mxu0 %v8135
  %8553 = vmatprep.subr.bf16.mxu0 0
  %8554 = vmatpush2.bf16.msra.mxu0 %v8134
  %8555 = vmatprep.subr.bf16.mxu0 0
  %8556 = vmatpush2.bf16.msra.mxu0 %v8133
  %8557 = vmatprep.subr.bf16.mxu0 0
  %8558 = vmatpush2.bf16.msra.mxu0 %v8132
  %8559 = vmatprep.subr.bf16.mxu0 0
  %8560 = vmatpush2.bf16.msra.mxu0 %v8131
  %8561 = vmatprep.mubr.bf16.mxu0 %v7247
  %8562 = vmatmul.mubr.bf16.gmra.mxu0 %v7246
  %v8563 = vpop.f32.mrf.mxu0
  %v8564 = vadd.f32 %v8523, %v8563
  %v8565 = vpop.f32.mrf.mxu0
  %v8566 = vpop.f32.mrf.mxu0
  %v8567 = vadd.f32 %v8526, %v8566
  %v8568 = vpop.f32.mrf.mxu0
  %8569 = vdwg.mxu0
  %8570 = vmatprep.subr.bf16.mxu0 0
  %8571 = vmatpush1.bf16.msra.mxu0 %v8146
  %8572 = vmatprep.subr.bf16.mxu0 0
  %8573 = vmatpush1.bf16.msra.mxu0 %v8145
  %8574 = vmatprep.subr.bf16.mxu0 0
  %8575 = vmatpush1.bf16.msra.mxu0 %v8144
  %8576 = vmatprep.subr.bf16.mxu0 0
  %8577 = vmatpush1.bf16.msra.mxu0 %v8143
  %8578 = vmatprep.subr.bf16.mxu0 0
  %8579 = vmatpush1.bf16.msra.mxu0 %v8142
  %8580 = vmatprep.subr.bf16.mxu0 0
  %8581 = vmatpush1.bf16.msra.mxu0 %v8141
  %8582 = vmatprep.subr.bf16.mxu0 0
  %8583 = vmatpush1.bf16.msra.mxu0 %v8140
  %8584 = vmatprep.subr.bf16.mxu0 0
  %8585 = vmatpush1.bf16.msra.mxu0 %v8139
  %8586 = vmatprep.subr.bf16.mxu0 0
  %8587 = vmatpush2.bf16.msra.mxu0 %v8154
  %8588 = vmatprep.subr.bf16.mxu0 0
  %8589 = vmatpush2.bf16.msra.mxu0 %v8153
  %8590 = vmatprep.subr.bf16.mxu0 0
  %8591 = vmatpush2.bf16.msra.mxu0 %v8152
  %8592 = vmatprep.subr.bf16.mxu0 0
  %8593 = vmatpush2.bf16.msra.mxu0 %v8151
  %8594 = vmatprep.subr.bf16.mxu0 0
  %8595 = vmatpush2.bf16.msra.mxu0 %v8150
  %8596 = vmatprep.subr.bf16.mxu0 0
  %8597 = vmatpush2.bf16.msra.mxu0 %v8149
  %8598 = vmatprep.subr.bf16.mxu0 0
  %8599 = vmatpush2.bf16.msra.mxu0 %v8148
  %8600 = vmatprep.subr.bf16.mxu0 0
  %8601 = vmatpush2.bf16.msra.mxu0 %v8147
  %8602 = vmatprep.mubr.bf16.mxu0 %v7249
  %8603 = vmatmul.mubr.bf16.gmra.mxu0 %v7248
  %v8604 = vpop.f32.mrf.mxu0
  %v8605 = vadd.f32 %v8564, %v8604
  %v8606 = vpop.f32.mrf.mxu0
  %v8607 = vpop.f32.mrf.mxu0
  %v8608 = vadd.f32 %v8567, %v8607
  %v8609 = vpop.f32.mrf.mxu0
  %8610 = vdwg.mxu0
  %v8611 = vadd.f32 %v6574, %v8605
  %v8612 = vadd.f32 %v6575, %v8608
  %s8613 = scalar_lea.vmem %s11, 1
  %v8614 = vld [vmem:[%s8613] sm:$0x1]
  %s8615 = scalar_lea.vmem %s12, 1
  %v8616 = vld [vmem:[%s8615] sm:$0x1]
  %v8617 = vsel %vm79, %v8611, 0.0
  %8618 = vadd.xlane.f32.xlu0 %v8617
  %v8619 = vpop.xlane.xlu0 %8618
  %v8620 = vsel %vm2229, %v8612, 0.0
  %8621 = vadd.xlane.f32.xlu0 %v8620
  %v8622 = vpop.xlane.xlu0 %8621
  %v8623 = vmul.f32 %v8619, %v2233
  %v8624 = vmul.f32 %v8622, %v2233
  %v8625 = vmul.f32 %v8611, %v8611
  %v8626 = vmul.f32 %v8612, %v8612
  %v8627 = vsel %vm79, %v8625, 0.0
  %8628 = vadd.xlane.f32.xlu0 %v8627
  %v8629 = vpop.xlane.xlu0 %8628
  %v8630 = vsel %vm2229, %v8626, 0.0
  %8631 = vadd.xlane.f32.xlu0 %v8630
  %v8632 = vpop.xlane.xlu0 %8631
  %v8633 = vmul.f32 %v8629, %v2233
  %v8634 = vmul.f32 %v8632, %v2233
  %v8635 = vsub.f32 %v8611, %v8623
  %v8636 = vsub.f32 %v8612, %v8624
  %v8637 = vmul.f32 %v8623, %v8623
  %v8638 = vmul.f32 %v8624, %v8624
  %v8639 = vsub.f32 %v8633, %v8637
  %v8640 = vsub.f32 %v8634, %v8638
  %v8641 = vadd.f32 %v8639, 1e-05
  %v8642 = vadd.f32 %v8640, 1e-05
  %v8643 = vrsqrt.pop %v8641
  %v8644 = vrsqrt.pop %v8642
  %v8645 = vmul.f32 %v8635, %v8643
  %v8646 = vmul.f32 %v8636, %v8644
  %v8648 = vlaneseq
  %v8649 = vshrl.u32 %v8648, 7
  %v8650 = vsub.s32 0, %v8649
  %v8651 = vrot.slane %v8614, %v8650
  %v8653 = vmul.f32 %v8645, %v8651
  %v8654 = vmul.f32 %v8646, %v8651
  %v8656 = vlaneseq
  %v8657 = vshrl.u32 %v8656, 7
  %v8658 = vsub.s32 0, %v8657
  %v8659 = vrot.slane %v8616, %v8658
  %v8661 = vadd.f32 %v8653, %v8659
  %v8662 = vadd.f32 %v8654, %v8659
  %v8663 = vsel %vm1376, %v5764, 0.0
  %v8664 = vsel %vm1376, %v5765, 0.0
  %v8665 = vadd.f32 %v8663, %v8664
  %v8666 = vsel %vm1376, %v5766, 0.0
  %v8667 = vadd.f32 %v8665, %v8666
  %v8668 = vsel %vm1376, %v5767, 0.0
  %v8669 = vadd.f32 %v8667, %v8668
  %v8670 = vsel %vm1376, %v5768, 0.0
  %v8671 = vsel %vm1376, %v5769, 0.0
  %v8672 = vadd.f32 %v8670, %v8671
  %v8673 = vsel %vm1376, %v5770, 0.0
  %v8674 = vadd.f32 %v8672, %v8673
  %v8675 = vsel %vm1376, %v5771, 0.0
  %v8676 = vadd.f32 %v8674, %v8675
  %v8677 = vrcp.pop 4.0
  %v8678 = vmul.f32 %v8669, %v8677
  %v8679 = vmul.f32 %v8676, %v8677
  %v8680 = vld [vmem:[%s13] sm:$0x1]
  %v8681 = vld [vmem:[%s14] sm:$0x1]
  %v8682 = vsel %vm79, %v8661, 0.0
  %8683 = vadd.xlane.f32.xlu0 %v8682
  %v8684 = vpop.xlane.xlu0 %8683
  %v8685 = vsel %vm2229, %v8662, 0.0
  %8686 = vadd.xlane.f32.xlu0 %v8685
  %v8687 = vpop.xlane.xlu0 %8686
  %v8688 = vmul.f32 %v8684, %v2233
  %v8689 = vmul.f32 %v8687, %v2233
  %v8690 = vmul.f32 %v8661, %v8661
  %v8691 = vmul.f32 %v8662, %v8662
  %v8692 = vsel %vm79, %v8690, 0.0
  %8693 = vadd.xlane.f32.xlu0 %v8692
  %v8694 = vpop.xlane.xlu0 %8693
  %v8695 = vsel %vm2229, %v8691, 0.0
  %8696 = vadd.xlane.f32.xlu0 %v8695
  %v8697 = vpop.xlane.xlu0 %8696
  %v8698 = vmul.f32 %v8694, %v2233
  %v8699 = vmul.f32 %v8697, %v2233
  %v8700 = vsub.f32 %v8661, %v8688
  %v8701 = vsub.f32 %v8662, %v8689
  %v8702 = vmul.f32 %v8688, %v8688
  %v8703 = vmul.f32 %v8689, %v8689
  %v8704 = vsub.f32 %v8698, %v8702
  %v8705 = vsub.f32 %v8699, %v8703
  %v8706 = vadd.f32 %v8704, 1e-05
  %v8707 = vadd.f32 %v8705, 1e-05
  %v8708 = vrsqrt.pop %v8706
  %v8709 = vrsqrt.pop %v8707
  %v8710 = vmul.f32 %v8700, %v8708
  %v8711 = vmul.f32 %v8701, %v8709
  %v8713 = vlaneseq
  %v8714 = vshrl.u32 %v8713, 7
  %v8715 = vsub.s32 0, %v8714
  %v8716 = vrot.slane %v8680, %v8715
  %v8718 = vmul.f32 %v8710, %v8716
  %v8719 = vmul.f32 %v8711, %v8716
  %v8721 = vlaneseq
  %v8722 = vshrl.u32 %v8721, 7
  %v8723 = vsub.s32 0, %v8722
  %v8724 = vrot.slane %v8681, %v8723
  %v8726 = vadd.f32 %v8718, %v8724
  %v8727 = vadd.f32 %v8719, %v8724
  %8728 = vst.msk [vmem:[%s15] sm:$0xff] %vm79, %v8726
  %8729 = vst.msk [vmem:[%s15 + $0x8] sm:$0x3f] %vm2229, %v8727
  %8730 = vst.msk [vmem:[%s16] sm:$0x7f] %vm1376, %v8678
  %8731 = vst.msk [vmem:[%s16 + $0x8] sm:$0x7f] %vm1376, %v8679
  // Predicated region
  $region62: #{weighted_transformer_encoder.1} parent=0 // pred_check
    _
  $region63: #{weighted_transformer_encoder.1} parent=0 // pred_check_branch
    %8733 = sbr.rel (0) target = $region65
  $region64: #{weighted_transformer_encoder.1} parent=0 // pred_region
    _
  $region65: #{weighted_transformer_encoder.1} parent=0 // pred_fallthru
    _
  // Predicated region
  $region66: #{weighted_transformer_encoder.1} parent=0 // pred_check
    _
  $region67: #{weighted_transformer_encoder.1} parent=0 // pred_check_branch
    %8735 = sbr.rel (0) target = $region69
  $region68: #{weighted_transformer_encoder.1} parent=0 // pred_region
    _
  $region69: #{weighted_transformer_encoder.1} parent=0 // pred_fallthru
    _
  // Predicated region
  $region70: #{weighted_transformer_encoder.1} parent=0 // pred_check
    _
  $region71: #{weighted_transformer_encoder.1} parent=0 // pred_check_branch
    %8737 = sbr.rel (0) target = $region73
  $region72: #{weighted_transformer_encoder.1} parent=0 // pred_region
    _
  $region73: #{weighted_transformer_encoder.1} parent=0 // pred_fallthru
    _
  // Predicated region
  $region74: #{weighted_transformer_encoder.1} parent=0 // pred_check
    _
  $region75: #{weighted_transformer_encoder.1} parent=0 // pred_check_branch
    %8739 = sbr.rel (0) target = $region77
  $region76: #{weighted_transformer_encoder.1} parent=0 // pred_region
    _
  $region77: #{weighted_transformer_encoder.1} parent=0 // pred_fallthru
    _

</llo_original>
